<compile_context>
chip_gen: v7x
topology: tpu7x:2x2x1
jax: 0.10.0
libtpu: 0.0.40
codegen_flags: <defaults>
</compile_context>

<pallas_src>
import math

import jax
import jax.numpy as jnp
from jax import lax
from jax.experimental import pallas as pl
from jax.experimental.pallas import tpu as pltpu


# ----------------------------------------------------------------- helpers --

def _pick_tile(M, cap=512):
    """Largest row-tile <= cap that divides M (fallback: full M, single block).
    Keeps per-block VMEM bounded (v7x: 64 MiB physical / 32 MiB scoped default)."""
    if M <= cap:
        return M
    for t in (512, 256, 128, 64, 32, 16, 8):
        if M % t == 0:
            return t
    return M


def _pick_chunk(L, cap=8):
    for t in (cap, 4, 2, 1):
        if L % t == 0:
            return t
    return 1


def _sigmoid(x):
    # exp/div only -- guaranteed Mosaic lowering.
    return 1.0 / (1.0 + jnp.exp(-x))


def _apply_act(y, act):
    if act is None:
        return y
    if act == "relu":
        return jnp.maximum(y, 0.0)
    if act == "silu":
        return y * _sigmoid(y)
    if act == "softplus":
        return jnp.maximum(y, 0.0) + jnp.log(1.0 + jnp.exp(-jnp.abs(y)))
    if act == "sigmoid":
        return _sigmoid(y)
    raise ValueError(act)


# ------------------------------------------------------- fused matmul kernel --

def _make_matmul_kernel(has_bias, normalize, act, post_ln):
    def kernel(*refs):
        x_ref, w_ref = refs[0], refs[1]
        i = 2
        b_ref = g_ref = bb_ref = None
        if has_bias:
            b_ref = refs[i]; i += 1
        if post_ln:
            g_ref = refs[i]; bb_ref = refs[i + 1]; i += 2
        o_ref = refs[i]

        x = x_ref[...]
        if normalize:
            # fused pre-LayerNorm: gamma/beta already folded into w / bias on host
            mu = jnp.mean(x, axis=-1, keepdims=True)
            xc = x - mu
            var = jnp.mean(xc * xc, axis=-1, keepdims=True)
            x = xc * lax.rsqrt(var + 1e-5)
        y = jnp.dot(x.astype(jnp.bfloat16), w_ref[...],
                    preferred_element_type=jnp.float32)
        if has_bias:
            y = y + b_ref[...]
        y = _apply_act(y, act)
        if post_ln:
            mu = jnp.mean(y, axis=-1, keepdims=True)
            yc = y - mu
            var = jnp.mean(yc * yc, axis=-1, keepdims=True)
            y = yc * lax.rsqrt(var + 1e-5) * g_ref[...] + bb_ref[...]
        o_ref[...] = y
    return kernel


def pallas_matmul(x, w, b=None, *, pre_ln=None, act=None, post_ln=None):
    """Fused (LayerNorm ->) matmul (-> bias -> act -> LayerNorm).  x:(M,K), w:(K,N).
    MXU operands in bf16, f32 accumulation; LN / epilogues in f32."""
    x = x.astype(jnp.float32)
    M, Kd = x.shape
    N = w.shape[1]
    w32 = w.astype(jnp.float32)
    bias = None if b is None else b.astype(jnp.float32)
    if pre_ln is not None:
        g, be = pre_ln
        fold = be.astype(jnp.float32) @ w32            # beta @ W  (uses un-scaled W)
        bias = fold if bias is None else bias + fold
        w32 = g.astype(jnp.float32)[:, None] * w32     # diag(gamma) @ W
    wq = w32.astype(jnp.bfloat16)
    has_bias = bias is not None
    tm = _pick_tile(M)

    in_specs = [pl.BlockSpec((tm, Kd), lambda i: (i, 0)),
                pl.BlockSpec((Kd, N), lambda i: (0, 0))]
    args = [x, wq]
    if has_bias:
        in_specs.append(pl.BlockSpec((1, N), lambda i: (0, 0)))
        args.append(bias.reshape(1, N))
    if post_ln is not None:
        g2, b2 = post_ln
        in_specs += [pl.BlockSpec((1, N), lambda i: (0, 0)),
                     pl.BlockSpec((1, N), lambda i: (0, 0))]
        args += [g2.reshape(1, N).astype(jnp.float32),
                 b2.reshape(1, N).astype(jnp.float32)]

    return pl.pallas_call(
        _make_matmul_kernel(has_bias, pre_ln is not None, act, post_ln is not None),
        out_shape=jax.ShapeDtypeStruct((M, N), jnp.float32),
        grid=(M // tm,),
        in_specs=in_specs,
        out_specs=pl.BlockSpec((tm, N), lambda i: (i, 0)),
        compiler_params=pltpu.CompilerParams(dimension_semantics=("parallel",)),
    )(*args)


# ------------------------------------------------------------ LayerNorm (std) --

def _layernorm_kernel(x_ref, g_ref, b_ref, o_ref):
    x = x_ref[...]
    mu = jnp.mean(x, axis=-1, keepdims=True)
    xc = x - mu
    var = jnp.mean(xc * xc, axis=-1, keepdims=True)
    o_ref[...] = xc * lax.rsqrt(var + 1e-5) * g_ref[...] + b_ref[...]


def pallas_layernorm(x, gamma, beta):
    shp = x.shape
    C = shp[-1]
    x2 = x.reshape(-1, C).astype(jnp.float32)
    M = x2.shape[0]
    tm = _pick_tile(M)
    out = pl.pallas_call(
        _layernorm_kernel,
        out_shape=jax.ShapeDtypeStruct((M, C), jnp.float32),
        grid=(M // tm,),
        in_specs=[pl.BlockSpec((tm, C), lambda i: (i, 0)),
                  pl.BlockSpec((1, C), lambda i: (0, 0)),
                  pl.BlockSpec((1, C), lambda i: (0, 0))],
        out_specs=pl.BlockSpec((tm, C), lambda i: (i, 0)),
        compiler_params=pltpu.CompilerParams(dimension_semantics=("parallel",)),
    )(x2, gamma.reshape(1, C).astype(jnp.float32),
      beta.reshape(1, C).astype(jnp.float32))
    return out.reshape(shp)


# --------------------------------------------------- depthwise 3x3 conv + SiLU --

def _dwconv3x3_silu_kernel(x_ref, w_ref, b_ref, o_ref):
    # x_ref: (H+2, W+2, C) zero-padded, w_ref: (3,3,C), b_ref: (1,1,C), o_ref: (H,W,C)
    H, W, C = o_ref.shape
    acc = jnp.zeros((H, W, C), jnp.float32)
    for dh in range(3):
        for dw in range(3):
            acc = acc + x_ref[dh:dh + H, dw:dw + W, :] * w_ref[dh, dw:dw + 1, :]
    acc = acc + b_ref[...]
    o_ref[...] = acc * _sigmoid(acc)        # fused SiLU epilogue


def pallas_dwconv3x3_silu(x, w, b):
    """Depthwise 3x3 conv, padding=1, fused SiLU. x:(B,H,W,C), w:(3,3,C), b:(C,)."""
    Bb, H, W, C = x.shape
    xp = jnp.pad(x.astype(jnp.float32), ((0, 0), (1, 1), (1, 1), (0, 0)))
    return pl.pallas_call(
        _dwconv3x3_silu_kernel,
        out_shape=jax.ShapeDtypeStruct((Bb, H, W, C), jnp.float32),
        grid=(Bb,),
        in_specs=[
            pl.BlockSpec((pl.Squeezed(), H + 2, W + 2, C), lambda b_: (b_, 0, 0, 0)),
            pl.BlockSpec((3, 3, C), lambda b_: (0, 0, 0)),
            pl.BlockSpec((1, 1, C), lambda b_: (0, 0, 0)),
        ],
        out_specs=pl.BlockSpec((pl.Squeezed(), H, W, C), lambda b_: (b_, 0, 0, 0)),
        compiler_params=pltpu.CompilerParams(dimension_semantics=("parallel",)),
    )(xp, w.astype(jnp.float32), b.reshape(1, 1, C).astype(jnp.float32))


# ------------------------------------------------------- selective scan (SSM) --

def _make_ssm_scan_kernel(Tc):
    def kernel(u_ref, dt_ref, B_ref, C_ref, A_ref, D_ref, y_ref):
        # u_ref/dt_ref/y_ref: (L, K, 1, d_inner)   B_ref/C_ref: (L, K, d_state, 1)
        # A_ref: (K, d_state, d_inner)             D_ref: (K, 1, d_inner)
        L = u_ref.shape[0]
        K, d_state, d_inner = A_ref.shape
        A = A_ref[...]
        D = D_ref[...]
        n_chunks = L // Tc

        def chunk_body(c, h):
            start = pl.multiple_of(c * Tc, Tc)
            u_c = u_ref[pl.ds(start, Tc), :, :, :]
            dt_c = dt_ref[pl.ds(start, Tc), :, :, :]
            B_c = B_ref[pl.ds(start, Tc), :, :, :]
            C_c = C_ref[pl.ds(start, Tc), :, :, :]
            ys = []
            for i in range(Tc):                      # statically unrolled timesteps
                u_t = u_c[i]                         # (K, 1, d_inner)
                dt_t = dt_c[i]                       # (K, 1, d_inner)
                B_t = B_c[i]                         # (K, d_state, 1)
                C_t = C_c[i]                         # (K, d_state, 1)
                dA = jnp.exp(A * dt_t)               # (K, d_state, d_inner)  EUP exp
                h = dA * h + B_t * (dt_t * u_t)      # pure VPU broadcast update
                y_t = jnp.sum(C_t * h, axis=1, keepdims=True) + D * u_t
                ys.append(y_t)
            # one chunked store per Tc steps instead of per-step partial stores
            y_ref[pl.ds(start, Tc), :, :, :] = jnp.stack(ys, axis=0)
            return h

        h0 = jnp.zeros((K, d_state, d_inner), jnp.float32)
        lax.fori_loop(0, n_chunks, chunk_body, h0, unroll=True)
    return kernel


def pallas_selective_scan(u, dt, Bm, Cm, A, D):
    """u,dt:(B,L,K,1,d_inner)  Bm,Cm:(B,L,K,d_state,1)  A:(K,d_state,d_inner)
    D:(K,1,d_inner).  All K directions are processed together per timestep; the
    grid runs over batch only and is marked parallel (2 TCs on v7x)."""
    Bb, L, K, _, d_inner = u.shape
    d_state = Bm.shape[3]
    Tc = _pick_chunk(L)
    return pl.pallas_call(
        _make_ssm_scan_kernel(Tc),
        out_shape=jax.ShapeDtypeStruct((Bb, L, K, 1, d_inner), jnp.float32),
        grid=(Bb,),
        in_specs=[
            pl.BlockSpec((pl.Squeezed(), L, K, 1, d_inner), lambda b: (b, 0, 0, 0, 0)),
            pl.BlockSpec((pl.Squeezed(), L, K, 1, d_inner), lambda b: (b, 0, 0, 0, 0)),
            pl.BlockSpec((pl.Squeezed(), L, K, d_state, 1), lambda b: (b, 0, 0, 0, 0)),
            pl.BlockSpec((pl.Squeezed(), L, K, d_state, 1), lambda b: (b, 0, 0, 0, 0)),
            pl.BlockSpec((K, d_state, d_inner), lambda b: (0, 0, 0)),   # A shared, no B-fold copy
            pl.BlockSpec((K, 1, d_inner), lambda b: (0, 0, 0)),         # D shared
        ],
        out_specs=pl.BlockSpec((pl.Squeezed(), L, K, 1, d_inner), lambda b: (b, 0, 0, 0, 0)),
        compiler_params=pltpu.CompilerParams(dimension_semantics=("parallel",)),
    )(u.astype(jnp.float32), dt.astype(jnp.float32), Bm.astype(jnp.float32),
      Cm.astype(jnp.float32), A.astype(jnp.float32), D.astype(jnp.float32))


# ------------------------------------------------ SS2D output fusion kernel --

def _ssm_out_kernel(y_ref, z_ref, g_ref, b_ref, w_ref, o_ref):
    # out_norm(y) * silu(z) @ W_out, all in one kernel
    y = y_ref[...]
    mu = jnp.mean(y, axis=-1, keepdims=True)
    yc = y - mu
    var = jnp.mean(yc * yc, axis=-1, keepdims=True)
    yn = yc * lax.rsqrt(var + 1e-5) * g_ref[...] + b_ref[...]
    z = z_ref[...]
    a = yn * (z * _sigmoid(z))
    o_ref[...] = jnp.dot(a.astype(jnp.bfloat16), w_ref[...],
                         preferred_element_type=jnp.float32)


def pallas_ssm_out(y, z, gamma, beta, w):
    M, d_inner = y.shape
    N = w.shape[1]
    tm = _pick_tile(M)
    return pl.pallas_call(
        _ssm_out_kernel,
        out_shape=jax.ShapeDtypeStruct((M, N), jnp.float32),
        grid=(M // tm,),
        in_specs=[pl.BlockSpec((tm, d_inner), lambda i: (i, 0)),
                  pl.BlockSpec((tm, d_inner), lambda i: (i, 0)),
                  pl.BlockSpec((1, d_inner), lambda i: (0, 0)),
                  pl.BlockSpec((1, d_inner), lambda i: (0, 0)),
                  pl.BlockSpec((d_inner, N), lambda i: (0, 0))],
        out_specs=pl.BlockSpec((tm, N), lambda i: (i, 0)),
        compiler_params=pltpu.CompilerParams(dimension_semantics=("parallel",)),
    )(y.astype(jnp.float32), z.astype(jnp.float32),
      gamma.reshape(1, d_inner).astype(jnp.float32),
      beta.reshape(1, d_inner).astype(jnp.float32),
      w.astype(jnp.bfloat16))


# ------------------------------------------------------------ model (glue) --

def conv_as_matmul(x, w, b, stride, post_ln=None):
    """Non-overlapping conv (kernel==stride) as patch-reshape + fused matmul(+LN)."""
    Bb, H, W, Cin = x.shape
    s = stride
    xw = (x.reshape(Bb, H // s, s, W // s, s, Cin)
            .transpose(0, 1, 3, 2, 4, 5)
            .reshape(Bb * (H // s) * (W // s), s * s * Cin))
    out = pallas_matmul(xw, w, b, post_ln=post_ln)
    return out.reshape(Bb, H // s, W // s, w.shape[1])


def ss2d_forward(x, n1g, n1b, p, d_state, dt_rank):
    """SS2D (4-direction 2D selective scan); norm1 is fused into in_proj."""
    Bb, H, W, dim = x.shape
    d_inner = p['conv_w'].shape[-1]
    L = H * W
    K = 4
    R2 = dt_rank + 2 * d_state

    xf = x.reshape(Bb * L, dim)
    xz = pallas_matmul(xf, p['in_proj_w'], pre_ln=(n1g, n1b))    # (B*L, 2*d_inner)
    xc = xz[:, :d_inner].reshape(Bb, H, W, d_inner)
    z = xz[:, d_inner:]                                          # (B*L, d_inner)

    xc = pallas_dwconv3x3_silu(xc, p['conv_w'], p['conv_b'])
    xc_flat = xc.reshape(Bb * L, d_inner)

    # x_proj for all 4 directions in ONE matmul (projection is pointwise per token)
    xdbl = pallas_matmul(xc_flat, p['x_proj_w'])                 # (B*L, K*R2)
    xdbl = xdbl.reshape(Bb, L, K, R2)
    dt_in = xdbl[:, :, :, :dt_rank].reshape(Bb * L, K * dt_rank)
    Bm = xdbl[:, :, :, dt_rank:dt_rank + d_state]                # (B,L,K,d_state)
    Cm = xdbl[:, :, :, dt_rank + d_state:]

    # dt_proj for all 4 directions via block-diagonal weight, softplus fused in-kernel
    delta = pallas_matmul(dt_in, p['dt_proj_w'], p['dt_proj_b'], act='softplus')
    delta = delta.reshape(Bb, L, K, d_inner)

    # CrossScan: reorder positions per direction (weights were applied pointwise above)
    # TODO(synk): these permutations could be folded into the scan kernel's index_map
    #             / reversed in-kernel indexing to cut activation traffic further.
    def cross_scan(a):  # a: (B, L, K, ch) in row-major position order
        ch = a.shape[-1]
        a_t = jnp.transpose(a.reshape(Bb, H, W, K, ch), (0, 2, 1, 3, 4)).reshape(Bb, L, K, ch)
        return jnp.stack([a[:, :, 0], a_t[:, :, 1],
                          jnp.flip(a[:, :, 2], axis=1),
                          jnp.flip(a_t[:, :, 3], axis=1)], axis=2)

    u0 = xc_flat.reshape(Bb, L, d_inner)
    u1 = jnp.transpose(xc, (0, 2, 1, 3)).reshape(Bb, L, d_inner)
    u_scan = jnp.stack([u0, u1, jnp.flip(u0, 1), jnp.flip(u1, 1)], axis=2)
    dt_scan = cross_scan(delta)
    B_scan = cross_scan(Bm)[..., None]                           # (B,L,K,d_state,1)
    C_scan = cross_scan(Cm)[..., None]

    A = -jnp.exp(p['A_logs'])                                    # (K, d_state, d_inner)
    ys = pallas_selective_scan(u_scan[..., None, :], dt_scan[..., None, :],
                               B_scan, C_scan, A, p['Ds'])
    ys = ys.reshape(Bb, L, K, d_inner)

    # CrossMerge
    def inv_t(y):
        return jnp.transpose(y.reshape(Bb, W, H, d_inner), (0, 2, 1, 3)).reshape(Bb, L, d_inner)

    y = (ys[:, :, 0] + jnp.flip(ys[:, :, 2], axis=1)
         + inv_t(ys[:, :, 1]) + inv_t(jnp.flip(ys[:, :, 3], axis=1)))

    out = pallas_ssm_out(y.reshape(Bb * L, d_inner), z,
                         p['out_norm_g'], p['out_norm_b'], p['out_proj_w'])
    return out.reshape(Bb, H, W, dim)


def vss_block(x, p, d_state, dt_rank):
    Bb, H, W, dim = x.shape
    x = x + ss2d_forward(x, p['norm1_g'], p['norm1_b'], p['ss2d'], d_state, dt_rank)
    xf = x.reshape(-1, dim)
    h = pallas_matmul(xf, p['fc1_w'], p['fc1_b'], pre_ln=(p['norm2_g'], p['norm2_b']))
    # TODO(synk): exact-erf GELU kept in XLA (erf lowering inside Mosaic not guaranteed).
    h = jax.nn.gelu(h, approximate=False)
    h = pallas_matmul(h, p['fc2_w'], p['fc2_b'])
    return x + h.reshape(Bb, H, W, dim)


def vssm_forward(params, x_nchw, cfg):
    x = jnp.transpose(x_nchw, (0, 2, 3, 1)).astype(jnp.float32)   # NCHW -> NHWC

    pe = params['patch_embed']
    x = conv_as_matmul(x, pe['w'], pe['b'], cfg['patch_size'],
                       post_ln=(pe['norm_g'], pe['norm_b']))

    for si, stage in enumerate(params['stages']):
        for bp in stage['blocks']:
            x = vss_block(x, bp, cfg['d_state'], cfg['dt_ranks'][si])
        if stage['downsample'] is not None:
            # TODO(synk): VMamba downsample "v3" uses a 3x3 stride-2 conv; this uses a 2x2
            # stride-2 patch-merge expressed as a fused matmul + LN.
            ds = stage['downsample']
            x = conv_as_matmul(x, ds['w'], ds['b'], 2,
                               post_ln=(ds['norm_g'], ds['norm_b']))

    cl = params['classifier']
    x = pallas_layernorm(x, cl['norm_g'], cl['norm_b'])
    x = jnp.mean(x, axis=(1, 2))                                  # global avg pool
    h = pallas_matmul(x, cl['fc1_w'], cl['fc1_b'], act='relu')    # Dropout(0.5)=identity (eval)
    out = pallas_matmul(h, cl['fc2_w'], cl['fc2_b'], act='sigmoid')
    return out                                                    # (B, 1)


# ------------------------------------------------------------------- params --

def init_params(key, in_chans, dims, depths, d_state, ssm_ratio, mlp_ratio,
                patch_size, dt_ranks):
    keys = iter(jax.random.split(key, 512))

    def nrm(shape, std=0.02):
        return std * jax.random.normal(next(keys), shape, jnp.float32)

    K = 4
    params = {}
    params['patch_embed'] = dict(
        w=nrm((patch_size * patch_size * in_chans, dims[0])),
        b=jnp.zeros((dims[0],), jnp.float32),
        norm_g=jnp.ones((dims[0],), jnp.float32),
        norm_b=jnp.zeros((dims[0],), jnp.float32))

    stages = []
    for si, (depth, dim) in enumerate(zip(depths, dims)):
        d_inner = int(ssm_ratio * dim)
        dt_rank = dt_ranks[si]
        R2 = dt_rank + 2 * d_state
        blocks = []
        for _ in range(depth):
            # A_logs stored directly in the scan layout (K, d_state, d_inner)
            A_logs = jnp.log(jnp.broadcast_to(
                jnp.arange(1, d_state + 1, dtype=jnp.float32)[None, :, None],
                (K, d_state, d_inner)))
            # dt projections as a block-diagonal (K*dt_rank, K*d_inner) weight
            wdt = jnp.zeros((K * dt_rank, K * d_inner), jnp.float32)
            for k in range(K):
                wdt = wdt.at[k * dt_rank:(k + 1) * dt_rank,
                             k * d_inner:(k + 1) * d_inner].set(
                    nrm((dt_rank, d_inner), std=dt_rank ** -0.5))
            ss2d = dict(
                in_proj_w=nrm((dim, 2 * d_inner)),
                conv_w=nrm((3, 3, d_inner)),
                conv_b=jnp.zeros((d_inner,), jnp.float32),
                x_proj_w=nrm((d_inner, K * R2)),         # 4 direction weights stacked (pre-transposed)
                dt_proj_w=wdt,
                dt_proj_b=jnp.full((K * d_inner,), 0.01, jnp.float32),
                A_logs=A_logs,
                Ds=jnp.ones((K, 1, d_inner), jnp.float32),
                out_norm_g=jnp.ones((d_inner,), jnp.float32),
                out_norm_b=jnp.zeros((d_inner,), jnp.float32),
                out_proj_w=nrm((d_inner, dim)))
            hidden = int(mlp_ratio * dim)
            blocks.append(dict(
                norm1_g=jnp.ones((dim,), jnp.float32), norm1_b=jnp.zeros((dim,), jnp.float32),
                norm2_g=jnp.ones((dim,), jnp.float32), norm2_b=jnp.zeros((dim,), jnp.float32),
                ss2d=ss2d,
                fc1_w=nrm((dim, hidden)), fc1_b=jnp.zeros((hidden,), jnp.float32),
                fc2_w=nrm((hidden, dim)), fc2_b=jnp.zeros((dim,), jnp.float32)))
        downsample = None
        if si < len(dims) - 1:
            downsample = dict(
                w=nrm((2 * 2 * dim, dims[si + 1])),
                b=jnp.zeros((dims[si + 1],), jnp.float32),
                norm_g=jnp.ones((dims[si + 1],), jnp.float32),
                norm_b=jnp.zeros((dims[si + 1],), jnp.float32))
        stages.append(dict(blocks=blocks, downsample=downsample))
    params['stages'] = stages

    nf = dims[-1]
    params['classifier'] = dict(
        norm_g=jnp.ones((nf,), jnp.float32), norm_b=jnp.zeros((nf,), jnp.float32),
        fc1_w=nrm((nf, 256)), fc1_b=jnp.zeros((256,), jnp.float32),
        fc2_w=nrm((256, 1)), fc2_b=jnp.zeros((1,), jnp.float32))
    return params


# --------------------------------------------------------------------- main --

if __name__ == "__main__":
    key = jax.random.PRNGKey(0)
    kp, kx = jax.random.split(key)

    # Small, forward-consistent shapes: batch=2, in_chans=4, 16x16 image.
    B, Cin, Himg, Wimg = 2, 4, 16, 16
    dims = (32, 64)
    depths = (1, 1)
    d_state = 8
    ssm_ratio = 2.0
    mlp_ratio = 4.0
    patch_size = 4
    dt_ranks = tuple(int(math.ceil(d / 16)) for d in dims)   # ssm_dt_rank='auto'

    params = init_params(kp, Cin, dims, depths, d_state, ssm_ratio, mlp_ratio,
                         patch_size, dt_ranks)
    x = jax.random.normal(kx, (B, Cin, Himg, Wimg), jnp.float32)
    cfg = dict(patch_size=patch_size, d_state=d_state, dt_ranks=dt_ranks)

    fwd = jax.jit(lambda p, xx: vssm_forward(p, xx, cfg))
    out = fwd(params, x)
    out = jax.block_until_ready(out)
    assert out.shape == (B, 1)
    assert bool(jnp.all(jnp.isfinite(out)))
    print("KERNEL_OK")
</pallas_src>

<mosaic_0001>
module attributes {stable_mosaic.version = 11 : i64} {
  func.func @kernel(%arg0: i32, %arg1: memref<32x64xf32, #tpu.memory_space<vmem>>, %arg2: memref<64x32xbf16, #tpu.memory_space<vmem>>, %arg3: memref<1x32xf32, #tpu.memory_space<vmem>>, %arg4: memref<1x32xf32, #tpu.memory_space<vmem>>, %arg5: memref<1x32xf32, #tpu.memory_space<vmem>>, %arg6: memref<32x32xf32, #tpu.memory_space<vmem>>) attributes {dimension_semantics = [#tpu.dimension_semantics<parallel>], iteration_bounds = array<i64: 1>, scalar_prefetch = 0 : i64, scratch_operands = 0 : i64, tpu.core_type = #tpu.core_type<tc>, window_params = [{transform_indices = @transform_0, window_bounds = array<i64: 32, 64>}, {pipeline_mode = #tpu.pipeline_mode<synchronous>, transform_indices = @transform_1, window_bounds = array<i64: 64, 32>}, {pipeline_mode = #tpu.pipeline_mode<synchronous>, transform_indices = @transform_2, window_bounds = array<i64: 1, 32>}, {pipeline_mode = #tpu.pipeline_mode<synchronous>, transform_indices = @transform_3, window_bounds = array<i64: 1, 32>}, {pipeline_mode = #tpu.pipeline_mode<synchronous>, transform_indices = @transform_4, window_bounds = array<i64: 1, 32>}, {transform_indices = @transform_5, window_bounds = array<i64: 32, 32>}]} {
    %c0 = arith.constant 0 : index
    %c0_0 = arith.constant 0 : index
    %0 = vector.load %arg1[%c0, %c0_0] : memref<32x64xf32, #tpu.memory_space<vmem>>, vector<32x64xf32>
    %1 = arith.truncf %0 : vector<32x64xf32> to vector<32x64xbf16>
    %c0_1 = arith.constant 0 : index
    %c0_2 = arith.constant 0 : index
    %2 = vector.load %arg2[%c0_1, %c0_2] : memref<64x32xbf16, #tpu.memory_space<vmem>>, vector<64x32xbf16>
    %cst = arith.constant dense<0.000000e+00> : vector<32x32xf32>
    %3 = tpu.matmul %1, %2, %cst {dimension_numbers = #tpu.dot_dimension_numbers<[1], [0], [0], [1], [0, 0, 1, 1], [], []>} : vector<32x64xbf16>, vector<64x32xbf16>, vector<32x32xf32> -> vector<32x32xf32>
    %c0_3 = arith.constant 0 : index
    %c0_4 = arith.constant 0 : index
    %4 = vector.load %arg3[%c0_3, %c0_4] : memref<1x32xf32, #tpu.memory_space<vmem>>, vector<1x32xf32>
    %5 = vector.broadcast %4 : vector<1x32xf32> to vector<32x32xf32>
    %6 = arith.addf %3, %5 : vector<32x32xf32>
    %cst_5 = arith.constant dense<0.000000e+00> : vector<32xf32>
    %7 = vector.multi_reduction <add>, %6, %cst_5 [1] : vector<32x32xf32> to vector<32xf32>
    %8 = vector.shape_cast %7 : vector<32xf32> to vector<32x1xf32>
    %cst_6 = arith.constant 3.200000e+01 : f32
    %9 = vector.broadcast %cst_6 : f32 to vector<32x1xf32>
    %10 = arith.divf %8, %9 : vector<32x1xf32>
    %11 = vector.broadcast %10 : vector<32x1xf32> to vector<32x32xf32>
    %12 = arith.subf %6, %11 : vector<32x32xf32>
    %13 = arith.mulf %12, %12 : vector<32x32xf32>
    %cst_7 = arith.constant dense<0.000000e+00> : vector<32xf32>
    %14 = vector.multi_reduction <add>, %13, %cst_7 [1] : vector<32x32xf32> to vector<32xf32>
    %15 = vector.shape_cast %14 : vector<32xf32> to vector<32x1xf32>
    %cst_8 = arith.constant 3.200000e+01 : f32
    %16 = vector.broadcast %cst_8 : f32 to vector<32x1xf32>
    %17 = arith.divf %15, %16 : vector<32x1xf32>
    %cst_9 = arith.constant 9.99999974E-6 : f32
    %18 = vector.broadcast %cst_9 : f32 to vector<32x1xf32>
    %19 = arith.addf %17, %18 : vector<32x1xf32>
    %20 = math.rsqrt %19 : vector<32x1xf32>
    %21 = vector.broadcast %20 : vector<32x1xf32> to vector<32x32xf32>
    %22 = arith.mulf %12, %21 : vector<32x32xf32>
    %c0_10 = arith.constant 0 : index
    %c0_11 = arith.constant 0 : index
    %23 = vector.load %arg4[%c0_10, %c0_11] : memref<1x32xf32, #tpu.memory_space<vmem>>, vector<1x32xf32>
    %24 = vector.broadcast %23 : vector<1x32xf32> to vector<32x32xf32>
    %25 = arith.mulf %22, %24 : vector<32x32xf32>
    %c0_12 = arith.constant 0 : index
    %c0_13 = arith.constant 0 : index
    %26 = vector.load %arg5[%c0_12, %c0_13] : memref<1x32xf32, #tpu.memory_space<vmem>>, vector<1x32xf32>
    %27 = vector.broadcast %26 : vector<1x32xf32> to vector<32x32xf32>
    %28 = arith.addf %25, %27 : vector<32x32xf32>
    %c0_14 = arith.constant 0 : index
    %c0_15 = arith.constant 0 : index
    %29 = vector.load %arg6[%c0_14, %c0_15] : memref<32x32xf32, #tpu.memory_space<vmem>>, vector<32x32xf32>
    tpu.vector_store %arg6[%c0_14, %c0_15], %28 {strides = array<i32>} : memref<32x32xf32, #tpu.memory_space<vmem>>, vector<32x32xf32>,
    return
  }
  func.func @transform_0(%arg0: i32) -> (i32, i32) {
    %c0_i32 = arith.constant 0 : i32
    %c0_i32_0 = arith.constant 0 : i32
    return %arg0, %c0_i32 : i32, i32
  }
  func.func @transform_1(%arg0: i32) -> (i32, i32) {
    %c0_i32 = arith.constant 0 : i32
    %c0_i32_0 = arith.constant 0 : i32
    %c0_i32_1 = arith.constant 0 : i32
    return %c0_i32, %c0_i32_0 : i32, i32
  }
  func.func @transform_2(%arg0: i32) -> (i32, i32) {
    %c0_i32 = arith.constant 0 : i32
    %c0_i32_0 = arith.constant 0 : i32
    %c0_i32_1 = arith.constant 0 : i32
    return %c0_i32, %c0_i32_0 : i32, i32
  }
  func.func @transform_3(%arg0: i32) -> (i32, i32) {
    %c0_i32 = arith.constant 0 : i32
    %c0_i32_0 = arith.constant 0 : i32
    %c0_i32_1 = arith.constant 0 : i32
    return %c0_i32, %c0_i32_0 : i32, i32
  }
  func.func @transform_4(%arg0: i32) -> (i32, i32) {
    %c0_i32 = arith.constant 0 : i32
    %c0_i32_0 = arith.constant 0 : i32
    %c0_i32_1 = arith.constant 0 : i32
    return %c0_i32, %c0_i32_0 : i32, i32
  }
  func.func @transform_5(%arg0: i32) -> (i32, i32) {
    %c0_i32 = arith.constant 0 : i32
    %c0_i32_0 = arith.constant 0 : i32
    return %arg0, %c0_i32 : i32, i32
  }
}

module attributes {stable_mosaic.version = 11 : i64} {
  func.func @kernel(%arg0: i32, %arg1: memref<32x32xf32, #tpu.memory_space<vmem>>, %arg2: memref<32x128xbf16, #tpu.memory_space<vmem>>, %arg3: memref<1x128xf32, #tpu.memory_space<vmem>>, %arg4: memref<32x128xf32, #tpu.memory_space<vmem>>) attributes {dimension_semantics = [#tpu.dimension_semantics<parallel>], iteration_bounds = array<i64: 1>, scalar_prefetch = 0 : i64, scratch_operands = 0 : i64, tpu.core_type = #tpu.core_type<tc>, window_params = [{transform_indices = @transform_0, window_bounds = array<i64: 32, 32>}, {pipeline_mode = #tpu.pipeline_mode<synchronous>, transform_indices = @transform_1, window_bounds = array<i64: 32, 128>}, {pipeline_mode = #tpu.pipeline_mode<synchronous>, transform_indices = @transform_2, window_bounds = array<i64: 1, 128>}, {transform_indices = @transform_3, window_bounds = array<i64: 32, 128>}]} {
    %c0 = arith.constant 0 : index
    %c0_0 = arith.constant 0 : index
    %0 = vector.load %arg1[%c0, %c0_0] : memref<32x32xf32, #tpu.memory_space<vmem>>, vector<32x32xf32>
    %cst = arith.constant dense<0.000000e+00> : vector<32xf32>
    %1 = vector.multi_reduction <add>, %0, %cst [1] : vector<32x32xf32> to vector<32xf32>
    %2 = vector.shape_cast %1 : vector<32xf32> to vector<32x1xf32>
    %cst_1 = arith.constant 3.200000e+01 : f32
    %3 = vector.broadcast %cst_1 : f32 to vector<32x1xf32>
    %4 = arith.divf %2, %3 : vector<32x1xf32>
    %5 = vector.broadcast %4 : vector<32x1xf32> to vector<32x32xf32>
    %6 = arith.subf %0, %5 : vector<32x32xf32>
    %7 = arith.mulf %6, %6 : vector<32x32xf32>
    %cst_2 = arith.constant dense<0.000000e+00> : vector<32xf32>
    %8 = vector.multi_reduction <add>, %7, %cst_2 [1] : vector<32x32xf32> to vector<32xf32>
    %9 = vector.shape_cast %8 : vector<32xf32> to vector<32x1xf32>
    %cst_3 = arith.constant 3.200000e+01 : f32
    %10 = vector.broadcast %cst_3 : f32 to vector<32x1xf32>
    %11 = arith.divf %9, %10 : vector<32x1xf32>
    %cst_4 = arith.constant 9.99999974E-6 : f32
    %12 = vector.broadcast %cst_4 : f32 to vector<32x1xf32>
    %13 = arith.addf %11, %12 : vector<32x1xf32>
    %14 = math.rsqrt %13 : vector<32x1xf32>
    %15 = vector.broadcast %14 : vector<32x1xf32> to vector<32x32xf32>
    %16 = arith.mulf %6, %15 : vector<32x32xf32>
    %17 = arith.truncf %16 : vector<32x32xf32> to vector<32x32xbf16>
    %c0_5 = arith.constant 0 : index
    %c0_6 = arith.constant 0 : index
    %18 = vector.load %arg2[%c0_5, %c0_6] : memref<32x128xbf16, #tpu.memory_space<vmem>>, vector<32x128xbf16>
    %cst_7 = arith.constant dense<0.000000e+00> : vector<32x128xf32>
    %19 = tpu.matmul %17, %18, %cst_7 {dimension_numbers = #tpu.dot_dimension_numbers<[1], [0], [0], [1], [0, 0, 1, 1], [], []>} : vector<32x32xbf16>, vector<32x128xbf16>, vector<32x128xf32> -> vector<32x128xf32>
    %c0_8 = arith.constant 0 : index
    %c0_9 = arith.constant 0 : index
    %20 = vector.load %arg3[%c0_8, %c0_9] : memref<1x128xf32, #tpu.memory_space<vmem>>, vector<1x128xf32>
    %21 = vector.broadcast %20 : vector<1x128xf32> to vector<32x128xf32>
    %22 = arith.addf %19, %21 : vector<32x128xf32>
    %c0_10 = arith.constant 0 : index
    %c0_11 = arith.constant 0 : index
    %23 = vector.load %arg4[%c0_10, %c0_11] : memref<32x128xf32, #tpu.memory_space<vmem>>, vector<32x128xf32>
    tpu.vector_store %arg4[%c0_10, %c0_11], %22 {strides = array<i32>} : memref<32x128xf32, #tpu.memory_space<vmem>>, vector<32x128xf32>,
    return
  }
  func.func @transform_0(%arg0: i32) -> (i32, i32) {
    %c0_i32 = arith.constant 0 : i32
    %c0_i32_0 = arith.constant 0 : i32
    return %arg0, %c0_i32 : i32, i32
  }
  func.func @transform_1(%arg0: i32) -> (i32, i32) {
    %c0_i32 = arith.constant 0 : i32
    %c0_i32_0 = arith.constant 0 : i32
    %c0_i32_1 = arith.constant 0 : i32
    return %c0_i32, %c0_i32_0 : i32, i32
  }
  func.func @transform_2(%arg0: i32) -> (i32, i32) {
    %c0_i32 = arith.constant 0 : i32
    %c0_i32_0 = arith.constant 0 : i32
    %c0_i32_1 = arith.constant 0 : i32
    return %c0_i32, %c0_i32_0 : i32, i32
  }
  func.func @transform_3(%arg0: i32) -> (i32, i32) {
    %c0_i32 = arith.constant 0 : i32
    %c0_i32_0 = arith.constant 0 : i32
    return %arg0, %c0_i32 : i32, i32
  }
}

module attributes {stable_mosaic.version = 11 : i64} {
  func.func @_dwconv3x3_silu_kernel(%arg0: i32, %arg1: memref<1x6x6x64xf32, #tpu.memory_space<vmem>>, %arg2: memref<3x3x64xf32, #tpu.memory_space<vmem>>, %arg3: memref<1x1x64xf32, #tpu.memory_space<vmem>>, %arg4: memref<1x4x4x64xf32, #tpu.memory_space<vmem>>) attributes {dimension_semantics = [#tpu.dimension_semantics<parallel>], iteration_bounds = array<i64: 2>, scalar_prefetch = 0 : i64, scratch_operands = 0 : i64, tpu.core_type = #tpu.core_type<tc>, window_params = [{transform_indices = @transform_0, window_bounds = array<i64: 1, 6, 6, 64>}, {pipeline_mode = #tpu.pipeline_mode<synchronous>, transform_indices = @transform_1, window_bounds = array<i64: 3, 3, 64>}, {pipeline_mode = #tpu.pipeline_mode<synchronous>, transform_indices = @transform_2, window_bounds = array<i64: 1, 1, 64>}, {transform_indices = @transform_3, window_bounds = array<i64: 1, 4, 4, 64>}]} {
    %cst = arith.constant 0.000000e+00 : f32
    %0 = vector.broadcast %cst : f32 to vector<4x4x64xf32>
    %c0 = arith.constant 0 : index
    %c0_0 = arith.constant 0 : index
    %c0_1 = arith.constant 0 : index
    %c0_2 = arith.constant 0 : index
    %1 = vector.load %arg1[%c0, %c0_0, %c0_1, %c0_2] : memref<1x6x6x64xf32, #tpu.memory_space<vmem>>, vector<1x4x4x64xf32>
    %2 = vector.shape_cast %1 : vector<1x4x4x64xf32> to vector<4x4x64xf32>
    %c0_3 = arith.constant 0 : index
    %c0_4 = arith.constant 0 : index
    %c0_5 = arith.constant 0 : index
    %3 = vector.load %arg2[%c0_3, %c0_4, %c0_5] : memref<3x3x64xf32, #tpu.memory_space<vmem>>, vector<1x1x64xf32>
    %4 = vector.shape_cast %3 : vector<1x1x64xf32> to vector<1x64xf32>
    %5 = vector.shape_cast %4 : vector<1x64xf32> to vector<1x1x64xf32>
    %6 = vector.broadcast %5 : vector<1x1x64xf32> to vector<4x4x64xf32>
    %7 = arith.mulf %2, %6 : vector<4x4x64xf32>
    %8 = arith.addf %0, %7 : vector<4x4x64xf32>
    %c0_6 = arith.constant 0 : index
    %c0_7 = arith.constant 0 : index
    %c1 = arith.constant 1 : index
    %c0_8 = arith.constant 0 : index
    %9 = vector.load %arg1[%c0_6, %c0_7, %c1, %c0_8] : memref<1x6x6x64xf32, #tpu.memory_space<vmem>>, vector<1x4x4x64xf32>
    %10 = vector.shape_cast %9 : vector<1x4x4x64xf32> to vector<4x4x64xf32>
    %c0_9 = arith.constant 0 : index
    %c1_10 = arith.constant 1 : index
    %c0_11 = arith.constant 0 : index
    %11 = vector.load %arg2[%c0_9, %c1_10, %c0_11] : memref<3x3x64xf32, #tpu.memory_space<vmem>>, vector<1x1x64xf32>
    %12 = vector.shape_cast %11 : vector<1x1x64xf32> to vector<1x64xf32>
    %13 = vector.shape_cast %12 : vector<1x64xf32> to vector<1x1x64xf32>
    %14 = vector.broadcast %13 : vector<1x1x64xf32> to vector<4x4x64xf32>
    %15 = arith.mulf %10, %14 : vector<4x4x64xf32>
    %16 = arith.addf %8, %15 : vector<4x4x64xf32>
    %c0_12 = arith.constant 0 : index
    %c0_13 = arith.constant 0 : index
    %c2 = arith.constant 2 : index
    %c0_14 = arith.constant 0 : index
    %17 = vector.load %arg1[%c0_12, %c0_13, %c2, %c0_14] : memref<1x6x6x64xf32, #tpu.memory_space<vmem>>, vector<1x4x4x64xf32>
    %18 = vector.shape_cast %17 : vector<1x4x4x64xf32> to vector<4x4x64xf32>
    %c0_15 = arith.constant 0 : index
    %c2_16 = arith.constant 2 : index
    %c0_17 = arith.constant 0 : index
    %19 = vector.load %arg2[%c0_15, %c2_16, %c0_17] : memref<3x3x64xf32, #tpu.memory_space<vmem>>, vector<1x1x64xf32>
    %20 = vector.shape_cast %19 : vector<1x1x64xf32> to vector<1x64xf32>
    %21 = vector.shape_cast %20 : vector<1x64xf32> to vector<1x1x64xf32>
    %22 = vector.broadcast %21 : vector<1x1x64xf32> to vector<4x4x64xf32>
    %23 = arith.mulf %18, %22 : vector<4x4x64xf32>
    %24 = arith.addf %16, %23 : vector<4x4x64xf32>
    %c0_18 = arith.constant 0 : index
    %c1_19 = arith.constant 1 : index
    %c0_20 = arith.constant 0 : index
    %c0_21 = arith.constant 0 : index
    %25 = vector.load %arg1[%c0_18, %c1_19, %c0_20, %c0_21] : memref<1x6x6x64xf32, #tpu.memory_space<vmem>>, vector<1x4x4x64xf32>
    %26 = vector.shape_cast %25 : vector<1x4x4x64xf32> to vector<4x4x64xf32>
    %c1_22 = arith.constant 1 : index
    %c0_23 = arith.constant 0 : index
    %c0_24 = arith.constant 0 : index
    %27 = vector.load %arg2[%c1_22, %c0_23, %c0_24] : memref<3x3x64xf32, #tpu.memory_space<vmem>>, vector<1x1x64xf32>
    %28 = vector.shape_cast %27 : vector<1x1x64xf32> to vector<1x64xf32>
    %29 = vector.shape_cast %28 : vector<1x64xf32> to vector<1x1x64xf32>
    %30 = vector.broadcast %29 : vector<1x1x64xf32> to vector<4x4x64xf32>
    %31 = arith.mulf %26, %30 : vector<4x4x64xf32>
    %32 = arith.addf %24, %31 : vector<4x4x64xf32>
    %c0_25 = arith.constant 0 : index
    %c1_26 = arith.constant 1 : index
    %c1_27 = arith.constant 1 : index
    %c0_28 = arith.constant 0 : index
    %33 = vector.load %arg1[%c0_25, %c1_26, %c1_27, %c0_28] : memref<1x6x6x64xf32, #tpu.memory_space<vmem>>, vector<1x4x4x64xf32>
    %34 = vector.shape_cast %33 : vector<1x4x4x64xf32> to vector<4x4x64xf32>
    %c1_29 = arith.constant 1 : index
    %c1_30 = arith.constant 1 : index
    %c0_31 = arith.constant 0 : index
    %35 = vector.load %arg2[%c1_29, %c1_30, %c0_31] : memref<3x3x64xf32, #tpu.memory_space<vmem>>, vector<1x1x64xf32>
    %36 = vector.shape_cast %35 : vector<1x1x64xf32> to vector<1x64xf32>
    %37 = vector.shape_cast %36 : vector<1x64xf32> to vector<1x1x64xf32>
    %38 = vector.broadcast %37 : vector<1x1x64xf32> to vector<4x4x64xf32>
    %39 = arith.mulf %34, %38 : vector<4x4x64xf32>
    %40 = arith.addf %32, %39 : vector<4x4x64xf32>
    %c0_32 = arith.constant 0 : index
    %c1_33 = arith.constant 1 : index
    %c2_34 = arith.constant 2 : index
    %c0_35 = arith.constant 0 : index
    %41 = vector.load %arg1[%c0_32, %c1_33, %c2_34, %c0_35] : memref<1x6x6x64xf32, #tpu.memory_space<vmem>>, vector<1x4x4x64xf32>
    %42 = vector.shape_cast %41 : vector<1x4x4x64xf32> to vector<4x4x64xf32>
    %c1_36 = arith.constant 1 : index
    %c2_37 = arith.constant 2 : index
    %c0_38 = arith.constant 0 : index
    %43 = vector.load %arg2[%c1_36, %c2_37, %c0_38] : memref<3x3x64xf32, #tpu.memory_space<vmem>>, vector<1x1x64xf32>
    %44 = vector.shape_cast %43 : vector<1x1x64xf32> to vector<1x64xf32>
    %45 = vector.shape_cast %44 : vector<1x64xf32> to vector<1x1x64xf32>
    %46 = vector.broadcast %45 : vector<1x1x64xf32> to vector<4x4x64xf32>
    %47 = arith.mulf %42, %46 : vector<4x4x64xf32>
    %48 = arith.addf %40, %47 : vector<4x4x64xf32>
    %c0_39 = arith.constant 0 : index
    %c2_40 = arith.constant 2 : index
    %c0_41 = arith.constant 0 : index
    %c0_42 = arith.constant 0 : index
    %49 = vector.load %arg1[%c0_39, %c2_40, %c0_41, %c0_42] : memref<1x6x6x64xf32, #tpu.memory_space<vmem>>, vector<1x4x4x64xf32>
    %50 = vector.shape_cast %49 : vector<1x4x4x64xf32> to vector<4x4x64xf32>
    %c2_43 = arith.constant 2 : index
    %c0_44 = arith.constant 0 : index
    %c0_45 = arith.constant 0 : index
    %51 = vector.load %arg2[%c2_43, %c0_44, %c0_45] : memref<3x3x64xf32, #tpu.memory_space<vmem>>, vector<1x1x64xf32>
    %52 = vector.shape_cast %51 : vector<1x1x64xf32> to vector<1x64xf32>
    %53 = vector.shape_cast %52 : vector<1x64xf32> to vector<1x1x64xf32>
    %54 = vector.broadcast %53 : vector<1x1x64xf32> to vector<4x4x64xf32>
    %55 = arith.mulf %50, %54 : vector<4x4x64xf32>
    %56 = arith.addf %48, %55 : vector<4x4x64xf32>
    %c0_46 = arith.constant 0 : index
    %c2_47 = arith.constant 2 : index
    %c1_48 = arith.constant 1 : index
    %c0_49 = arith.constant 0 : index
    %57 = vector.load %arg1[%c0_46, %c2_47, %c1_48, %c0_49] : memref<1x6x6x64xf32, #tpu.memory_space<vmem>>, vector<1x4x4x64xf32>
    %58 = vector.shape_cast %57 : vector<1x4x4x64xf32> to vector<4x4x64xf32>
    %c2_50 = arith.constant 2 : index
    %c1_51 = arith.constant 1 : index
    %c0_52 = arith.constant 0 : index
    %59 = vector.load %arg2[%c2_50, %c1_51, %c0_52] : memref<3x3x64xf32, #tpu.memory_space<vmem>>, vector<1x1x64xf32>
    %60 = vector.shape_cast %59 : vector<1x1x64xf32> to vector<1x64xf32>
    %61 = vector.shape_cast %60 : vector<1x64xf32> to vector<1x1x64xf32>
    %62 = vector.broadcast %61 : vector<1x1x64xf32> to vector<4x4x64xf32>
    %63 = arith.mulf %58, %62 : vector<4x4x64xf32>
    %64 = arith.addf %56, %63 : vector<4x4x64xf32>
    %c0_53 = arith.constant 0 : index
    %c2_54 = arith.constant 2 : index
    %c2_55 = arith.constant 2 : index
    %c0_56 = arith.constant 0 : index
    %65 = vector.load %arg1[%c0_53, %c2_54, %c2_55, %c0_56] : memref<1x6x6x64xf32, #tpu.memory_space<vmem>>, vector<1x4x4x64xf32>
    %66 = vector.shape_cast %65 : vector<1x4x4x64xf32> to vector<4x4x64xf32>
    %c2_57 = arith.constant 2 : index
    %c2_58 = arith.constant 2 : index
    %c0_59 = arith.constant 0 : index
    %67 = vector.load %arg2[%c2_57, %c2_58, %c0_59] : memref<3x3x64xf32, #tpu.memory_space<vmem>>, vector<1x1x64xf32>
    %68 = vector.shape_cast %67 : vector<1x1x64xf32> to vector<1x64xf32>
    %69 = vector.shape_cast %68 : vector<1x64xf32> to vector<1x1x64xf32>
    %70 = vector.broadcast %69 : vector<1x1x64xf32> to vector<4x4x64xf32>
    %71 = arith.mulf %66, %70 : vector<4x4x64xf32>
    %72 = arith.addf %64, %71 : vector<4x4x64xf32>
    %c0_60 = arith.constant 0 : index
    %c0_61 = arith.constant 0 : index
    %c0_62 = arith.constant 0 : index
    %73 = vector.load %arg3[%c0_60, %c0_61, %c0_62] : memref<1x1x64xf32, #tpu.memory_space<vmem>>, vector<1x1x64xf32>
    %74 = vector.broadcast %73 : vector<1x1x64xf32> to vector<4x4x64xf32>
    %75 = arith.addf %72, %74 : vector<4x4x64xf32>
    %cst_63 = arith.constant 0.000000e+00 : f32
    %76 = vector.broadcast %cst_63 : f32 to vector<4x4x64xf32>
    %77 = arith.subf %76, %75 : vector<4x4x64xf32>
    %78 = math.exp %77 : vector<4x4x64xf32>
    %cst_64 = arith.constant 1.000000e+00 : f32
    %79 = vector.broadcast %cst_64 : f32 to vector<4x4x64xf32>
    %80 = arith.addf %79, %78 : vector<4x4x64xf32>
    %cst_65 = arith.constant 1.000000e+00 : f32
    %81 = vector.broadcast %cst_65 : f32 to vector<4x4x64xf32>
    %82 = arith.divf %81, %80 : vector<4x4x64xf32>
    %83 = arith.mulf %75, %82 : vector<4x4x64xf32>
    %c0_66 = arith.constant 0 : index
    %c0_67 = arith.constant 0 : index
    %c0_68 = arith.constant 0 : index
    %c0_69 = arith.constant 0 : index
    %84 = vector.load %arg4[%c0_66, %c0_67, %c0_68, %c0_69] : memref<1x4x4x64xf32, #tpu.memory_space<vmem>>, vector<1x4x4x64xf32>
    %85 = vector.shape_cast %84 : vector<1x4x4x64xf32> to vector<4x4x64xf32>
    %86 = vector.shape_cast %83 : vector<4x4x64xf32> to vector<1x4x4x64xf32>
    tpu.vector_store %arg4[%c0_66, %c0_67, %c0_68, %c0_69], %86 {strides = array<i32>} : memref<1x4x4x64xf32, #tpu.memory_space<vmem>>, vector<1x4x4x64xf32>,
    return
  }
  func.func @transform_0(%arg0: i32) -> (i32, i32, i32, i32) {
    %c0_i32 = arith.constant 0 : i32
    %c0_i32_0 = arith.constant 0 : i32
    %c0_i32_1 = arith.constant 0 : i32
    %c0_i32_2 = arith.constant 0 : i32
    return %arg0, %c0_i32, %c0_i32_0, %c0_i32_1 : i32, i32, i32, i32
  }
  func.func @transform_1(%arg0: i32) -> (i32, i32, i32) {
    %c0_i32 = arith.constant 0 : i32
    %c0_i32_0 = arith.constant 0 : i32
    %c0_i32_1 = arith.constant 0 : i32
    %c0_i32_2 = arith.constant 0 : i32
    return %c0_i32, %c0_i32_0, %c0_i32_1 : i32, i32, i32
  }
  func.func @transform_2(%arg0: i32) -> (i32, i32, i32) {
    %c0_i32 = arith.constant 0 : i32
    %c0_i32_0 = arith.constant 0 : i32
    %c0_i32_1 = arith.constant 0 : i32
    %c0_i32_2 = arith.constant 0 : i32
    return %c0_i32, %c0_i32_0, %c0_i32_1 : i32, i32, i32
  }
  func.func @transform_3(%arg0: i32) -> (i32, i32, i32, i32) {
    %c0_i32 = arith.constant 0 : i32
    %c0_i32_0 = arith.constant 0 : i32
    %c0_i32_1 = arith.constant 0 : i32
    %c0_i32_2 = arith.constant 0 : i32
    return %arg0, %c0_i32, %c0_i32_0, %c0_i32_1 : i32, i32, i32, i32
  }
}

module attributes {stable_mosaic.version = 11 : i64} {
  func.func @kernel(%arg0: i32, %arg1: memref<32x64xf32, #tpu.memory_space<vmem>>, %arg2: memref<64x72xbf16, #tpu.memory_space<vmem>>, %arg3: memref<32x72xf32, #tpu.memory_space<vmem>>) attributes {dimension_semantics = [#tpu.dimension_semantics<parallel>], iteration_bounds = array<i64: 1>, scalar_prefetch = 0 : i64, scratch_operands = 0 : i64, tpu.core_type = #tpu.core_type<tc>, window_params = [{transform_indices = @transform_0, window_bounds = array<i64: 32, 64>}, {pipeline_mode = #tpu.pipeline_mode<synchronous>, transform_indices = @transform_1, window_bounds = array<i64: 64, 72>}, {transform_indices = @transform_2, window_bounds = array<i64: 32, 72>}]} {
    %c0 = arith.constant 0 : index
    %c0_0 = arith.constant 0 : index
    %0 = vector.load %arg1[%c0, %c0_0] : memref<32x64xf32, #tpu.memory_space<vmem>>, vector<32x64xf32>
    %1 = arith.truncf %0 : vector<32x64xf32> to vector<32x64xbf16>
    %c0_1 = arith.constant 0 : index
    %c0_2 = arith.constant 0 : index
    %2 = vector.load %arg2[%c0_1, %c0_2] : memref<64x72xbf16, #tpu.memory_space<vmem>>, vector<64x72xbf16>
    %cst = arith.constant dense<0.000000e+00> : vector<32x72xf32>
    %3 = tpu.matmul %1, %2, %cst {dimension_numbers = #tpu.dot_dimension_numbers<[1], [0], [0], [1], [0, 0, 1, 1], [], []>} : vector<32x64xbf16>, vector<64x72xbf16>, vector<32x72xf32> -> vector<32x72xf32>
    %c0_3 = arith.constant 0 : index
    %c0_4 = arith.constant 0 : index
    %4 = vector.load %arg3[%c0_3, %c0_4] : memref<32x72xf32, #tpu.memory_space<vmem>>, vector<32x72xf32>
    tpu.vector_store %arg3[%c0_3, %c0_4], %3 {strides = array<i32>} : memref<32x72xf32, #tpu.memory_space<vmem>>, vector<32x72xf32>,
    return
  }
  func.func @transform_0(%arg0: i32) -> (i32, i32) {
    %c0_i32 = arith.constant 0 : i32
    %c0_i32_0 = arith.constant 0 : i32
    return %arg0, %c0_i32 : i32, i32
  }
  func.func @transform_1(%arg0: i32) -> (i32, i32) {
    %c0_i32 = arith.constant 0 : i32
    %c0_i32_0 = arith.constant 0 : i32
    %c0_i32_1 = arith.constant 0 : i32
    return %c0_i32, %c0_i32_0 : i32, i32
  }
  func.func @transform_2(%arg0: i32) -> (i32, i32) {
    %c0_i32 = arith.constant 0 : i32
    %c0_i32_0 = arith.constant 0 : i32
    return %arg0, %c0_i32 : i32, i32
  }
}

module attributes {stable_mosaic.version = 11 : i64} {
  func.func @kernel(%arg0: i32, %arg1: memref<32x8xf32, #tpu.memory_space<vmem>>, %arg2: memref<8x256xbf16, #tpu.memory_space<vmem>>, %arg3: memref<1x256xf32, #tpu.memory_space<vmem>>, %arg4: memref<32x256xf32, #tpu.memory_space<vmem>>) attributes {dimension_semantics = [#tpu.dimension_semantics<parallel>], iteration_bounds = array<i64: 1>, scalar_prefetch = 0 : i64, scratch_operands = 0 : i64, tpu.core_type = #tpu.core_type<tc>, window_params = [{transform_indices = @transform_0, window_bounds = array<i64: 32, 8>}, {pipeline_mode = #tpu.pipeline_mode<synchronous>, transform_indices = @transform_1, window_bounds = array<i64: 8, 256>}, {pipeline_mode = #tpu.pipeline_mode<synchronous>, transform_indices = @transform_2, window_bounds = array<i64: 1, 256>}, {transform_indices = @transform_3, window_bounds = array<i64: 32, 256>}]} {
    %c0 = arith.constant 0 : index
    %c0_0 = arith.constant 0 : index
    %0 = vector.load %arg1[%c0, %c0_0] : memref<32x8xf32, #tpu.memory_space<vmem>>, vector<32x8xf32>
    %1 = arith.truncf %0 : vector<32x8xf32> to vector<32x8xbf16>
    %c0_1 = arith.constant 0 : index
    %c0_2 = arith.constant 0 : index
    %2 = vector.load %arg2[%c0_1, %c0_2] : memref<8x256xbf16, #tpu.memory_space<vmem>>, vector<8x256xbf16>
    %cst = arith.constant dense<0.000000e+00> : vector<32x256xf32>
    %3 = tpu.matmul %1, %2, %cst {dimension_numbers = #tpu.dot_dimension_numbers<[1], [0], [0], [1], [0, 0, 1, 1], [], []>} : vector<32x8xbf16>, vector<8x256xbf16>, vector<32x256xf32> -> vector<32x256xf32>
    %c0_3 = arith.constant 0 : index
    %c0_4 = arith.constant 0 : index
    %4 = vector.load %arg3[%c0_3, %c0_4] : memref<1x256xf32, #tpu.memory_space<vmem>>, vector<1x256xf32>
    %5 = vector.broadcast %4 : vector<1x256xf32> to vector<32x256xf32>
    %6 = arith.addf %3, %5 : vector<32x256xf32>
    %cst_5 = arith.constant 0.000000e+00 : f32
    %7 = vector.broadcast %cst_5 : f32 to vector<32x256xf32>
    %8 = arith.maximumf %6, %7 : vector<32x256xf32>
    %9 = math.absf %6 : vector<32x256xf32>
    %cst_6 = arith.constant 0.000000e+00 : f32
    %10 = vector.broadcast %cst_6 : f32 to vector<32x256xf32>
    %11 = arith.subf %10, %9 : vector<32x256xf32>
    %12 = math.exp %11 : vector<32x256xf32>
    %cst_7 = arith.constant 1.000000e+00 : f32
    %13 = vector.broadcast %cst_7 : f32 to vector<32x256xf32>
    %14 = arith.addf %13, %12 : vector<32x256xf32>
    %15 = math.log %14 : vector<32x256xf32>
    %16 = arith.addf %8, %15 : vector<32x256xf32>
    %c0_8 = arith.constant 0 : index
    %c0_9 = arith.constant 0 : index
    %17 = vector.load %arg4[%c0_8, %c0_9] : memref<32x256xf32, #tpu.memory_space<vmem>>, vector<32x256xf32>
    tpu.vector_store %arg4[%c0_8, %c0_9], %16 {strides = array<i32>} : memref<32x256xf32, #tpu.memory_space<vmem>>, vector<32x256xf32>,
    return
  }
  func.func @transform_0(%arg0: i32) -> (i32, i32) {
    %c0_i32 = arith.constant 0 : i32
    %c0_i32_0 = arith.constant 0 : i32
    return %arg0, %c0_i32 : i32, i32
  }
  func.func @transform_1(%arg0: i32) -> (i32, i32) {
    %c0_i32 = arith.constant 0 : i32
    %c0_i32_0 = arith.constant 0 : i32
    %c0_i32_1 = arith.constant 0 : i32
    return %c0_i32, %c0_i32_0 : i32, i32
  }
  func.func @transform_2(%arg0: i32) -> (i32, i32) {
    %c0_i32 = arith.constant 0 : i32
    %c0_i32_0 = arith.constant 0 : i32
    %c0_i32_1 = arith.constant 0 : i32
    return %c0_i32, %c0_i32_0 : i32, i32
  }
  func.func @transform_3(%arg0: i32) -> (i32, i32) {
    %c0_i32 = arith.constant 0 : i32
    %c0_i32_0 = arith.constant 0 : i32
    return %arg0, %c0_i32 : i32, i32
  }
}

module attributes {stable_mosaic.version = 11 : i64} {
  func.func @kernel(%arg0: i32, %arg1: memref<1x16x4x1x64xf32, #tpu.memory_space<vmem>>, %arg2: memref<1x16x4x1x64xf32, #tpu.memory_space<vmem>>, %arg3: memref<1x16x4x8x1xf32, #tpu.memory_space<vmem>>, %arg4: memref<1x16x4x8x1xf32, #tpu.memory_space<vmem>>, %arg5: memref<4x8x64xf32, #tpu.memory_space<vmem>>, %arg6: memref<4x1x64xf32, #tpu.memory_space<vmem>>, %arg7: memref<1x16x4x1x64xf32, #tpu.memory_space<vmem>>) attributes {dimension_semantics = [#tpu.dimension_semantics<parallel>], iteration_bounds = array<i64: 2>, scalar_prefetch = 0 : i64, scratch_operands = 0 : i64, tpu.core_type = #tpu.core_type<tc>, window_params = [{transform_indices = @transform_0, window_bounds = array<i64: 1, 16, 4, 1, 64>}, {transform_indices = @transform_1, window_bounds = array<i64: 1, 16, 4, 1, 64>}, {transform_indices = @transform_2, window_bounds = array<i64: 1, 16, 4, 8, 1>}, {transform_indices = @transform_3, window_bounds = array<i64: 1, 16, 4, 8, 1>}, {pipeline_mode = #tpu.pipeline_mode<synchronous>, transform_indices = @transform_4, window_bounds = array<i64: 4, 8, 64>}, {pipeline_mode = #tpu.pipeline_mode<synchronous>, transform_indices = @transform_5, window_bounds = array<i64: 4, 1, 64>}, {transform_indices = @transform_6, window_bounds = array<i64: 1, 16, 4, 1, 64>}]} {
    %c0 = arith.constant 0 : index
    %c0_0 = arith.constant 0 : index
    %c0_1 = arith.constant 0 : index
    %0 = vector.load %arg5[%c0, %c0_0, %c0_1] : memref<4x8x64xf32, #tpu.memory_space<vmem>>, vector<4x8x64xf32>
    %c0_2 = arith.constant 0 : index
    %c0_3 = arith.constant 0 : index
    %c0_4 = arith.constant 0 : index
    %1 = vector.load %arg6[%c0_2, %c0_3, %c0_4] : memref<4x1x64xf32, #tpu.memory_space<vmem>>, vector<4x1x64xf32>
    %cst = arith.constant 0.000000e+00 : f32
    %2 = vector.broadcast %cst : f32 to vector<4x8x64xf32>
    %c0_i32 = arith.constant 0 : i32
    %c8_i32 = arith.constant 8 : i32
    %3 = arith.muli %c0_i32, %c8_i32 : i32
    %4 = tpu.assume_multiple %3, 8 : i32
    %c0_5 = arith.constant 0 : index
    %5 = arith.index_cast %4 : i32 to index
    %c0_6 = arith.constant 0 : index
    %c0_7 = arith.constant 0 : index
    %c0_8 = arith.constant 0 : index
    %6 = vector.load %arg1[%c0_5, %5, %c0_6, %c0_7, %c0_8] : memref<1x16x4x1x64xf32, #tpu.memory_space<vmem>>, vector<1x8x4x1x64xf32>
    %7 = vector.shape_cast %6 : vector<1x8x4x1x64xf32> to vector<8x4x1x64xf32>
    %c0_9 = arith.constant 0 : index
    %8 = arith.index_cast %4 : i32 to index
    %c0_10 = arith.constant 0 : index
    %c0_11 = arith.constant 0 : index
    %c0_12 = arith.constant 0 : index
    %9 = vector.load %arg2[%c0_9, %8, %c0_10, %c0_11, %c0_12] : memref<1x16x4x1x64xf32, #tpu.memory_space<vmem>>, vector<1x8x4x1x64xf32>
    %10 = vector.shape_cast %9 : vector<1x8x4x1x64xf32> to vector<8x4x1x64xf32>
    %c0_13 = arith.constant 0 : index
    %11 = arith.index_cast %4 : i32 to index
    %c0_14 = arith.constant 0 : index
    %c0_15 = arith.constant 0 : index
    %c0_16 = arith.constant 0 : index
    %12 = vector.load %arg3[%c0_13, %11, %c0_14, %c0_15, %c0_16] : memref<1x16x4x8x1xf32, #tpu.memory_space<vmem>>, vector<1x8x4x8x1xf32>
    %13 = vector.shape_cast %12 : vector<1x8x4x8x1xf32> to vector<8x4x8x1xf32>
    %c0_17 = arith.constant 0 : index
    %14 = arith.index_cast %4 : i32 to index
    %c0_18 = arith.constant 0 : index
    %c0_19 = arith.constant 0 : index
    %c0_20 = arith.constant 0 : index
    %15 = vector.load %arg4[%c0_17, %14, %c0_18, %c0_19, %c0_20] : memref<1x16x4x8x1xf32, #tpu.memory_space<vmem>>, vector<1x8x4x8x1xf32>
    %16 = vector.shape_cast %15 : vector<1x8x4x8x1xf32> to vector<8x4x8x1xf32>
    %17 = vector.extract_strided_slice %7 {offsets = [0, 0, 0, 0], sizes = [1, 4, 1, 64], strides = [1, 1, 1, 1]} : vector<8x4x1x64xf32> to vector<1x4x1x64xf32>
    %18 = vector.shape_cast %17 : vector<1x4x1x64xf32> to vector<4x1x64xf32>
    %19 = vector.extract_strided_slice %10 {offsets = [0, 0, 0, 0], sizes = [1, 4, 1, 64], strides = [1, 1, 1, 1]} : vector<8x4x1x64xf32> to vector<1x4x1x64xf32>
    %20 = vector.shape_cast %19 : vector<1x4x1x64xf32> to vector<4x1x64xf32>
    %21 = vector.extract_strided_slice %13 {offsets = [0, 0, 0, 0], sizes = [1, 4, 8, 1], strides = [1, 1, 1, 1]} : vector<8x4x8x1xf32> to vector<1x4x8x1xf32>
    %22 = vector.shape_cast %21 : vector<1x4x8x1xf32> to vector<4x8x1xf32>
    %23 = vector.extract_strided_slice %16 {offsets = [0, 0, 0, 0], sizes = [1, 4, 8, 1], strides = [1, 1, 1, 1]} : vector<8x4x8x1xf32> to vector<1x4x8x1xf32>
    %24 = vector.shape_cast %23 : vector<1x4x8x1xf32> to vector<4x8x1xf32>
    %25 = vector.broadcast %20 : vector<4x1x64xf32> to vector<4x8x64xf32>
    %26 = arith.mulf %0, %25 : vector<4x8x64xf32>
    %27 = math.exp %26 : vector<4x8x64xf32>
    %28 = arith.mulf %27, %2 : vector<4x8x64xf32>
    %29 = arith.mulf %20, %18 : vector<4x1x64xf32>
    %30 = vector.broadcast %22 : vector<4x8x1xf32> to vector<4x8x64xf32>
    %31 = vector.broadcast %29 : vector<4x1x64xf32> to vector<4x8x64xf32>
    %32 = arith.mulf %30, %31 : vector<4x8x64xf32>
    %33 = arith.addf %28, %32 : vector<4x8x64xf32>
    %34 = vector.broadcast %24 : vector<4x8x1xf32> to vector<4x8x64xf32>
    %35 = arith.mulf %34, %33 : vector<4x8x64xf32>
    %cst_21 = arith.constant dense<0.000000e+00> : vector<4x64xf32>
    %36 = vector.multi_reduction <add>, %35, %cst_21 [1] : vector<4x8x64xf32> to vector<4x64xf32>
    %37 = vector.shape_cast %36 : vector<4x64xf32> to vector<4x1x64xf32>
    %38 = arith.mulf %1, %18 : vector<4x1x64xf32>
    %39 = arith.addf %37, %38 : vector<4x1x64xf32>
    %40 = vector.extract_strided_slice %7 {offsets = [1, 0, 0, 0], sizes = [1, 4, 1, 64], strides = [1, 1, 1, 1]} : vector<8x4x1x64xf32> to vector<1x4x1x64xf32>
    %41 = vector.shape_cast %40 : vector<1x4x1x64xf32> to vector<4x1x64xf32>
    %42 = vector.extract_strided_slice %10 {offsets = [1, 0, 0, 0], sizes = [1, 4, 1, 64], strides = [1, 1, 1, 1]} : vector<8x4x1x64xf32> to vector<1x4x1x64xf32>
    %43 = vector.shape_cast %42 : vector<1x4x1x64xf32> to vector<4x1x64xf32>
    %44 = vector.extract_strided_slice %13 {offsets = [1, 0, 0, 0], sizes = [1, 4, 8, 1], strides = [1, 1, 1, 1]} : vector<8x4x8x1xf32> to vector<1x4x8x1xf32>
    %45 = vector.shape_cast %44 : vector<1x4x8x1xf32> to vector<4x8x1xf32>
    %46 = vector.extract_strided_slice %16 {offsets = [1, 0, 0, 0], sizes = [1, 4, 8, 1], strides = [1, 1, 1, 1]} : vector<8x4x8x1xf32> to vector<1x4x8x1xf32>
    %47 = vector.shape_cast %46 : vector<1x4x8x1xf32> to vector<4x8x1xf32>
    %48 = vector.broadcast %43 : vector<4x1x64xf32> to vector<4x8x64xf32>
    %49 = arith.mulf %0, %48 : vector<4x8x64xf32>
    %50 = math.exp %49 : vector<4x8x64xf32>
    %51 = arith.mulf %50, %33 : vector<4x8x64xf32>
    %52 = arith.mulf %43, %41 : vector<4x1x64xf32>
    %53 = vector.broadcast %45 : vector<4x8x1xf32> to vector<4x8x64xf32>
    %54 = vector.broadcast %52 : vector<4x1x64xf32> to vector<4x8x64xf32>
    %55 = arith.mulf %53, %54 : vector<4x8x64xf32>
    %56 = arith.addf %51, %55 : vector<4x8x64xf32>
    %57 = vector.broadcast %47 : vector<4x8x1xf32> to vector<4x8x64xf32>
    %58 = arith.mulf %57, %56 : vector<4x8x64xf32>
    %cst_22 = arith.constant dense<0.000000e+00> : vector<4x64xf32>
    %59 = vector.multi_reduction <add>, %58, %cst_22 [1] : vector<4x8x64xf32> to vector<4x64xf32>
    %60 = vector.shape_cast %59 : vector<4x64xf32> to vector<4x1x64xf32>
    %61 = arith.mulf %1, %41 : vector<4x1x64xf32>
    %62 = arith.addf %60, %61 : vector<4x1x64xf32>
    %63 = vector.extract_strided_slice %7 {offsets = [2, 0, 0, 0], sizes = [1, 4, 1, 64], strides = [1, 1, 1, 1]} : vector<8x4x1x64xf32> to vector<1x4x1x64xf32>
    %64 = vector.shape_cast %63 : vector<1x4x1x64xf32> to vector<4x1x64xf32>
    %65 = vector.extract_strided_slice %10 {offsets = [2, 0, 0, 0], sizes = [1, 4, 1, 64], strides = [1, 1, 1, 1]} : vector<8x4x1x64xf32> to vector<1x4x1x64xf32>
    %66 = vector.shape_cast %65 : vector<1x4x1x64xf32> to vector<4x1x64xf32>
    %67 = vector.extract_strided_slice %13 {offsets = [2, 0, 0, 0], sizes = [1, 4, 8, 1], strides = [1, 1, 1, 1]} : vector<8x4x8x1xf32> to vector<1x4x8x1xf32>
    %68 = vector.shape_cast %67 : vector<1x4x8x1xf32> to vector<4x8x1xf32>
    %69 = vector.extract_strided_slice %16 {offsets = [2, 0, 0, 0], sizes = [1, 4, 8, 1], strides = [1, 1, 1, 1]} : vector<8x4x8x1xf32> to vector<1x4x8x1xf32>
    %70 = vector.shape_cast %69 : vector<1x4x8x1xf32> to vector<4x8x1xf32>
    %71 = vector.broadcast %66 : vector<4x1x64xf32> to vector<4x8x64xf32>
    %72 = arith.mulf %0, %71 : vector<4x8x64xf32>
    %73 = math.exp %72 : vector<4x8x64xf32>
    %74 = arith.mulf %73, %56 : vector<4x8x64xf32>
    %75 = arith.mulf %66, %64 : vector<4x1x64xf32>
    %76 = vector.broadcast %68 : vector<4x8x1xf32> to vector<4x8x64xf32>
    %77 = vector.broadcast %75 : vector<4x1x64xf32> to vector<4x8x64xf32>
    %78 = arith.mulf %76, %77 : vector<4x8x64xf32>
    %79 = arith.addf %74, %78 : vector<4x8x64xf32>
    %80 = vector.broadcast %70 : vector<4x8x1xf32> to vector<4x8x64xf32>
    %81 = arith.mulf %80, %79 : vector<4x8x64xf32>
    %cst_23 = arith.constant dense<0.000000e+00> : vector<4x64xf32>
    %82 = vector.multi_reduction <add>, %81, %cst_23 [1] : vector<4x8x64xf32> to vector<4x64xf32>
    %83 = vector.shape_cast %82 : vector<4x64xf32> to vector<4x1x64xf32>
    %84 = arith.mulf %1, %64 : vector<4x1x64xf32>
    %85 = arith.addf %83, %84 : vector<4x1x64xf32>
    %86 = vector.extract_strided_slice %7 {offsets = [3, 0, 0, 0], sizes = [1, 4, 1, 64], strides = [1, 1, 1, 1]} : vector<8x4x1x64xf32> to vector<1x4x1x64xf32>
    %87 = vector.shape_cast %86 : vector<1x4x1x64xf32> to vector<4x1x64xf32>
    %88 = vector.extract_strided_slice %10 {offsets = [3, 0, 0, 0], sizes = [1, 4, 1, 64], strides = [1, 1, 1, 1]} : vector<8x4x1x64xf32> to vector<1x4x1x64xf32>
    %89 = vector.shape_cast %88 : vector<1x4x1x64xf32> to vector<4x1x64xf32>
    %90 = vector.extract_strided_slice %13 {offsets = [3, 0, 0, 0], sizes = [1, 4, 8, 1], strides = [1, 1, 1, 1]} : vector<8x4x8x1xf32> to vector<1x4x8x1xf32>
    %91 = vector.shape_cast %90 : vector<1x4x8x1xf32> to vector<4x8x1xf32>
    %92 = vector.extract_strided_slice %16 {offsets = [3, 0, 0, 0], sizes = [1, 4, 8, 1], strides = [1, 1, 1, 1]} : vector<8x4x8x1xf32> to vector<1x4x8x1xf32>
    %93 = vector.shape_cast %92 : vector<1x4x8x1xf32> to vector<4x8x1xf32>
    %94 = vector.broadcast %89 : vector<4x1x64xf32> to vector<4x8x64xf32>
    %95 = arith.mulf %0, %94 : vector<4x8x64xf32>
    %96 = math.exp %95 : vector<4x8x64xf32>
    %97 = arith.mulf %96, %79 : vector<4x8x64xf32>
    %98 = arith.mulf %89, %87 : vector<4x1x64xf32>
    %99 = vector.broadcast %91 : vector<4x8x1xf32> to vector<4x8x64xf32>
    %100 = vector.broadcast %98 : vector<4x1x64xf32> to vector<4x8x64xf32>
    %101 = arith.mulf %99, %100 : vector<4x8x64xf32>
    %102 = arith.addf %97, %101 : vector<4x8x64xf32>
    %103 = vector.broadcast %93 : vector<4x8x1xf32> to vector<4x8x64xf32>
    %104 = arith.mulf %103, %102 : vector<4x8x64xf32>
    %cst_24 = arith.constant dense<0.000000e+00> : vector<4x64xf32>
    %105 = vector.multi_reduction <add>, %104, %cst_24 [1] : vector<4x8x64xf32> to vector<4x64xf32>
    %106 = vector.shape_cast %105 : vector<4x64xf32> to vector<4x1x64xf32>
    %107 = arith.mulf %1, %87 : vector<4x1x64xf32>
    %108 = arith.addf %106, %107 : vector<4x1x64xf32>
    %109 = vector.extract_strided_slice %7 {offsets = [4, 0, 0, 0], sizes = [1, 4, 1, 64], strides = [1, 1, 1, 1]} : vector<8x4x1x64xf32> to vector<1x4x1x64xf32>
    %110 = vector.shape_cast %109 : vector<1x4x1x64xf32> to vector<4x1x64xf32>
    %111 = vector.extract_strided_slice %10 {offsets = [4, 0, 0, 0], sizes = [1, 4, 1, 64], strides = [1, 1, 1, 1]} : vector<8x4x1x64xf32> to vector<1x4x1x64xf32>
    %112 = vector.shape_cast %111 : vector<1x4x1x64xf32> to vector<4x1x64xf32>
    %113 = vector.extract_strided_slice %13 {offsets = [4, 0, 0, 0], sizes = [1, 4, 8, 1], strides = [1, 1, 1, 1]} : vector<8x4x8x1xf32> to vector<1x4x8x1xf32>
    %114 = vector.shape_cast %113 : vector<1x4x8x1xf32> to vector<4x8x1xf32>
    %115 = vector.extract_strided_slice %16 {offsets = [4, 0, 0, 0], sizes = [1, 4, 8, 1], strides = [1, 1, 1, 1]} : vector<8x4x8x1xf32> to vector<1x4x8x1xf32>
    %116 = vector.shape_cast %115 : vector<1x4x8x1xf32> to vector<4x8x1xf32>
    %117 = vector.broadcast %112 : vector<4x1x64xf32> to vector<4x8x64xf32>
    %118 = arith.mulf %0, %117 : vector<4x8x64xf32>
    %119 = math.exp %118 : vector<4x8x64xf32>
    %120 = arith.mulf %119, %102 : vector<4x8x64xf32>
    %121 = arith.mulf %112, %110 : vector<4x1x64xf32>
    %122 = vector.broadcast %114 : vector<4x8x1xf32> to vector<4x8x64xf32>
    %123 = vector.broadcast %121 : vector<4x1x64xf32> to vector<4x8x64xf32>
    %124 = arith.mulf %122, %123 : vector<4x8x64xf32>
    %125 = arith.addf %120, %124 : vector<4x8x64xf32>
    %126 = vector.broadcast %116 : vector<4x8x1xf32> to vector<4x8x64xf32>
    %127 = arith.mulf %126, %125 : vector<4x8x64xf32>
    %cst_25 = arith.constant dense<0.000000e+00> : vector<4x64xf32>
    %128 = vector.multi_reduction <add>, %127, %cst_25 [1] : vector<4x8x64xf32> to vector<4x64xf32>
    %129 = vector.shape_cast %128 : vector<4x64xf32> to vector<4x1x64xf32>
    %130 = arith.mulf %1, %110 : vector<4x1x64xf32>
    %131 = arith.addf %129, %130 : vector<4x1x64xf32>
    %132 = vector.extract_strided_slice %7 {offsets = [5, 0, 0, 0], sizes = [1, 4, 1, 64], strides = [1, 1, 1, 1]} : vector<8x4x1x64xf32> to vector<1x4x1x64xf32>
    %133 = vector.shape_cast %132 : vector<1x4x1x64xf32> to vector<4x1x64xf32>
    %134 = vector.extract_strided_slice %10 {offsets = [5, 0, 0, 0], sizes = [1, 4, 1, 64], strides = [1, 1, 1, 1]} : vector<8x4x1x64xf32> to vector<1x4x1x64xf32>
    %135 = vector.shape_cast %134 : vector<1x4x1x64xf32> to vector<4x1x64xf32>
    %136 = vector.extract_strided_slice %13 {offsets = [5, 0, 0, 0], sizes = [1, 4, 8, 1], strides = [1, 1, 1, 1]} : vector<8x4x8x1xf32> to vector<1x4x8x1xf32>
    %137 = vector.shape_cast %136 : vector<1x4x8x1xf32> to vector<4x8x1xf32>
    %138 = vector.extract_strided_slice %16 {offsets = [5, 0, 0, 0], sizes = [1, 4, 8, 1], strides = [1, 1, 1, 1]} : vector<8x4x8x1xf32> to vector<1x4x8x1xf32>
    %139 = vector.shape_cast %138 : vector<1x4x8x1xf32> to vector<4x8x1xf32>
    %140 = vector.broadcast %135 : vector<4x1x64xf32> to vector<4x8x64xf32>
    %141 = arith.mulf %0, %140 : vector<4x8x64xf32>
    %142 = math.exp %141 : vector<4x8x64xf32>
    %143 = arith.mulf %142, %125 : vector<4x8x64xf32>
    %144 = arith.mulf %135, %133 : vector<4x1x64xf32>
    %145 = vector.broadcast %137 : vector<4x8x1xf32> to vector<4x8x64xf32>
    %146 = vector.broadcast %144 : vector<4x1x64xf32> to vector<4x8x64xf32>
    %147 = arith.mulf %145, %146 : vector<4x8x64xf32>
    %148 = arith.addf %143, %147 : vector<4x8x64xf32>
    %149 = vector.broadcast %139 : vector<4x8x1xf32> to vector<4x8x64xf32>
    %150 = arith.mulf %149, %148 : vector<4x8x64xf32>
    %cst_26 = arith.constant dense<0.000000e+00> : vector<4x64xf32>
    %151 = vector.multi_reduction <add>, %150, %cst_26 [1] : vector<4x8x64xf32> to vector<4x64xf32>
    %152 = vector.shape_cast %151 : vector<4x64xf32> to vector<4x1x64xf32>
    %153 = arith.mulf %1, %133 : vector<4x1x64xf32>
    %154 = arith.addf %152, %153 : vector<4x1x64xf32>
    %155 = vector.extract_strided_slice %7 {offsets = [6, 0, 0, 0], sizes = [1, 4, 1, 64], strides = [1, 1, 1, 1]} : vector<8x4x1x64xf32> to vector<1x4x1x64xf32>
    %156 = vector.shape_cast %155 : vector<1x4x1x64xf32> to vector<4x1x64xf32>
    %157 = vector.extract_strided_slice %10 {offsets = [6, 0, 0, 0], sizes = [1, 4, 1, 64], strides = [1, 1, 1, 1]} : vector<8x4x1x64xf32> to vector<1x4x1x64xf32>
    %158 = vector.shape_cast %157 : vector<1x4x1x64xf32> to vector<4x1x64xf32>
    %159 = vector.extract_strided_slice %13 {offsets = [6, 0, 0, 0], sizes = [1, 4, 8, 1], strides = [1, 1, 1, 1]} : vector<8x4x8x1xf32> to vector<1x4x8x1xf32>
    %160 = vector.shape_cast %159 : vector<1x4x8x1xf32> to vector<4x8x1xf32>
    %161 = vector.extract_strided_slice %16 {offsets = [6, 0, 0, 0], sizes = [1, 4, 8, 1], strides = [1, 1, 1, 1]} : vector<8x4x8x1xf32> to vector<1x4x8x1xf32>
    %162 = vector.shape_cast %161 : vector<1x4x8x1xf32> to vector<4x8x1xf32>
    %163 = vector.broadcast %158 : vector<4x1x64xf32> to vector<4x8x64xf32>
    %164 = arith.mulf %0, %163 : vector<4x8x64xf32>
    %165 = math.exp %164 : vector<4x8x64xf32>
    %166 = arith.mulf %165, %148 : vector<4x8x64xf32>
    %167 = arith.mulf %158, %156 : vector<4x1x64xf32>
    %168 = vector.broadcast %160 : vector<4x8x1xf32> to vector<4x8x64xf32>
    %169 = vector.broadcast %167 : vector<4x1x64xf32> to vector<4x8x64xf32>
    %170 = arith.mulf %168, %169 : vector<4x8x64xf32>
    %171 = arith.addf %166, %170 : vector<4x8x64xf32>
    %172 = vector.broadcast %162 : vector<4x8x1xf32> to vector<4x8x64xf32>
    %173 = arith.mulf %172, %171 : vector<4x8x64xf32>
    %cst_27 = arith.constant dense<0.000000e+00> : vector<4x64xf32>
    %174 = vector.multi_reduction <add>, %173, %cst_27 [1] : vector<4x8x64xf32> to vector<4x64xf32>
    %175 = vector.shape_cast %174 : vector<4x64xf32> to vector<4x1x64xf32>
    %176 = arith.mulf %1, %156 : vector<4x1x64xf32>
    %177 = arith.addf %175, %176 : vector<4x1x64xf32>
    %178 = vector.extract_strided_slice %7 {offsets = [7, 0, 0, 0], sizes = [1, 4, 1, 64], strides = [1, 1, 1, 1]} : vector<8x4x1x64xf32> to vector<1x4x1x64xf32>
    %179 = vector.shape_cast %178 : vector<1x4x1x64xf32> to vector<4x1x64xf32>
    %180 = vector.extract_strided_slice %10 {offsets = [7, 0, 0, 0], sizes = [1, 4, 1, 64], strides = [1, 1, 1, 1]} : vector<8x4x1x64xf32> to vector<1x4x1x64xf32>
    %181 = vector.shape_cast %180 : vector<1x4x1x64xf32> to vector<4x1x64xf32>
    %182 = vector.extract_strided_slice %13 {offsets = [7, 0, 0, 0], sizes = [1, 4, 8, 1], strides = [1, 1, 1, 1]} : vector<8x4x8x1xf32> to vector<1x4x8x1xf32>
    %183 = vector.shape_cast %182 : vector<1x4x8x1xf32> to vector<4x8x1xf32>
    %184 = vector.extract_strided_slice %16 {offsets = [7, 0, 0, 0], sizes = [1, 4, 8, 1], strides = [1, 1, 1, 1]} : vector<8x4x8x1xf32> to vector<1x4x8x1xf32>
    %185 = vector.shape_cast %184 : vector<1x4x8x1xf32> to vector<4x8x1xf32>
    %186 = vector.broadcast %181 : vector<4x1x64xf32> to vector<4x8x64xf32>
    %187 = arith.mulf %0, %186 : vector<4x8x64xf32>
    %188 = math.exp %187 : vector<4x8x64xf32>
    %189 = arith.mulf %188, %171 : vector<4x8x64xf32>
    %190 = arith.mulf %181, %179 : vector<4x1x64xf32>
    %191 = vector.broadcast %183 : vector<4x8x1xf32> to vector<4x8x64xf32>
    %192 = vector.broadcast %190 : vector<4x1x64xf32> to vector<4x8x64xf32>
    %193 = arith.mulf %191, %192 : vector<4x8x64xf32>
    %194 = arith.addf %189, %193 : vector<4x8x64xf32>
    %195 = vector.broadcast %185 : vector<4x8x1xf32> to vector<4x8x64xf32>
    %196 = arith.mulf %195, %194 : vector<4x8x64xf32>
    %cst_28 = arith.constant dense<0.000000e+00> : vector<4x64xf32>
    %197 = vector.multi_reduction <add>, %196, %cst_28 [1] : vector<4x8x64xf32> to vector<4x64xf32>
    %198 = vector.shape_cast %197 : vector<4x64xf32> to vector<4x1x64xf32>
    %199 = arith.mulf %1, %179 : vector<4x1x64xf32>
    %200 = arith.addf %198, %199 : vector<4x1x64xf32>
    %201 = vector.shape_cast %39 : vector<4x1x64xf32> to vector<1x4x1x64xf32>
    %202 = vector.shape_cast %62 : vector<4x1x64xf32> to vector<1x4x1x64xf32>
    %203 = vector.shape_cast %85 : vector<4x1x64xf32> to vector<1x4x1x64xf32>
    %204 = vector.shape_cast %108 : vector<4x1x64xf32> to vector<1x4x1x64xf32>
    %205 = vector.shape_cast %131 : vector<4x1x64xf32> to vector<1x4x1x64xf32>
    %206 = vector.shape_cast %154 : vector<4x1x64xf32> to vector<1x4x1x64xf32>
    %207 = vector.shape_cast %177 : vector<4x1x64xf32> to vector<1x4x1x64xf32>
    %208 = vector.shape_cast %200 : vector<4x1x64xf32> to vector<1x4x1x64xf32>
    %209 = tpu.concatenate %201, %202, %203, %204, %205, %206, %207, %208 in 0 : vector<1x4x1x64xf32>, vector<1x4x1x64xf32>, vector<1x4x1x64xf32>, vector<1x4x1x64xf32>, vector<1x4x1x64xf32>, vector<1x4x1x64xf32>, vector<1x4x1x64xf32>, vector<1x4x1x64xf32> -> vector<8x4x1x64xf32>
    %c0_29 = arith.constant 0 : index
    %210 = arith.index_cast %4 : i32 to index
    %c0_30 = arith.constant 0 : index
    %c0_31 = arith.constant 0 : index
    %c0_32 = arith.constant 0 : index
    %211 = vector.load %arg7[%c0_29, %210, %c0_30, %c0_31, %c0_32] : memref<1x16x4x1x64xf32, #tpu.memory_space<vmem>>, vector<1x8x4x1x64xf32>
    %212 = vector.shape_cast %211 : vector<1x8x4x1x64xf32> to vector<8x4x1x64xf32>
    %213 = vector.shape_cast %209 : vector<8x4x1x64xf32> to vector<1x8x4x1x64xf32>
    tpu.vector_store %arg7[%c0_29, %210, %c0_30, %c0_31, %c0_32], %213 {strides = array<i32>} : memref<1x16x4x1x64xf32, #tpu.memory_space<vmem>>, vector<1x8x4x1x64xf32>,
    %c1_i32 = arith.constant 1 : i32
    %c8_i32_33 = arith.constant 8 : i32
    %214 = arith.muli %c1_i32, %c8_i32_33 : i32
    %215 = tpu.assume_multiple %214, 8 : i32
    %c0_34 = arith.constant 0 : index
    %216 = arith.index_cast %215 : i32 to index
    %c0_35 = arith.constant 0 : index
    %c0_36 = arith.constant 0 : index
    %c0_37 = arith.constant 0 : index
    %217 = vector.load %arg1[%c0_34, %216, %c0_35, %c0_36, %c0_37] : memref<1x16x4x1x64xf32, #tpu.memory_space<vmem>>, vector<1x8x4x1x64xf32>
    %218 = vector.shape_cast %217 : vector<1x8x4x1x64xf32> to vector<8x4x1x64xf32>
    %c0_38 = arith.constant 0 : index
    %219 = arith.index_cast %215 : i32 to index
    %c0_39 = arith.constant 0 : index
    %c0_40 = arith.constant 0 : index
    %c0_41 = arith.constant 0 : index
    %220 = vector.load %arg2[%c0_38, %219, %c0_39, %c0_40, %c0_41] : memref<1x16x4x1x64xf32, #tpu.memory_space<vmem>>, vector<1x8x4x1x64xf32>
    %221 = vector.shape_cast %220 : vector<1x8x4x1x64xf32> to vector<8x4x1x64xf32>
    %c0_42 = arith.constant 0 : index
    %222 = arith.index_cast %215 : i32 to index
    %c0_43 = arith.constant 0 : index
    %c0_44 = arith.constant 0 : index
    %c0_45 = arith.constant 0 : index
    %223 = vector.load %arg3[%c0_42, %222, %c0_43, %c0_44, %c0_45] : memref<1x16x4x8x1xf32, #tpu.memory_space<vmem>>, vector<1x8x4x8x1xf32>
    %224 = vector.shape_cast %223 : vector<1x8x4x8x1xf32> to vector<8x4x8x1xf32>
    %c0_46 = arith.constant 0 : index
    %225 = arith.index_cast %215 : i32 to index
    %c0_47 = arith.constant 0 : index
    %c0_48 = arith.constant 0 : index
    %c0_49 = arith.constant 0 : index
    %226 = vector.load %arg4[%c0_46, %225, %c0_47, %c0_48, %c0_49] : memref<1x16x4x8x1xf32, #tpu.memory_space<vmem>>, vector<1x8x4x8x1xf32>
    %227 = vector.shape_cast %226 : vector<1x8x4x8x1xf32> to vector<8x4x8x1xf32>
    %228 = vector.extract_strided_slice %218 {offsets = [0, 0, 0, 0], sizes = [1, 4, 1, 64], strides = [1, 1, 1, 1]} : vector<8x4x1x64xf32> to vector<1x4x1x64xf32>
    %229 = vector.shape_cast %228 : vector<1x4x1x64xf32> to vector<4x1x64xf32>
    %230 = vector.extract_strided_slice %221 {offsets = [0, 0, 0, 0], sizes = [1, 4, 1, 64], strides = [1, 1, 1, 1]} : vector<8x4x1x64xf32> to vector<1x4x1x64xf32>
    %231 = vector.shape_cast %230 : vector<1x4x1x64xf32> to vector<4x1x64xf32>
    %232 = vector.extract_strided_slice %224 {offsets = [0, 0, 0, 0], sizes = [1, 4, 8, 1], strides = [1, 1, 1, 1]} : vector<8x4x8x1xf32> to vector<1x4x8x1xf32>
    %233 = vector.shape_cast %232 : vector<1x4x8x1xf32> to vector<4x8x1xf32>
    %234 = vector.extract_strided_slice %227 {offsets = [0, 0, 0, 0], sizes = [1, 4, 8, 1], strides = [1, 1, 1, 1]} : vector<8x4x8x1xf32> to vector<1x4x8x1xf32>
    %235 = vector.shape_cast %234 : vector<1x4x8x1xf32> to vector<4x8x1xf32>
    %236 = vector.broadcast %231 : vector<4x1x64xf32> to vector<4x8x64xf32>
    %237 = arith.mulf %0, %236 : vector<4x8x64xf32>
    %238 = math.exp %237 : vector<4x8x64xf32>
    %239 = arith.mulf %238, %194 : vector<4x8x64xf32>
    %240 = arith.mulf %231, %229 : vector<4x1x64xf32>
    %241 = vector.broadcast %233 : vector<4x8x1xf32> to vector<4x8x64xf32>
    %242 = vector.broadcast %240 : vector<4x1x64xf32> to vector<4x8x64xf32>
    %243 = arith.mulf %241, %242 : vector<4x8x64xf32>
    %244 = arith.addf %239, %243 : vector<4x8x64xf32>
    %245 = vector.broadcast %235 : vector<4x8x1xf32> to vector<4x8x64xf32>
    %246 = arith.mulf %245, %244 : vector<4x8x64xf32>
    %cst_50 = arith.constant dense<0.000000e+00> : vector<4x64xf32>
    %247 = vector.multi_reduction <add>, %246, %cst_50 [1] : vector<4x8x64xf32> to vector<4x64xf32>
    %248 = vector.shape_cast %247 : vector<4x64xf32> to vector<4x1x64xf32>
    %249 = arith.mulf %1, %229 : vector<4x1x64xf32>
    %250 = arith.addf %248, %249 : vector<4x1x64xf32>
    %251 = vector.extract_strided_slice %218 {offsets = [1, 0, 0, 0], sizes = [1, 4, 1, 64], strides = [1, 1, 1, 1]} : vector<8x4x1x64xf32> to vector<1x4x1x64xf32>
    %252 = vector.shape_cast %251 : vector<1x4x1x64xf32> to vector<4x1x64xf32>
    %253 = vector.extract_strided_slice %221 {offsets = [1, 0, 0, 0], sizes = [1, 4, 1, 64], strides = [1, 1, 1, 1]} : vector<8x4x1x64xf32> to vector<1x4x1x64xf32>
    %254 = vector.shape_cast %253 : vector<1x4x1x64xf32> to vector<4x1x64xf32>
    %255 = vector.extract_strided_slice %224 {offsets = [1, 0, 0, 0], sizes = [1, 4, 8, 1], strides = [1, 1, 1, 1]} : vector<8x4x8x1xf32> to vector<1x4x8x1xf32>
    %256 = vector.shape_cast %255 : vector<1x4x8x1xf32> to vector<4x8x1xf32>
    %257 = vector.extract_strided_slice %227 {offsets = [1, 0, 0, 0], sizes = [1, 4, 8, 1], strides = [1, 1, 1, 1]} : vector<8x4x8x1xf32> to vector<1x4x8x1xf32>
    %258 = vector.shape_cast %257 : vector<1x4x8x1xf32> to vector<4x8x1xf32>
    %259 = vector.broadcast %254 : vector<4x1x64xf32> to vector<4x8x64xf32>
    %260 = arith.mulf %0, %259 : vector<4x8x64xf32>
    %261 = math.exp %260 : vector<4x8x64xf32>
    %262 = arith.mulf %261, %244 : vector<4x8x64xf32>
    %263 = arith.mulf %254, %252 : vector<4x1x64xf32>
    %264 = vector.broadcast %256 : vector<4x8x1xf32> to vector<4x8x64xf32>
    %265 = vector.broadcast %263 : vector<4x1x64xf32> to vector<4x8x64xf32>
    %266 = arith.mulf %264, %265 : vector<4x8x64xf32>
    %267 = arith.addf %262, %266 : vector<4x8x64xf32>
    %268 = vector.broadcast %258 : vector<4x8x1xf32> to vector<4x8x64xf32>
    %269 = arith.mulf %268, %267 : vector<4x8x64xf32>
    %cst_51 = arith.constant dense<0.000000e+00> : vector<4x64xf32>
    %270 = vector.multi_reduction <add>, %269, %cst_51 [1] : vector<4x8x64xf32> to vector<4x64xf32>
    %271 = vector.shape_cast %270 : vector<4x64xf32> to vector<4x1x64xf32>
    %272 = arith.mulf %1, %252 : vector<4x1x64xf32>
    %273 = arith.addf %271, %272 : vector<4x1x64xf32>
    %274 = vector.extract_strided_slice %218 {offsets = [2, 0, 0, 0], sizes = [1, 4, 1, 64], strides = [1, 1, 1, 1]} : vector<8x4x1x64xf32> to vector<1x4x1x64xf32>
    %275 = vector.shape_cast %274 : vector<1x4x1x64xf32> to vector<4x1x64xf32>
    %276 = vector.extract_strided_slice %221 {offsets = [2, 0, 0, 0], sizes = [1, 4, 1, 64], strides = [1, 1, 1, 1]} : vector<8x4x1x64xf32> to vector<1x4x1x64xf32>
    %277 = vector.shape_cast %276 : vector<1x4x1x64xf32> to vector<4x1x64xf32>
    %278 = vector.extract_strided_slice %224 {offsets = [2, 0, 0, 0], sizes = [1, 4, 8, 1], strides = [1, 1, 1, 1]} : vector<8x4x8x1xf32> to vector<1x4x8x1xf32>
    %279 = vector.shape_cast %278 : vector<1x4x8x1xf32> to vector<4x8x1xf32>
    %280 = vector.extract_strided_slice %227 {offsets = [2, 0, 0, 0], sizes = [1, 4, 8, 1], strides = [1, 1, 1, 1]} : vector<8x4x8x1xf32> to vector<1x4x8x1xf32>
    %281 = vector.shape_cast %280 : vector<1x4x8x1xf32> to vector<4x8x1xf32>
    %282 = vector.broadcast %277 : vector<4x1x64xf32> to vector<4x8x64xf32>
    %283 = arith.mulf %0, %282 : vector<4x8x64xf32>
    %284 = math.exp %283 : vector<4x8x64xf32>
    %285 = arith.mulf %284, %267 : vector<4x8x64xf32>
    %286 = arith.mulf %277, %275 : vector<4x1x64xf32>
    %287 = vector.broadcast %279 : vector<4x8x1xf32> to vector<4x8x64xf32>
    %288 = vector.broadcast %286 : vector<4x1x64xf32> to vector<4x8x64xf32>
    %289 = arith.mulf %287, %288 : vector<4x8x64xf32>
    %290 = arith.addf %285, %289 : vector<4x8x64xf32>
    %291 = vector.broadcast %281 : vector<4x8x1xf32> to vector<4x8x64xf32>
    %292 = arith.mulf %291, %290 : vector<4x8x64xf32>
    %cst_52 = arith.constant dense<0.000000e+00> : vector<4x64xf32>
    %293 = vector.multi_reduction <add>, %292, %cst_52 [1] : vector<4x8x64xf32> to vector<4x64xf32>
    %294 = vector.shape_cast %293 : vector<4x64xf32> to vector<4x1x64xf32>
    %295 = arith.mulf %1, %275 : vector<4x1x64xf32>
    %296 = arith.addf %294, %295 : vector<4x1x64xf32>
    %297 = vector.extract_strided_slice %218 {offsets = [3, 0, 0, 0], sizes = [1, 4, 1, 64], strides = [1, 1, 1, 1]} : vector<8x4x1x64xf32> to vector<1x4x1x64xf32>
    %298 = vector.shape_cast %297 : vector<1x4x1x64xf32> to vector<4x1x64xf32>
    %299 = vector.extract_strided_slice %221 {offsets = [3, 0, 0, 0], sizes = [1, 4, 1, 64], strides = [1, 1, 1, 1]} : vector<8x4x1x64xf32> to vector<1x4x1x64xf32>
    %300 = vector.shape_cast %299 : vector<1x4x1x64xf32> to vector<4x1x64xf32>
    %301 = vector.extract_strided_slice %224 {offsets = [3, 0, 0, 0], sizes = [1, 4, 8, 1], strides = [1, 1, 1, 1]} : vector<8x4x8x1xf32> to vector<1x4x8x1xf32>
    %302 = vector.shape_cast %301 : vector<1x4x8x1xf32> to vector<4x8x1xf32>
    %303 = vector.extract_strided_slice %227 {offsets = [3, 0, 0, 0], sizes = [1, 4, 8, 1], strides = [1, 1, 1, 1]} : vector<8x4x8x1xf32> to vector<1x4x8x1xf32>
    %304 = vector.shape_cast %303 : vector<1x4x8x1xf32> to vector<4x8x1xf32>
    %305 = vector.broadcast %300 : vector<4x1x64xf32> to vector<4x8x64xf32>
    %306 = arith.mulf %0, %305 : vector<4x8x64xf32>
    %307 = math.exp %306 : vector<4x8x64xf32>
    %308 = arith.mulf %307, %290 : vector<4x8x64xf32>
    %309 = arith.mulf %300, %298 : vector<4x1x64xf32>
    %310 = vector.broadcast %302 : vector<4x8x1xf32> to vector<4x8x64xf32>
    %311 = vector.broadcast %309 : vector<4x1x64xf32> to vector<4x8x64xf32>
    %312 = arith.mulf %310, %311 : vector<4x8x64xf32>
    %313 = arith.addf %308, %312 : vector<4x8x64xf32>
    %314 = vector.broadcast %304 : vector<4x8x1xf32> to vector<4x8x64xf32>
    %315 = arith.mulf %314, %313 : vector<4x8x64xf32>
    %cst_53 = arith.constant dense<0.000000e+00> : vector<4x64xf32>
    %316 = vector.multi_reduction <add>, %315, %cst_53 [1] : vector<4x8x64xf32> to vector<4x64xf32>
    %317 = vector.shape_cast %316 : vector<4x64xf32> to vector<4x1x64xf32>
    %318 = arith.mulf %1, %298 : vector<4x1x64xf32>
    %319 = arith.addf %317, %318 : vector<4x1x64xf32>
    %320 = vector.extract_strided_slice %218 {offsets = [4, 0, 0, 0], sizes = [1, 4, 1, 64], strides = [1, 1, 1, 1]} : vector<8x4x1x64xf32> to vector<1x4x1x64xf32>
    %321 = vector.shape_cast %320 : vector<1x4x1x64xf32> to vector<4x1x64xf32>
    %322 = vector.extract_strided_slice %221 {offsets = [4, 0, 0, 0], sizes = [1, 4, 1, 64], strides = [1, 1, 1, 1]} : vector<8x4x1x64xf32> to vector<1x4x1x64xf32>
    %323 = vector.shape_cast %322 : vector<1x4x1x64xf32> to vector<4x1x64xf32>
    %324 = vector.extract_strided_slice %224 {offsets = [4, 0, 0, 0], sizes = [1, 4, 8, 1], strides = [1, 1, 1, 1]} : vector<8x4x8x1xf32> to vector<1x4x8x1xf32>
    %325 = vector.shape_cast %324 : vector<1x4x8x1xf32> to vector<4x8x1xf32>
    %326 = vector.extract_strided_slice %227 {offsets = [4, 0, 0, 0], sizes = [1, 4, 8, 1], strides = [1, 1, 1, 1]} : vector<8x4x8x1xf32> to vector<1x4x8x1xf32>
    %327 = vector.shape_cast %326 : vector<1x4x8x1xf32> to vector<4x8x1xf32>
    %328 = vector.broadcast %323 : vector<4x1x64xf32> to vector<4x8x64xf32>
    %329 = arith.mulf %0, %328 : vector<4x8x64xf32>
    %330 = math.exp %329 : vector<4x8x64xf32>
    %331 = arith.mulf %330, %313 : vector<4x8x64xf32>
    %332 = arith.mulf %323, %321 : vector<4x1x64xf32>
    %333 = vector.broadcast %325 : vector<4x8x1xf32> to vector<4x8x64xf32>
    %334 = vector.broadcast %332 : vector<4x1x64xf32> to vector<4x8x64xf32>
    %335 = arith.mulf %333, %334 : vector<4x8x64xf32>
    %336 = arith.addf %331, %335 : vector<4x8x64xf32>
    %337 = vector.broadcast %327 : vector<4x8x1xf32> to vector<4x8x64xf32>
    %338 = arith.mulf %337, %336 : vector<4x8x64xf32>
    %cst_54 = arith.constant dense<0.000000e+00> : vector<4x64xf32>
    %339 = vector.multi_reduction <add>, %338, %cst_54 [1] : vector<4x8x64xf32> to vector<4x64xf32>
    %340 = vector.shape_cast %339 : vector<4x64xf32> to vector<4x1x64xf32>
    %341 = arith.mulf %1, %321 : vector<4x1x64xf32>
    %342 = arith.addf %340, %341 : vector<4x1x64xf32>
    %343 = vector.extract_strided_slice %218 {offsets = [5, 0, 0, 0], sizes = [1, 4, 1, 64], strides = [1, 1, 1, 1]} : vector<8x4x1x64xf32> to vector<1x4x1x64xf32>
    %344 = vector.shape_cast %343 : vector<1x4x1x64xf32> to vector<4x1x64xf32>
    %345 = vector.extract_strided_slice %221 {offsets = [5, 0, 0, 0], sizes = [1, 4, 1, 64], strides = [1, 1, 1, 1]} : vector<8x4x1x64xf32> to vector<1x4x1x64xf32>
    %346 = vector.shape_cast %345 : vector<1x4x1x64xf32> to vector<4x1x64xf32>
    %347 = vector.extract_strided_slice %224 {offsets = [5, 0, 0, 0], sizes = [1, 4, 8, 1], strides = [1, 1, 1, 1]} : vector<8x4x8x1xf32> to vector<1x4x8x1xf32>
    %348 = vector.shape_cast %347 : vector<1x4x8x1xf32> to vector<4x8x1xf32>
    %349 = vector.extract_strided_slice %227 {offsets = [5, 0, 0, 0], sizes = [1, 4, 8, 1], strides = [1, 1, 1, 1]} : vector<8x4x8x1xf32> to vector<1x4x8x1xf32>
    %350 = vector.shape_cast %349 : vector<1x4x8x1xf32> to vector<4x8x1xf32>
    %351 = vector.broadcast %346 : vector<4x1x64xf32> to vector<4x8x64xf32>
    %352 = arith.mulf %0, %351 : vector<4x8x64xf32>
    %353 = math.exp %352 : vector<4x8x64xf32>
    %354 = arith.mulf %353, %336 : vector<4x8x64xf32>
    %355 = arith.mulf %346, %344 : vector<4x1x64xf32>
    %356 = vector.broadcast %348 : vector<4x8x1xf32> to vector<4x8x64xf32>
    %357 = vector.broadcast %355 : vector<4x1x64xf32> to vector<4x8x64xf32>
    %358 = arith.mulf %356, %357 : vector<4x8x64xf32>
    %359 = arith.addf %354, %358 : vector<4x8x64xf32>
    %360 = vector.broadcast %350 : vector<4x8x1xf32> to vector<4x8x64xf32>
    %361 = arith.mulf %360, %359 : vector<4x8x64xf32>
    %cst_55 = arith.constant dense<0.000000e+00> : vector<4x64xf32>
    %362 = vector.multi_reduction <add>, %361, %cst_55 [1] : vector<4x8x64xf32> to vector<4x64xf32>
    %363 = vector.shape_cast %362 : vector<4x64xf32> to vector<4x1x64xf32>
    %364 = arith.mulf %1, %344 : vector<4x1x64xf32>
    %365 = arith.addf %363, %364 : vector<4x1x64xf32>
    %366 = vector.extract_strided_slice %218 {offsets = [6, 0, 0, 0], sizes = [1, 4, 1, 64], strides = [1, 1, 1, 1]} : vector<8x4x1x64xf32> to vector<1x4x1x64xf32>
    %367 = vector.shape_cast %366 : vector<1x4x1x64xf32> to vector<4x1x64xf32>
    %368 = vector.extract_strided_slice %221 {offsets = [6, 0, 0, 0], sizes = [1, 4, 1, 64], strides = [1, 1, 1, 1]} : vector<8x4x1x64xf32> to vector<1x4x1x64xf32>
    %369 = vector.shape_cast %368 : vector<1x4x1x64xf32> to vector<4x1x64xf32>
    %370 = vector.extract_strided_slice %224 {offsets = [6, 0, 0, 0], sizes = [1, 4, 8, 1], strides = [1, 1, 1, 1]} : vector<8x4x8x1xf32> to vector<1x4x8x1xf32>
    %371 = vector.shape_cast %370 : vector<1x4x8x1xf32> to vector<4x8x1xf32>
    %372 = vector.extract_strided_slice %227 {offsets = [6, 0, 0, 0], sizes = [1, 4, 8, 1], strides = [1, 1, 1, 1]} : vector<8x4x8x1xf32> to vector<1x4x8x1xf32>
    %373 = vector.shape_cast %372 : vector<1x4x8x1xf32> to vector<4x8x1xf32>
    %374 = vector.broadcast %369 : vector<4x1x64xf32> to vector<4x8x64xf32>
    %375 = arith.mulf %0, %374 : vector<4x8x64xf32>
    %376 = math.exp %375 : vector<4x8x64xf32>
    %377 = arith.mulf %376, %359 : vector<4x8x64xf32>
    %378 = arith.mulf %369, %367 : vector<4x1x64xf32>
    %379 = vector.broadcast %371 : vector<4x8x1xf32> to vector<4x8x64xf32>
    %380 = vector.broadcast %378 : vector<4x1x64xf32> to vector<4x8x64xf32>
    %381 = arith.mulf %379, %380 : vector<4x8x64xf32>
    %382 = arith.addf %377, %381 : vector<4x8x64xf32>
    %383 = vector.broadcast %373 : vector<4x8x1xf32> to vector<4x8x64xf32>
    %384 = arith.mulf %383, %382 : vector<4x8x64xf32>
    %cst_56 = arith.constant dense<0.000000e+00> : vector<4x64xf32>
    %385 = vector.multi_reduction <add>, %384, %cst_56 [1] : vector<4x8x64xf32> to vector<4x64xf32>
    %386 = vector.shape_cast %385 : vector<4x64xf32> to vector<4x1x64xf32>
    %387 = arith.mulf %1, %367 : vector<4x1x64xf32>
    %388 = arith.addf %386, %387 : vector<4x1x64xf32>
    %389 = vector.extract_strided_slice %218 {offsets = [7, 0, 0, 0], sizes = [1, 4, 1, 64], strides = [1, 1, 1, 1]} : vector<8x4x1x64xf32> to vector<1x4x1x64xf32>
    %390 = vector.shape_cast %389 : vector<1x4x1x64xf32> to vector<4x1x64xf32>
    %391 = vector.extract_strided_slice %221 {offsets = [7, 0, 0, 0], sizes = [1, 4, 1, 64], strides = [1, 1, 1, 1]} : vector<8x4x1x64xf32> to vector<1x4x1x64xf32>
    %392 = vector.shape_cast %391 : vector<1x4x1x64xf32> to vector<4x1x64xf32>
    %393 = vector.extract_strided_slice %224 {offsets = [7, 0, 0, 0], sizes = [1, 4, 8, 1], strides = [1, 1, 1, 1]} : vector<8x4x8x1xf32> to vector<1x4x8x1xf32>
    %394 = vector.shape_cast %393 : vector<1x4x8x1xf32> to vector<4x8x1xf32>
    %395 = vector.extract_strided_slice %227 {offsets = [7, 0, 0, 0], sizes = [1, 4, 8, 1], strides = [1, 1, 1, 1]} : vector<8x4x8x1xf32> to vector<1x4x8x1xf32>
    %396 = vector.shape_cast %395 : vector<1x4x8x1xf32> to vector<4x8x1xf32>
    %397 = vector.broadcast %392 : vector<4x1x64xf32> to vector<4x8x64xf32>
    %398 = arith.mulf %0, %397 : vector<4x8x64xf32>
    %399 = math.exp %398 : vector<4x8x64xf32>
    %400 = arith.mulf %399, %382 : vector<4x8x64xf32>
    %401 = arith.mulf %392, %390 : vector<4x1x64xf32>
    %402 = vector.broadcast %394 : vector<4x8x1xf32> to vector<4x8x64xf32>
    %403 = vector.broadcast %401 : vector<4x1x64xf32> to vector<4x8x64xf32>
    %404 = arith.mulf %402, %403 : vector<4x8x64xf32>
    %405 = arith.addf %400, %404 : vector<4x8x64xf32>
    %406 = vector.broadcast %396 : vector<4x8x1xf32> to vector<4x8x64xf32>
    %407 = arith.mulf %406, %405 : vector<4x8x64xf32>
    %cst_57 = arith.constant dense<0.000000e+00> : vector<4x64xf32>
    %408 = vector.multi_reduction <add>, %407, %cst_57 [1] : vector<4x8x64xf32> to vector<4x64xf32>
    %409 = vector.shape_cast %408 : vector<4x64xf32> to vector<4x1x64xf32>
    %410 = arith.mulf %1, %390 : vector<4x1x64xf32>
    %411 = arith.addf %409, %410 : vector<4x1x64xf32>
    %412 = vector.shape_cast %250 : vector<4x1x64xf32> to vector<1x4x1x64xf32>
    %413 = vector.shape_cast %273 : vector<4x1x64xf32> to vector<1x4x1x64xf32>
    %414 = vector.shape_cast %296 : vector<4x1x64xf32> to vector<1x4x1x64xf32>
    %415 = vector.shape_cast %319 : vector<4x1x64xf32> to vector<1x4x1x64xf32>
    %416 = vector.shape_cast %342 : vector<4x1x64xf32> to vector<1x4x1x64xf32>
    %417 = vector.shape_cast %365 : vector<4x1x64xf32> to vector<1x4x1x64xf32>
    %418 = vector.shape_cast %388 : vector<4x1x64xf32> to vector<1x4x1x64xf32>
    %419 = vector.shape_cast %411 : vector<4x1x64xf32> to vector<1x4x1x64xf32>
    %420 = tpu.concatenate %412, %413, %414, %415, %416, %417, %418, %419 in 0 : vector<1x4x1x64xf32>, vector<1x4x1x64xf32>, vector<1x4x1x64xf32>, vector<1x4x1x64xf32>, vector<1x4x1x64xf32>, vector<1x4x1x64xf32>, vector<1x4x1x64xf32>, vector<1x4x1x64xf32> -> vector<8x4x1x64xf32>
    %c0_58 = arith.constant 0 : index
    %421 = arith.index_cast %215 : i32 to index
    %c0_59 = arith.constant 0 : index
    %c0_60 = arith.constant 0 : index
    %c0_61 = arith.constant 0 : index
    %422 = vector.load %arg7[%c0_58, %421, %c0_59, %c0_60, %c0_61] : memref<1x16x4x1x64xf32, #tpu.memory_space<vmem>>, vector<1x8x4x1x64xf32>
    %423 = vector.shape_cast %422 : vector<1x8x4x1x64xf32> to vector<8x4x1x64xf32>
    %424 = vector.shape_cast %420 : vector<8x4x1x64xf32> to vector<1x8x4x1x64xf32>
    tpu.vector_store %arg7[%c0_58, %421, %c0_59, %c0_60, %c0_61], %424 {strides = array<i32>} : memref<1x16x4x1x64xf32, #tpu.memory_space<vmem>>, vector<1x8x4x1x64xf32>,
    %c2_i32 = arith.constant 2 : i32
    return
  }
  func.func @transform_0(%arg0: i32) -> (i32, i32, i32, i32, i32) {
    %c0_i32 = arith.constant 0 : i32
    %c0_i32_0 = arith.constant 0 : i32
    %c0_i32_1 = arith.constant 0 : i32
    %c0_i32_2 = arith.constant 0 : i32
    %c0_i32_3 = arith.constant 0 : i32
    return %arg0, %c0_i32, %c0_i32_0, %c0_i32_1, %c0_i32_2 : i32, i32, i32, i32, i32
  }
  func.func @transform_1(%arg0: i32) -> (i32, i32, i32, i32, i32) {
    %c0_i32 = arith.constant 0 : i32
    %c0_i32_0 = arith.constant 0 : i32
    %c0_i32_1 = arith.constant 0 : i32
    %c0_i32_2 = arith.constant 0 : i32
    %c0_i32_3 = arith.constant 0 : i32
    return %arg0, %c0_i32, %c0_i32_0, %c0_i32_1, %c0_i32_2 : i32, i32, i32, i32, i32
  }
  func.func @transform_2(%arg0: i32) -> (i32, i32, i32, i32, i32) {
    %c0_i32 = arith.constant 0 : i32
    %c0_i32_0 = arith.constant 0 : i32
    %c0_i32_1 = arith.constant 0 : i32
    %c0_i32_2 = arith.constant 0 : i32
    %c0_i32_3 = arith.constant 0 : i32
    return %arg0, %c0_i32, %c0_i32_0, %c0_i32_1, %c0_i32_2 : i32, i32, i32, i32, i32
  }
  func.func @transform_3(%arg0: i32) -> (i32, i32, i32, i32, i32) {
    %c0_i32 = arith.constant 0 : i32
    %c0_i32_0 = arith.constant 0 : i32
    %c0_i32_1 = arith.constant 0 : i32
    %c0_i32_2 = arith.constant 0 : i32
    %c0_i32_3 = arith.constant 0 : i32
    return %arg0, %c0_i32, %c0_i32_0, %c0_i32_1, %c0_i32_2 : i32, i32, i32, i32, i32
  }
  func.func @transform_4(%arg0: i32) -> (i32, i32, i32) {
    %c0_i32 = arith.constant 0 : i32
    %c0_i32_0 = arith.constant 0 : i32
    %c0_i32_1 = arith.constant 0 : i32
    %c0_i32_2 = arith.constant 0 : i32
    return %c0_i32, %c0_i32_0, %c0_i32_1 : i32, i32, i32
  }
  func.func @transform_5(%arg0: i32) -> (i32, i32, i32) {
    %c0_i32 = arith.constant 0 : i32
    %c0_i32_0 = arith.constant 0 : i32
    %c0_i32_1 = arith.constant 0 : i32
    %c0_i32_2 = arith.constant 0 : i32
    return %c0_i32, %c0_i32_0, %c0_i32_1 : i32, i32, i32
  }
  func.func @transform_6(%arg0: i32) -> (i32, i32, i32, i32, i32) {
    %c0_i32 = arith.constant 0 : i32
    %c0_i32_0 = arith.constant 0 : i32
    %c0_i32_1 = arith.constant 0 : i32
    %c0_i32_2 = arith.constant 0 : i32
    %c0_i32_3 = arith.constant 0 : i32
    return %arg0, %c0_i32, %c0_i32_0, %c0_i32_1, %c0_i32_2 : i32, i32, i32, i32, i32
  }
}

module attributes {stable_mosaic.version = 11 : i64} {
  func.func @_ssm_out_kernel(%arg0: i32, %arg1: memref<32x64xf32, #tpu.memory_space<vmem>>, %arg2: memref<32x64xf32, #tpu.memory_space<vmem>>, %arg3: memref<1x64xf32, #tpu.memory_space<vmem>>, %arg4: memref<1x64xf32, #tpu.memory_space<vmem>>, %arg5: memref<64x32xbf16, #tpu.memory_space<vmem>>, %arg6: memref<32x32xf32, #tpu.memory_space<vmem>>) attributes {dimension_semantics = [#tpu.dimension_semantics<parallel>], iteration_bounds = array<i64: 1>, scalar_prefetch = 0 : i64, scratch_operands = 0 : i64, tpu.core_type = #tpu.core_type<tc>, window_params = [{transform_indices = @transform_0, window_bounds = array<i64: 32, 64>}, {transform_indices = @transform_1, window_bounds = array<i64: 32, 64>}, {pipeline_mode = #tpu.pipeline_mode<synchronous>, transform_indices = @transform_2, window_bounds = array<i64: 1, 64>}, {pipeline_mode = #tpu.pipeline_mode<synchronous>, transform_indices = @transform_3, window_bounds = array<i64: 1, 64>}, {pipeline_mode = #tpu.pipeline_mode<synchronous>, transform_indices = @transform_4, window_bounds = array<i64: 64, 32>}, {transform_indices = @transform_5, window_bounds = array<i64: 32, 32>}]} {
    %c0 = arith.constant 0 : index
    %c0_0 = arith.constant 0 : index
    %0 = vector.load %arg1[%c0, %c0_0] : memref<32x64xf32, #tpu.memory_space<vmem>>, vector<32x64xf32>
    %cst = arith.constant dense<0.000000e+00> : vector<32xf32>
    %1 = vector.multi_reduction <add>, %0, %cst [1] : vector<32x64xf32> to vector<32xf32>
    %2 = vector.shape_cast %1 : vector<32xf32> to vector<32x1xf32>
    %cst_1 = arith.constant 6.400000e+01 : f32
    %3 = vector.broadcast %cst_1 : f32 to vector<32x1xf32>
    %4 = arith.divf %2, %3 : vector<32x1xf32>
    %5 = vector.broadcast %4 : vector<32x1xf32> to vector<32x64xf32>
    %6 = arith.subf %0, %5 : vector<32x64xf32>
    %7 = arith.mulf %6, %6 : vector<32x64xf32>
    %cst_2 = arith.constant dense<0.000000e+00> : vector<32xf32>
    %8 = vector.multi_reduction <add>, %7, %cst_2 [1] : vector<32x64xf32> to vector<32xf32>
    %9 = vector.shape_cast %8 : vector<32xf32> to vector<32x1xf32>
    %cst_3 = arith.constant 6.400000e+01 : f32
    %10 = vector.broadcast %cst_3 : f32 to vector<32x1xf32>
    %11 = arith.divf %9, %10 : vector<32x1xf32>
    %cst_4 = arith.constant 9.99999974E-6 : f32
    %12 = vector.broadcast %cst_4 : f32 to vector<32x1xf32>
    %13 = arith.addf %11, %12 : vector<32x1xf32>
    %14 = math.rsqrt %13 : vector<32x1xf32>
    %15 = vector.broadcast %14 : vector<32x1xf32> to vector<32x64xf32>
    %16 = arith.mulf %6, %15 : vector<32x64xf32>
    %c0_5 = arith.constant 0 : index
    %c0_6 = arith.constant 0 : index
    %17 = vector.load %arg3[%c0_5, %c0_6] : memref<1x64xf32, #tpu.memory_space<vmem>>, vector<1x64xf32>
    %18 = vector.broadcast %17 : vector<1x64xf32> to vector<32x64xf32>
    %19 = arith.mulf %16, %18 : vector<32x64xf32>
    %c0_7 = arith.constant 0 : index
    %c0_8 = arith.constant 0 : index
    %20 = vector.load %arg4[%c0_7, %c0_8] : memref<1x64xf32, #tpu.memory_space<vmem>>, vector<1x64xf32>
    %21 = vector.broadcast %20 : vector<1x64xf32> to vector<32x64xf32>
    %22 = arith.addf %19, %21 : vector<32x64xf32>
    %c0_9 = arith.constant 0 : index
    %c0_10 = arith.constant 0 : index
    %23 = vector.load %arg2[%c0_9, %c0_10] : memref<32x64xf32, #tpu.memory_space<vmem>>, vector<32x64xf32>
    %cst_11 = arith.constant 0.000000e+00 : f32
    %24 = vector.broadcast %cst_11 : f32 to vector<32x64xf32>
    %25 = arith.subf %24, %23 : vector<32x64xf32>
    %26 = math.exp %25 : vector<32x64xf32>
    %cst_12 = arith.constant 1.000000e+00 : f32
    %27 = vector.broadcast %cst_12 : f32 to vector<32x64xf32>
    %28 = arith.addf %27, %26 : vector<32x64xf32>
    %cst_13 = arith.constant 1.000000e+00 : f32
    %29 = vector.broadcast %cst_13 : f32 to vector<32x64xf32>
    %30 = arith.divf %29, %28 : vector<32x64xf32>
    %31 = arith.mulf %23, %30 : vector<32x64xf32>
    %32 = arith.mulf %22, %31 : vector<32x64xf32>
    %33 = arith.truncf %32 : vector<32x64xf32> to vector<32x64xbf16>
    %c0_14 = arith.constant 0 : index
    %c0_15 = arith.constant 0 : index
    %34 = vector.load %arg5[%c0_14, %c0_15] : memref<64x32xbf16, #tpu.memory_space<vmem>>, vector<64x32xbf16>
    %cst_16 = arith.constant dense<0.000000e+00> : vector<32x32xf32>
    %35 = tpu.matmul %33, %34, %cst_16 {dimension_numbers = #tpu.dot_dimension_numbers<[1], [0], [0], [1], [0, 0, 1, 1], [], []>} : vector<32x64xbf16>, vector<64x32xbf16>, vector<32x32xf32> -> vector<32x32xf32>
    %c0_17 = arith.constant 0 : index
    %c0_18 = arith.constant 0 : index
    %36 = vector.load %arg6[%c0_17, %c0_18] : memref<32x32xf32, #tpu.memory_space<vmem>>, vector<32x32xf32>
    tpu.vector_store %arg6[%c0_17, %c0_18], %35 {strides = array<i32>} : memref<32x32xf32, #tpu.memory_space<vmem>>, vector<32x32xf32>,
    return
  }
  func.func @transform_0(%arg0: i32) -> (i32, i32) {
    %c0_i32 = arith.constant 0 : i32
    %c0_i32_0 = arith.constant 0 : i32
    return %arg0, %c0_i32 : i32, i32
  }
  func.func @transform_1(%arg0: i32) -> (i32, i32) {
    %c0_i32 = arith.constant 0 : i32
    %c0_i32_0 = arith.constant 0 : i32
    return %arg0, %c0_i32 : i32, i32
  }
  func.func @transform_2(%arg0: i32) -> (i32, i32) {
    %c0_i32 = arith.constant 0 : i32
    %c0_i32_0 = arith.constant 0 : i32
    %c0_i32_1 = arith.constant 0 : i32
    return %c0_i32, %c0_i32_0 : i32, i32
  }
  func.func @transform_3(%arg0: i32) -> (i32, i32) {
    %c0_i32 = arith.constant 0 : i32
    %c0_i32_0 = arith.constant 0 : i32
    %c0_i32_1 = arith.constant 0 : i32
    return %c0_i32, %c0_i32_0 : i32, i32
  }
  func.func @transform_4(%arg0: i32) -> (i32, i32) {
    %c0_i32 = arith.constant 0 : i32
    %c0_i32_0 = arith.constant 0 : i32
    %c0_i32_1 = arith.constant 0 : i32
    return %c0_i32, %c0_i32_0 : i32, i32
  }
  func.func @transform_5(%arg0: i32) -> (i32, i32) {
    %c0_i32 = arith.constant 0 : i32
    %c0_i32_0 = arith.constant 0 : i32
    return %arg0, %c0_i32 : i32, i32
  }
}

module attributes {stable_mosaic.version = 11 : i64} {
  func.func @kernel(%arg0: i32, %arg1: memref<32x128xf32, #tpu.memory_space<vmem>>, %arg2: memref<128x32xbf16, #tpu.memory_space<vmem>>, %arg3: memref<1x32xf32, #tpu.memory_space<vmem>>, %arg4: memref<32x32xf32, #tpu.memory_space<vmem>>) attributes {dimension_semantics = [#tpu.dimension_semantics<parallel>], iteration_bounds = array<i64: 1>, scalar_prefetch = 0 : i64, scratch_operands = 0 : i64, tpu.core_type = #tpu.core_type<tc>, window_params = [{transform_indices = @transform_0, window_bounds = array<i64: 32, 128>}, {pipeline_mode = #tpu.pipeline_mode<synchronous>, transform_indices = @transform_1, window_bounds = array<i64: 128, 32>}, {pipeline_mode = #tpu.pipeline_mode<synchronous>, transform_indices = @transform_2, window_bounds = array<i64: 1, 32>}, {transform_indices = @transform_3, window_bounds = array<i64: 32, 32>}]} {
    %c0 = arith.constant 0 : index
    %c0_0 = arith.constant 0 : index
    %0 = vector.load %arg1[%c0, %c0_0] : memref<32x128xf32, #tpu.memory_space<vmem>>, vector<32x128xf32>
    %1 = arith.truncf %0 : vector<32x128xf32> to vector<32x128xbf16>
    %c0_1 = arith.constant 0 : index
    %c0_2 = arith.constant 0 : index
    %2 = vector.load %arg2[%c0_1, %c0_2] : memref<128x32xbf16, #tpu.memory_space<vmem>>, vector<128x32xbf16>
    %cst = arith.constant dense<0.000000e+00> : vector<32x32xf32>
    %3 = tpu.matmul %1, %2, %cst {dimension_numbers = #tpu.dot_dimension_numbers<[1], [0], [0], [1], [0, 0, 1, 1], [], []>} : vector<32x128xbf16>, vector<128x32xbf16>, vector<32x32xf32> -> vector<32x32xf32>
    %c0_3 = arith.constant 0 : index
    %c0_4 = arith.constant 0 : index
    %4 = vector.load %arg3[%c0_3, %c0_4] : memref<1x32xf32, #tpu.memory_space<vmem>>, vector<1x32xf32>
    %5 = vector.broadcast %4 : vector<1x32xf32> to vector<32x32xf32>
    %6 = arith.addf %3, %5 : vector<32x32xf32>
    %c0_5 = arith.constant 0 : index
    %c0_6 = arith.constant 0 : index
    %7 = vector.load %arg4[%c0_5, %c0_6] : memref<32x32xf32, #tpu.memory_space<vmem>>, vector<32x32xf32>
    tpu.vector_store %arg4[%c0_5, %c0_6], %6 {strides = array<i32>} : memref<32x32xf32, #tpu.memory_space<vmem>>, vector<32x32xf32>,
    return
  }
  func.func @transform_0(%arg0: i32) -> (i32, i32) {
    %c0_i32 = arith.constant 0 : i32
    %c0_i32_0 = arith.constant 0 : i32
    return %arg0, %c0_i32 : i32, i32
  }
  func.func @transform_1(%arg0: i32) -> (i32, i32) {
    %c0_i32 = arith.constant 0 : i32
    %c0_i32_0 = arith.constant 0 : i32
    %c0_i32_1 = arith.constant 0 : i32
    return %c0_i32, %c0_i32_0 : i32, i32
  }
  func.func @transform_2(%arg0: i32) -> (i32, i32) {
    %c0_i32 = arith.constant 0 : i32
    %c0_i32_0 = arith.constant 0 : i32
    %c0_i32_1 = arith.constant 0 : i32
    return %c0_i32, %c0_i32_0 : i32, i32
  }
  func.func @transform_3(%arg0: i32) -> (i32, i32) {
    %c0_i32 = arith.constant 0 : i32
    %c0_i32_0 = arith.constant 0 : i32
    return %arg0, %c0_i32 : i32, i32
  }
}

module attributes {stable_mosaic.version = 11 : i64} {
  func.func @kernel(%arg0: i32, %arg1: memref<8x128xf32, #tpu.memory_space<vmem>>, %arg2: memref<128x64xbf16, #tpu.memory_space<vmem>>, %arg3: memref<1x64xf32, #tpu.memory_space<vmem>>, %arg4: memref<1x64xf32, #tpu.memory_space<vmem>>, %arg5: memref<1x64xf32, #tpu.memory_space<vmem>>, %arg6: memref<8x64xf32, #tpu.memory_space<vmem>>) attributes {dimension_semantics = [#tpu.dimension_semantics<parallel>], iteration_bounds = array<i64: 1>, scalar_prefetch = 0 : i64, scratch_operands = 0 : i64, tpu.core_type = #tpu.core_type<tc>, window_params = [{transform_indices = @transform_0, window_bounds = array<i64: 8, 128>}, {pipeline_mode = #tpu.pipeline_mode<synchronous>, transform_indices = @transform_1, window_bounds = array<i64: 128, 64>}, {pipeline_mode = #tpu.pipeline_mode<synchronous>, transform_indices = @transform_2, window_bounds = array<i64: 1, 64>}, {pipeline_mode = #tpu.pipeline_mode<synchronous>, transform_indices = @transform_3, window_bounds = array<i64: 1, 64>}, {pipeline_mode = #tpu.pipeline_mode<synchronous>, transform_indices = @transform_4, window_bounds = array<i64: 1, 64>}, {transform_indices = @transform_5, window_bounds = array<i64: 8, 64>}]} {
    %c0 = arith.constant 0 : index
    %c0_0 = arith.constant 0 : index
    %0 = vector.load %arg1[%c0, %c0_0] : memref<8x128xf32, #tpu.memory_space<vmem>>, vector<8x128xf32>
    %1 = arith.truncf %0 : vector<8x128xf32> to vector<8x128xbf16>
    %c0_1 = arith.constant 0 : index
    %c0_2 = arith.constant 0 : index
    %2 = vector.load %arg2[%c0_1, %c0_2] : memref<128x64xbf16, #tpu.memory_space<vmem>>, vector<128x64xbf16>
    %cst = arith.constant dense<0.000000e+00> : vector<8x64xf32>
    %3 = tpu.matmul %1, %2, %cst {dimension_numbers = #tpu.dot_dimension_numbers<[1], [0], [0], [1], [0, 0, 1, 1], [], []>} : vector<8x128xbf16>, vector<128x64xbf16>, vector<8x64xf32> -> vector<8x64xf32>
    %c0_3 = arith.constant 0 : index
    %c0_4 = arith.constant 0 : index
    %4 = vector.load %arg3[%c0_3, %c0_4] : memref<1x64xf32, #tpu.memory_space<vmem>>, vector<1x64xf32>
    %5 = vector.broadcast %4 : vector<1x64xf32> to vector<8x64xf32>
    %6 = arith.addf %3, %5 : vector<8x64xf32>
    %cst_5 = arith.constant dense<0.000000e+00> : vector<8xf32>
    %7 = vector.multi_reduction <add>, %6, %cst_5 [1] : vector<8x64xf32> to vector<8xf32>
    %8 = vector.shape_cast %7 : vector<8xf32> to vector<8x1xf32>
    %cst_6 = arith.constant 6.400000e+01 : f32
    %9 = vector.broadcast %cst_6 : f32 to vector<8x1xf32>
    %10 = arith.divf %8, %9 : vector<8x1xf32>
    %11 = vector.broadcast %10 : vector<8x1xf32> to vector<8x64xf32>
    %12 = arith.subf %6, %11 : vector<8x64xf32>
    %13 = arith.mulf %12, %12 : vector<8x64xf32>
    %cst_7 = arith.constant dense<0.000000e+00> : vector<8xf32>
    %14 = vector.multi_reduction <add>, %13, %cst_7 [1] : vector<8x64xf32> to vector<8xf32>
    %15 = vector.shape_cast %14 : vector<8xf32> to vector<8x1xf32>
    %cst_8 = arith.constant 6.400000e+01 : f32
    %16 = vector.broadcast %cst_8 : f32 to vector<8x1xf32>
    %17 = arith.divf %15, %16 : vector<8x1xf32>
    %cst_9 = arith.constant 9.99999974E-6 : f32
    %18 = vector.broadcast %cst_9 : f32 to vector<8x1xf32>
    %19 = arith.addf %17, %18 : vector<8x1xf32>
    %20 = math.rsqrt %19 : vector<8x1xf32>
    %21 = vector.broadcast %20 : vector<8x1xf32> to vector<8x64xf32>
    %22 = arith.mulf %12, %21 : vector<8x64xf32>
    %c0_10 = arith.constant 0 : index
    %c0_11 = arith.constant 0 : index
    %23 = vector.load %arg4[%c0_10, %c0_11] : memref<1x64xf32, #tpu.memory_space<vmem>>, vector<1x64xf32>
    %24 = vector.broadcast %23 : vector<1x64xf32> to vector<8x64xf32>
    %25 = arith.mulf %22, %24 : vector<8x64xf32>
    %c0_12 = arith.constant 0 : index
    %c0_13 = arith.constant 0 : index
    %26 = vector.load %arg5[%c0_12, %c0_13] : memref<1x64xf32, #tpu.memory_space<vmem>>, vector<1x64xf32>
    %27 = vector.broadcast %26 : vector<1x64xf32> to vector<8x64xf32>
    %28 = arith.addf %25, %27 : vector<8x64xf32>
    %c0_14 = arith.constant 0 : index
    %c0_15 = arith.constant 0 : index
    %29 = vector.load %arg6[%c0_14, %c0_15] : memref<8x64xf32, #tpu.memory_space<vmem>>, vector<8x64xf32>
    tpu.vector_store %arg6[%c0_14, %c0_15], %28 {strides = array<i32>} : memref<8x64xf32, #tpu.memory_space<vmem>>, vector<8x64xf32>,
    return
  }
  func.func @transform_0(%arg0: i32) -> (i32, i32) {
    %c0_i32 = arith.constant 0 : i32
    %c0_i32_0 = arith.constant 0 : i32
    return %arg0, %c0_i32 : i32, i32
  }
  func.func @transform_1(%arg0: i32) -> (i32, i32) {
    %c0_i32 = arith.constant 0 : i32
    %c0_i32_0 = arith.constant 0 : i32
    %c0_i32_1 = arith.constant 0 : i32
    return %c0_i32, %c0_i32_0 : i32, i32
  }
  func.func @transform_2(%arg0: i32) -> (i32, i32) {
    %c0_i32 = arith.constant 0 : i32
    %c0_i32_0 = arith.constant 0 : i32
    %c0_i32_1 = arith.constant 0 : i32
    return %c0_i32, %c0_i32_0 : i32, i32
  }
  func.func @transform_3(%arg0: i32) -> (i32, i32) {
    %c0_i32 = arith.constant 0 : i32
    %c0_i32_0 = arith.constant 0 : i32
    %c0_i32_1 = arith.constant 0 : i32
    return %c0_i32, %c0_i32_0 : i32, i32
  }
  func.func @transform_4(%arg0: i32) -> (i32, i32) {
    %c0_i32 = arith.constant 0 : i32
    %c0_i32_0 = arith.constant 0 : i32
    %c0_i32_1 = arith.constant 0 : i32
    return %c0_i32, %c0_i32_0 : i32, i32
  }
  func.func @transform_5(%arg0: i32) -> (i32, i32) {
    %c0_i32 = arith.constant 0 : i32
    %c0_i32_0 = arith.constant 0 : i32
    return %arg0, %c0_i32 : i32, i32
  }
}

module attributes {stable_mosaic.version = 11 : i64} {
  func.func @kernel(%arg0: i32, %arg1: memref<8x64xf32, #tpu.memory_space<vmem>>, %arg2: memref<64x256xbf16, #tpu.memory_space<vmem>>, %arg3: memref<1x256xf32, #tpu.memory_space<vmem>>, %arg4: memref<8x256xf32, #tpu.memory_space<vmem>>) attributes {dimension_semantics = [#tpu.dimension_semantics<parallel>], iteration_bounds = array<i64: 1>, scalar_prefetch = 0 : i64, scratch_operands = 0 : i64, tpu.core_type = #tpu.core_type<tc>, window_params = [{transform_indices = @transform_0, window_bounds = array<i64: 8, 64>}, {pipeline_mode = #tpu.pipeline_mode<synchronous>, transform_indices = @transform_1, window_bounds = array<i64: 64, 256>}, {pipeline_mode = #tpu.pipeline_mode<synchronous>, transform_indices = @transform_2, window_bounds = array<i64: 1, 256>}, {transform_indices = @transform_3, window_bounds = array<i64: 8, 256>}]} {
    %c0 = arith.constant 0 : index
    %c0_0 = arith.constant 0 : index
    %0 = vector.load %arg1[%c0, %c0_0] : memref<8x64xf32, #tpu.memory_space<vmem>>, vector<8x64xf32>
    %cst = arith.constant dense<0.000000e+00> : vector<8xf32>
    %1 = vector.multi_reduction <add>, %0, %cst [1] : vector<8x64xf32> to vector<8xf32>
    %2 = vector.shape_cast %1 : vector<8xf32> to vector<8x1xf32>
    %cst_1 = arith.constant 6.400000e+01 : f32
    %3 = vector.broadcast %cst_1 : f32 to vector<8x1xf32>
    %4 = arith.divf %2, %3 : vector<8x1xf32>
    %5 = vector.broadcast %4 : vector<8x1xf32> to vector<8x64xf32>
    %6 = arith.subf %0, %5 : vector<8x64xf32>
    %7 = arith.mulf %6, %6 : vector<8x64xf32>
    %cst_2 = arith.constant dense<0.000000e+00> : vector<8xf32>
    %8 = vector.multi_reduction <add>, %7, %cst_2 [1] : vector<8x64xf32> to vector<8xf32>
    %9 = vector.shape_cast %8 : vector<8xf32> to vector<8x1xf32>
    %cst_3 = arith.constant 6.400000e+01 : f32
    %10 = vector.broadcast %cst_3 : f32 to vector<8x1xf32>
    %11 = arith.divf %9, %10 : vector<8x1xf32>
    %cst_4 = arith.constant 9.99999974E-6 : f32
    %12 = vector.broadcast %cst_4 : f32 to vector<8x1xf32>
    %13 = arith.addf %11, %12 : vector<8x1xf32>
    %14 = math.rsqrt %13 : vector<8x1xf32>
    %15 = vector.broadcast %14 : vector<8x1xf32> to vector<8x64xf32>
    %16 = arith.mulf %6, %15 : vector<8x64xf32>
    %17 = arith.truncf %16 : vector<8x64xf32> to vector<8x64xbf16>
    %c0_5 = arith.constant 0 : index
    %c0_6 = arith.constant 0 : index
    %18 = vector.load %arg2[%c0_5, %c0_6] : memref<64x256xbf16, #tpu.memory_space<vmem>>, vector<64x256xbf16>
    %cst_7 = arith.constant dense<0.000000e+00> : vector<8x256xf32>
    %19 = tpu.matmul %17, %18, %cst_7 {dimension_numbers = #tpu.dot_dimension_numbers<[1], [0], [0], [1], [0, 0, 1, 1], [], []>} : vector<8x64xbf16>, vector<64x256xbf16>, vector<8x256xf32> -> vector<8x256xf32>
    %c0_8 = arith.constant 0 : index
    %c0_9 = arith.constant 0 : index
    %20 = vector.load %arg3[%c0_8, %c0_9] : memref<1x256xf32, #tpu.memory_space<vmem>>, vector<1x256xf32>
    %21 = vector.broadcast %20 : vector<1x256xf32> to vector<8x256xf32>
    %22 = arith.addf %19, %21 : vector<8x256xf32>
    %c0_10 = arith.constant 0 : index
    %c0_11 = arith.constant 0 : index
    %23 = vector.load %arg4[%c0_10, %c0_11] : memref<8x256xf32, #tpu.memory_space<vmem>>, vector<8x256xf32>
    tpu.vector_store %arg4[%c0_10, %c0_11], %22 {strides = array<i32>} : memref<8x256xf32, #tpu.memory_space<vmem>>, vector<8x256xf32>,
    return
  }
  func.func @transform_0(%arg0: i32) -> (i32, i32) {
    %c0_i32 = arith.constant 0 : i32
    %c0_i32_0 = arith.constant 0 : i32
    return %arg0, %c0_i32 : i32, i32
  }
  func.func @transform_1(%arg0: i32) -> (i32, i32) {
    %c0_i32 = arith.constant 0 : i32
    %c0_i32_0 = arith.constant 0 : i32
    %c0_i32_1 = arith.constant 0 : i32
    return %c0_i32, %c0_i32_0 : i32, i32
  }
  func.func @transform_2(%arg0: i32) -> (i32, i32) {
    %c0_i32 = arith.constant 0 : i32
    %c0_i32_0 = arith.constant 0 : i32
    %c0_i32_1 = arith.constant 0 : i32
    return %c0_i32, %c0_i32_0 : i32, i32
  }
  func.func @transform_3(%arg0: i32) -> (i32, i32) {
    %c0_i32 = arith.constant 0 : i32
    %c0_i32_0 = arith.constant 0 : i32
    return %arg0, %c0_i32 : i32, i32
  }
}

module attributes {stable_mosaic.version = 11 : i64} {
  func.func @_dwconv3x3_silu_kernel(%arg0: i32, %arg1: memref<1x4x4x128xf32, #tpu.memory_space<vmem>>, %arg2: memref<3x3x128xf32, #tpu.memory_space<vmem>>, %arg3: memref<1x1x128xf32, #tpu.memory_space<vmem>>, %arg4: memref<1x2x2x128xf32, #tpu.memory_space<vmem>>) attributes {dimension_semantics = [#tpu.dimension_semantics<parallel>], iteration_bounds = array<i64: 2>, scalar_prefetch = 0 : i64, scratch_operands = 0 : i64, tpu.core_type = #tpu.core_type<tc>, window_params = [{transform_indices = @transform_0, window_bounds = array<i64: 1, 4, 4, 128>}, {pipeline_mode = #tpu.pipeline_mode<synchronous>, transform_indices = @transform_1, window_bounds = array<i64: 3, 3, 128>}, {pipeline_mode = #tpu.pipeline_mode<synchronous>, transform_indices = @transform_2, window_bounds = array<i64: 1, 1, 128>}, {transform_indices = @transform_3, window_bounds = array<i64: 1, 2, 2, 128>}]} {
    %cst = arith.constant 0.000000e+00 : f32
    %0 = vector.broadcast %cst : f32 to vector<2x2x128xf32>
    %c0 = arith.constant 0 : index
    %c0_0 = arith.constant 0 : index
    %c0_1 = arith.constant 0 : index
    %c0_2 = arith.constant 0 : index
    %1 = vector.load %arg1[%c0, %c0_0, %c0_1, %c0_2] : memref<1x4x4x128xf32, #tpu.memory_space<vmem>>, vector<1x2x2x128xf32>
    %2 = vector.shape_cast %1 : vector<1x2x2x128xf32> to vector<2x2x128xf32>
    %c0_3 = arith.constant 0 : index
    %c0_4 = arith.constant 0 : index
    %c0_5 = arith.constant 0 : index
    %3 = vector.load %arg2[%c0_3, %c0_4, %c0_5] : memref<3x3x128xf32, #tpu.memory_space<vmem>>, vector<1x1x128xf32>
    %4 = vector.shape_cast %3 : vector<1x1x128xf32> to vector<1x128xf32>
    %5 = vector.shape_cast %4 : vector<1x128xf32> to vector<1x1x128xf32>
    %6 = vector.broadcast %5 : vector<1x1x128xf32> to vector<2x2x128xf32>
    %7 = arith.mulf %2, %6 : vector<2x2x128xf32>
    %8 = arith.addf %0, %7 : vector<2x2x128xf32>
    %c0_6 = arith.constant 0 : index
    %c0_7 = arith.constant 0 : index
    %c1 = arith.constant 1 : index
    %c0_8 = arith.constant 0 : index
    %9 = vector.load %arg1[%c0_6, %c0_7, %c1, %c0_8] : memref<1x4x4x128xf32, #tpu.memory_space<vmem>>, vector<1x2x2x128xf32>
    %10 = vector.shape_cast %9 : vector<1x2x2x128xf32> to vector<2x2x128xf32>
    %c0_9 = arith.constant 0 : index
    %c1_10 = arith.constant 1 : index
    %c0_11 = arith.constant 0 : index
    %11 = vector.load %arg2[%c0_9, %c1_10, %c0_11] : memref<3x3x128xf32, #tpu.memory_space<vmem>>, vector<1x1x128xf32>
    %12 = vector.shape_cast %11 : vector<1x1x128xf32> to vector<1x128xf32>
    %13 = vector.shape_cast %12 : vector<1x128xf32> to vector<1x1x128xf32>
    %14 = vector.broadcast %13 : vector<1x1x128xf32> to vector<2x2x128xf32>
    %15 = arith.mulf %10, %14 : vector<2x2x128xf32>
    %16 = arith.addf %8, %15 : vector<2x2x128xf32>
    %c0_12 = arith.constant 0 : index
    %c0_13 = arith.constant 0 : index
    %c2 = arith.constant 2 : index
    %c0_14 = arith.constant 0 : index
    %17 = vector.load %arg1[%c0_12, %c0_13, %c2, %c0_14] : memref<1x4x4x128xf32, #tpu.memory_space<vmem>>, vector<1x2x2x128xf32>
    %18 = vector.shape_cast %17 : vector<1x2x2x128xf32> to vector<2x2x128xf32>
    %c0_15 = arith.constant 0 : index
    %c2_16 = arith.constant 2 : index
    %c0_17 = arith.constant 0 : index
    %19 = vector.load %arg2[%c0_15, %c2_16, %c0_17] : memref<3x3x128xf32, #tpu.memory_space<vmem>>, vector<1x1x128xf32>
    %20 = vector.shape_cast %19 : vector<1x1x128xf32> to vector<1x128xf32>
    %21 = vector.shape_cast %20 : vector<1x128xf32> to vector<1x1x128xf32>
    %22 = vector.broadcast %21 : vector<1x1x128xf32> to vector<2x2x128xf32>
    %23 = arith.mulf %18, %22 : vector<2x2x128xf32>
    %24 = arith.addf %16, %23 : vector<2x2x128xf32>
    %c0_18 = arith.constant 0 : index
    %c1_19 = arith.constant 1 : index
    %c0_20 = arith.constant 0 : index
    %c0_21 = arith.constant 0 : index
    %25 = vector.load %arg1[%c0_18, %c1_19, %c0_20, %c0_21] : memref<1x4x4x128xf32, #tpu.memory_space<vmem>>, vector<1x2x2x128xf32>
    %26 = vector.shape_cast %25 : vector<1x2x2x128xf32> to vector<2x2x128xf32>
    %c1_22 = arith.constant 1 : index
    %c0_23 = arith.constant 0 : index
    %c0_24 = arith.constant 0 : index
    %27 = vector.load %arg2[%c1_22, %c0_23, %c0_24] : memref<3x3x128xf32, #tpu.memory_space<vmem>>, vector<1x1x128xf32>
    %28 = vector.shape_cast %27 : vector<1x1x128xf32> to vector<1x128xf32>
    %29 = vector.shape_cast %28 : vector<1x128xf32> to vector<1x1x128xf32>
    %30 = vector.broadcast %29 : vector<1x1x128xf32> to vector<2x2x128xf32>
    %31 = arith.mulf %26, %30 : vector<2x2x128xf32>
    %32 = arith.addf %24, %31 : vector<2x2x128xf32>
    %c0_25 = arith.constant 0 : index
    %c1_26 = arith.constant 1 : index
    %c1_27 = arith.constant 1 : index
    %c0_28 = arith.constant 0 : index
    %33 = vector.load %arg1[%c0_25, %c1_26, %c1_27, %c0_28] : memref<1x4x4x128xf32, #tpu.memory_space<vmem>>, vector<1x2x2x128xf32>
    %34 = vector.shape_cast %33 : vector<1x2x2x128xf32> to vector<2x2x128xf32>
    %c1_29 = arith.constant 1 : index
    %c1_30 = arith.constant 1 : index
    %c0_31 = arith.constant 0 : index
    %35 = vector.load %arg2[%c1_29, %c1_30, %c0_31] : memref<3x3x128xf32, #tpu.memory_space<vmem>>, vector<1x1x128xf32>
    %36 = vector.shape_cast %35 : vector<1x1x128xf32> to vector<1x128xf32>
    %37 = vector.shape_cast %36 : vector<1x128xf32> to vector<1x1x128xf32>
    %38 = vector.broadcast %37 : vector<1x1x128xf32> to vector<2x2x128xf32>
    %39 = arith.mulf %34, %38 : vector<2x2x128xf32>
    %40 = arith.addf %32, %39 : vector<2x2x128xf32>
    %c0_32 = arith.constant 0 : index
    %c1_33 = arith.constant 1 : index
    %c2_34 = arith.constant 2 : index
    %c0_35 = arith.constant 0 : index
    %41 = vector.load %arg1[%c0_32, %c1_33, %c2_34, %c0_35] : memref<1x4x4x128xf32, #tpu.memory_space<vmem>>, vector<1x2x2x128xf32>
    %42 = vector.shape_cast %41 : vector<1x2x2x128xf32> to vector<2x2x128xf32>
    %c1_36 = arith.constant 1 : index
    %c2_37 = arith.constant 2 : index
    %c0_38 = arith.constant 0 : index
    %43 = vector.load %arg2[%c1_36, %c2_37, %c0_38] : memref<3x3x128xf32, #tpu.memory_space<vmem>>, vector<1x1x128xf32>
    %44 = vector.shape_cast %43 : vector<1x1x128xf32> to vector<1x128xf32>
    %45 = vector.shape_cast %44 : vector<1x128xf32> to vector<1x1x128xf32>
    %46 = vector.broadcast %45 : vector<1x1x128xf32> to vector<2x2x128xf32>
    %47 = arith.mulf %42, %46 : vector<2x2x128xf32>
    %48 = arith.addf %40, %47 : vector<2x2x128xf32>
    %c0_39 = arith.constant 0 : index
    %c2_40 = arith.constant 2 : index
    %c0_41 = arith.constant 0 : index
    %c0_42 = arith.constant 0 : index
    %49 = vector.load %arg1[%c0_39, %c2_40, %c0_41, %c0_42] : memref<1x4x4x128xf32, #tpu.memory_space<vmem>>, vector<1x2x2x128xf32>
    %50 = vector.shape_cast %49 : vector<1x2x2x128xf32> to vector<2x2x128xf32>
    %c2_43 = arith.constant 2 : index
    %c0_44 = arith.constant 0 : index
    %c0_45 = arith.constant 0 : index
    %51 = vector.load %arg2[%c2_43, %c0_44, %c0_45] : memref<3x3x128xf32, #tpu.memory_space<vmem>>, vector<1x1x128xf32>
    %52 = vector.shape_cast %51 : vector<1x1x128xf32> to vector<1x128xf32>
    %53 = vector.shape_cast %52 : vector<1x128xf32> to vector<1x1x128xf32>
    %54 = vector.broadcast %53 : vector<1x1x128xf32> to vector<2x2x128xf32>
    %55 = arith.mulf %50, %54 : vector<2x2x128xf32>
    %56 = arith.addf %48, %55 : vector<2x2x128xf32>
    %c0_46 = arith.constant 0 : index
    %c2_47 = arith.constant 2 : index
    %c1_48 = arith.constant 1 : index
    %c0_49 = arith.constant 0 : index
    %57 = vector.load %arg1[%c0_46, %c2_47, %c1_48, %c0_49] : memref<1x4x4x128xf32, #tpu.memory_space<vmem>>, vector<1x2x2x128xf32>
    %58 = vector.shape_cast %57 : vector<1x2x2x128xf32> to vector<2x2x128xf32>
    %c2_50 = arith.constant 2 : index
    %c1_51 = arith.constant 1 : index
    %c0_52 = arith.constant 0 : index
    %59 = vector.load %arg2[%c2_50, %c1_51, %c0_52] : memref<3x3x128xf32, #tpu.memory_space<vmem>>, vector<1x1x128xf32>
    %60 = vector.shape_cast %59 : vector<1x1x128xf32> to vector<1x128xf32>
    %61 = vector.shape_cast %60 : vector<1x128xf32> to vector<1x1x128xf32>
    %62 = vector.broadcast %61 : vector<1x1x128xf32> to vector<2x2x128xf32>
    %63 = arith.mulf %58, %62 : vector<2x2x128xf32>
    %64 = arith.addf %56, %63 : vector<2x2x128xf32>
    %c0_53 = arith.constant 0 : index
    %c2_54 = arith.constant 2 : index
    %c2_55 = arith.constant 2 : index
    %c0_56 = arith.constant 0 : index
    %65 = vector.load %arg1[%c0_53, %c2_54, %c2_55, %c0_56] : memref<1x4x4x128xf32, #tpu.memory_space<vmem>>, vector<1x2x2x128xf32>
    %66 = vector.shape_cast %65 : vector<1x2x2x128xf32> to vector<2x2x128xf32>
    %c2_57 = arith.constant 2 : index
    %c2_58 = arith.constant 2 : index
    %c0_59 = arith.constant 0 : index
    %67 = vector.load %arg2[%c2_57, %c2_58, %c0_59] : memref<3x3x128xf32, #tpu.memory_space<vmem>>, vector<1x1x128xf32>
    %68 = vector.shape_cast %67 : vector<1x1x128xf32> to vector<1x128xf32>
    %69 = vector.shape_cast %68 : vector<1x128xf32> to vector<1x1x128xf32>
    %70 = vector.broadcast %69 : vector<1x1x128xf32> to vector<2x2x128xf32>
    %71 = arith.mulf %66, %70 : vector<2x2x128xf32>
    %72 = arith.addf %64, %71 : vector<2x2x128xf32>
    %c0_60 = arith.constant 0 : index
    %c0_61 = arith.constant 0 : index
    %c0_62 = arith.constant 0 : index
    %73 = vector.load %arg3[%c0_60, %c0_61, %c0_62] : memref<1x1x128xf32, #tpu.memory_space<vmem>>, vector<1x1x128xf32>
    %74 = vector.broadcast %73 : vector<1x1x128xf32> to vector<2x2x128xf32>
    %75 = arith.addf %72, %74 : vector<2x2x128xf32>
    %cst_63 = arith.constant 0.000000e+00 : f32
    %76 = vector.broadcast %cst_63 : f32 to vector<2x2x128xf32>
    %77 = arith.subf %76, %75 : vector<2x2x128xf32>
    %78 = math.exp %77 : vector<2x2x128xf32>
    %cst_64 = arith.constant 1.000000e+00 : f32
    %79 = vector.broadcast %cst_64 : f32 to vector<2x2x128xf32>
    %80 = arith.addf %79, %78 : vector<2x2x128xf32>
    %cst_65 = arith.constant 1.000000e+00 : f32
    %81 = vector.broadcast %cst_65 : f32 to vector<2x2x128xf32>
    %82 = arith.divf %81, %80 : vector<2x2x128xf32>
    %83 = arith.mulf %75, %82 : vector<2x2x128xf32>
    %c0_66 = arith.constant 0 : index
    %c0_67 = arith.constant 0 : index
    %c0_68 = arith.constant 0 : index
    %c0_69 = arith.constant 0 : index
    %84 = vector.load %arg4[%c0_66, %c0_67, %c0_68, %c0_69] : memref<1x2x2x128xf32, #tpu.memory_space<vmem>>, vector<1x2x2x128xf32>
    %85 = vector.shape_cast %84 : vector<1x2x2x128xf32> to vector<2x2x128xf32>
    %86 = vector.shape_cast %83 : vector<2x2x128xf32> to vector<1x2x2x128xf32>
    tpu.vector_store %arg4[%c0_66, %c0_67, %c0_68, %c0_69], %86 {strides = array<i32>} : memref<1x2x2x128xf32, #tpu.memory_space<vmem>>, vector<1x2x2x128xf32>,
    return
  }
  func.func @transform_0(%arg0: i32) -> (i32, i32, i32, i32) {
    %c0_i32 = arith.constant 0 : i32
    %c0_i32_0 = arith.constant 0 : i32
    %c0_i32_1 = arith.constant 0 : i32
    %c0_i32_2 = arith.constant 0 : i32
    return %arg0, %c0_i32, %c0_i32_0, %c0_i32_1 : i32, i32, i32, i32
  }
  func.func @transform_1(%arg0: i32) -> (i32, i32, i32) {
    %c0_i32 = arith.constant 0 : i32
    %c0_i32_0 = arith.constant 0 : i32
    %c0_i32_1 = arith.constant 0 : i32
    %c0_i32_2 = arith.constant 0 : i32
    return %c0_i32, %c0_i32_0, %c0_i32_1 : i32, i32, i32
  }
  func.func @transform_2(%arg0: i32) -> (i32, i32, i32) {
    %c0_i32 = arith.constant 0 : i32
    %c0_i32_0 = arith.constant 0 : i32
    %c0_i32_1 = arith.constant 0 : i32
    %c0_i32_2 = arith.constant 0 : i32
    return %c0_i32, %c0_i32_0, %c0_i32_1 : i32, i32, i32
  }
  func.func @transform_3(%arg0: i32) -> (i32, i32, i32, i32) {
    %c0_i32 = arith.constant 0 : i32
    %c0_i32_0 = arith.constant 0 : i32
    %c0_i32_1 = arith.constant 0 : i32
    %c0_i32_2 = arith.constant 0 : i32
    return %arg0, %c0_i32, %c0_i32_0, %c0_i32_1 : i32, i32, i32, i32
  }
}

module attributes {stable_mosaic.version = 11 : i64} {
  func.func @kernel(%arg0: i32, %arg1: memref<8x128xf32, #tpu.memory_space<vmem>>, %arg2: memref<128x80xbf16, #tpu.memory_space<vmem>>, %arg3: memref<8x80xf32, #tpu.memory_space<vmem>>) attributes {dimension_semantics = [#tpu.dimension_semantics<parallel>], iteration_bounds = array<i64: 1>, scalar_prefetch = 0 : i64, scratch_operands = 0 : i64, tpu.core_type = #tpu.core_type<tc>, window_params = [{transform_indices = @transform_0, window_bounds = array<i64: 8, 128>}, {pipeline_mode = #tpu.pipeline_mode<synchronous>, transform_indices = @transform_1, window_bounds = array<i64: 128, 80>}, {transform_indices = @transform_2, window_bounds = array<i64: 8, 80>}]} {
    %c0 = arith.constant 0 : index
    %c0_0 = arith.constant 0 : index
    %0 = vector.load %arg1[%c0, %c0_0] : memref<8x128xf32, #tpu.memory_space<vmem>>, vector<8x128xf32>
    %1 = arith.truncf %0 : vector<8x128xf32> to vector<8x128xbf16>
    %c0_1 = arith.constant 0 : index
    %c0_2 = arith.constant 0 : index
    %2 = vector.load %arg2[%c0_1, %c0_2] : memref<128x80xbf16, #tpu.memory_space<vmem>>, vector<128x80xbf16>
    %cst = arith.constant dense<0.000000e+00> : vector<8x80xf32>
    %3 = tpu.matmul %1, %2, %cst {dimension_numbers = #tpu.dot_dimension_numbers<[1], [0], [0], [1], [0, 0, 1, 1], [], []>} : vector<8x128xbf16>, vector<128x80xbf16>, vector<8x80xf32> -> vector<8x80xf32>
    %c0_3 = arith.constant 0 : index
    %c0_4 = arith.constant 0 : index
    %4 = vector.load %arg3[%c0_3, %c0_4] : memref<8x80xf32, #tpu.memory_space<vmem>>, vector<8x80xf32>
    tpu.vector_store %arg3[%c0_3, %c0_4], %3 {strides = array<i32>} : memref<8x80xf32, #tpu.memory_space<vmem>>, vector<8x80xf32>,
    return
  }
  func.func @transform_0(%arg0: i32) -> (i32, i32) {
    %c0_i32 = arith.constant 0 : i32
    %c0_i32_0 = arith.constant 0 : i32
    return %arg0, %c0_i32 : i32, i32
  }
  func.func @transform_1(%arg0: i32) -> (i32, i32) {
    %c0_i32 = arith.constant 0 : i32
    %c0_i32_0 = arith.constant 0 : i32
    %c0_i32_1 = arith.constant 0 : i32
    return %c0_i32, %c0_i32_0 : i32, i32
  }
  func.func @transform_2(%arg0: i32) -> (i32, i32) {
    %c0_i32 = arith.constant 0 : i32
    %c0_i32_0 = arith.constant 0 : i32
    return %arg0, %c0_i32 : i32, i32
  }
}

module attributes {stable_mosaic.version = 11 : i64} {
  func.func @kernel(%arg0: i32, %arg1: memref<8x16xf32, #tpu.memory_space<vmem>>, %arg2: memref<16x512xbf16, #tpu.memory_space<vmem>>, %arg3: memref<1x512xf32, #tpu.memory_space<vmem>>, %arg4: memref<8x512xf32, #tpu.memory_space<vmem>>) attributes {dimension_semantics = [#tpu.dimension_semantics<parallel>], iteration_bounds = array<i64: 1>, scalar_prefetch = 0 : i64, scratch_operands = 0 : i64, tpu.core_type = #tpu.core_type<tc>, window_params = [{transform_indices = @transform_0, window_bounds = array<i64: 8, 16>}, {pipeline_mode = #tpu.pipeline_mode<synchronous>, transform_indices = @transform_1, window_bounds = array<i64: 16, 512>}, {pipeline_mode = #tpu.pipeline_mode<synchronous>, transform_indices = @transform_2, window_bounds = array<i64: 1, 512>}, {transform_indices = @transform_3, window_bounds = array<i64: 8, 512>}]} {
    %c0 = arith.constant 0 : index
    %c0_0 = arith.constant 0 : index
    %0 = vector.load %arg1[%c0, %c0_0] : memref<8x16xf32, #tpu.memory_space<vmem>>, vector<8x16xf32>
    %1 = arith.truncf %0 : vector<8x16xf32> to vector<8x16xbf16>
    %c0_1 = arith.constant 0 : index
    %c0_2 = arith.constant 0 : index
    %2 = vector.load %arg2[%c0_1, %c0_2] : memref<16x512xbf16, #tpu.memory_space<vmem>>, vector<16x512xbf16>
    %cst = arith.constant dense<0.000000e+00> : vector<8x512xf32>
    %3 = tpu.matmul %1, %2, %cst {dimension_numbers = #tpu.dot_dimension_numbers<[1], [0], [0], [1], [0, 0, 1, 1], [], []>} : vector<8x16xbf16>, vector<16x512xbf16>, vector<8x512xf32> -> vector<8x512xf32>
    %c0_3 = arith.constant 0 : index
    %c0_4 = arith.constant 0 : index
    %4 = vector.load %arg3[%c0_3, %c0_4] : memref<1x512xf32, #tpu.memory_space<vmem>>, vector<1x512xf32>
    %5 = vector.broadcast %4 : vector<1x512xf32> to vector<8x512xf32>
    %6 = arith.addf %3, %5 : vector<8x512xf32>
    %cst_5 = arith.constant 0.000000e+00 : f32
    %7 = vector.broadcast %cst_5 : f32 to vector<8x512xf32>
    %8 = arith.maximumf %6, %7 : vector<8x512xf32>
    %9 = math.absf %6 : vector<8x512xf32>
    %cst_6 = arith.constant 0.000000e+00 : f32
    %10 = vector.broadcast %cst_6 : f32 to vector<8x512xf32>
    %11 = arith.subf %10, %9 : vector<8x512xf32>
    %12 = math.exp %11 : vector<8x512xf32>
    %cst_7 = arith.constant 1.000000e+00 : f32
    %13 = vector.broadcast %cst_7 : f32 to vector<8x512xf32>
    %14 = arith.addf %13, %12 : vector<8x512xf32>
    %15 = math.log %14 : vector<8x512xf32>
    %16 = arith.addf %8, %15 : vector<8x512xf32>
    %c0_8 = arith.constant 0 : index
    %c0_9 = arith.constant 0 : index
    %17 = vector.load %arg4[%c0_8, %c0_9] : memref<8x512xf32, #tpu.memory_space<vmem>>, vector<8x512xf32>
    tpu.vector_store %arg4[%c0_8, %c0_9], %16 {strides = array<i32>} : memref<8x512xf32, #tpu.memory_space<vmem>>, vector<8x512xf32>,
    return
  }
  func.func @transform_0(%arg0: i32) -> (i32, i32) {
    %c0_i32 = arith.constant 0 : i32
    %c0_i32_0 = arith.constant 0 : i32
    return %arg0, %c0_i32 : i32, i32
  }
  func.func @transform_1(%arg0: i32) -> (i32, i32) {
    %c0_i32 = arith.constant 0 : i32
    %c0_i32_0 = arith.constant 0 : i32
    %c0_i32_1 = arith.constant 0 : i32
    return %c0_i32, %c0_i32_0 : i32, i32
  }
  func.func @transform_2(%arg0: i32) -> (i32, i32) {
    %c0_i32 = arith.constant 0 : i32
    %c0_i32_0 = arith.constant 0 : i32
    %c0_i32_1 = arith.constant 0 : i32
    return %c0_i32, %c0_i32_0 : i32, i32
  }
  func.func @transform_3(%arg0: i32) -> (i32, i32) {
    %c0_i32 = arith.constant 0 : i32
    %c0_i32_0 = arith.constant 0 : i32
    return %arg0, %c0_i32 : i32, i32
  }
}

module attributes {stable_mosaic.version = 11 : i64} {
  func.func @kernel(%arg0: i32, %arg1: memref<1x4x4x1x128xf32, #tpu.memory_space<vmem>>, %arg2: memref<1x4x4x1x128xf32, #tpu.memory_space<vmem>>, %arg3: memref<1x4x4x8x1xf32, #tpu.memory_space<vmem>>, %arg4: memref<1x4x4x8x1xf32, #tpu.memory_space<vmem>>, %arg5: memref<4x8x128xf32, #tpu.memory_space<vmem>>, %arg6: memref<4x1x128xf32, #tpu.memory_space<vmem>>, %arg7: memref<1x4x4x1x128xf32, #tpu.memory_space<vmem>>) attributes {dimension_semantics = [#tpu.dimension_semantics<parallel>], iteration_bounds = array<i64: 2>, scalar_prefetch = 0 : i64, scratch_operands = 0 : i64, tpu.core_type = #tpu.core_type<tc>, window_params = [{transform_indices = @transform_0, window_bounds = array<i64: 1, 4, 4, 1, 128>}, {transform_indices = @transform_1, window_bounds = array<i64: 1, 4, 4, 1, 128>}, {transform_indices = @transform_2, window_bounds = array<i64: 1, 4, 4, 8, 1>}, {transform_indices = @transform_3, window_bounds = array<i64: 1, 4, 4, 8, 1>}, {pipeline_mode = #tpu.pipeline_mode<synchronous>, transform_indices = @transform_4, window_bounds = array<i64: 4, 8, 128>}, {pipeline_mode = #tpu.pipeline_mode<synchronous>, transform_indices = @transform_5, window_bounds = array<i64: 4, 1, 128>}, {transform_indices = @transform_6, window_bounds = array<i64: 1, 4, 4, 1, 128>}]} {
    %c0 = arith.constant 0 : index
    %c0_0 = arith.constant 0 : index
    %c0_1 = arith.constant 0 : index
    %0 = vector.load %arg5[%c0, %c0_0, %c0_1] : memref<4x8x128xf32, #tpu.memory_space<vmem>>, vector<4x8x128xf32>
    %c0_2 = arith.constant 0 : index
    %c0_3 = arith.constant 0 : index
    %c0_4 = arith.constant 0 : index
    %1 = vector.load %arg6[%c0_2, %c0_3, %c0_4] : memref<4x1x128xf32, #tpu.memory_space<vmem>>, vector<4x1x128xf32>
    %cst = arith.constant 0.000000e+00 : f32
    %2 = vector.broadcast %cst : f32 to vector<4x8x128xf32>
    %c0_i32 = arith.constant 0 : i32
    %c4_i32 = arith.constant 4 : i32
    %3 = arith.muli %c0_i32, %c4_i32 : i32
    %4 = tpu.assume_multiple %3, 4 : i32
    %c0_5 = arith.constant 0 : index
    %5 = arith.index_cast %4 : i32 to index
    %c0_6 = arith.constant 0 : index
    %c0_7 = arith.constant 0 : index
    %c0_8 = arith.constant 0 : index
    %6 = vector.load %arg1[%c0_5, %5, %c0_6, %c0_7, %c0_8] : memref<1x4x4x1x128xf32, #tpu.memory_space<vmem>>, vector<1x4x4x1x128xf32>
    %7 = vector.shape_cast %6 : vector<1x4x4x1x128xf32> to vector<4x4x1x128xf32>
    %c0_9 = arith.constant 0 : index
    %8 = arith.index_cast %4 : i32 to index
    %c0_10 = arith.constant 0 : index
    %c0_11 = arith.constant 0 : index
    %c0_12 = arith.constant 0 : index
    %9 = vector.load %arg2[%c0_9, %8, %c0_10, %c0_11, %c0_12] : memref<1x4x4x1x128xf32, #tpu.memory_space<vmem>>, vector<1x4x4x1x128xf32>
    %10 = vector.shape_cast %9 : vector<1x4x4x1x128xf32> to vector<4x4x1x128xf32>
    %c0_13 = arith.constant 0 : index
    %11 = arith.index_cast %4 : i32 to index
    %c0_14 = arith.constant 0 : index
    %c0_15 = arith.constant 0 : index
    %c0_16 = arith.constant 0 : index
    %12 = vector.load %arg3[%c0_13, %11, %c0_14, %c0_15, %c0_16] : memref<1x4x4x8x1xf32, #tpu.memory_space<vmem>>, vector<1x4x4x8x1xf32>
    %13 = vector.shape_cast %12 : vector<1x4x4x8x1xf32> to vector<4x4x8x1xf32>
    %c0_17 = arith.constant 0 : index
    %14 = arith.index_cast %4 : i32 to index
    %c0_18 = arith.constant 0 : index
    %c0_19 = arith.constant 0 : index
    %c0_20 = arith.constant 0 : index
    %15 = vector.load %arg4[%c0_17, %14, %c0_18, %c0_19, %c0_20] : memref<1x4x4x8x1xf32, #tpu.memory_space<vmem>>, vector<1x4x4x8x1xf32>
    %16 = vector.shape_cast %15 : vector<1x4x4x8x1xf32> to vector<4x4x8x1xf32>
    %17 = vector.extract_strided_slice %7 {offsets = [0, 0, 0, 0], sizes = [1, 4, 1, 128], strides = [1, 1, 1, 1]} : vector<4x4x1x128xf32> to vector<1x4x1x128xf32>
    %18 = vector.shape_cast %17 : vector<1x4x1x128xf32> to vector<4x1x128xf32>
    %19 = vector.extract_strided_slice %10 {offsets = [0, 0, 0, 0], sizes = [1, 4, 1, 128], strides = [1, 1, 1, 1]} : vector<4x4x1x128xf32> to vector<1x4x1x128xf32>
    %20 = vector.shape_cast %19 : vector<1x4x1x128xf32> to vector<4x1x128xf32>
    %21 = vector.extract_strided_slice %13 {offsets = [0, 0, 0, 0], sizes = [1, 4, 8, 1], strides = [1, 1, 1, 1]} : vector<4x4x8x1xf32> to vector<1x4x8x1xf32>
    %22 = vector.shape_cast %21 : vector<1x4x8x1xf32> to vector<4x8x1xf32>
    %23 = vector.extract_strided_slice %16 {offsets = [0, 0, 0, 0], sizes = [1, 4, 8, 1], strides = [1, 1, 1, 1]} : vector<4x4x8x1xf32> to vector<1x4x8x1xf32>
    %24 = vector.shape_cast %23 : vector<1x4x8x1xf32> to vector<4x8x1xf32>
    %25 = vector.broadcast %20 : vector<4x1x128xf32> to vector<4x8x128xf32>
    %26 = arith.mulf %0, %25 : vector<4x8x128xf32>
    %27 = math.exp %26 : vector<4x8x128xf32>
    %28 = arith.mulf %27, %2 : vector<4x8x128xf32>
    %29 = arith.mulf %20, %18 : vector<4x1x128xf32>
    %30 = vector.broadcast %22 : vector<4x8x1xf32> to vector<4x8x128xf32>
    %31 = vector.broadcast %29 : vector<4x1x128xf32> to vector<4x8x128xf32>
    %32 = arith.mulf %30, %31 : vector<4x8x128xf32>
    %33 = arith.addf %28, %32 : vector<4x8x128xf32>
    %34 = vector.broadcast %24 : vector<4x8x1xf32> to vector<4x8x128xf32>
    %35 = arith.mulf %34, %33 : vector<4x8x128xf32>
    %cst_21 = arith.constant dense<0.000000e+00> : vector<4x128xf32>
    %36 = vector.multi_reduction <add>, %35, %cst_21 [1] : vector<4x8x128xf32> to vector<4x128xf32>
    %37 = vector.shape_cast %36 : vector<4x128xf32> to vector<4x1x128xf32>
    %38 = arith.mulf %1, %18 : vector<4x1x128xf32>
    %39 = arith.addf %37, %38 : vector<4x1x128xf32>
    %40 = vector.extract_strided_slice %7 {offsets = [1, 0, 0, 0], sizes = [1, 4, 1, 128], strides = [1, 1, 1, 1]} : vector<4x4x1x128xf32> to vector<1x4x1x128xf32>
    %41 = vector.shape_cast %40 : vector<1x4x1x128xf32> to vector<4x1x128xf32>
    %42 = vector.extract_strided_slice %10 {offsets = [1, 0, 0, 0], sizes = [1, 4, 1, 128], strides = [1, 1, 1, 1]} : vector<4x4x1x128xf32> to vector<1x4x1x128xf32>
    %43 = vector.shape_cast %42 : vector<1x4x1x128xf32> to vector<4x1x128xf32>
    %44 = vector.extract_strided_slice %13 {offsets = [1, 0, 0, 0], sizes = [1, 4, 8, 1], strides = [1, 1, 1, 1]} : vector<4x4x8x1xf32> to vector<1x4x8x1xf32>
    %45 = vector.shape_cast %44 : vector<1x4x8x1xf32> to vector<4x8x1xf32>
    %46 = vector.extract_strided_slice %16 {offsets = [1, 0, 0, 0], sizes = [1, 4, 8, 1], strides = [1, 1, 1, 1]} : vector<4x4x8x1xf32> to vector<1x4x8x1xf32>
    %47 = vector.shape_cast %46 : vector<1x4x8x1xf32> to vector<4x8x1xf32>
    %48 = vector.broadcast %43 : vector<4x1x128xf32> to vector<4x8x128xf32>
    %49 = arith.mulf %0, %48 : vector<4x8x128xf32>
    %50 = math.exp %49 : vector<4x8x128xf32>
    %51 = arith.mulf %50, %33 : vector<4x8x128xf32>
    %52 = arith.mulf %43, %41 : vector<4x1x128xf32>
    %53 = vector.broadcast %45 : vector<4x8x1xf32> to vector<4x8x128xf32>
    %54 = vector.broadcast %52 : vector<4x1x128xf32> to vector<4x8x128xf32>
    %55 = arith.mulf %53, %54 : vector<4x8x128xf32>
    %56 = arith.addf %51, %55 : vector<4x8x128xf32>
    %57 = vector.broadcast %47 : vector<4x8x1xf32> to vector<4x8x128xf32>
    %58 = arith.mulf %57, %56 : vector<4x8x128xf32>
    %cst_22 = arith.constant dense<0.000000e+00> : vector<4x128xf32>
    %59 = vector.multi_reduction <add>, %58, %cst_22 [1] : vector<4x8x128xf32> to vector<4x128xf32>
    %60 = vector.shape_cast %59 : vector<4x128xf32> to vector<4x1x128xf32>
    %61 = arith.mulf %1, %41 : vector<4x1x128xf32>
    %62 = arith.addf %60, %61 : vector<4x1x128xf32>
    %63 = vector.extract_strided_slice %7 {offsets = [2, 0, 0, 0], sizes = [1, 4, 1, 128], strides = [1, 1, 1, 1]} : vector<4x4x1x128xf32> to vector<1x4x1x128xf32>
    %64 = vector.shape_cast %63 : vector<1x4x1x128xf32> to vector<4x1x128xf32>
    %65 = vector.extract_strided_slice %10 {offsets = [2, 0, 0, 0], sizes = [1, 4, 1, 128], strides = [1, 1, 1, 1]} : vector<4x4x1x128xf32> to vector<1x4x1x128xf32>
    %66 = vector.shape_cast %65 : vector<1x4x1x128xf32> to vector<4x1x128xf32>
    %67 = vector.extract_strided_slice %13 {offsets = [2, 0, 0, 0], sizes = [1, 4, 8, 1], strides = [1, 1, 1, 1]} : vector<4x4x8x1xf32> to vector<1x4x8x1xf32>
    %68 = vector.shape_cast %67 : vector<1x4x8x1xf32> to vector<4x8x1xf32>
    %69 = vector.extract_strided_slice %16 {offsets = [2, 0, 0, 0], sizes = [1, 4, 8, 1], strides = [1, 1, 1, 1]} : vector<4x4x8x1xf32> to vector<1x4x8x1xf32>
    %70 = vector.shape_cast %69 : vector<1x4x8x1xf32> to vector<4x8x1xf32>
    %71 = vector.broadcast %66 : vector<4x1x128xf32> to vector<4x8x128xf32>
    %72 = arith.mulf %0, %71 : vector<4x8x128xf32>
    %73 = math.exp %72 : vector<4x8x128xf32>
    %74 = arith.mulf %73, %56 : vector<4x8x128xf32>
    %75 = arith.mulf %66, %64 : vector<4x1x128xf32>
    %76 = vector.broadcast %68 : vector<4x8x1xf32> to vector<4x8x128xf32>
    %77 = vector.broadcast %75 : vector<4x1x128xf32> to vector<4x8x128xf32>
    %78 = arith.mulf %76, %77 : vector<4x8x128xf32>
    %79 = arith.addf %74, %78 : vector<4x8x128xf32>
    %80 = vector.broadcast %70 : vector<4x8x1xf32> to vector<4x8x128xf32>
    %81 = arith.mulf %80, %79 : vector<4x8x128xf32>
    %cst_23 = arith.constant dense<0.000000e+00> : vector<4x128xf32>
    %82 = vector.multi_reduction <add>, %81, %cst_23 [1] : vector<4x8x128xf32> to vector<4x128xf32>
    %83 = vector.shape_cast %82 : vector<4x128xf32> to vector<4x1x128xf32>
    %84 = arith.mulf %1, %64 : vector<4x1x128xf32>
    %85 = arith.addf %83, %84 : vector<4x1x128xf32>
    %86 = vector.extract_strided_slice %7 {offsets = [3, 0, 0, 0], sizes = [1, 4, 1, 128], strides = [1, 1, 1, 1]} : vector<4x4x1x128xf32> to vector<1x4x1x128xf32>
    %87 = vector.shape_cast %86 : vector<1x4x1x128xf32> to vector<4x1x128xf32>
    %88 = vector.extract_strided_slice %10 {offsets = [3, 0, 0, 0], sizes = [1, 4, 1, 128], strides = [1, 1, 1, 1]} : vector<4x4x1x128xf32> to vector<1x4x1x128xf32>
    %89 = vector.shape_cast %88 : vector<1x4x1x128xf32> to vector<4x1x128xf32>
    %90 = vector.extract_strided_slice %13 {offsets = [3, 0, 0, 0], sizes = [1, 4, 8, 1], strides = [1, 1, 1, 1]} : vector<4x4x8x1xf32> to vector<1x4x8x1xf32>
    %91 = vector.shape_cast %90 : vector<1x4x8x1xf32> to vector<4x8x1xf32>
    %92 = vector.extract_strided_slice %16 {offsets = [3, 0, 0, 0], sizes = [1, 4, 8, 1], strides = [1, 1, 1, 1]} : vector<4x4x8x1xf32> to vector<1x4x8x1xf32>
    %93 = vector.shape_cast %92 : vector<1x4x8x1xf32> to vector<4x8x1xf32>
    %94 = vector.broadcast %89 : vector<4x1x128xf32> to vector<4x8x128xf32>
    %95 = arith.mulf %0, %94 : vector<4x8x128xf32>
    %96 = math.exp %95 : vector<4x8x128xf32>
    %97 = arith.mulf %96, %79 : vector<4x8x128xf32>
    %98 = arith.mulf %89, %87 : vector<4x1x128xf32>
    %99 = vector.broadcast %91 : vector<4x8x1xf32> to vector<4x8x128xf32>
    %100 = vector.broadcast %98 : vector<4x1x128xf32> to vector<4x8x128xf32>
    %101 = arith.mulf %99, %100 : vector<4x8x128xf32>
    %102 = arith.addf %97, %101 : vector<4x8x128xf32>
    %103 = vector.broadcast %93 : vector<4x8x1xf32> to vector<4x8x128xf32>
    %104 = arith.mulf %103, %102 : vector<4x8x128xf32>
    %cst_24 = arith.constant dense<0.000000e+00> : vector<4x128xf32>
    %105 = vector.multi_reduction <add>, %104, %cst_24 [1] : vector<4x8x128xf32> to vector<4x128xf32>
    %106 = vector.shape_cast %105 : vector<4x128xf32> to vector<4x1x128xf32>
    %107 = arith.mulf %1, %87 : vector<4x1x128xf32>
    %108 = arith.addf %106, %107 : vector<4x1x128xf32>
    %109 = vector.shape_cast %39 : vector<4x1x128xf32> to vector<1x4x1x128xf32>
    %110 = vector.shape_cast %62 : vector<4x1x128xf32> to vector<1x4x1x128xf32>
    %111 = vector.shape_cast %85 : vector<4x1x128xf32> to vector<1x4x1x128xf32>
    %112 = vector.shape_cast %108 : vector<4x1x128xf32> to vector<1x4x1x128xf32>
    %113 = tpu.concatenate %109, %110, %111, %112 in 0 : vector<1x4x1x128xf32>, vector<1x4x1x128xf32>, vector<1x4x1x128xf32>, vector<1x4x1x128xf32> -> vector<4x4x1x128xf32>
    %c0_25 = arith.constant 0 : index
    %114 = arith.index_cast %4 : i32 to index
    %c0_26 = arith.constant 0 : index
    %c0_27 = arith.constant 0 : index
    %c0_28 = arith.constant 0 : index
    %115 = vector.load %arg7[%c0_25, %114, %c0_26, %c0_27, %c0_28] : memref<1x4x4x1x128xf32, #tpu.memory_space<vmem>>, vector<1x4x4x1x128xf32>
    %116 = vector.shape_cast %115 : vector<1x4x4x1x128xf32> to vector<4x4x1x128xf32>
    %117 = vector.shape_cast %113 : vector<4x4x1x128xf32> to vector<1x4x4x1x128xf32>
    tpu.vector_store %arg7[%c0_25, %114, %c0_26, %c0_27, %c0_28], %117 {strides = array<i32>} : memref<1x4x4x1x128xf32, #tpu.memory_space<vmem>>, vector<1x4x4x1x128xf32>,
    %c1_i32 = arith.constant 1 : i32
    return
  }
  func.func @transform_0(%arg0: i32) -> (i32, i32, i32, i32, i32) {
    %c0_i32 = arith.constant 0 : i32
    %c0_i32_0 = arith.constant 0 : i32
    %c0_i32_1 = arith.constant 0 : i32
    %c0_i32_2 = arith.constant 0 : i32
    %c0_i32_3 = arith.constant 0 : i32
    return %arg0, %c0_i32, %c0_i32_0, %c0_i32_1, %c0_i32_2 : i32, i32, i32, i32, i32
  }
  func.func @transform_1(%arg0: i32) -> (i32, i32, i32, i32, i32) {
    %c0_i32 = arith.constant 0 : i32
    %c0_i32_0 = arith.constant 0 : i32
    %c0_i32_1 = arith.constant 0 : i32
    %c0_i32_2 = arith.constant 0 : i32
    %c0_i32_3 = arith.constant 0 : i32
    return %arg0, %c0_i32, %c0_i32_0, %c0_i32_1, %c0_i32_2 : i32, i32, i32, i32, i32
  }
  func.func @transform_2(%arg0: i32) -> (i32, i32, i32, i32, i32) {
    %c0_i32 = arith.constant 0 : i32
    %c0_i32_0 = arith.constant 0 : i32
    %c0_i32_1 = arith.constant 0 : i32
    %c0_i32_2 = arith.constant 0 : i32
    %c0_i32_3 = arith.constant 0 : i32
    return %arg0, %c0_i32, %c0_i32_0, %c0_i32_1, %c0_i32_2 : i32, i32, i32, i32, i32
  }
  func.func @transform_3(%arg0: i32) -> (i32, i32, i32, i32, i32) {
    %c0_i32 = arith.constant 0 : i32
    %c0_i32_0 = arith.constant 0 : i32
    %c0_i32_1 = arith.constant 0 : i32
    %c0_i32_2 = arith.constant 0 : i32
    %c0_i32_3 = arith.constant 0 : i32
    return %arg0, %c0_i32, %c0_i32_0, %c0_i32_1, %c0_i32_2 : i32, i32, i32, i32, i32
  }
  func.func @transform_4(%arg0: i32) -> (i32, i32, i32) {
    %c0_i32 = arith.constant 0 : i32
    %c0_i32_0 = arith.constant 0 : i32
    %c0_i32_1 = arith.constant 0 : i32
    %c0_i32_2 = arith.constant 0 : i32
    return %c0_i32, %c0_i32_0, %c0_i32_1 : i32, i32, i32
  }
  func.func @transform_5(%arg0: i32) -> (i32, i32, i32) {
    %c0_i32 = arith.constant 0 : i32
    %c0_i32_0 = arith.constant 0 : i32
    %c0_i32_1 = arith.constant 0 : i32
    %c0_i32_2 = arith.constant 0 : i32
    return %c0_i32, %c0_i32_0, %c0_i32_1 : i32, i32, i32
  }
  func.func @transform_6(%arg0: i32) -> (i32, i32, i32, i32, i32) {
    %c0_i32 = arith.constant 0 : i32
    %c0_i32_0 = arith.constant 0 : i32
    %c0_i32_1 = arith.constant 0 : i32
    %c0_i32_2 = arith.constant 0 : i32
    %c0_i32_3 = arith.constant 0 : i32
    return %arg0, %c0_i32, %c0_i32_0, %c0_i32_1, %c0_i32_2 : i32, i32, i32, i32, i32
  }
}

module attributes {stable_mosaic.version = 11 : i64} {
  func.func @_ssm_out_kernel(%arg0: i32, %arg1: memref<8x128xf32, #tpu.memory_space<vmem>>, %arg2: memref<8x128xf32, #tpu.memory_space<vmem>>, %arg3: memref<1x128xf32, #tpu.memory_space<vmem>>, %arg4: memref<1x128xf32, #tpu.memory_space<vmem>>, %arg5: memref<128x64xbf16, #tpu.memory_space<vmem>>, %arg6: memref<8x64xf32, #tpu.memory_space<vmem>>) attributes {dimension_semantics = [#tpu.dimension_semantics<parallel>], iteration_bounds = array<i64: 1>, scalar_prefetch = 0 : i64, scratch_operands = 0 : i64, tpu.core_type = #tpu.core_type<tc>, window_params = [{transform_indices = @transform_0, window_bounds = array<i64: 8, 128>}, {transform_indices = @transform_1, window_bounds = array<i64: 8, 128>}, {pipeline_mode = #tpu.pipeline_mode<synchronous>, transform_indices = @transform_2, window_bounds = array<i64: 1, 128>}, {pipeline_mode = #tpu.pipeline_mode<synchronous>, transform_indices = @transform_3, window_bounds = array<i64: 1, 128>}, {pipeline_mode = #tpu.pipeline_mode<synchronous>, transform_indices = @transform_4, window_bounds = array<i64: 128, 64>}, {transform_indices = @transform_5, window_bounds = array<i64: 8, 64>}]} {
    %c0 = arith.constant 0 : index
    %c0_0 = arith.constant 0 : index
    %0 = vector.load %arg1[%c0, %c0_0] : memref<8x128xf32, #tpu.memory_space<vmem>>, vector<8x128xf32>
    %cst = arith.constant dense<0.000000e+00> : vector<8xf32>
    %1 = vector.multi_reduction <add>, %0, %cst [1] : vector<8x128xf32> to vector<8xf32>
    %2 = vector.shape_cast %1 : vector<8xf32> to vector<8x1xf32>
    %cst_1 = arith.constant 1.280000e+02 : f32
    %3 = vector.broadcast %cst_1 : f32 to vector<8x1xf32>
    %4 = arith.divf %2, %3 : vector<8x1xf32>
    %5 = vector.broadcast %4 : vector<8x1xf32> to vector<8x128xf32>
    %6 = arith.subf %0, %5 : vector<8x128xf32>
    %7 = arith.mulf %6, %6 : vector<8x128xf32>
    %cst_2 = arith.constant dense<0.000000e+00> : vector<8xf32>
    %8 = vector.multi_reduction <add>, %7, %cst_2 [1] : vector<8x128xf32> to vector<8xf32>
    %9 = vector.shape_cast %8 : vector<8xf32> to vector<8x1xf32>
    %cst_3 = arith.constant 1.280000e+02 : f32
    %10 = vector.broadcast %cst_3 : f32 to vector<8x1xf32>
    %11 = arith.divf %9, %10 : vector<8x1xf32>
    %cst_4 = arith.constant 9.99999974E-6 : f32
    %12 = vector.broadcast %cst_4 : f32 to vector<8x1xf32>
    %13 = arith.addf %11, %12 : vector<8x1xf32>
    %14 = math.rsqrt %13 : vector<8x1xf32>
    %15 = vector.broadcast %14 : vector<8x1xf32> to vector<8x128xf32>
    %16 = arith.mulf %6, %15 : vector<8x128xf32>
    %c0_5 = arith.constant 0 : index
    %c0_6 = arith.constant 0 : index
    %17 = vector.load %arg3[%c0_5, %c0_6] : memref<1x128xf32, #tpu.memory_space<vmem>>, vector<1x128xf32>
    %18 = vector.broadcast %17 : vector<1x128xf32> to vector<8x128xf32>
    %19 = arith.mulf %16, %18 : vector<8x128xf32>
    %c0_7 = arith.constant 0 : index
    %c0_8 = arith.constant 0 : index
    %20 = vector.load %arg4[%c0_7, %c0_8] : memref<1x128xf32, #tpu.memory_space<vmem>>, vector<1x128xf32>
    %21 = vector.broadcast %20 : vector<1x128xf32> to vector<8x128xf32>
    %22 = arith.addf %19, %21 : vector<8x128xf32>
    %c0_9 = arith.constant 0 : index
    %c0_10 = arith.constant 0 : index
    %23 = vector.load %arg2[%c0_9, %c0_10] : memref<8x128xf32, #tpu.memory_space<vmem>>, vector<8x128xf32>
    %cst_11 = arith.constant 0.000000e+00 : f32
    %24 = vector.broadcast %cst_11 : f32 to vector<8x128xf32>
    %25 = arith.subf %24, %23 : vector<8x128xf32>
    %26 = math.exp %25 : vector<8x128xf32>
    %cst_12 = arith.constant 1.000000e+00 : f32
    %27 = vector.broadcast %cst_12 : f32 to vector<8x128xf32>
    %28 = arith.addf %27, %26 : vector<8x128xf32>
    %cst_13 = arith.constant 1.000000e+00 : f32
    %29 = vector.broadcast %cst_13 : f32 to vector<8x128xf32>
    %30 = arith.divf %29, %28 : vector<8x128xf32>
    %31 = arith.mulf %23, %30 : vector<8x128xf32>
    %32 = arith.mulf %22, %31 : vector<8x128xf32>
    %33 = arith.truncf %32 : vector<8x128xf32> to vector<8x128xbf16>
    %c0_14 = arith.constant 0 : index
    %c0_15 = arith.constant 0 : index
    %34 = vector.load %arg5[%c0_14, %c0_15] : memref<128x64xbf16, #tpu.memory_space<vmem>>, vector<128x64xbf16>
    %cst_16 = arith.constant dense<0.000000e+00> : vector<8x64xf32>
    %35 = tpu.matmul %33, %34, %cst_16 {dimension_numbers = #tpu.dot_dimension_numbers<[1], [0], [0], [1], [0, 0, 1, 1], [], []>} : vector<8x128xbf16>, vector<128x64xbf16>, vector<8x64xf32> -> vector<8x64xf32>
    %c0_17 = arith.constant 0 : index
    %c0_18 = arith.constant 0 : index
    %36 = vector.load %arg6[%c0_17, %c0_18] : memref<8x64xf32, #tpu.memory_space<vmem>>, vector<8x64xf32>
    tpu.vector_store %arg6[%c0_17, %c0_18], %35 {strides = array<i32>} : memref<8x64xf32, #tpu.memory_space<vmem>>, vector<8x64xf32>,
    return
  }
  func.func @transform_0(%arg0: i32) -> (i32, i32) {
    %c0_i32 = arith.constant 0 : i32
    %c0_i32_0 = arith.constant 0 : i32
    return %arg0, %c0_i32 : i32, i32
  }
  func.func @transform_1(%arg0: i32) -> (i32, i32) {
    %c0_i32 = arith.constant 0 : i32
    %c0_i32_0 = arith.constant 0 : i32
    return %arg0, %c0_i32 : i32, i32
  }
  func.func @transform_2(%arg0: i32) -> (i32, i32) {
    %c0_i32 = arith.constant 0 : i32
    %c0_i32_0 = arith.constant 0 : i32
    %c0_i32_1 = arith.constant 0 : i32
    return %c0_i32, %c0_i32_0 : i32, i32
  }
  func.func @transform_3(%arg0: i32) -> (i32, i32) {
    %c0_i32 = arith.constant 0 : i32
    %c0_i32_0 = arith.constant 0 : i32
    %c0_i32_1 = arith.constant 0 : i32
    return %c0_i32, %c0_i32_0 : i32, i32
  }
  func.func @transform_4(%arg0: i32) -> (i32, i32) {
    %c0_i32 = arith.constant 0 : i32
    %c0_i32_0 = arith.constant 0 : i32
    %c0_i32_1 = arith.constant 0 : i32
    return %c0_i32, %c0_i32_0 : i32, i32
  }
  func.func @transform_5(%arg0: i32) -> (i32, i32) {
    %c0_i32 = arith.constant 0 : i32
    %c0_i32_0 = arith.constant 0 : i32
    return %arg0, %c0_i32 : i32, i32
  }
}

module attributes {stable_mosaic.version = 11 : i64} {
  func.func @kernel(%arg0: i32, %arg1: memref<8x256xf32, #tpu.memory_space<vmem>>, %arg2: memref<256x64xbf16, #tpu.memory_space<vmem>>, %arg3: memref<1x64xf32, #tpu.memory_space<vmem>>, %arg4: memref<8x64xf32, #tpu.memory_space<vmem>>) attributes {dimension_semantics = [#tpu.dimension_semantics<parallel>], iteration_bounds = array<i64: 1>, scalar_prefetch = 0 : i64, scratch_operands = 0 : i64, tpu.core_type = #tpu.core_type<tc>, window_params = [{transform_indices = @transform_0, window_bounds = array<i64: 8, 256>}, {pipeline_mode = #tpu.pipeline_mode<synchronous>, transform_indices = @transform_1, window_bounds = array<i64: 256, 64>}, {pipeline_mode = #tpu.pipeline_mode<synchronous>, transform_indices = @transform_2, window_bounds = array<i64: 1, 64>}, {transform_indices = @transform_3, window_bounds = array<i64: 8, 64>}]} {
    %c0 = arith.constant 0 : index
    %c0_0 = arith.constant 0 : index
    %0 = vector.load %arg1[%c0, %c0_0] : memref<8x256xf32, #tpu.memory_space<vmem>>, vector<8x256xf32>
    %1 = arith.truncf %0 : vector<8x256xf32> to vector<8x256xbf16>
    %c0_1 = arith.constant 0 : index
    %c0_2 = arith.constant 0 : index
    %2 = vector.load %arg2[%c0_1, %c0_2] : memref<256x64xbf16, #tpu.memory_space<vmem>>, vector<256x64xbf16>
    %cst = arith.constant dense<0.000000e+00> : vector<8x64xf32>
    %3 = tpu.matmul %1, %2, %cst {dimension_numbers = #tpu.dot_dimension_numbers<[1], [0], [0], [1], [0, 0, 1, 1], [], []>} : vector<8x256xbf16>, vector<256x64xbf16>, vector<8x64xf32> -> vector<8x64xf32>
    %c0_3 = arith.constant 0 : index
    %c0_4 = arith.constant 0 : index
    %4 = vector.load %arg3[%c0_3, %c0_4] : memref<1x64xf32, #tpu.memory_space<vmem>>, vector<1x64xf32>
    %5 = vector.broadcast %4 : vector<1x64xf32> to vector<8x64xf32>
    %6 = arith.addf %3, %5 : vector<8x64xf32>
    %c0_5 = arith.constant 0 : index
    %c0_6 = arith.constant 0 : index
    %7 = vector.load %arg4[%c0_5, %c0_6] : memref<8x64xf32, #tpu.memory_space<vmem>>, vector<8x64xf32>
    tpu.vector_store %arg4[%c0_5, %c0_6], %6 {strides = array<i32>} : memref<8x64xf32, #tpu.memory_space<vmem>>, vector<8x64xf32>,
    return
  }
  func.func @transform_0(%arg0: i32) -> (i32, i32) {
    %c0_i32 = arith.constant 0 : i32
    %c0_i32_0 = arith.constant 0 : i32
    return %arg0, %c0_i32 : i32, i32
  }
  func.func @transform_1(%arg0: i32) -> (i32, i32) {
    %c0_i32 = arith.constant 0 : i32
    %c0_i32_0 = arith.constant 0 : i32
    %c0_i32_1 = arith.constant 0 : i32
    return %c0_i32, %c0_i32_0 : i32, i32
  }
  func.func @transform_2(%arg0: i32) -> (i32, i32) {
    %c0_i32 = arith.constant 0 : i32
    %c0_i32_0 = arith.constant 0 : i32
    %c0_i32_1 = arith.constant 0 : i32
    return %c0_i32, %c0_i32_0 : i32, i32
  }
  func.func @transform_3(%arg0: i32) -> (i32, i32) {
    %c0_i32 = arith.constant 0 : i32
    %c0_i32_0 = arith.constant 0 : i32
    return %arg0, %c0_i32 : i32, i32
  }
}

module attributes {stable_mosaic.version = 11 : i64} {
  func.func @_layernorm_kernel(%arg0: i32, %arg1: memref<8x64xf32, #tpu.memory_space<vmem>>, %arg2: memref<1x64xf32, #tpu.memory_space<vmem>>, %arg3: memref<1x64xf32, #tpu.memory_space<vmem>>, %arg4: memref<8x64xf32, #tpu.memory_space<vmem>>) attributes {dimension_semantics = [#tpu.dimension_semantics<parallel>], iteration_bounds = array<i64: 1>, scalar_prefetch = 0 : i64, scratch_operands = 0 : i64, tpu.core_type = #tpu.core_type<tc>, window_params = [{transform_indices = @transform_0, window_bounds = array<i64: 8, 64>}, {pipeline_mode = #tpu.pipeline_mode<synchronous>, transform_indices = @transform_1, window_bounds = array<i64: 1, 64>}, {pipeline_mode = #tpu.pipeline_mode<synchronous>, transform_indices = @transform_2, window_bounds = array<i64: 1, 64>}, {transform_indices = @transform_3, window_bounds = array<i64: 8, 64>}]} {
    %c0 = arith.constant 0 : index
    %c0_0 = arith.constant 0 : index
    %0 = vector.load %arg1[%c0, %c0_0] : memref<8x64xf32, #tpu.memory_space<vmem>>, vector<8x64xf32>
    %cst = arith.constant dense<0.000000e+00> : vector<8xf32>
    %1 = vector.multi_reduction <add>, %0, %cst [1] : vector<8x64xf32> to vector<8xf32>
    %2 = vector.shape_cast %1 : vector<8xf32> to vector<8x1xf32>
    %cst_1 = arith.constant 6.400000e+01 : f32
    %3 = vector.broadcast %cst_1 : f32 to vector<8x1xf32>
    %4 = arith.divf %2, %3 : vector<8x1xf32>
    %5 = vector.broadcast %4 : vector<8x1xf32> to vector<8x64xf32>
    %6 = arith.subf %0, %5 : vector<8x64xf32>
    %7 = arith.mulf %6, %6 : vector<8x64xf32>
    %cst_2 = arith.constant dense<0.000000e+00> : vector<8xf32>
    %8 = vector.multi_reduction <add>, %7, %cst_2 [1] : vector<8x64xf32> to vector<8xf32>
    %9 = vector.shape_cast %8 : vector<8xf32> to vector<8x1xf32>
    %cst_3 = arith.constant 6.400000e+01 : f32
    %10 = vector.broadcast %cst_3 : f32 to vector<8x1xf32>
    %11 = arith.divf %9, %10 : vector<8x1xf32>
    %cst_4 = arith.constant 9.99999974E-6 : f32
    %12 = vector.broadcast %cst_4 : f32 to vector<8x1xf32>
    %13 = arith.addf %11, %12 : vector<8x1xf32>
    %14 = math.rsqrt %13 : vector<8x1xf32>
    %15 = vector.broadcast %14 : vector<8x1xf32> to vector<8x64xf32>
    %16 = arith.mulf %6, %15 : vector<8x64xf32>
    %c0_5 = arith.constant 0 : index
    %c0_6 = arith.constant 0 : index
    %17 = vector.load %arg2[%c0_5, %c0_6] : memref<1x64xf32, #tpu.memory_space<vmem>>, vector<1x64xf32>
    %18 = vector.broadcast %17 : vector<1x64xf32> to vector<8x64xf32>
    %19 = arith.mulf %16, %18 : vector<8x64xf32>
    %c0_7 = arith.constant 0 : index
    %c0_8 = arith.constant 0 : index
    %20 = vector.load %arg3[%c0_7, %c0_8] : memref<1x64xf32, #tpu.memory_space<vmem>>, vector<1x64xf32>
    %21 = vector.broadcast %20 : vector<1x64xf32> to vector<8x64xf32>
    %22 = arith.addf %19, %21 : vector<8x64xf32>
    %c0_9 = arith.constant 0 : index
    %c0_10 = arith.constant 0 : index
    %23 = vector.load %arg4[%c0_9, %c0_10] : memref<8x64xf32, #tpu.memory_space<vmem>>, vector<8x64xf32>
    tpu.vector_store %arg4[%c0_9, %c0_10], %22 {strides = array<i32>} : memref<8x64xf32, #tpu.memory_space<vmem>>, vector<8x64xf32>,
    return
  }
  func.func @transform_0(%arg0: i32) -> (i32, i32) {
    %c0_i32 = arith.constant 0 : i32
    %c0_i32_0 = arith.constant 0 : i32
    return %arg0, %c0_i32 : i32, i32
  }
  func.func @transform_1(%arg0: i32) -> (i32, i32) {
    %c0_i32 = arith.constant 0 : i32
    %c0_i32_0 = arith.constant 0 : i32
    %c0_i32_1 = arith.constant 0 : i32
    return %c0_i32, %c0_i32_0 : i32, i32
  }
  func.func @transform_2(%arg0: i32) -> (i32, i32) {
    %c0_i32 = arith.constant 0 : i32
    %c0_i32_0 = arith.constant 0 : i32
    %c0_i32_1 = arith.constant 0 : i32
    return %c0_i32, %c0_i32_0 : i32, i32
  }
  func.func @transform_3(%arg0: i32) -> (i32, i32) {
    %c0_i32 = arith.constant 0 : i32
    %c0_i32_0 = arith.constant 0 : i32
    return %arg0, %c0_i32 : i32, i32
  }
}

module attributes {stable_mosaic.version = 11 : i64} {
  func.func @kernel(%arg0: i32, %arg1: memref<2x64xf32, #tpu.memory_space<vmem>>, %arg2: memref<64x256xbf16, #tpu.memory_space<vmem>>, %arg3: memref<1x256xf32, #tpu.memory_space<vmem>>, %arg4: memref<2x256xf32, #tpu.memory_space<vmem>>) attributes {dimension_semantics = [#tpu.dimension_semantics<parallel>], iteration_bounds = array<i64: 1>, scalar_prefetch = 0 : i64, scratch_operands = 0 : i64, tpu.core_type = #tpu.core_type<tc>, window_params = [{transform_indices = @transform_0, window_bounds = array<i64: 2, 64>}, {pipeline_mode = #tpu.pipeline_mode<synchronous>, transform_indices = @transform_1, window_bounds = array<i64: 64, 256>}, {pipeline_mode = #tpu.pipeline_mode<synchronous>, transform_indices = @transform_2, window_bounds = array<i64: 1, 256>}, {transform_indices = @transform_3, window_bounds = array<i64: 2, 256>}]} {
    %c0 = arith.constant 0 : index
    %c0_0 = arith.constant 0 : index
    %0 = vector.load %arg1[%c0, %c0_0] : memref<2x64xf32, #tpu.memory_space<vmem>>, vector<2x64xf32>
    %1 = arith.truncf %0 : vector<2x64xf32> to vector<2x64xbf16>
    %c0_1 = arith.constant 0 : index
    %c0_2 = arith.constant 0 : index
    %2 = vector.load %arg2[%c0_1, %c0_2] : memref<64x256xbf16, #tpu.memory_space<vmem>>, vector<64x256xbf16>
    %cst = arith.constant dense<0.000000e+00> : vector<2x256xf32>
    %3 = tpu.matmul %1, %2, %cst {dimension_numbers = #tpu.dot_dimension_numbers<[1], [0], [0], [1], [0, 0, 1, 1], [], []>} : vector<2x64xbf16>, vector<64x256xbf16>, vector<2x256xf32> -> vector<2x256xf32>
    %c0_3 = arith.constant 0 : index
    %c0_4 = arith.constant 0 : index
    %4 = vector.load %arg3[%c0_3, %c0_4] : memref<1x256xf32, #tpu.memory_space<vmem>>, vector<1x256xf32>
    %5 = vector.broadcast %4 : vector<1x256xf32> to vector<2x256xf32>
    %6 = arith.addf %3, %5 : vector<2x256xf32>
    %cst_5 = arith.constant 0.000000e+00 : f32
    %7 = vector.broadcast %cst_5 : f32 to vector<2x256xf32>
    %8 = arith.maximumf %6, %7 : vector<2x256xf32>
    %c0_6 = arith.constant 0 : index
    %c0_7 = arith.constant 0 : index
    %9 = vector.load %arg4[%c0_6, %c0_7] : memref<2x256xf32, #tpu.memory_space<vmem>>, vector<2x256xf32>
    tpu.vector_store %arg4[%c0_6, %c0_7], %8 {strides = array<i32>} : memref<2x256xf32, #tpu.memory_space<vmem>>, vector<2x256xf32>,
    return
  }
  func.func @transform_0(%arg0: i32) -> (i32, i32) {
    %c0_i32 = arith.constant 0 : i32
    %c0_i32_0 = arith.constant 0 : i32
    return %arg0, %c0_i32 : i32, i32
  }
  func.func @transform_1(%arg0: i32) -> (i32, i32) {
    %c0_i32 = arith.constant 0 : i32
    %c0_i32_0 = arith.constant 0 : i32
    %c0_i32_1 = arith.constant 0 : i32
    return %c0_i32, %c0_i32_0 : i32, i32
  }
  func.func @transform_2(%arg0: i32) -> (i32, i32) {
    %c0_i32 = arith.constant 0 : i32
    %c0_i32_0 = arith.constant 0 : i32
    %c0_i32_1 = arith.constant 0 : i32
    return %c0_i32, %c0_i32_0 : i32, i32
  }
  func.func @transform_3(%arg0: i32) -> (i32, i32) {
    %c0_i32 = arith.constant 0 : i32
    %c0_i32_0 = arith.constant 0 : i32
    return %arg0, %c0_i32 : i32, i32
  }
}

module attributes {stable_mosaic.version = 11 : i64} {
  func.func @kernel(%arg0: i32, %arg1: memref<2x256xf32, #tpu.memory_space<vmem>>, %arg2: memref<256x1xbf16, #tpu.memory_space<vmem>>, %arg3: memref<1x1xf32, #tpu.memory_space<vmem>>, %arg4: memref<2x1xf32, #tpu.memory_space<vmem>>) attributes {dimension_semantics = [#tpu.dimension_semantics<parallel>], iteration_bounds = array<i64: 1>, scalar_prefetch = 0 : i64, scratch_operands = 0 : i64, tpu.core_type = #tpu.core_type<tc>, window_params = [{transform_indices = @transform_0, window_bounds = array<i64: 2, 256>}, {pipeline_mode = #tpu.pipeline_mode<synchronous>, transform_indices = @transform_1, window_bounds = array<i64: 256, 1>}, {pipeline_mode = #tpu.pipeline_mode<synchronous>, transform_indices = @transform_2, window_bounds = array<i64: 1, 1>}, {transform_indices = @transform_3, window_bounds = array<i64: 2, 1>}]} {
    %c0 = arith.constant 0 : index
    %c0_0 = arith.constant 0 : index
    %0 = vector.load %arg1[%c0, %c0_0] : memref<2x256xf32, #tpu.memory_space<vmem>>, vector<2x256xf32>
    %1 = arith.truncf %0 : vector<2x256xf32> to vector<2x256xbf16>
    %c0_1 = arith.constant 0 : index
    %c0_2 = arith.constant 0 : index
    %2 = vector.load %arg2[%c0_1, %c0_2] : memref<256x1xbf16, #tpu.memory_space<vmem>>, vector<256x1xbf16>
    %cst = arith.constant dense<0.000000e+00> : vector<2x1xf32>
    %3 = tpu.matmul %1, %2, %cst {dimension_numbers = #tpu.dot_dimension_numbers<[1], [0], [0], [1], [0, 0, 1, 1], [], []>} : vector<2x256xbf16>, vector<256x1xbf16>, vector<2x1xf32> -> vector<2x1xf32>
    %c0_3 = arith.constant 0 : index
    %c0_4 = arith.constant 0 : index
    %4 = vector.load %arg3[%c0_3, %c0_4] : memref<1x1xf32, #tpu.memory_space<vmem>>, vector<1x1xf32>
    %5 = vector.broadcast %4 : vector<1x1xf32> to vector<2x1xf32>
    %6 = arith.addf %3, %5 : vector<2x1xf32>
    %cst_5 = arith.constant 0.000000e+00 : f32
    %7 = vector.broadcast %cst_5 : f32 to vector<2x1xf32>
    %8 = arith.subf %7, %6 : vector<2x1xf32>
    %9 = math.exp %8 : vector<2x1xf32>
    %cst_6 = arith.constant 1.000000e+00 : f32
    %10 = vector.broadcast %cst_6 : f32 to vector<2x1xf32>
    %11 = arith.addf %10, %9 : vector<2x1xf32>
    %cst_7 = arith.constant 1.000000e+00 : f32
    %12 = vector.broadcast %cst_7 : f32 to vector<2x1xf32>
    %13 = arith.divf %12, %11 : vector<2x1xf32>
    %c0_8 = arith.constant 0 : index
    %c0_9 = arith.constant 0 : index
    %14 = vector.load %arg4[%c0_8, %c0_9] : memref<2x1xf32, #tpu.memory_space<vmem>>, vector<2x1xf32>
    tpu.vector_store %arg4[%c0_8, %c0_9], %13 {strides = array<i32>} : memref<2x1xf32, #tpu.memory_space<vmem>>, vector<2x1xf32>,
    return
  }
  func.func @transform_0(%arg0: i32) -> (i32, i32) {
    %c0_i32 = arith.constant 0 : i32
    %c0_i32_0 = arith.constant 0 : i32
    return %arg0, %c0_i32 : i32, i32
  }
  func.func @transform_1(%arg0: i32) -> (i32, i32) {
    %c0_i32 = arith.constant 0 : i32
    %c0_i32_0 = arith.constant 0 : i32
    %c0_i32_1 = arith.constant 0 : i32
    return %c0_i32, %c0_i32_0 : i32, i32
  }
  func.func @transform_2(%arg0: i32) -> (i32, i32) {
    %c0_i32 = arith.constant 0 : i32
    %c0_i32_0 = arith.constant 0 : i32
    %c0_i32_1 = arith.constant 0 : i32
    return %c0_i32, %c0_i32_0 : i32, i32
  }
  func.func @transform_3(%arg0: i32) -> (i32, i32) {
    %c0_i32 = arith.constant 0 : i32
    %c0_i32_0 = arith.constant 0 : i32
    return %arg0, %c0_i32 : i32, i32
  }
}

</mosaic_0001>

<llo_original>
// kernel: _lambda_.22
$region0: #{_lambda_.22}
  #allocation0 [shape = 'u32[]', space=smem, size = 0x4, offset = 0x4, fixed_abs, tag = 'smem constant byte address 0x4 - core index']
  #allocation1 [shape = 'u32[144,128]{1,0:T(1,128)}', space=vmem, size = 0x12000, scoped, tag = 'internal scratch']
  %s0 = inlined_call_operand.vmem [shape: f32[32,32], index: 0, kind: input, shape index: {}]
  %s1 = inlined_call_operand.vmem [shape: bf16[32,128], index: 1, kind: input, shape index: {}]
  %s2 = inlined_call_operand.vmem [shape: f32[1,128], index: 2, kind: input, shape index: {}]
  %s3 = inlined_call_operand.vmem [shape: f32[32,128], index: 3, kind: output, shape index: {}]
  %s4 = sld [smem:[#allocation0]]
  $region22: #{_lambda_.22} parent=0
    _
  %s6 = ssub.s32 1, %s4
  %s7 = scalar_select 0, %s6, %s4
  // Predicated region
  $region2: #{_lambda_.22} parent=0 // pred_check
    _
  $region3: #{_lambda_.22} parent=0 // pred_check_branch
    %9 = sbr.rel (0) target = $region5
  $region4: #{_lambda_.22} parent=0 // pred_region
    _
  $region5: #{_lambda_.22} parent=0 // pred_fallthru
    _
  // Predicated region
  $region6: #{_lambda_.22} parent=0 // pred_check
    _
  $region7: #{_lambda_.22} parent=0 // pred_check_branch
    %11 = sbr.rel (0) target = $region9
  $region8: #{_lambda_.22} parent=0 // pred_region
    _
  $region9: #{_lambda_.22} parent=0 // pred_fallthru
    _
  // Predicated region
  $region10: #{_lambda_.22} parent=0 // pred_check
    _
  $region11: #{_lambda_.22} parent=0 // pred_check_branch
    %13 = sbr.rel (0) target = $region13
  $region12: #{_lambda_.22} parent=0 // pred_region
    _
  $region13: #{_lambda_.22} parent=0 // pred_fallthru
    _
  %v15 = vld [vmem:[%s0] sm:$0xff]
  %v16 = vld [vmem:[%s0 + $0x8] sm:$0xff]
  %v17 = vld [vmem:[%s0 + $0x10] sm:$0xff]
  %v18 = vld [vmem:[%s0 + $0x18] sm:$0xff]
  %vm19 = vcmask 261120
  %v20 = vsel %vm19, %v15, 0.0
  %21 = vadd.xlane.f32.xlu0 %v20
  %v22 = vpop.xlane.xlu0 %21
  %v23 = vsel %vm19, %v16, 0.0
  %24 = vadd.xlane.f32.xlu0 %v23
  %v25 = vpop.xlane.xlu0 %24
  %v26 = vsel %vm19, %v17, 0.0
  %27 = vadd.xlane.f32.xlu0 %v26
  %v28 = vpop.xlane.xlu0 %27
  %v29 = vsel %vm19, %v18, 0.0
  %30 = vadd.xlane.f32.xlu0 %v29
  %v31 = vpop.xlane.xlu0 %30
  %v32 = vrcp.pop 32.0
  %v33 = vmul.f32 %v22, %v32
  %v34 = vmul.f32 %v25, %v32
  %v35 = vmul.f32 %v28, %v32
  %v36 = vmul.f32 %v31, %v32
  %v37 = vsub.f32 %v15, %v33
  %v38 = vsub.f32 %v16, %v34
  %v39 = vsub.f32 %v17, %v35
  %v40 = vsub.f32 %v18, %v36
  %v41 = vmul.f32 %v37, %v37
  %v42 = vmul.f32 %v38, %v38
  %v43 = vmul.f32 %v39, %v39
  %v44 = vmul.f32 %v40, %v40
  %v45 = vsel %vm19, %v41, 0.0
  %46 = vadd.xlane.f32.xlu0 %v45
  %v47 = vpop.xlane.xlu0 %46
  %v48 = vsel %vm19, %v42, 0.0
  %49 = vadd.xlane.f32.xlu0 %v48
  %v50 = vpop.xlane.xlu0 %49
  %v51 = vsel %vm19, %v43, 0.0
  %52 = vadd.xlane.f32.xlu0 %v51
  %v53 = vpop.xlane.xlu0 %52
  %v54 = vsel %vm19, %v44, 0.0
  %55 = vadd.xlane.f32.xlu0 %v54
  %v56 = vpop.xlane.xlu0 %55
  %v57 = vmul.f32 %v47, %v32
  %v58 = vmul.f32 %v50, %v32
  %v59 = vmul.f32 %v53, %v32
  %v60 = vmul.f32 %v56, %v32
  %v61 = vadd.f32 %v57, 1e-05
  %v62 = vadd.f32 %v58, 1e-05
  %v63 = vadd.f32 %v59, 1e-05
  %v64 = vadd.f32 %v60, 1e-05
  %v65 = vrsqrt.pop %v61
  %v66 = vrsqrt.pop %v62
  %v67 = vrsqrt.pop %v63
  %v68 = vrsqrt.pop %v64
  %v69 = vmul.f32 %v37, %v65
  %v70 = vmul.f32 %v38, %v66
  %v71 = vmul.f32 %v39, %v67
  %v72 = vmul.f32 %v40, %v68
  %v73 = vpack.c.bf16 %v70, %v69
  %v74 = vpack.c.bf16 %v72, %v71
  %v75 = vld [vmem:[%s1] sm:$0xf]
  %v76 = vld [vmem:[%s1 + $0x4] sm:$0xf]
  %v77 = vld [vmem:[%s1 + $0x8] sm:$0xf]
  %v78 = vld [vmem:[%s1 + $0xc] sm:$0xf]
  %v79 = vld [vmem:[%s2] sm:$0x1]
  %v81 = vlaneseq
  %v82 = vshrl.u32 %v81, 7
  %v83 = vsub.s32 0, %v82
  %v84 = vrot.slane %v79, %v83
  %v90 = vunpack.c.l.b16 %v75
  %v91 = vunpack.c.l.b16 %v76
  %v92 = vunpack.c.l.b16 %v77
  %v93 = vunpack.c.l.b16 %v78
  %v94 = vpack.c.b16 %v91, %v90
  %v95 = vpack.c.b16 %v93, %v92
  %v99 = vsel %vm19, %v73, 0
  %v102 = vsel %vm19, %v74, 0
  %104 = vmatprep.subr.bf16.mxu0 0
  %105 = vmatpush1.bf16.msra.mxu0 %v94
  %106 = vmatprep.subr.bf16.mxu0 0
  %107 = vmatpush1.bf16.msra.mxu0 %v95
  %108 = vmatprep.subr.bf16.mxu0 0
  %109 = vmatpush1.bf16.msra.mxu0 0
  %110 = vmatprep.subr.bf16.mxu0 0
  %111 = vmatpush1.bf16.msra.mxu0 0
  %112 = vmatprep.subr.bf16.mxu0 0
  %113 = vmatpush1.bf16.msra.mxu0 0
  %114 = vmatprep.subr.bf16.mxu0 0
  %115 = vmatpush1.bf16.msra.mxu0 0
  %116 = vmatprep.subr.bf16.mxu0 0
  %117 = vmatpush1.bf16.msra.mxu0 0
  %118 = vmatprep.subr.bf16.mxu0 0
  %119 = vmatpush1.bf16.msra.mxu0 0
  %120 = vmatprep.subr.bf16.mxu0 0
  %121 = vmatpush1.bf16.msra.mxu0 0
  %122 = vmatprep.subr.bf16.mxu0 0
  %123 = vmatpush1.bf16.msra.mxu0 0
  %124 = vmatprep.subr.bf16.mxu0 0
  %125 = vmatpush1.bf16.msra.mxu0 0
  %126 = vmatprep.subr.bf16.mxu0 0
  %127 = vmatpush1.bf16.msra.mxu0 0
  %128 = vmatprep.subr.bf16.mxu0 0
  %129 = vmatpush1.bf16.msra.mxu0 0
  %130 = vmatprep.subr.bf16.mxu0 0
  %131 = vmatpush1.bf16.msra.mxu0 0
  %132 = vmatprep.subr.bf16.mxu0 0
  %133 = vmatpush1.bf16.msra.mxu0 0
  %134 = vmatprep.subr.bf16.mxu0 0
  %135 = vmatpush1.bf16.msra.mxu0 0
  %136 = vmatprep.mubr.bf16.mxu0 0
  %137 = vmatmul.mubr.bf16.gmra.mrb[0].mxu0 %v99
  %v138 = vpop.f32.mrb[0].mxu0
  %v139 = vadd.f32 %v84, %v138
  %v140 = vpop.f32.mrb[0].mxu0
  %v141 = vpop.f32.mrb[0].mxu0
  %v142 = vadd.f32 %v84, %v141
  %v143 = vpop.f32.mrb[0].mxu0
  %144 = vmatprep.mubr.bf16.mxu0 0
  %145 = vmatmul.mubr.bf16.gmra.mrb[0].mxu0 %v102
  %v146 = vpop.f32.mrb[0].mxu0
  %v147 = vadd.f32 %v84, %v146
  %v148 = vpop.f32.mrb[0].mxu0
  %v149 = vpop.f32.mrb[0].mxu0
  %v150 = vadd.f32 %v84, %v149
  %v151 = vpop.f32.mrb[0].mxu0
  %152 = vdwg.mxu0
  %153 = vst [vmem:[%s3] sm:$0xff] %v139
  %154 = vst [vmem:[%s3 + $0x8] sm:$0xff] %v142
  %155 = vst [vmem:[%s3 + $0x10] sm:$0xff] %v147
  %156 = vst [vmem:[%s3 + $0x18] sm:$0xff] %v150
  // Predicated region
  $region14: #{_lambda_.22} parent=0 // pred_check
    _
  $region15: #{_lambda_.22} parent=0 // pred_check_branch
    %158 = sbr.rel (0) target = $region17
  $region16: #{_lambda_.22} parent=0 // pred_region
    _
  $region17: #{_lambda_.22} parent=0 // pred_fallthru
    _
  // Predicated region
  $region18: #{_lambda_.22} parent=0 // pred_check
    _
  $region19: #{_lambda_.22} parent=0 // pred_check_branch
    %160 = sbr.rel (0) target = $region21
  $region20: #{_lambda_.22} parent=0 // pred_region
    _
  $region21: #{_lambda_.22} parent=0 // pred_fallthru
    _

// kernel: _lambda_.21
$region0: #{_lambda_.21}
  #allocation0 [shape = 'u32[]', space=smem, size = 0x4, offset = 0x4, fixed_abs, tag = 'smem constant byte address 0x4 - core index']
  #allocation1 [shape = 'u32[144,128]{1,0:T(1,128)}', space=vmem, size = 0x12000, scoped, tag = 'internal scratch']
  %s0 = inlined_call_operand.vmem [shape: f32[32,64], index: 0, kind: input, shape index: {}]
  %s1 = inlined_call_operand.vmem [shape: bf16[64,32], index: 1, kind: input, shape index: {}]
  %s2 = inlined_call_operand.vmem [shape: f32[1,32], index: 2, kind: input, shape index: {}]
  %s3 = inlined_call_operand.vmem [shape: f32[1,32], index: 3, kind: input, shape index: {}]
  %s4 = inlined_call_operand.vmem [shape: f32[1,32], index: 4, kind: input, shape index: {}]
  %s5 = inlined_call_operand.vmem [shape: f32[32,32], index: 5, kind: output, shape index: {}]
  %s6 = sld [smem:[#allocation0]]
  $region30: #{_lambda_.21} parent=0
    _
  %s8 = ssub.s32 1, %s6
  %s9 = scalar_select 0, %s8, %s6
  // Predicated region
  $region2: #{_lambda_.21} parent=0 // pred_check
    _
  $region3: #{_lambda_.21} parent=0 // pred_check_branch
    %11 = sbr.rel (0) target = $region5
  $region4: #{_lambda_.21} parent=0 // pred_region
    _
  $region5: #{_lambda_.21} parent=0 // pred_fallthru
    _
  // Predicated region
  $region6: #{_lambda_.21} parent=0 // pred_check
    _
  $region7: #{_lambda_.21} parent=0 // pred_check_branch
    %13 = sbr.rel (0) target = $region9
  $region8: #{_lambda_.21} parent=0 // pred_region
    _
  $region9: #{_lambda_.21} parent=0 // pred_fallthru
    _
  // Predicated region
  $region10: #{_lambda_.21} parent=0 // pred_check
    _
  $region11: #{_lambda_.21} parent=0 // pred_check_branch
    %15 = sbr.rel (0) target = $region13
  $region12: #{_lambda_.21} parent=0 // pred_region
    _
  $region13: #{_lambda_.21} parent=0 // pred_fallthru
    _
  // Predicated region
  $region14: #{_lambda_.21} parent=0 // pred_check
    _
  $region15: #{_lambda_.21} parent=0 // pred_check_branch
    %17 = sbr.rel (0) target = $region17
  $region16: #{_lambda_.21} parent=0 // pred_region
    _
  $region17: #{_lambda_.21} parent=0 // pred_fallthru
    _
  // Predicated region
  $region18: #{_lambda_.21} parent=0 // pred_check
    _
  $region19: #{_lambda_.21} parent=0 // pred_check_branch
    %19 = sbr.rel (0) target = $region21
  $region20: #{_lambda_.21} parent=0 // pred_region
    _
  $region21: #{_lambda_.21} parent=0 // pred_fallthru
    _
  %v21 = vld [vmem:[%s0] sm:$0xff]
  %v22 = vld [vmem:[%s0 + $0x8] sm:$0xff]
  %v23 = vld [vmem:[%s0 + $0x10] sm:$0xff]
  %v24 = vld [vmem:[%s0 + $0x18] sm:$0xff]
  %v25 = vpack.c.bf16 %v22, %v21
  %v26 = vpack.c.bf16 %v24, %v23
  %v27 = vld [vmem:[%s1] sm:$0xf]
  %v28 = vld [vmem:[%s1 + $0x4] sm:$0xf]
  %v29 = vld [vmem:[%s1 + $0x8] sm:$0xf]
  %v30 = vld [vmem:[%s1 + $0xc] sm:$0xf]
  %v31 = vld [vmem:[%s1 + $0x10] sm:$0xf]
  %v32 = vld [vmem:[%s1 + $0x14] sm:$0xf]
  %v33 = vld [vmem:[%s1 + $0x18] sm:$0xf]
  %v34 = vld [vmem:[%s1 + $0x1c] sm:$0xf]
  %v35 = vld [vmem:[%s2] sm:$0x1]
  %v37 = vlaneseq
  %v38 = vshrl.u32 %v37, 7
  %v39 = vsub.s32 0, %v38
  %v40 = vrot.slane %v35, %v39
  %v50 = vunpack.c.l.b16 %v27
  %v51 = vunpack.c.l.b16 %v28
  %v52 = vunpack.c.l.b16 %v29
  %v53 = vunpack.c.l.b16 %v30
  %v54 = vunpack.c.l.b16 %v31
  %v55 = vunpack.c.l.b16 %v32
  %v56 = vunpack.c.l.b16 %v33
  %v57 = vunpack.c.l.b16 %v34
  %v58 = vpack.c.b16 %v51, %v50
  %v59 = vpack.c.b16 %v53, %v52
  %v60 = vpack.c.b16 %v55, %v54
  %v61 = vpack.c.b16 %v57, %v56
  %vm66 = vcmask 523264
  %v68 = vsel %vm66, %v25, 0
  %v71 = vsel %vm66, %v26, 0
  %73 = vmatprep.subr.bf16.mxu0 0
  %74 = vmatpush1.bf16.msra.mxu0 %v58
  %75 = vmatprep.subr.bf16.mxu0 0
  %76 = vmatpush1.bf16.msra.mxu0 %v59
  %77 = vmatprep.subr.bf16.mxu0 0
  %78 = vmatpush1.bf16.msra.mxu0 %v60
  %79 = vmatprep.subr.bf16.mxu0 0
  %80 = vmatpush1.bf16.msra.mxu0 %v61
  %81 = vmatprep.subr.bf16.mxu0 0
  %82 = vmatpush1.bf16.msra.mxu0 0
  %83 = vmatprep.subr.bf16.mxu0 0
  %84 = vmatpush1.bf16.msra.mxu0 0
  %85 = vmatprep.subr.bf16.mxu0 0
  %86 = vmatpush1.bf16.msra.mxu0 0
  %87 = vmatprep.subr.bf16.mxu0 0
  %88 = vmatpush1.bf16.msra.mxu0 0
  %89 = vmatprep.subr.bf16.mxu0 0
  %90 = vmatpush1.bf16.msra.mxu0 0
  %91 = vmatprep.subr.bf16.mxu0 0
  %92 = vmatpush1.bf16.msra.mxu0 0
  %93 = vmatprep.subr.bf16.mxu0 0
  %94 = vmatpush1.bf16.msra.mxu0 0
  %95 = vmatprep.subr.bf16.mxu0 0
  %96 = vmatpush1.bf16.msra.mxu0 0
  %97 = vmatprep.subr.bf16.mxu0 0
  %98 = vmatpush1.bf16.msra.mxu0 0
  %99 = vmatprep.subr.bf16.mxu0 0
  %100 = vmatpush1.bf16.msra.mxu0 0
  %101 = vmatprep.subr.bf16.mxu0 0
  %102 = vmatpush1.bf16.msra.mxu0 0
  %103 = vmatprep.subr.bf16.mxu0 0
  %104 = vmatpush1.bf16.msra.mxu0 0
  %105 = vmatprep.mubr.bf16.mxu0 0
  %106 = vmatmul.mubr.bf16.gmra.mrb[0].mxu0 %v68
  %v107 = vpop.f32.mrb[0].mxu0
  %v108 = vadd.f32 %v40, %v107
  %v109 = vpop.f32.mrb[0].mxu0
  %v110 = vpop.f32.mrb[0].mxu0
  %v111 = vadd.f32 %v40, %v110
  %v112 = vpop.f32.mrb[0].mxu0
  %113 = vmatprep.mubr.bf16.mxu0 0
  %114 = vmatmul.mubr.bf16.gmra.mrb[0].mxu0 %v71
  %v115 = vpop.f32.mrb[0].mxu0
  %v116 = vadd.f32 %v40, %v115
  %v117 = vpop.f32.mrb[0].mxu0
  %v118 = vpop.f32.mrb[0].mxu0
  %v119 = vadd.f32 %v40, %v118
  %v120 = vpop.f32.mrb[0].mxu0
  %121 = vdwg.mxu0
  %vm122 = vcmask 261120
  %v123 = vsel %vm122, %v108, 0.0
  %124 = vadd.xlane.f32.xlu0 %v123
  %v125 = vpop.xlane.xlu0 %124
  %v126 = vsel %vm122, %v111, 0.0
  %127 = vadd.xlane.f32.xlu0 %v126
  %v128 = vpop.xlane.xlu0 %127
  %v129 = vsel %vm122, %v116, 0.0
  %130 = vadd.xlane.f32.xlu0 %v129
  %v131 = vpop.xlane.xlu0 %130
  %v132 = vsel %vm122, %v119, 0.0
  %133 = vadd.xlane.f32.xlu0 %v132
  %v134 = vpop.xlane.xlu0 %133
  %v135 = vrcp.pop 32.0
  %v136 = vmul.f32 %v125, %v135
  %v137 = vmul.f32 %v128, %v135
  %v138 = vmul.f32 %v131, %v135
  %v139 = vmul.f32 %v134, %v135
  %v140 = vsub.f32 %v108, %v136
  %v141 = vsub.f32 %v111, %v137
  %v142 = vsub.f32 %v116, %v138
  %v143 = vsub.f32 %v119, %v139
  %v144 = vmul.f32 %v140, %v140
  %v145 = vmul.f32 %v141, %v141
  %v146 = vmul.f32 %v142, %v142
  %v147 = vmul.f32 %v143, %v143
  %v148 = vsel %vm122, %v144, 0.0
  %149 = vadd.xlane.f32.xlu0 %v148
  %v150 = vpop.xlane.xlu0 %149
  %v151 = vsel %vm122, %v145, 0.0
  %152 = vadd.xlane.f32.xlu0 %v151
  %v153 = vpop.xlane.xlu0 %152
  %v154 = vsel %vm122, %v146, 0.0
  %155 = vadd.xlane.f32.xlu0 %v154
  %v156 = vpop.xlane.xlu0 %155
  %v157 = vsel %vm122, %v147, 0.0
  %158 = vadd.xlane.f32.xlu0 %v157
  %v159 = vpop.xlane.xlu0 %158
  %v160 = vmul.f32 %v150, %v135
  %v161 = vmul.f32 %v153, %v135
  %v162 = vmul.f32 %v156, %v135
  %v163 = vmul.f32 %v159, %v135
  %v164 = vadd.f32 %v160, 1e-05
  %v165 = vadd.f32 %v161, 1e-05
  %v166 = vadd.f32 %v162, 1e-05
  %v167 = vadd.f32 %v163, 1e-05
  %v168 = vrsqrt.pop %v164
  %v169 = vrsqrt.pop %v165
  %v170 = vrsqrt.pop %v166
  %v171 = vrsqrt.pop %v167
  %v172 = vmul.f32 %v140, %v168
  %v173 = vmul.f32 %v141, %v169
  %v174 = vmul.f32 %v142, %v170
  %v175 = vmul.f32 %v143, %v171
  %v176 = vld [vmem:[%s3] sm:$0x1]
  %v178 = vlaneseq
  %v179 = vshrl.u32 %v178, 7
  %v180 = vsub.s32 0, %v179
  %v181 = vrot.slane %v176, %v180
  %v183 = vmul.f32 %v172, %v181
  %v184 = vmul.f32 %v173, %v181
  %v185 = vmul.f32 %v174, %v181
  %v186 = vmul.f32 %v175, %v181
  %v187 = vld [vmem:[%s4] sm:$0x1]
  %v189 = vlaneseq
  %v190 = vshrl.u32 %v189, 7
  %v191 = vsub.s32 0, %v190
  %v192 = vrot.slane %v187, %v191
  %v194 = vadd.f32 %v183, %v192
  %v195 = vadd.f32 %v184, %v192
  %v196 = vadd.f32 %v185, %v192
  %v197 = vadd.f32 %v186, %v192
  %198 = vst.msk [vmem:[%s5] sm:$0xff] %vm122, %v194
  %199 = vst.msk [vmem:[%s5 + $0x8] sm:$0xff] %vm122, %v195
  %200 = vst.msk [vmem:[%s5 + $0x10] sm:$0xff] %vm122, %v196
  %201 = vst.msk [vmem:[%s5 + $0x18] sm:$0xff] %vm122, %v197
  // Predicated region
  $region22: #{_lambda_.21} parent=0 // pred_check
    _
  $region23: #{_lambda_.21} parent=0 // pred_check_branch
    %203 = sbr.rel (0) target = $region25
  $region24: #{_lambda_.21} parent=0 // pred_region
    _
  $region25: #{_lambda_.21} parent=0 // pred_fallthru
    _
  // Predicated region
  $region26: #{_lambda_.21} parent=0 // pred_check
    _
  $region27: #{_lambda_.21} parent=0 // pred_check_branch
    %205 = sbr.rel (0) target = $region29
  $region28: #{_lambda_.21} parent=0 // pred_region
    _
  $region29: #{_lambda_.21} parent=0 // pred_fallthru
    _

// kernel: _lambda_.24
$region0: #{_lambda_.24}
  #allocation0 [shape = 'u32[]', space=smem, size = 0x4, offset = 0x4, fixed_abs, tag = 'smem constant byte address 0x4 - core index']
  #allocation1 [shape = 'u32[144,128]{1,0:T(1,128)}', space=vmem, size = 0x12000, scoped, tag = 'internal scratch']
  %s0 = inlined_call_operand.vmem [shape: f32[32,64], index: 0, kind: input, shape index: {}]
  %s1 = inlined_call_operand.vmem [shape: bf16[64,72], index: 1, kind: input, shape index: {}]
  %s2 = inlined_call_operand.vmem [shape: f32[32,72], index: 2, kind: output, shape index: {}]
  %s3 = sld [smem:[#allocation0]]
  $region18: #{_lambda_.24} parent=0
    _
  %s5 = ssub.s32 1, %s3
  %s6 = scalar_select 0, %s5, %s3
  // Predicated region
  $region2: #{_lambda_.24} parent=0 // pred_check
    _
  $region3: #{_lambda_.24} parent=0 // pred_check_branch
    %8 = sbr.rel (0) target = $region5
  $region4: #{_lambda_.24} parent=0 // pred_region
    _
  $region5: #{_lambda_.24} parent=0 // pred_fallthru
    _
  // Predicated region
  $region6: #{_lambda_.24} parent=0 // pred_check
    _
  $region7: #{_lambda_.24} parent=0 // pred_check_branch
    %10 = sbr.rel (0) target = $region9
  $region8: #{_lambda_.24} parent=0 // pred_region
    _
  $region9: #{_lambda_.24} parent=0 // pred_fallthru
    _
  %v12 = vld [vmem:[%s0] sm:$0xff]
  %v13 = vld [vmem:[%s0 + $0x8] sm:$0xff]
  %v14 = vld [vmem:[%s0 + $0x10] sm:$0xff]
  %v15 = vld [vmem:[%s0 + $0x18] sm:$0xff]
  %v16 = vpack.c.bf16 %v13, %v12
  %v17 = vpack.c.bf16 %v15, %v14
  %v18 = vld [vmem:[%s1] sm:$0xf]
  %v19 = vld [vmem:[%s1 + $0x4] sm:$0xf]
  %v20 = vld [vmem:[%s1 + $0x8] sm:$0xf]
  %v21 = vld [vmem:[%s1 + $0xc] sm:$0xf]
  %v22 = vld [vmem:[%s1 + $0x10] sm:$0xf]
  %v23 = vld [vmem:[%s1 + $0x14] sm:$0xf]
  %v24 = vld [vmem:[%s1 + $0x18] sm:$0xf]
  %v25 = vld [vmem:[%s1 + $0x1c] sm:$0xf]
  %v34 = vunpack.c.l.b16 %v18
  %v35 = vunpack.c.l.b16 %v19
  %v36 = vunpack.c.l.b16 %v20
  %v37 = vunpack.c.l.b16 %v21
  %v38 = vunpack.c.l.b16 %v22
  %v39 = vunpack.c.l.b16 %v23
  %v40 = vunpack.c.l.b16 %v24
  %v41 = vunpack.c.l.b16 %v25
  %v42 = vpack.c.b16 %v35, %v34
  %v43 = vpack.c.b16 %v37, %v36
  %v44 = vpack.c.b16 %v39, %v38
  %v45 = vpack.c.b16 %v41, %v40
  %vm50 = vcmask 523264
  %v52 = vsel %vm50, %v16, 0
  %v55 = vsel %vm50, %v17, 0
  %57 = vmatprep.subr.bf16.mxu0 0
  %58 = vmatpush1.bf16.msra.mxu0 %v42
  %59 = vmatprep.subr.bf16.mxu0 0
  %60 = vmatpush1.bf16.msra.mxu0 %v43
  %61 = vmatprep.subr.bf16.mxu0 0
  %62 = vmatpush1.bf16.msra.mxu0 %v44
  %63 = vmatprep.subr.bf16.mxu0 0
  %64 = vmatpush1.bf16.msra.mxu0 %v45
  %65 = vmatprep.subr.bf16.mxu0 0
  %66 = vmatpush1.bf16.msra.mxu0 0
  %67 = vmatprep.subr.bf16.mxu0 0
  %68 = vmatpush1.bf16.msra.mxu0 0
  %69 = vmatprep.subr.bf16.mxu0 0
  %70 = vmatpush1.bf16.msra.mxu0 0
  %71 = vmatprep.subr.bf16.mxu0 0
  %72 = vmatpush1.bf16.msra.mxu0 0
  %73 = vmatprep.subr.bf16.mxu0 0
  %74 = vmatpush1.bf16.msra.mxu0 0
  %75 = vmatprep.subr.bf16.mxu0 0
  %76 = vmatpush1.bf16.msra.mxu0 0
  %77 = vmatprep.subr.bf16.mxu0 0
  %78 = vmatpush1.bf16.msra.mxu0 0
  %79 = vmatprep.subr.bf16.mxu0 0
  %80 = vmatpush1.bf16.msra.mxu0 0
  %81 = vmatprep.subr.bf16.mxu0 0
  %82 = vmatpush1.bf16.msra.mxu0 0
  %83 = vmatprep.subr.bf16.mxu0 0
  %84 = vmatpush1.bf16.msra.mxu0 0
  %85 = vmatprep.subr.bf16.mxu0 0
  %86 = vmatpush1.bf16.msra.mxu0 0
  %87 = vmatprep.subr.bf16.mxu0 0
  %88 = vmatpush1.bf16.msra.mxu0 0
  %89 = vmatprep.mubr.bf16.mxu0 0
  %90 = vmatmul.mubr.bf16.gmra.mrb[0].mxu0 %v52
  %v91 = vpop.f32.mrb[0].mxu0
  %v92 = vadd.f32 0.0, %v91
  %v93 = vpop.f32.mrb[0].mxu0
  %v94 = vpop.f32.mrb[0].mxu0
  %v95 = vadd.f32 0.0, %v94
  %v96 = vpop.f32.mrb[0].mxu0
  %97 = vmatprep.mubr.bf16.mxu0 0
  %98 = vmatmul.mubr.bf16.gmra.mrb[0].mxu0 %v55
  %v99 = vpop.f32.mrb[0].mxu0
  %v100 = vadd.f32 0.0, %v99
  %v101 = vpop.f32.mrb[0].mxu0
  %v102 = vpop.f32.mrb[0].mxu0
  %v103 = vadd.f32 0.0, %v102
  %v104 = vpop.f32.mrb[0].mxu0
  %105 = vdwg.mxu0
  %vm106 = vcmask 588800
  %107 = vst.msk [vmem:[%s2] sm:$0xff] %vm106, %v92
  %108 = vst.msk [vmem:[%s2 + $0x8] sm:$0xff] %vm106, %v95
  %109 = vst.msk [vmem:[%s2 + $0x10] sm:$0xff] %vm106, %v100
  %110 = vst.msk [vmem:[%s2 + $0x18] sm:$0xff] %vm106, %v103
  // Predicated region
  $region10: #{_lambda_.24} parent=0 // pred_check
    _
  $region11: #{_lambda_.24} parent=0 // pred_check_branch
    %112 = sbr.rel (0) target = $region13
  $region12: #{_lambda_.24} parent=0 // pred_region
    _
  $region13: #{_lambda_.24} parent=0 // pred_fallthru
    _
  // Predicated region
  $region14: #{_lambda_.24} parent=0 // pred_check
    _
  $region15: #{_lambda_.24} parent=0 // pred_check_branch
    %114 = sbr.rel (0) target = $region17
  $region16: #{_lambda_.24} parent=0 // pred_region
    _
  $region17: #{_lambda_.24} parent=0 // pred_fallthru
    _

// kernel: _lambda_.23
$region0: #{_lambda_.23}
  #allocation0 [shape = 'u32[]', space=smem, size = 0x4, offset = 0x4, fixed_abs, tag = 'smem constant byte address 0x4 - core index']
  #allocation1 [shape = 'u32[144,128]{1,0:T(1,128)}', space=vmem, size = 0x12000, scoped, tag = 'internal scratch']
  %s0 = inlined_call_operand.vmem [shape: f32[2,6,6,64], index: 0, kind: input, shape index: {}]
  %s1 = inlined_call_operand.vmem [shape: f32[3,3,64], index: 1, kind: input, shape index: {}]
  %s2 = inlined_call_operand.vmem [shape: f32[1,1,64], index: 2, kind: input, shape index: {}]
  %s3 = inlined_call_operand.vmem [shape: f32[2,4,4,64], index: 3, kind: output, shape index: {}]
  %s4 = sld [smem:[#allocation0]]
  $region45: #{_lambda_.23} parent=0
    _
  %s6 = ssub.s32 1, %s4
  %s7 = scalar_select 0, %s6, %s4
  loop: start=0, step=1, limit=4
  $region2: #{_lambda_.23} parent=0 // loop_pre_header
    _
  $region3: #{_lambda_.23} parent=0 // loop_header
    %s9 = sphi 0, %s13
    %p10 = scmp.ge.s32.totalorder %s9, 4
    %s19 = sphi 0, %s21
    %s22 = sphi 0, %s19
    %s23 = sphi 0, %s22
    %s39 = sphi 0, %s23
    %s43 = sphi 0, %s43
    %s45 = sphi 0, %s43
    %s46 = sphi 0, %s45
    %s60 = sphi 0, %s46
    %s64 = sphi 0, %s64
    %s66 = sphi 0, %s64
    %s67 = sphi 0, %s66
    %s81 = sphi 0, %s67
    %s87 = sphi 0, %s89
    %s90 = sphi 0, %s87
    %s91 = sphi 0, %s90
    %s107 = sphi 0, %s91
  $region4: #{_lambda_.23} parent=0 // loop_header_branch
    %12 = sbr.rel (%p10) target = $region8
  $region5: #{_lambda_.23} parent=0 // loop_body
    %s14 = ssub.s32 %s9, 1
    %s15 = ssub.s32 %s9, 2
    %s16 = sadd.s32 %s9, 1
    %s17 = ssub.s32 %s9, %s16
    %p18 = scmp.eq.s32.totalorder %s17, 0
    %s20 = sadd.s32 %s19, 1
    %s21 = scalar_select %p18, %s19, %s20
    %p24 = pneg %p18
    %p25 = scmp.eq.s32.totalorder %s9, 1
    %p26 = por %p24, %p25
    %p27 = scmp.ne.s32.totalorder %s19, %s22
    %p28 = scmp.eq.s32.totalorder %s9, 0
    %p29 = por %p27, %p28
    %p30 = scmp.ne.s32.totalorder %s19, %s22
    %p31 = scmp.eq.s32.totalorder %s14, 1
    %p32 = por %p30, %p31
    %p33 = scmp.ne.s32.totalorder %s22, %s23
    %p34 = scmp.eq.s32.totalorder %s14, 0
    %p35 = por %p33, %p34
    %p36 = scmp.ne.s32.totalorder %s22, %s23
    %p37 = scmp.eq.s32.totalorder %s15, 1
    %p38 = por %p36, %p37
    %p40 = scmp.ne.s32.totalorder %s23, %s39
    %p41 = scmp.eq.s32.totalorder %s15, 0
    %p42 = por %p40, %p41
    %s44 = sadd.s32 %s43, 1
    %p47 = scmp.eq.s32.totalorder %s9, 1
    %p48 = scmp.ne.s32.totalorder %s43, %s45
    %p49 = scmp.eq.s32.totalorder %s9, 0
    %p50 = por %p48, %p49
    %p51 = scmp.ne.s32.totalorder %s43, %s45
    %p52 = scmp.eq.s32.totalorder %s14, 1
    %p53 = por %p51, %p52
    %p54 = scmp.ne.s32.totalorder %s45, %s46
    %p55 = scmp.eq.s32.totalorder %s14, 0
    %p56 = por %p54, %p55
    %p57 = scmp.ne.s32.totalorder %s45, %s46
    %p58 = scmp.eq.s32.totalorder %s15, 1
    %p59 = por %p57, %p58
    %p61 = scmp.ne.s32.totalorder %s46, %s60
    %p62 = scmp.eq.s32.totalorder %s15, 0
    %p63 = por %p61, %p62
    %s65 = sadd.s32 %s64, 1
    %p68 = scmp.eq.s32.totalorder %s9, 1
    %p69 = scmp.ne.s32.totalorder %s64, %s66
    %p70 = scmp.eq.s32.totalorder %s9, 0
    %p71 = por %p69, %p70
    %p72 = scmp.ne.s32.totalorder %s64, %s66
    %p73 = scmp.eq.s32.totalorder %s14, 1
    %p74 = por %p72, %p73
    %p75 = scmp.ne.s32.totalorder %s66, %s67
    %p76 = scmp.eq.s32.totalorder %s14, 0
    %p77 = por %p75, %p76
    %p78 = scmp.ne.s32.totalorder %s66, %s67
    %p79 = scmp.eq.s32.totalorder %s15, 1
    %p80 = por %p78, %p79
    %p82 = scmp.ne.s32.totalorder %s67, %s81
    %p83 = scmp.eq.s32.totalorder %s15, 0
    %p84 = por %p82, %p83
    %s85 = ssub.s32 %s9, %s16
    %p86 = scmp.eq.s32.totalorder %s85, 0
    %s88 = sadd.s32 %s87, 1
    %s89 = scalar_select %p86, %s87, %s88
    %p92 = pneg %p86
    %p93 = scmp.eq.s32.totalorder %s9, 1
    %p94 = por %p92, %p93
    %p95 = scmp.ne.s32.totalorder %s87, %s90
    %p96 = scmp.eq.s32.totalorder %s9, 0
    %p97 = por %p95, %p96
    %p98 = scmp.ne.s32.totalorder %s87, %s90
    %p99 = scmp.eq.s32.totalorder %s14, 1
    %p100 = por %p98, %p99
    %p101 = scmp.ne.s32.totalorder %s90, %s91
    %p102 = scmp.eq.s32.totalorder %s14, 0
    %p103 = por %p101, %p102
    %p104 = scmp.ne.s32.totalorder %s90, %s91
    %p105 = scmp.eq.s32.totalorder %s15, 1
    %p106 = por %p104, %p105
    %p108 = scmp.ne.s32.totalorder %s91, %s107
    %p109 = scmp.eq.s32.totalorder %s15, 0
    %p110 = por %p108, %p109
    %p111 = scmp.le.s32.totalorder 1, %s9
    %p112 = scmp.lt.s32.totalorder %s9, 3
    %p113 = pnand %p111, %p112
    %p114 = pneg %p113
    // Predicated region
    $region9: #{_lambda_.23} parent=5 // pred_check
      _
    $region10: #{_lambda_.23} parent=5 // pred_check_branch
      %116 = sbr.rel (%p113) target = $region12
    $region11: #{_lambda_.23} parent=5 // pred_region
      %s117 = ssub.s32 %s9, 1
      // Predicated region
      $region13: #{_lambda_.23} parent=11 // pred_check
        %p118 = pneg %p56
      $region14: #{_lambda_.23} parent=11 // pred_check_branch
        %120 = sbr.rel (%p118) target = $region16
      $region15: #{_lambda_.23} parent=11 // pred_region
        _
      $region16: #{_lambda_.23} parent=11 // pred_fallthru
        _
      // Predicated region
      $region17: #{_lambda_.23} parent=11 // pred_check
        %p121 = pneg %p77
      $region18: #{_lambda_.23} parent=11 // pred_check_branch
        %123 = sbr.rel (%p121) target = $region20
      $region19: #{_lambda_.23} parent=11 // pred_region
        _
      $region20: #{_lambda_.23} parent=11 // pred_fallthru
        _
    $region12: #{_lambda_.23} parent=5 // pred_fallthru
      _
    %p124 = scmp.lt.s32.totalorder %s9, 2
    // Predicated region
    $region21: #{_lambda_.23} parent=5 // pred_check
      %p125 = pneg %p124
    $region22: #{_lambda_.23} parent=5 // pred_check_branch
      %127 = sbr.rel (%p125) target = $region24
    $region23: #{_lambda_.23} parent=5 // pred_region
      // Predicated region
      $region25: #{_lambda_.23} parent=23 // pred_check
        %p128 = pneg %p29
      $region26: #{_lambda_.23} parent=23 // pred_check_branch
        %130 = sbr.rel (%p128) target = $region28
      $region27: #{_lambda_.23} parent=23 // pred_region
        %p131 = scmp.lt.s32.totalorder %s9, 1
        %s132 = scalar_select %p131, %s9, 1
        %s133 = smul.addr %s132, 6
        %s134 = smul.addr %s133, 8
        %s135 = scalar_lea.vmem %s0, %s134
      $region28: #{_lambda_.23} parent=23 // pred_fallthru
        _
    $region24: #{_lambda_.23} parent=5 // pred_fallthru
      _
    %p136 = scmp.le.s32.totalorder 1, %s9
    %p137 = scmp.lt.s32.totalorder %s9, 3
    %p138 = pnand %p136, %p137
    %p139 = pneg %p138
    // Predicated region
    $region29: #{_lambda_.23} parent=5 // pred_check
      _
    $region30: #{_lambda_.23} parent=5 // pred_check_branch
      %141 = sbr.rel (%p138) target = $region32
    $region31: #{_lambda_.23} parent=5 // pred_region
      %s142 = ssub.s32 %s9, 1
      %p143 = scmp.lt.s32.totalorder %s14, 1
      %s144 = scalar_select %p143, %s14, 1
      %s145 = smul.addr %s144, 6
      %s146 = smul.addr %s145, 8
      %s147 = scalar_lea.vmem %s0, %s146
      %p148 = pneg %p35
      %p149 = pneg %p32
      %p150 = pneg %p56
      %p151 = pneg %p53
      %p152 = pneg %p77
      %p153 = pneg %p74
      %p154 = pneg %p103
      %p155 = pneg %p100
      %p156 = scmp.lt.s32.totalorder %s14, 1
      %s157 = scalar_select %p156, %s14, 1
      %s158 = smul.addr %s157, 4
      %s159 = smul.addr %s158, 4
      %s160 = scalar_lea.vmem %s3, %s159
      %p161 = scmp.lt.s32.totalorder %s14, 1
      %s162 = scalar_select %p161, %s14, 1
      %s163 = smul.addr %s162, 6
      %s164 = smul.addr %s163, 8
      %s165 = scalar_lea.vmem %s0, %s164
      %p166 = scmp.lt.s32.totalorder %s14, 1
      %s167 = scalar_select %p166, %s14, 1
      %s168 = smul.addr %s167, 4
      %s169 = smul.addr %s168, 4
      %s170 = scalar_lea.vmem %s3, %s169
      %v171 = vld [vmem:[%s165] sm:$0xf]
      %v172 = vld [vmem:[%s165 + $0x8] sm:$0xf]
      %v173 = vld [vmem:[%s165 + $0x10] sm:$0xf]
      %v174 = vld [vmem:[%s165 + $0x18] sm:$0xf]
      %v175 = vld [vmem:[%s1] sm:$0x1]
      %v176 = vlaneseq
      %v177 = vshrl.u32 %v176, 7
      %v178 = vsub.s32 0, %v177
      %v179 = vrot.slane %v175, %v178
      %v180 = vmul.f32 %v171, %v179
      %v181 = vmul.f32 %v172, %v179
      %v182 = vmul.f32 %v173, %v179
      %v183 = vmul.f32 %v174, %v179
      %v184 = vadd.f32 %v180, 0.0
      %v185 = vadd.f32 %v181, 0.0
      %v186 = vadd.f32 %v182, 0.0
      %v187 = vadd.f32 %v183, 0.0
      %v188 = vld [vmem:[%s165 + $0x1] sm:$0xf]
      %v189 = vld [vmem:[%s165 + $0x9] sm:$0xf]
      %v190 = vld [vmem:[%s165 + $0x11] sm:$0xf]
      %v191 = vld [vmem:[%s165 + $0x19] sm:$0xf]
      %v192 = vld [vmem:[%s1 + $0x1] sm:$0x1]
      %v193 = vlaneseq
      %v194 = vshrl.u32 %v193, 7
      %v195 = vsub.s32 0, %v194
      %v196 = vrot.slane %v192, %v195
      %v197 = vmul.f32 %v188, %v196
      %v198 = vmul.f32 %v189, %v196
      %v199 = vmul.f32 %v190, %v196
      %v200 = vmul.f32 %v191, %v196
      %v201 = vadd.f32 %v184, %v197
      %v202 = vadd.f32 %v185, %v198
      %v203 = vadd.f32 %v186, %v199
      %v204 = vadd.f32 %v187, %v200
      %v205 = vld [vmem:[%s165 + $0x2] sm:$0xf]
      %v206 = vld [vmem:[%s165 + $0xa] sm:$0xf]
      %v207 = vld [vmem:[%s165 + $0x12] sm:$0xf]
      %v208 = vld [vmem:[%s165 + $0x1a] sm:$0xf]
      %v209 = vld [vmem:[%s1 + $0x2] sm:$0x1]
      %v210 = vlaneseq
      %v211 = vshrl.u32 %v210, 7
      %v212 = vsub.s32 0, %v211
      %v213 = vrot.slane %v209, %v212
      %v214 = vmul.f32 %v205, %v213
      %v215 = vmul.f32 %v206, %v213
      %v216 = vmul.f32 %v207, %v213
      %v217 = vmul.f32 %v208, %v213
      %v218 = vadd.f32 %v201, %v214
      %v219 = vadd.f32 %v202, %v215
      %v220 = vadd.f32 %v203, %v216
      %v221 = vadd.f32 %v204, %v217
      %s222 = scalar_lea.vmem %s165, 8
      %v223 = vld [vmem:[%s222] sm:$0xf]
      %v224 = vld [vmem:[%s222 + $0x8] sm:$0xf]
      %v225 = vld [vmem:[%s222 + $0x10] sm:$0xf]
      %v226 = vld [vmem:[%s222 + $0x18] sm:$0xf]
      %s227 = scalar_lea.vmem %s1, 4
      %v228 = vld [vmem:[%s227] sm:$0x1]
      %v229 = vlaneseq
      %v230 = vshrl.u32 %v229, 7
      %v231 = vsub.s32 0, %v230
      %v232 = vrot.slane %v228, %v231
      %v233 = vmul.f32 %v223, %v232
      %v234 = vmul.f32 %v224, %v232
      %v235 = vmul.f32 %v225, %v232
      %v236 = vmul.f32 %v226, %v232
      %v237 = vadd.f32 %v218, %v233
      %v238 = vadd.f32 %v219, %v234
      %v239 = vadd.f32 %v220, %v235
      %v240 = vadd.f32 %v221, %v236
      %v241 = vld [vmem:[%s222 + $0x1] sm:$0xf]
      %v242 = vld [vmem:[%s222 + $0x9] sm:$0xf]
      %v243 = vld [vmem:[%s222 + $0x11] sm:$0xf]
      %v244 = vld [vmem:[%s222 + $0x19] sm:$0xf]
      %v245 = vld [vmem:[%s227 + $0x1] sm:$0x1]
      %v246 = vlaneseq
      %v247 = vshrl.u32 %v246, 7
      %v248 = vsub.s32 0, %v247
      %v249 = vrot.slane %v245, %v248
      %v250 = vmul.f32 %v241, %v249
      %v251 = vmul.f32 %v242, %v249
      %v252 = vmul.f32 %v243, %v249
      %v253 = vmul.f32 %v244, %v249
      %v254 = vadd.f32 %v237, %v250
      %v255 = vadd.f32 %v238, %v251
      %v256 = vadd.f32 %v239, %v252
      %v257 = vadd.f32 %v240, %v253
      %v258 = vld [vmem:[%s222 + $0x2] sm:$0xf]
      %v259 = vld [vmem:[%s222 + $0xa] sm:$0xf]
      %v260 = vld [vmem:[%s222 + $0x12] sm:$0xf]
      %v261 = vld [vmem:[%s222 + $0x1a] sm:$0xf]
      %v262 = vld [vmem:[%s227 + $0x2] sm:$0x1]
      %v263 = vlaneseq
      %v264 = vshrl.u32 %v263, 7
      %v265 = vsub.s32 0, %v264
      %v266 = vrot.slane %v262, %v265
      %v267 = vmul.f32 %v258, %v266
      %v268 = vmul.f32 %v259, %v266
      %v269 = vmul.f32 %v260, %v266
      %v270 = vmul.f32 %v261, %v266
      %v271 = vadd.f32 %v254, %v267
      %v272 = vadd.f32 %v255, %v268
      %v273 = vadd.f32 %v256, %v269
      %v274 = vadd.f32 %v257, %v270
      %s275 = scalar_lea.vmem %s165, 16
      %v276 = vld [vmem:[%s275] sm:$0xf]
      %v277 = vld [vmem:[%s275 + $0x8] sm:$0xf]
      %v278 = vld [vmem:[%s275 + $0x10] sm:$0xf]
      %v279 = vld [vmem:[%s275 + $0x18] sm:$0xf]
      %s280 = scalar_lea.vmem %s1, 8
      %v281 = vld [vmem:[%s280] sm:$0x1]
      %v282 = vlaneseq
      %v283 = vshrl.u32 %v282, 7
      %v284 = vsub.s32 0, %v283
      %v285 = vrot.slane %v281, %v284
      %v286 = vmul.f32 %v276, %v285
      %v287 = vmul.f32 %v277, %v285
      %v288 = vmul.f32 %v278, %v285
      %v289 = vmul.f32 %v279, %v285
      %v290 = vadd.f32 %v271, %v286
      %v291 = vadd.f32 %v272, %v287
      %v292 = vadd.f32 %v273, %v288
      %v293 = vadd.f32 %v274, %v289
      %v294 = vld [vmem:[%s275 + $0x1] sm:$0xf]
      %v295 = vld [vmem:[%s275 + $0x9] sm:$0xf]
      %v296 = vld [vmem:[%s275 + $0x11] sm:$0xf]
      %v297 = vld [vmem:[%s275 + $0x19] sm:$0xf]
      %v298 = vld [vmem:[%s280 + $0x1] sm:$0x1]
      %v299 = vlaneseq
      %v300 = vshrl.u32 %v299, 7
      %v301 = vsub.s32 0, %v300
      %v302 = vrot.slane %v298, %v301
      %v303 = vmul.f32 %v294, %v302
      %v304 = vmul.f32 %v295, %v302
      %v305 = vmul.f32 %v296, %v302
      %v306 = vmul.f32 %v297, %v302
      %v307 = vadd.f32 %v290, %v303
      %v308 = vadd.f32 %v291, %v304
      %v309 = vadd.f32 %v292, %v305
      %v310 = vadd.f32 %v293, %v306
      %v311 = vld [vmem:[%s275 + $0x2] sm:$0xf]
      %v312 = vld [vmem:[%s275 + $0xa] sm:$0xf]
      %v313 = vld [vmem:[%s275 + $0x12] sm:$0xf]
      %v314 = vld [vmem:[%s275 + $0x1a] sm:$0xf]
      %v315 = vld [vmem:[%s280 + $0x2] sm:$0x1]
      %v316 = vlaneseq
      %v317 = vshrl.u32 %v316, 7
      %v318 = vsub.s32 0, %v317
      %v319 = vrot.slane %v315, %v318
      %v320 = vmul.f32 %v311, %v319
      %v321 = vmul.f32 %v312, %v319
      %v322 = vmul.f32 %v313, %v319
      %v323 = vmul.f32 %v314, %v319
      %v324 = vadd.f32 %v307, %v320
      %v325 = vadd.f32 %v308, %v321
      %v326 = vadd.f32 %v309, %v322
      %v327 = vadd.f32 %v310, %v323
      %v328 = vld [vmem:[%s2] sm:$0x1]
      %v330 = vlaneseq
      %v331 = vshrl.u32 %v330, 7
      %v332 = vsub.s32 0, %v331
      %v333 = vrot.slane %v328, %v332
      %v335 = vadd.f32 %v324, %v333
      %v336 = vadd.f32 %v325, %v333
      %v337 = vadd.f32 %v326, %v333
      %v338 = vadd.f32 %v327, %v333
      %v339 = vsub.f32 0.0, %v335
      %v340 = vsub.f32 0.0, %v336
      %v341 = vsub.f32 0.0, %v337
      %v342 = vsub.f32 0.0, %v338
      %v343 = vmul.f32 %v339, 1.442695
      %v344 = vpow.pop %v343
      %v345 = vmul.f32 %v340, 1.442695
      %v346 = vpow.pop %v345
      %v347 = vmul.f32 %v341, 1.442695
      %v348 = vpow.pop %v347
      %v349 = vmul.f32 %v342, 1.442695
      %v350 = vpow.pop %v349
      %v351 = vadd.f32 %v344, 1.0
      %v352 = vadd.f32 %v346, 1.0
      %v353 = vadd.f32 %v348, 1.0
      %v354 = vadd.f32 %v350, 1.0
      %v355 = vrcp.pop %v351
      %v356 = vmul.f32 1.0, %v355
      %v357 = vrcp.pop %v352
      %v358 = vmul.f32 1.0, %v357
      %v359 = vrcp.pop %v353
      %v360 = vmul.f32 1.0, %v359
      %v361 = vrcp.pop %v354
      %v362 = vmul.f32 1.0, %v361
      %v363 = vmul.f32 %v335, %v356
      %v364 = vmul.f32 %v336, %v358
      %v365 = vmul.f32 %v337, %v360
      %v366 = vmul.f32 %v338, %v362
      %vm367 = vcmask 519168
      %368 = vst.msk [vmem:[%s170] sm:$0xf] %vm367, %v363
      %369 = vst.msk [vmem:[%s170 + $0x4] sm:$0xf] %vm367, %v364
      %370 = vst.msk [vmem:[%s170 + $0x8] sm:$0xf] %vm367, %v365
      %371 = vst.msk [vmem:[%s170 + $0xc] sm:$0xf] %vm367, %v366
      %p372 = scmp.lt.s32.totalorder %s14, 1
      %s373 = scalar_select %p372, %s14, 1
      %s374 = smul.addr %s373, 4
      %s375 = smul.addr %s374, 4
      %s376 = scalar_lea.vmem %s3, %s375
      // Predicated region
      $region33: #{_lambda_.23} parent=31 // pred_check
        %p377 = pneg %p100
      $region34: #{_lambda_.23} parent=31 // pred_check_branch
        %379 = sbr.rel (%p377) target = $region36
      $region35: #{_lambda_.23} parent=31 // pred_region
        _
      $region36: #{_lambda_.23} parent=31 // pred_fallthru
        _
    $region32: #{_lambda_.23} parent=5 // pred_fallthru
      _
    %p380 = scmp.le.s32.totalorder 2, %s9
    // Predicated region
    $region37: #{_lambda_.23} parent=5 // pred_check
      %p381 = pneg %p380
    $region38: #{_lambda_.23} parent=5 // pred_check_branch
      %383 = sbr.rel (%p381) target = $region40
    $region39: #{_lambda_.23} parent=5 // pred_region
      %s384 = ssub.s32 %s9, 2
      // Predicated region
      $region41: #{_lambda_.23} parent=39 // pred_check
        %p385 = pneg %p106
      $region42: #{_lambda_.23} parent=39 // pred_check_branch
        %387 = sbr.rel (%p385) target = $region44
      $region43: #{_lambda_.23} parent=39 // pred_region
        %p388 = scmp.lt.s32.totalorder %s15, 1
        %s389 = scalar_select %p388, %s15, 1
        %s390 = smul.addr %s389, 4
        %s391 = smul.addr %s390, 4
        %s392 = scalar_lea.vmem %s3, %s391
      $region44: #{_lambda_.23} parent=39 // pred_fallthru
        _
    $region40: #{_lambda_.23} parent=5 // pred_fallthru
      _
  $region6: #{_lambda_.23} parent=0 // loop_footer
    %s13 = sadd.s32 1, %s9
  $region7: #{_lambda_.23} parent=0 // loop_footer_branch
    %8 = sbr.rel target = $region3
  $region8: #{_lambda_.23} parent=0 // loop_exit
    _

// kernel: _lambda_.25
$region0: #{_lambda_.25}
  #allocation0 [shape = 'u32[]', space=smem, size = 0x4, offset = 0x4, fixed_abs, tag = 'smem constant byte address 0x4 - core index']
  #allocation1 [shape = 'u32[144,128]{1,0:T(1,128)}', space=vmem, size = 0x12000, scoped, tag = 'internal scratch']
  %s0 = inlined_call_operand.vmem [shape: f32[32,8], index: 0, kind: input, shape index: {}]
  %s1 = inlined_call_operand.vmem [shape: bf16[8,256], index: 1, kind: input, shape index: {}]
  %s2 = inlined_call_operand.vmem [shape: f32[1,256], index: 2, kind: input, shape index: {}]
  %s3 = inlined_call_operand.vmem [shape: f32[32,256], index: 3, kind: output, shape index: {}]
  %s4 = sld [smem:[#allocation0]]
  $region22: #{_lambda_.25} parent=0
    _
  %s6 = ssub.s32 1, %s4
  %s7 = scalar_select 0, %s6, %s4
  // Predicated region
  $region2: #{_lambda_.25} parent=0 // pred_check
    _
  $region3: #{_lambda_.25} parent=0 // pred_check_branch
    %9 = sbr.rel (0) target = $region5
  $region4: #{_lambda_.25} parent=0 // pred_region
    _
  $region5: #{_lambda_.25} parent=0 // pred_fallthru
    _
  // Predicated region
  $region6: #{_lambda_.25} parent=0 // pred_check
    _
  $region7: #{_lambda_.25} parent=0 // pred_check_branch
    %11 = sbr.rel (0) target = $region9
  $region8: #{_lambda_.25} parent=0 // pred_region
    _
  $region9: #{_lambda_.25} parent=0 // pred_fallthru
    _
  // Predicated region
  $region10: #{_lambda_.25} parent=0 // pred_check
    _
  $region11: #{_lambda_.25} parent=0 // pred_check_branch
    %13 = sbr.rel (0) target = $region13
  $region12: #{_lambda_.25} parent=0 // pred_region
    _
  $region13: #{_lambda_.25} parent=0 // pred_fallthru
    _
  %v15 = vld [vmem:[%s0] sm:$0xff]
  %v16 = vld [vmem:[%s0 + $0x8] sm:$0xff]
  %v17 = vld [vmem:[%s0 + $0x10] sm:$0xff]
  %v18 = vld [vmem:[%s0 + $0x18] sm:$0xff]
  %v19 = vpack.c.bf16 %v16, %v15
  %v20 = vpack.c.bf16 %v18, %v17
  %v21 = vld [vmem:[%s1] sm:$0xff]
  %v22 = vld [vmem:[%s2] sm:$0x3]
  %v24 = vlaneseq
  %v25 = vshrl.u32 %v24, 7
  %v26 = vsub.s32 0, %v25
  %v27 = vrot.slane %v22, %v26
  %v28 = vlaneseq
  %v29 = vshrl.u32 %v28, 7
  %v30 = vsub.s32 1, %v29
  %v31 = vrot.slane %v22, %v30
  %v35 = vunpack.c.l.b16 %v21
  %v36 = vunpack.c.h.b16 %v21
  %v37 = vpack.c.b16 %v35, %v35
  %v38 = vpack.c.b16 %v36, %v36
  %vm39 = vcmask 64512
  %v41 = vsel %vm39, %v19, 0
  %v44 = vsel %vm39, %v20, 0
  %vm46 = vcmask 1043456
  %v48 = vsel %vm46, %v37, 0
  %v51 = vsel %vm46, %v38, 0
  %53 = vmatprep.subr.bf16.mxu0 %v51
  %54 = vmatpush1.bf16.msra.mxu0 %v48
  %55 = vmatprep.subr.bf16.mxu0 0
  %56 = vmatpush1.bf16.msra.mxu0 0
  %57 = vmatprep.subr.bf16.mxu0 0
  %58 = vmatpush1.bf16.msra.mxu0 0
  %59 = vmatprep.subr.bf16.mxu0 0
  %60 = vmatpush1.bf16.msra.mxu0 0
  %61 = vmatprep.subr.bf16.mxu0 0
  %62 = vmatpush1.bf16.msra.mxu0 0
  %63 = vmatprep.subr.bf16.mxu0 0
  %64 = vmatpush1.bf16.msra.mxu0 0
  %65 = vmatprep.subr.bf16.mxu0 0
  %66 = vmatpush1.bf16.msra.mxu0 0
  %67 = vmatprep.subr.bf16.mxu0 0
  %68 = vmatpush1.bf16.msra.mxu0 0
  %69 = vmatprep.subr.bf16.mxu0 0
  %70 = vmatpush1.bf16.msra.mxu0 0
  %71 = vmatprep.subr.bf16.mxu0 0
  %72 = vmatpush1.bf16.msra.mxu0 0
  %73 = vmatprep.subr.bf16.mxu0 0
  %74 = vmatpush1.bf16.msra.mxu0 0
  %75 = vmatprep.subr.bf16.mxu0 0
  %76 = vmatpush1.bf16.msra.mxu0 0
  %77 = vmatprep.subr.bf16.mxu0 0
  %78 = vmatpush1.bf16.msra.mxu0 0
  %79 = vmatprep.subr.bf16.mxu0 0
  %80 = vmatpush1.bf16.msra.mxu0 0
  %81 = vmatprep.subr.bf16.mxu0 0
  %82 = vmatpush1.bf16.msra.mxu0 0
  %83 = vmatprep.subr.bf16.mxu0 0
  %84 = vmatpush1.bf16.msra.mxu0 0
  %85 = vmatprep.mubr.bf16.mxu0 0
  %86 = vmatmul.mubr.bf16.gmra.mrb[0].mxu0 %v41
  %v87 = vpop.f32.mrb[0].mxu0
  %v88 = vadd.f32 %v27, %v87
  %v89 = vpop.f32.mrb[0].mxu0
  %v90 = vadd.f32 %v31, %v89
  %v91 = vpop.f32.mrb[0].mxu0
  %v92 = vadd.f32 %v27, %v91
  %v93 = vpop.f32.mrb[0].mxu0
  %v94 = vadd.f32 %v31, %v93
  %95 = vmatprep.mubr.bf16.mxu0 0
  %96 = vmatmul.mubr.bf16.gmra.mrb[0].mxu0 %v44
  %v97 = vpop.f32.mrb[0].mxu0
  %v98 = vadd.f32 %v27, %v97
  %v99 = vpop.f32.mrb[0].mxu0
  %v100 = vadd.f32 %v31, %v99
  %v101 = vpop.f32.mrb[0].mxu0
  %v102 = vadd.f32 %v27, %v101
  %v103 = vpop.f32.mrb[0].mxu0
  %v104 = vadd.f32 %v31, %v103
  %105 = vdwg.mxu0
  %v106 = vmax.f32 %v88, 0.0
  %v107 = vmax.f32 %v90, 0.0
  %v108 = vmax.f32 %v92, 0.0
  %v109 = vmax.f32 %v94, 0.0
  %v110 = vmax.f32 %v98, 0.0
  %v111 = vmax.f32 %v100, 0.0
  %v112 = vmax.f32 %v102, 0.0
  %v113 = vmax.f32 %v104, 0.0
  %v114 = vand.u32 2147483647, %v88
  %v115 = vand.u32 2147483647, %v90
  %v116 = vand.u32 2147483647, %v92
  %v117 = vand.u32 2147483647, %v94
  %v118 = vand.u32 2147483647, %v98
  %v119 = vand.u32 2147483647, %v100
  %v120 = vand.u32 2147483647, %v102
  %v121 = vand.u32 2147483647, %v104
  %v122 = vsub.f32 0.0, %v114
  %v123 = vsub.f32 0.0, %v115
  %v124 = vsub.f32 0.0, %v116
  %v125 = vsub.f32 0.0, %v117
  %v126 = vsub.f32 0.0, %v118
  %v127 = vsub.f32 0.0, %v119
  %v128 = vsub.f32 0.0, %v120
  %v129 = vsub.f32 0.0, %v121
  %v130 = vmul.f32 %v122, 1.442695
  %v131 = vpow.pop %v130
  %v132 = vmul.f32 %v123, 1.442695
  %v133 = vpow.pop %v132
  %v134 = vmul.f32 %v124, 1.442695
  %v135 = vpow.pop %v134
  %v136 = vmul.f32 %v125, 1.442695
  %v137 = vpow.pop %v136
  %v138 = vmul.f32 %v126, 1.442695
  %v139 = vpow.pop %v138
  %v140 = vmul.f32 %v127, 1.442695
  %v141 = vpow.pop %v140
  %v142 = vmul.f32 %v128, 1.442695
  %v143 = vpow.pop %v142
  %v144 = vmul.f32 %v129, 1.442695
  %v145 = vpow.pop %v144
  %v146 = vadd.f32 %v131, 1.0
  %v147 = vadd.f32 %v133, 1.0
  %v148 = vadd.f32 %v135, 1.0
  %v149 = vadd.f32 %v137, 1.0
  %v150 = vadd.f32 %v139, 1.0
  %v151 = vadd.f32 %v141, 1.0
  %v152 = vadd.f32 %v143, 1.0
  %v153 = vadd.f32 %v145, 1.0
  %v154 = vlog2.pop %v146
  %v155 = vmul.f32 %v154, 0.6931472
  %v156 = vlog2.pop %v147
  %v157 = vmul.f32 %v156, 0.6931472
  %v158 = vlog2.pop %v148
  %v159 = vmul.f32 %v158, 0.6931472
  %v160 = vlog2.pop %v149
  %v161 = vmul.f32 %v160, 0.6931472
  %v162 = vlog2.pop %v150
  %v163 = vmul.f32 %v162, 0.6931472
  %v164 = vlog2.pop %v151
  %v165 = vmul.f32 %v164, 0.6931472
  %v166 = vlog2.pop %v152
  %v167 = vmul.f32 %v166, 0.6931472
  %v168 = vlog2.pop %v153
  %v169 = vmul.f32 %v168, 0.6931472
  %v170 = vadd.f32 %v106, %v155
  %v171 = vadd.f32 %v107, %v157
  %v172 = vadd.f32 %v108, %v159
  %v173 = vadd.f32 %v109, %v161
  %v174 = vadd.f32 %v110, %v163
  %v175 = vadd.f32 %v111, %v165
  %v176 = vadd.f32 %v112, %v167
  %v177 = vadd.f32 %v113, %v169
  %178 = vst [vmem:[%s3] sm:$0xff] %v170
  %179 = vst [vmem:[%s3 + $0x8] sm:$0xff] %v171
  %180 = vst [vmem:[%s3 + $0x10] sm:$0xff] %v172
  %181 = vst [vmem:[%s3 + $0x18] sm:$0xff] %v173
  %182 = vst [vmem:[%s3 + $0x20] sm:$0xff] %v174
  %183 = vst [vmem:[%s3 + $0x28] sm:$0xff] %v175
  %184 = vst [vmem:[%s3 + $0x30] sm:$0xff] %v176
  %185 = vst [vmem:[%s3 + $0x38] sm:$0xff] %v177
  // Predicated region
  $region14: #{_lambda_.25} parent=0 // pred_check
    _
  $region15: #{_lambda_.25} parent=0 // pred_check_branch
    %187 = sbr.rel (0) target = $region17
  $region16: #{_lambda_.25} parent=0 // pred_region
    _
  $region17: #{_lambda_.25} parent=0 // pred_fallthru
    _
  // Predicated region
  $region18: #{_lambda_.25} parent=0 // pred_check
    _
  $region19: #{_lambda_.25} parent=0 // pred_check_branch
    %189 = sbr.rel (0) target = $region21
  $region20: #{_lambda_.25} parent=0 // pred_region
    _
  $region21: #{_lambda_.25} parent=0 // pred_fallthru
    _

// kernel: _lambda_.27
$region0: #{_lambda_.27}
  #allocation0 [shape = 'u32[]', space=smem, size = 0x4, offset = 0x4, fixed_abs, tag = 'smem constant byte address 0x4 - core index']
  #allocation1 [shape = 'u32[144,128]{1,0:T(1,128)}', space=vmem, size = 0x12000, scoped, tag = 'internal scratch']
  %s0 = inlined_call_operand.vmem [shape: f32[32,64], index: 0, kind: input, shape index: {}]
  %s1 = inlined_call_operand.vmem [shape: f32[32,64], index: 1, kind: input, shape index: {}]
  %s2 = inlined_call_operand.vmem [shape: f32[1,64], index: 2, kind: input, shape index: {}]
  %s3 = inlined_call_operand.vmem [shape: f32[1,64], index: 3, kind: input, shape index: {}]
  %s4 = inlined_call_operand.vmem [shape: bf16[64,32], index: 4, kind: input, shape index: {}]
  %s5 = inlined_call_operand.vmem [shape: f32[32,32], index: 5, kind: output, shape index: {}]
  %s6 = sld [smem:[#allocation0]]
  $region30: #{_lambda_.27} parent=0
    _
  %s8 = ssub.s32 1, %s6
  %s9 = scalar_select 0, %s8, %s6
  // Predicated region
  $region2: #{_lambda_.27} parent=0 // pred_check
    _
  $region3: #{_lambda_.27} parent=0 // pred_check_branch
    %11 = sbr.rel (0) target = $region5
  $region4: #{_lambda_.27} parent=0 // pred_region
    _
  $region5: #{_lambda_.27} parent=0 // pred_fallthru
    _
  // Predicated region
  $region6: #{_lambda_.27} parent=0 // pred_check
    _
  $region7: #{_lambda_.27} parent=0 // pred_check_branch
    %13 = sbr.rel (0) target = $region9
  $region8: #{_lambda_.27} parent=0 // pred_region
    _
  $region9: #{_lambda_.27} parent=0 // pred_fallthru
    _
  // Predicated region
  $region10: #{_lambda_.27} parent=0 // pred_check
    _
  $region11: #{_lambda_.27} parent=0 // pred_check_branch
    %15 = sbr.rel (0) target = $region13
  $region12: #{_lambda_.27} parent=0 // pred_region
    _
  $region13: #{_lambda_.27} parent=0 // pred_fallthru
    _
  // Predicated region
  $region14: #{_lambda_.27} parent=0 // pred_check
    _
  $region15: #{_lambda_.27} parent=0 // pred_check_branch
    %17 = sbr.rel (0) target = $region17
  $region16: #{_lambda_.27} parent=0 // pred_region
    _
  $region17: #{_lambda_.27} parent=0 // pred_fallthru
    _
  // Predicated region
  $region18: #{_lambda_.27} parent=0 // pred_check
    _
  $region19: #{_lambda_.27} parent=0 // pred_check_branch
    %19 = sbr.rel (0) target = $region21
  $region20: #{_lambda_.27} parent=0 // pred_region
    _
  $region21: #{_lambda_.27} parent=0 // pred_fallthru
    _
  %v21 = vld [vmem:[%s0] sm:$0xff]
  %v22 = vld [vmem:[%s0 + $0x8] sm:$0xff]
  %v23 = vld [vmem:[%s0 + $0x10] sm:$0xff]
  %v24 = vld [vmem:[%s0 + $0x18] sm:$0xff]
  %vm25 = vcmask 523264
  %v26 = vsel %vm25, %v21, 0.0
  %27 = vadd.xlane.f32.xlu0 %v26
  %v28 = vpop.xlane.xlu0 %27
  %v29 = vsel %vm25, %v22, 0.0
  %30 = vadd.xlane.f32.xlu0 %v29
  %v31 = vpop.xlane.xlu0 %30
  %v32 = vsel %vm25, %v23, 0.0
  %33 = vadd.xlane.f32.xlu0 %v32
  %v34 = vpop.xlane.xlu0 %33
  %v35 = vsel %vm25, %v24, 0.0
  %36 = vadd.xlane.f32.xlu0 %v35
  %v37 = vpop.xlane.xlu0 %36
  %v38 = vrcp.pop 64.0
  %v39 = vmul.f32 %v28, %v38
  %v40 = vmul.f32 %v31, %v38
  %v41 = vmul.f32 %v34, %v38
  %v42 = vmul.f32 %v37, %v38
  %v43 = vsub.f32 %v21, %v39
  %v44 = vsub.f32 %v22, %v40
  %v45 = vsub.f32 %v23, %v41
  %v46 = vsub.f32 %v24, %v42
  %v47 = vmul.f32 %v43, %v43
  %v48 = vmul.f32 %v44, %v44
  %v49 = vmul.f32 %v45, %v45
  %v50 = vmul.f32 %v46, %v46
  %v51 = vsel %vm25, %v47, 0.0
  %52 = vadd.xlane.f32.xlu0 %v51
  %v53 = vpop.xlane.xlu0 %52
  %v54 = vsel %vm25, %v48, 0.0
  %55 = vadd.xlane.f32.xlu0 %v54
  %v56 = vpop.xlane.xlu0 %55
  %v57 = vsel %vm25, %v49, 0.0
  %58 = vadd.xlane.f32.xlu0 %v57
  %v59 = vpop.xlane.xlu0 %58
  %v60 = vsel %vm25, %v50, 0.0
  %61 = vadd.xlane.f32.xlu0 %v60
  %v62 = vpop.xlane.xlu0 %61
  %v63 = vmul.f32 %v53, %v38
  %v64 = vmul.f32 %v56, %v38
  %v65 = vmul.f32 %v59, %v38
  %v66 = vmul.f32 %v62, %v38
  %v67 = vadd.f32 %v63, 1e-05
  %v68 = vadd.f32 %v64, 1e-05
  %v69 = vadd.f32 %v65, 1e-05
  %v70 = vadd.f32 %v66, 1e-05
  %v71 = vrsqrt.pop %v67
  %v72 = vrsqrt.pop %v68
  %v73 = vrsqrt.pop %v69
  %v74 = vrsqrt.pop %v70
  %v75 = vmul.f32 %v43, %v71
  %v76 = vmul.f32 %v44, %v72
  %v77 = vmul.f32 %v45, %v73
  %v78 = vmul.f32 %v46, %v74
  %v79 = vld [vmem:[%s2] sm:$0x1]
  %v81 = vlaneseq
  %v82 = vshrl.u32 %v81, 7
  %v83 = vsub.s32 0, %v82
  %v84 = vrot.slane %v79, %v83
  %v86 = vmul.f32 %v75, %v84
  %v87 = vmul.f32 %v76, %v84
  %v88 = vmul.f32 %v77, %v84
  %v89 = vmul.f32 %v78, %v84
  %v90 = vld [vmem:[%s3] sm:$0x1]
  %v92 = vlaneseq
  %v93 = vshrl.u32 %v92, 7
  %v94 = vsub.s32 0, %v93
  %v95 = vrot.slane %v90, %v94
  %v97 = vadd.f32 %v86, %v95
  %v98 = vadd.f32 %v87, %v95
  %v99 = vadd.f32 %v88, %v95
  %v100 = vadd.f32 %v89, %v95
  %v101 = vld [vmem:[%s1] sm:$0xff]
  %v102 = vld [vmem:[%s1 + $0x8] sm:$0xff]
  %v103 = vld [vmem:[%s1 + $0x10] sm:$0xff]
  %v104 = vld [vmem:[%s1 + $0x18] sm:$0xff]
  %v105 = vsub.f32 0.0, %v101
  %v106 = vsub.f32 0.0, %v102
  %v107 = vsub.f32 0.0, %v103
  %v108 = vsub.f32 0.0, %v104
  %v109 = vmul.f32 %v105, 1.442695
  %v110 = vpow.pop %v109
  %v111 = vmul.f32 %v106, 1.442695
  %v112 = vpow.pop %v111
  %v113 = vmul.f32 %v107, 1.442695
  %v114 = vpow.pop %v113
  %v115 = vmul.f32 %v108, 1.442695
  %v116 = vpow.pop %v115
  %v117 = vadd.f32 %v110, 1.0
  %v118 = vadd.f32 %v112, 1.0
  %v119 = vadd.f32 %v114, 1.0
  %v120 = vadd.f32 %v116, 1.0
  %v121 = vrcp.pop %v117
  %v122 = vmul.f32 1.0, %v121
  %v123 = vrcp.pop %v118
  %v124 = vmul.f32 1.0, %v123
  %v125 = vrcp.pop %v119
  %v126 = vmul.f32 1.0, %v125
  %v127 = vrcp.pop %v120
  %v128 = vmul.f32 1.0, %v127
  %v129 = vmul.f32 %v101, %v122
  %v130 = vmul.f32 %v102, %v124
  %v131 = vmul.f32 %v103, %v126
  %v132 = vmul.f32 %v104, %v128
  %v133 = vmul.f32 %v97, %v129
  %v134 = vmul.f32 %v98, %v130
  %v135 = vmul.f32 %v99, %v131
  %v136 = vmul.f32 %v100, %v132
  %v137 = vpack.c.bf16 %v134, %v133
  %v138 = vpack.c.bf16 %v136, %v135
  %v139 = vld [vmem:[%s4] sm:$0xf]
  %v140 = vld [vmem:[%s4 + $0x4] sm:$0xf]
  %v141 = vld [vmem:[%s4 + $0x8] sm:$0xf]
  %v142 = vld [vmem:[%s4 + $0xc] sm:$0xf]
  %v143 = vld [vmem:[%s4 + $0x10] sm:$0xf]
  %v144 = vld [vmem:[%s4 + $0x14] sm:$0xf]
  %v145 = vld [vmem:[%s4 + $0x18] sm:$0xf]
  %v146 = vld [vmem:[%s4 + $0x1c] sm:$0xf]
  %v155 = vunpack.c.l.b16 %v139
  %v156 = vunpack.c.l.b16 %v140
  %v157 = vunpack.c.l.b16 %v141
  %v158 = vunpack.c.l.b16 %v142
  %v159 = vunpack.c.l.b16 %v143
  %v160 = vunpack.c.l.b16 %v144
  %v161 = vunpack.c.l.b16 %v145
  %v162 = vunpack.c.l.b16 %v146
  %v163 = vpack.c.b16 %v156, %v155
  %v164 = vpack.c.b16 %v158, %v157
  %v165 = vpack.c.b16 %v160, %v159
  %v166 = vpack.c.b16 %v162, %v161
  %v172 = vsel %vm25, %v137, 0
  %v175 = vsel %vm25, %v138, 0
  %177 = vmatprep.subr.bf16.mxu0 0
  %178 = vmatpush1.bf16.msra.mxu0 %v163
  %179 = vmatprep.subr.bf16.mxu0 0
  %180 = vmatpush1.bf16.msra.mxu0 %v164
  %181 = vmatprep.subr.bf16.mxu0 0
  %182 = vmatpush1.bf16.msra.mxu0 %v165
  %183 = vmatprep.subr.bf16.mxu0 0
  %184 = vmatpush1.bf16.msra.mxu0 %v166
  %185 = vmatprep.subr.bf16.mxu0 0
  %186 = vmatpush1.bf16.msra.mxu0 0
  %187 = vmatprep.subr.bf16.mxu0 0
  %188 = vmatpush1.bf16.msra.mxu0 0
  %189 = vmatprep.subr.bf16.mxu0 0
  %190 = vmatpush1.bf16.msra.mxu0 0
  %191 = vmatprep.subr.bf16.mxu0 0
  %192 = vmatpush1.bf16.msra.mxu0 0
  %193 = vmatprep.subr.bf16.mxu0 0
  %194 = vmatpush1.bf16.msra.mxu0 0
  %195 = vmatprep.subr.bf16.mxu0 0
  %196 = vmatpush1.bf16.msra.mxu0 0
  %197 = vmatprep.subr.bf16.mxu0 0
  %198 = vmatpush1.bf16.msra.mxu0 0
  %199 = vmatprep.subr.bf16.mxu0 0
  %200 = vmatpush1.bf16.msra.mxu0 0
  %201 = vmatprep.subr.bf16.mxu0 0
  %202 = vmatpush1.bf16.msra.mxu0 0
  %203 = vmatprep.subr.bf16.mxu0 0
  %204 = vmatpush1.bf16.msra.mxu0 0
  %205 = vmatprep.subr.bf16.mxu0 0
  %206 = vmatpush1.bf16.msra.mxu0 0
  %207 = vmatprep.subr.bf16.mxu0 0
  %208 = vmatpush1.bf16.msra.mxu0 0
  %209 = vmatprep.mubr.bf16.mxu0 0
  %210 = vmatmul.mubr.bf16.gmra.mrb[0].mxu0 %v172
  %v211 = vpop.f32.mrb[0].mxu0
  %v212 = vadd.f32 0.0, %v211
  %v213 = vpop.f32.mrb[0].mxu0
  %v214 = vpop.f32.mrb[0].mxu0
  %v215 = vadd.f32 0.0, %v214
  %v216 = vpop.f32.mrb[0].mxu0
  %217 = vmatprep.mubr.bf16.mxu0 0
  %218 = vmatmul.mubr.bf16.gmra.mrb[0].mxu0 %v175
  %v219 = vpop.f32.mrb[0].mxu0
  %v220 = vadd.f32 0.0, %v219
  %v221 = vpop.f32.mrb[0].mxu0
  %v222 = vpop.f32.mrb[0].mxu0
  %v223 = vadd.f32 0.0, %v222
  %v224 = vpop.f32.mrb[0].mxu0
  %225 = vdwg.mxu0
  %vm226 = vcmask 261120
  %227 = vst.msk [vmem:[%s5] sm:$0xff] %vm226, %v212
  %228 = vst.msk [vmem:[%s5 + $0x8] sm:$0xff] %vm226, %v215
  %229 = vst.msk [vmem:[%s5 + $0x10] sm:$0xff] %vm226, %v220
  %230 = vst.msk [vmem:[%s5 + $0x18] sm:$0xff] %vm226, %v223
  // Predicated region
  $region22: #{_lambda_.27} parent=0 // pred_check
    _
  $region23: #{_lambda_.27} parent=0 // pred_check_branch
    %232 = sbr.rel (0) target = $region25
  $region24: #{_lambda_.27} parent=0 // pred_region
    _
  $region25: #{_lambda_.27} parent=0 // pred_fallthru
    _
  // Predicated region
  $region26: #{_lambda_.27} parent=0 // pred_check
    _
  $region27: #{_lambda_.27} parent=0 // pred_check_branch
    %234 = sbr.rel (0) target = $region29
  $region28: #{_lambda_.27} parent=0 // pred_region
    _
  $region29: #{_lambda_.27} parent=0 // pred_fallthru
    _

// kernel: _lambda_.29
$region0: #{_lambda_.29}
  #allocation0 [shape = 'u32[]', space=smem, size = 0x4, offset = 0x4, fixed_abs, tag = 'smem constant byte address 0x4 - core index']
  #allocation1 [shape = 'u32[144,128]{1,0:T(1,128)}', space=vmem, size = 0x12000, scoped, tag = 'internal scratch']
  %s0 = inlined_call_operand.vmem [shape: f32[32,128], index: 0, kind: input, shape index: {}]
  %s1 = inlined_call_operand.vmem [shape: bf16[128,32], index: 1, kind: input, shape index: {}]
  %s2 = inlined_call_operand.vmem [shape: f32[1,32], index: 2, kind: input, shape index: {}]
  %s3 = inlined_call_operand.vmem [shape: f32[32,32], index: 3, kind: output, shape index: {}]
  %s4 = sld [smem:[#allocation0]]
  $region22: #{_lambda_.29} parent=0
    _
  %s6 = ssub.s32 1, %s4
  %s7 = scalar_select 0, %s6, %s4
  // Predicated region
  $region2: #{_lambda_.29} parent=0 // pred_check
    _
  $region3: #{_lambda_.29} parent=0 // pred_check_branch
    %9 = sbr.rel (0) target = $region5
  $region4: #{_lambda_.29} parent=0 // pred_region
    _
  $region5: #{_lambda_.29} parent=0 // pred_fallthru
    _
  // Predicated region
  $region6: #{_lambda_.29} parent=0 // pred_check
    _
  $region7: #{_lambda_.29} parent=0 // pred_check_branch
    %11 = sbr.rel (0) target = $region9
  $region8: #{_lambda_.29} parent=0 // pred_region
    _
  $region9: #{_lambda_.29} parent=0 // pred_fallthru
    _
  // Predicated region
  $region10: #{_lambda_.29} parent=0 // pred_check
    _
  $region11: #{_lambda_.29} parent=0 // pred_check_branch
    %13 = sbr.rel (0) target = $region13
  $region12: #{_lambda_.29} parent=0 // pred_region
    _
  $region13: #{_lambda_.29} parent=0 // pred_fallthru
    _
  %v15 = vld [vmem:[%s0] sm:$0xff]
  %v16 = vld [vmem:[%s0 + $0x8] sm:$0xff]
  %v17 = vld [vmem:[%s0 + $0x10] sm:$0xff]
  %v18 = vld [vmem:[%s0 + $0x18] sm:$0xff]
  %v19 = vpack.c.bf16 %v16, %v15
  %v20 = vpack.c.bf16 %v18, %v17
  %v21 = vld [vmem:[%s1] sm:$0xf]
  %v22 = vld [vmem:[%s1 + $0x4] sm:$0xf]
  %v23 = vld [vmem:[%s1 + $0x8] sm:$0xf]
  %v24 = vld [vmem:[%s1 + $0xc] sm:$0xf]
  %v25 = vld [vmem:[%s1 + $0x10] sm:$0xf]
  %v26 = vld [vmem:[%s1 + $0x14] sm:$0xf]
  %v27 = vld [vmem:[%s1 + $0x18] sm:$0xf]
  %v28 = vld [vmem:[%s1 + $0x1c] sm:$0xf]
  %v29 = vld [vmem:[%s1 + $0x20] sm:$0xf]
  %v30 = vld [vmem:[%s1 + $0x24] sm:$0xf]
  %v31 = vld [vmem:[%s1 + $0x28] sm:$0xf]
  %v32 = vld [vmem:[%s1 + $0x2c] sm:$0xf]
  %v33 = vld [vmem:[%s1 + $0x30] sm:$0xf]
  %v34 = vld [vmem:[%s1 + $0x34] sm:$0xf]
  %v35 = vld [vmem:[%s1 + $0x38] sm:$0xf]
  %v36 = vld [vmem:[%s1 + $0x3c] sm:$0xf]
  %v37 = vld [vmem:[%s2] sm:$0x1]
  %v39 = vlaneseq
  %v40 = vshrl.u32 %v39, 7
  %v41 = vsub.s32 0, %v40
  %v42 = vrot.slane %v37, %v41
  %v60 = vunpack.c.l.b16 %v21
  %v61 = vunpack.c.l.b16 %v22
  %v62 = vunpack.c.l.b16 %v23
  %v63 = vunpack.c.l.b16 %v24
  %v64 = vunpack.c.l.b16 %v25
  %v65 = vunpack.c.l.b16 %v26
  %v66 = vunpack.c.l.b16 %v27
  %v67 = vunpack.c.l.b16 %v28
  %v68 = vunpack.c.l.b16 %v29
  %v69 = vunpack.c.l.b16 %v30
  %v70 = vunpack.c.l.b16 %v31
  %v71 = vunpack.c.l.b16 %v32
  %v72 = vunpack.c.l.b16 %v33
  %v73 = vunpack.c.l.b16 %v34
  %v74 = vunpack.c.l.b16 %v35
  %v75 = vunpack.c.l.b16 %v36
  %v76 = vpack.c.b16 %v61, %v60
  %v77 = vpack.c.b16 %v63, %v62
  %v78 = vpack.c.b16 %v65, %v64
  %v79 = vpack.c.b16 %v67, %v66
  %v80 = vpack.c.b16 %v69, %v68
  %v81 = vpack.c.b16 %v71, %v70
  %v82 = vpack.c.b16 %v73, %v72
  %v83 = vpack.c.b16 %v75, %v74
  %92 = vmatprep.subr.bf16.mxu0 0
  %93 = vmatpush1.bf16.msra.mxu0 %v76
  %94 = vmatprep.subr.bf16.mxu0 0
  %95 = vmatpush1.bf16.msra.mxu0 %v77
  %96 = vmatprep.subr.bf16.mxu0 0
  %97 = vmatpush1.bf16.msra.mxu0 %v78
  %98 = vmatprep.subr.bf16.mxu0 0
  %99 = vmatpush1.bf16.msra.mxu0 %v79
  %100 = vmatprep.subr.bf16.mxu0 0
  %101 = vmatpush1.bf16.msra.mxu0 %v80
  %102 = vmatprep.subr.bf16.mxu0 0
  %103 = vmatpush1.bf16.msra.mxu0 %v81
  %104 = vmatprep.subr.bf16.mxu0 0
  %105 = vmatpush1.bf16.msra.mxu0 %v82
  %106 = vmatprep.subr.bf16.mxu0 0
  %107 = vmatpush1.bf16.msra.mxu0 %v83
  %108 = vmatprep.subr.bf16.mxu0 0
  %109 = vmatpush1.bf16.msra.mxu0 0
  %110 = vmatprep.subr.bf16.mxu0 0
  %111 = vmatpush1.bf16.msra.mxu0 0
  %112 = vmatprep.subr.bf16.mxu0 0
  %113 = vmatpush1.bf16.msra.mxu0 0
  %114 = vmatprep.subr.bf16.mxu0 0
  %115 = vmatpush1.bf16.msra.mxu0 0
  %116 = vmatprep.subr.bf16.mxu0 0
  %117 = vmatpush1.bf16.msra.mxu0 0
  %118 = vmatprep.subr.bf16.mxu0 0
  %119 = vmatpush1.bf16.msra.mxu0 0
  %120 = vmatprep.subr.bf16.mxu0 0
  %121 = vmatpush1.bf16.msra.mxu0 0
  %122 = vmatprep.subr.bf16.mxu0 0
  %123 = vmatpush1.bf16.msra.mxu0 0
  %124 = vmatprep.mubr.bf16.mxu0 0
  %125 = vmatmul.mubr.bf16.gmra.mrb[0].mxu0 %v19
  %v126 = vpop.f32.mrb[0].mxu0
  %v127 = vadd.f32 %v42, %v126
  %v128 = vpop.f32.mrb[0].mxu0
  %v129 = vpop.f32.mrb[0].mxu0
  %v130 = vadd.f32 %v42, %v129
  %v131 = vpop.f32.mrb[0].mxu0
  %132 = vmatprep.mubr.bf16.mxu0 0
  %133 = vmatmul.mubr.bf16.gmra.mrb[0].mxu0 %v20
  %v134 = vpop.f32.mrb[0].mxu0
  %v135 = vadd.f32 %v42, %v134
  %v136 = vpop.f32.mrb[0].mxu0
  %v137 = vpop.f32.mrb[0].mxu0
  %v138 = vadd.f32 %v42, %v137
  %v139 = vpop.f32.mrb[0].mxu0
  %140 = vdwg.mxu0
  %vm141 = vcmask 261120
  %142 = vst.msk [vmem:[%s3] sm:$0xff] %vm141, %v127
  %143 = vst.msk [vmem:[%s3 + $0x8] sm:$0xff] %vm141, %v130
  %144 = vst.msk [vmem:[%s3 + $0x10] sm:$0xff] %vm141, %v135
  %145 = vst.msk [vmem:[%s3 + $0x18] sm:$0xff] %vm141, %v138
  // Predicated region
  $region14: #{_lambda_.29} parent=0 // pred_check
    _
  $region15: #{_lambda_.29} parent=0 // pred_check_branch
    %147 = sbr.rel (0) target = $region17
  $region16: #{_lambda_.29} parent=0 // pred_region
    _
  $region17: #{_lambda_.29} parent=0 // pred_fallthru
    _
  // Predicated region
  $region18: #{_lambda_.29} parent=0 // pred_check
    _
  $region19: #{_lambda_.29} parent=0 // pred_check_branch
    %149 = sbr.rel (0) target = $region21
  $region20: #{_lambda_.29} parent=0 // pred_region
    _
  $region21: #{_lambda_.29} parent=0 // pred_fallthru
    _

// kernel: _lambda_.30
$region0: #{_lambda_.30}
  #allocation0 [shape = 'u32[]', space=smem, size = 0x4, offset = 0x4, fixed_abs, tag = 'smem constant byte address 0x4 - core index']
  #allocation1 [shape = 'u32[144,128]{1,0:T(1,128)}', space=vmem, size = 0x12000, scoped, tag = 'internal scratch']
  %s0 = inlined_call_operand.vmem [shape: f32[8,128], index: 0, kind: input, shape index: {}]
  %s1 = inlined_call_operand.vmem [shape: bf16[128,64], index: 1, kind: input, shape index: {}]
  %s2 = inlined_call_operand.vmem [shape: f32[1,64], index: 2, kind: input, shape index: {}]
  %s3 = inlined_call_operand.vmem [shape: f32[1,64], index: 3, kind: input, shape index: {}]
  %s4 = inlined_call_operand.vmem [shape: f32[1,64], index: 4, kind: input, shape index: {}]
  %s5 = inlined_call_operand.vmem [shape: f32[8,64], index: 5, kind: output, shape index: {}]
  %s6 = sld [smem:[#allocation0]]
  $region30: #{_lambda_.30} parent=0
    _
  %s8 = ssub.s32 1, %s6
  %s9 = scalar_select 0, %s8, %s6
  // Predicated region
  $region2: #{_lambda_.30} parent=0 // pred_check
    _
  $region3: #{_lambda_.30} parent=0 // pred_check_branch
    %11 = sbr.rel (0) target = $region5
  $region4: #{_lambda_.30} parent=0 // pred_region
    _
  $region5: #{_lambda_.30} parent=0 // pred_fallthru
    _
  // Predicated region
  $region6: #{_lambda_.30} parent=0 // pred_check
    _
  $region7: #{_lambda_.30} parent=0 // pred_check_branch
    %13 = sbr.rel (0) target = $region9
  $region8: #{_lambda_.30} parent=0 // pred_region
    _
  $region9: #{_lambda_.30} parent=0 // pred_fallthru
    _
  // Predicated region
  $region10: #{_lambda_.30} parent=0 // pred_check
    _
  $region11: #{_lambda_.30} parent=0 // pred_check_branch
    %15 = sbr.rel (0) target = $region13
  $region12: #{_lambda_.30} parent=0 // pred_region
    _
  $region13: #{_lambda_.30} parent=0 // pred_fallthru
    _
  // Predicated region
  $region14: #{_lambda_.30} parent=0 // pred_check
    _
  $region15: #{_lambda_.30} parent=0 // pred_check_branch
    %17 = sbr.rel (0) target = $region17
  $region16: #{_lambda_.30} parent=0 // pred_region
    _
  $region17: #{_lambda_.30} parent=0 // pred_fallthru
    _
  // Predicated region
  $region18: #{_lambda_.30} parent=0 // pred_check
    _
  $region19: #{_lambda_.30} parent=0 // pred_check_branch
    %19 = sbr.rel (0) target = $region21
  $region20: #{_lambda_.30} parent=0 // pred_region
    _
  $region21: #{_lambda_.30} parent=0 // pred_fallthru
    _
  %v21 = vld [vmem:[%s0] sm:$0xff]
  %v22 = vpack.c.bf16 %v21, %v21
  %v23 = vld [vmem:[%s1] sm:$0xf]
  %v24 = vld [vmem:[%s1 + $0x4] sm:$0xf]
  %v25 = vld [vmem:[%s1 + $0x8] sm:$0xf]
  %v26 = vld [vmem:[%s1 + $0xc] sm:$0xf]
  %v27 = vld [vmem:[%s1 + $0x10] sm:$0xf]
  %v28 = vld [vmem:[%s1 + $0x14] sm:$0xf]
  %v29 = vld [vmem:[%s1 + $0x18] sm:$0xf]
  %v30 = vld [vmem:[%s1 + $0x1c] sm:$0xf]
  %v31 = vld [vmem:[%s1 + $0x20] sm:$0xf]
  %v32 = vld [vmem:[%s1 + $0x24] sm:$0xf]
  %v33 = vld [vmem:[%s1 + $0x28] sm:$0xf]
  %v34 = vld [vmem:[%s1 + $0x2c] sm:$0xf]
  %v35 = vld [vmem:[%s1 + $0x30] sm:$0xf]
  %v36 = vld [vmem:[%s1 + $0x34] sm:$0xf]
  %v37 = vld [vmem:[%s1 + $0x38] sm:$0xf]
  %v38 = vld [vmem:[%s1 + $0x3c] sm:$0xf]
  %v39 = vld [vmem:[%s2] sm:$0x1]
  %v41 = vlaneseq
  %v42 = vshrl.u32 %v41, 7
  %v43 = vsub.s32 0, %v42
  %v44 = vrot.slane %v39, %v43
  %v62 = vunpack.c.l.b16 %v23
  %v63 = vunpack.c.l.b16 %v24
  %v64 = vunpack.c.l.b16 %v25
  %v65 = vunpack.c.l.b16 %v26
  %v66 = vunpack.c.l.b16 %v27
  %v67 = vunpack.c.l.b16 %v28
  %v68 = vunpack.c.l.b16 %v29
  %v69 = vunpack.c.l.b16 %v30
  %v70 = vunpack.c.l.b16 %v31
  %v71 = vunpack.c.l.b16 %v32
  %v72 = vunpack.c.l.b16 %v33
  %v73 = vunpack.c.l.b16 %v34
  %v74 = vunpack.c.l.b16 %v35
  %v75 = vunpack.c.l.b16 %v36
  %v76 = vunpack.c.l.b16 %v37
  %v77 = vunpack.c.l.b16 %v38
  %v78 = vpack.c.b16 %v63, %v62
  %v79 = vpack.c.b16 %v65, %v64
  %v80 = vpack.c.b16 %v67, %v66
  %v81 = vpack.c.b16 %v69, %v68
  %v82 = vpack.c.b16 %v71, %v70
  %v83 = vpack.c.b16 %v73, %v72
  %v84 = vpack.c.b16 %v75, %v74
  %v85 = vpack.c.b16 %v77, %v76
  %94 = vmatprep.subr.bf16.mxu0 0
  %95 = vmatpush1.bf16.msra.mxu0 %v78
  %96 = vmatprep.subr.bf16.mxu0 0
  %97 = vmatpush1.bf16.msra.mxu0 %v79
  %98 = vmatprep.subr.bf16.mxu0 0
  %99 = vmatpush1.bf16.msra.mxu0 %v80
  %100 = vmatprep.subr.bf16.mxu0 0
  %101 = vmatpush1.bf16.msra.mxu0 %v81
  %102 = vmatprep.subr.bf16.mxu0 0
  %103 = vmatpush1.bf16.msra.mxu0 %v82
  %104 = vmatprep.subr.bf16.mxu0 0
  %105 = vmatpush1.bf16.msra.mxu0 %v83
  %106 = vmatprep.subr.bf16.mxu0 0
  %107 = vmatpush1.bf16.msra.mxu0 %v84
  %108 = vmatprep.subr.bf16.mxu0 0
  %109 = vmatpush1.bf16.msra.mxu0 %v85
  %110 = vmatprep.subr.bf16.mxu0 0
  %111 = vmatpush1.bf16.msra.mxu0 0
  %112 = vmatprep.subr.bf16.mxu0 0
  %113 = vmatpush1.bf16.msra.mxu0 0
  %114 = vmatprep.subr.bf16.mxu0 0
  %115 = vmatpush1.bf16.msra.mxu0 0
  %116 = vmatprep.subr.bf16.mxu0 0
  %117 = vmatpush1.bf16.msra.mxu0 0
  %118 = vmatprep.subr.bf16.mxu0 0
  %119 = vmatpush1.bf16.msra.mxu0 0
  %120 = vmatprep.subr.bf16.mxu0 0
  %121 = vmatpush1.bf16.msra.mxu0 0
  %122 = vmatprep.subr.bf16.mxu0 0
  %123 = vmatpush1.bf16.msra.mxu0 0
  %124 = vmatprep.subr.bf16.mxu0 0
  %125 = vmatpush1.bf16.msra.mxu0 0
  %126 = vmatprep.mubr.bf16.mxu0 0
  %127 = vmatmul.mubr.bf16.gmra.mrb[0].mxu0 %v22
  %v128 = vpop.f32.mrb[0].mxu0
  %v129 = vadd.f32 %v44, %v128
  %v130 = vpop.f32.mrb[0].mxu0
  %v131 = vpop.f32.mrb[0].mxu0
  %v132 = vpop.f32.mrb[0].mxu0
  %133 = vdwg.mxu0
  %vm134 = vcmask 523264
  %v135 = vsel %vm134, %v129, 0.0
  %136 = vadd.xlane.f32.xlu0 %v135
  %v137 = vpop.xlane.xlu0 %136
  %v138 = vrcp.pop 64.0
  %v139 = vmul.f32 %v137, %v138
  %v140 = vsub.f32 %v129, %v139
  %v141 = vmul.f32 %v140, %v140
  %v142 = vsel %vm134, %v141, 0.0
  %143 = vadd.xlane.f32.xlu0 %v142
  %v144 = vpop.xlane.xlu0 %143
  %v145 = vmul.f32 %v144, %v138
  %v146 = vadd.f32 %v145, 1e-05
  %v147 = vrsqrt.pop %v146
  %v148 = vmul.f32 %v140, %v147
  %v149 = vld [vmem:[%s3] sm:$0x1]
  %v151 = vlaneseq
  %v152 = vshrl.u32 %v151, 7
  %v153 = vsub.s32 0, %v152
  %v154 = vrot.slane %v149, %v153
  %v156 = vmul.f32 %v148, %v154
  %v157 = vld [vmem:[%s4] sm:$0x1]
  %v159 = vlaneseq
  %v160 = vshrl.u32 %v159, 7
  %v161 = vsub.s32 0, %v160
  %v162 = vrot.slane %v157, %v161
  %v164 = vadd.f32 %v156, %v162
  %165 = vst.msk [vmem:[%s5] sm:$0xff] %vm134, %v164
  // Predicated region
  $region22: #{_lambda_.30} parent=0 // pred_check
    _
  $region23: #{_lambda_.30} parent=0 // pred_check_branch
    %167 = sbr.rel (0) target = $region25
  $region24: #{_lambda_.30} parent=0 // pred_region
    _
  $region25: #{_lambda_.30} parent=0 // pred_fallthru
    _
  // Predicated region
  $region26: #{_lambda_.30} parent=0 // pred_check
    _
  $region27: #{_lambda_.30} parent=0 // pred_check_branch
    %169 = sbr.rel (0) target = $region29
  $region28: #{_lambda_.30} parent=0 // pred_region
    _
  $region29: #{_lambda_.30} parent=0 // pred_fallthru
    _

// kernel: _lambda_.26
$region0: #{_lambda_.26}
  #allocation0 [shape = 'u32[]', space=smem, size = 0x4, offset = 0x4, fixed_abs, tag = 'smem constant byte address 0x4 - core index']
  #allocation1 [shape = 'u32[144,128]{1,0:T(1,128)}', space=vmem, size = 0x12000, scoped, tag = 'internal scratch']
  %s0 = inlined_call_operand.vmem [shape: f32[2,16,4,1,64], index: 0, kind: input, shape index: {}]
  %s1 = inlined_call_operand.vmem [shape: f32[2,16,4,1,64], index: 1, kind: input, shape index: {}]
  %s2 = inlined_call_operand.vmem [shape: f32[2,16,4,8,1], index: 2, kind: input, shape index: {}]
  %s3 = inlined_call_operand.vmem [shape: f32[2,16,4,8,1], index: 3, kind: input, shape index: {}]
  %s4 = inlined_call_operand.vmem [shape: f32[4,8,64], index: 4, kind: input, shape index: {}]
  %s5 = inlined_call_operand.vmem [shape: f32[4,1,64], index: 5, kind: input, shape index: {}]
  %s6 = inlined_call_operand.vmem [shape: f32[2,16,4,1,64], index: 6, kind: output, shape index: {}]
  %s7 = sld [smem:[#allocation0]]
  $region57: #{_lambda_.26} parent=0
    _
  %s9 = ssub.s32 1, %s7
  %s10 = scalar_select 0, %s9, %s7
  loop: start=0, step=1, limit=4
  $region2: #{_lambda_.26} parent=0 // loop_pre_header
    _
  $region3: #{_lambda_.26} parent=0 // loop_header
    %s12 = sphi 0, %s16
    %p13 = scmp.ge.s32.totalorder %s12, 4
    %s22 = sphi 0, %s24
    %s25 = sphi 0, %s22
    %s26 = sphi 0, %s25
    %s42 = sphi 0, %s26
    %s48 = sphi 0, %s50
    %s51 = sphi 0, %s48
    %s52 = sphi 0, %s51
    %s68 = sphi 0, %s52
    %s74 = sphi 0, %s76
    %s77 = sphi 0, %s74
    %s78 = sphi 0, %s77
    %s94 = sphi 0, %s78
    %s100 = sphi 0, %s102
    %s103 = sphi 0, %s100
    %s104 = sphi 0, %s103
    %s120 = sphi 0, %s104
    %s124 = sphi 0, %s124
    %s126 = sphi 0, %s124
    %s127 = sphi 0, %s126
    %s141 = sphi 0, %s127
    %s145 = sphi 0, %s145
    %s147 = sphi 0, %s145
    %s148 = sphi 0, %s147
    %s162 = sphi 0, %s148
    %s168 = sphi 0, %s170
    %s171 = sphi 0, %s168
    %s172 = sphi 0, %s171
    %s188 = sphi 0, %s172
  $region4: #{_lambda_.26} parent=0 // loop_header_branch
    %15 = sbr.rel (%p13) target = $region8
  $region5: #{_lambda_.26} parent=0 // loop_body
    %s17 = ssub.s32 %s12, 1
    %s18 = ssub.s32 %s12, 2
    %s19 = sadd.s32 %s12, 1
    %s20 = ssub.s32 %s12, %s19
    %p21 = scmp.eq.s32.totalorder %s20, 0
    %s23 = sadd.s32 %s22, 1
    %s24 = scalar_select %p21, %s22, %s23
    %p27 = pneg %p21
    %p28 = scmp.eq.s32.totalorder %s12, 1
    %p29 = por %p27, %p28
    %p30 = scmp.ne.s32.totalorder %s22, %s25
    %p31 = scmp.eq.s32.totalorder %s12, 0
    %p32 = por %p30, %p31
    %p33 = scmp.ne.s32.totalorder %s22, %s25
    %p34 = scmp.eq.s32.totalorder %s17, 1
    %p35 = por %p33, %p34
    %p36 = scmp.ne.s32.totalorder %s25, %s26
    %p37 = scmp.eq.s32.totalorder %s17, 0
    %p38 = por %p36, %p37
    %p39 = scmp.ne.s32.totalorder %s25, %s26
    %p40 = scmp.eq.s32.totalorder %s18, 1
    %p41 = por %p39, %p40
    %p43 = scmp.ne.s32.totalorder %s26, %s42
    %p44 = scmp.eq.s32.totalorder %s18, 0
    %p45 = por %p43, %p44
    %s46 = ssub.s32 %s12, %s19
    %p47 = scmp.eq.s32.totalorder %s46, 0
    %s49 = sadd.s32 %s48, 1
    %s50 = scalar_select %p47, %s48, %s49
    %p53 = pneg %p47
    %p54 = scmp.eq.s32.totalorder %s12, 1
    %p55 = por %p53, %p54
    %p56 = scmp.ne.s32.totalorder %s48, %s51
    %p57 = scmp.eq.s32.totalorder %s12, 0
    %p58 = por %p56, %p57
    %p59 = scmp.ne.s32.totalorder %s48, %s51
    %p60 = scmp.eq.s32.totalorder %s17, 1
    %p61 = por %p59, %p60
    %p62 = scmp.ne.s32.totalorder %s51, %s52
    %p63 = scmp.eq.s32.totalorder %s17, 0
    %p64 = por %p62, %p63
    %p65 = scmp.ne.s32.totalorder %s51, %s52
    %p66 = scmp.eq.s32.totalorder %s18, 1
    %p67 = por %p65, %p66
    %p69 = scmp.ne.s32.totalorder %s52, %s68
    %p70 = scmp.eq.s32.totalorder %s18, 0
    %p71 = por %p69, %p70
    %s72 = ssub.s32 %s12, %s19
    %p73 = scmp.eq.s32.totalorder %s72, 0
    %s75 = sadd.s32 %s74, 1
    %s76 = scalar_select %p73, %s74, %s75
    %p79 = pneg %p73
    %p80 = scmp.eq.s32.totalorder %s12, 1
    %p81 = por %p79, %p80
    %p82 = scmp.ne.s32.totalorder %s74, %s77
    %p83 = scmp.eq.s32.totalorder %s12, 0
    %p84 = por %p82, %p83
    %p85 = scmp.ne.s32.totalorder %s74, %s77
    %p86 = scmp.eq.s32.totalorder %s17, 1
    %p87 = por %p85, %p86
    %p88 = scmp.ne.s32.totalorder %s77, %s78
    %p89 = scmp.eq.s32.totalorder %s17, 0
    %p90 = por %p88, %p89
    %p91 = scmp.ne.s32.totalorder %s77, %s78
    %p92 = scmp.eq.s32.totalorder %s18, 1
    %p93 = por %p91, %p92
    %p95 = scmp.ne.s32.totalorder %s78, %s94
    %p96 = scmp.eq.s32.totalorder %s18, 0
    %p97 = por %p95, %p96
    %s98 = ssub.s32 %s12, %s19
    %p99 = scmp.eq.s32.totalorder %s98, 0
    %s101 = sadd.s32 %s100, 1
    %s102 = scalar_select %p99, %s100, %s101
    %p105 = pneg %p99
    %p106 = scmp.eq.s32.totalorder %s12, 1
    %p107 = por %p105, %p106
    %p108 = scmp.ne.s32.totalorder %s100, %s103
    %p109 = scmp.eq.s32.totalorder %s12, 0
    %p110 = por %p108, %p109
    %p111 = scmp.ne.s32.totalorder %s100, %s103
    %p112 = scmp.eq.s32.totalorder %s17, 1
    %p113 = por %p111, %p112
    %p114 = scmp.ne.s32.totalorder %s103, %s104
    %p115 = scmp.eq.s32.totalorder %s17, 0
    %p116 = por %p114, %p115
    %p117 = scmp.ne.s32.totalorder %s103, %s104
    %p118 = scmp.eq.s32.totalorder %s18, 1
    %p119 = por %p117, %p118
    %p121 = scmp.ne.s32.totalorder %s104, %s120
    %p122 = scmp.eq.s32.totalorder %s18, 0
    %p123 = por %p121, %p122
    %s125 = sadd.s32 %s124, 1
    %p128 = scmp.eq.s32.totalorder %s12, 1
    %p129 = scmp.ne.s32.totalorder %s124, %s126
    %p130 = scmp.eq.s32.totalorder %s12, 0
    %p131 = por %p129, %p130
    %p132 = scmp.ne.s32.totalorder %s124, %s126
    %p133 = scmp.eq.s32.totalorder %s17, 1
    %p134 = por %p132, %p133
    %p135 = scmp.ne.s32.totalorder %s126, %s127
    %p136 = scmp.eq.s32.totalorder %s17, 0
    %p137 = por %p135, %p136
    %p138 = scmp.ne.s32.totalorder %s126, %s127
    %p139 = scmp.eq.s32.totalorder %s18, 1
    %p140 = por %p138, %p139
    %p142 = scmp.ne.s32.totalorder %s127, %s141
    %p143 = scmp.eq.s32.totalorder %s18, 0
    %p144 = por %p142, %p143
    %s146 = sadd.s32 %s145, 1
    %p149 = scmp.eq.s32.totalorder %s12, 1
    %p150 = scmp.ne.s32.totalorder %s145, %s147
    %p151 = scmp.eq.s32.totalorder %s12, 0
    %p152 = por %p150, %p151
    %p153 = scmp.ne.s32.totalorder %s145, %s147
    %p154 = scmp.eq.s32.totalorder %s17, 1
    %p155 = por %p153, %p154
    %p156 = scmp.ne.s32.totalorder %s147, %s148
    %p157 = scmp.eq.s32.totalorder %s17, 0
    %p158 = por %p156, %p157
    %p159 = scmp.ne.s32.totalorder %s147, %s148
    %p160 = scmp.eq.s32.totalorder %s18, 1
    %p161 = por %p159, %p160
    %p163 = scmp.ne.s32.totalorder %s148, %s162
    %p164 = scmp.eq.s32.totalorder %s18, 0
    %p165 = por %p163, %p164
    %s166 = ssub.s32 %s12, %s19
    %p167 = scmp.eq.s32.totalorder %s166, 0
    %s169 = sadd.s32 %s168, 1
    %s170 = scalar_select %p167, %s168, %s169
    %p173 = pneg %p167
    %p174 = scmp.eq.s32.totalorder %s12, 1
    %p175 = por %p173, %p174
    %p176 = scmp.ne.s32.totalorder %s168, %s171
    %p177 = scmp.eq.s32.totalorder %s12, 0
    %p178 = por %p176, %p177
    %p179 = scmp.ne.s32.totalorder %s168, %s171
    %p180 = scmp.eq.s32.totalorder %s17, 1
    %p181 = por %p179, %p180
    %p182 = scmp.ne.s32.totalorder %s171, %s172
    %p183 = scmp.eq.s32.totalorder %s17, 0
    %p184 = por %p182, %p183
    %p185 = scmp.ne.s32.totalorder %s171, %s172
    %p186 = scmp.eq.s32.totalorder %s18, 1
    %p187 = por %p185, %p186
    %p189 = scmp.ne.s32.totalorder %s172, %s188
    %p190 = scmp.eq.s32.totalorder %s18, 0
    %p191 = por %p189, %p190
    %p192 = scmp.le.s32.totalorder 1, %s12
    %p193 = scmp.lt.s32.totalorder %s12, 3
    %p194 = pnand %p192, %p193
    %p195 = pneg %p194
    // Predicated region
    $region9: #{_lambda_.26} parent=5 // pred_check
      _
    $region10: #{_lambda_.26} parent=5 // pred_check_branch
      %197 = sbr.rel (%p194) target = $region12
    $region11: #{_lambda_.26} parent=5 // pred_region
      %s198 = ssub.s32 %s12, 1
      // Predicated region
      $region13: #{_lambda_.26} parent=11 // pred_check
        %p199 = pneg %p137
      $region14: #{_lambda_.26} parent=11 // pred_check_branch
        %201 = sbr.rel (%p199) target = $region16
      $region15: #{_lambda_.26} parent=11 // pred_region
        _
      $region16: #{_lambda_.26} parent=11 // pred_fallthru
        _
      // Predicated region
      $region17: #{_lambda_.26} parent=11 // pred_check
        %p202 = pneg %p158
      $region18: #{_lambda_.26} parent=11 // pred_check_branch
        %204 = sbr.rel (%p202) target = $region20
      $region19: #{_lambda_.26} parent=11 // pred_region
        _
      $region20: #{_lambda_.26} parent=11 // pred_fallthru
        _
    $region12: #{_lambda_.26} parent=5 // pred_fallthru
      _
    %p205 = scmp.lt.s32.totalorder %s12, 2
    // Predicated region
    $region21: #{_lambda_.26} parent=5 // pred_check
      %p206 = pneg %p205
    $region22: #{_lambda_.26} parent=5 // pred_check_branch
      %208 = sbr.rel (%p206) target = $region24
    $region23: #{_lambda_.26} parent=5 // pred_region
      // Predicated region
      $region25: #{_lambda_.26} parent=23 // pred_check
        %p209 = pneg %p32
      $region26: #{_lambda_.26} parent=23 // pred_check_branch
        %211 = sbr.rel (%p209) target = $region28
      $region27: #{_lambda_.26} parent=23 // pred_region
        %p212 = scmp.lt.s32.totalorder %s12, 1
        %s213 = scalar_select %p212, %s12, 1
        %s214 = smul.addr %s213, 64
        %s215 = scalar_lea.vmem %s0, %s214
      $region28: #{_lambda_.26} parent=23 // pred_fallthru
        _
      // Predicated region
      $region29: #{_lambda_.26} parent=23 // pred_check
        %p216 = pneg %p58
      $region30: #{_lambda_.26} parent=23 // pred_check_branch
        %218 = sbr.rel (%p216) target = $region32
      $region31: #{_lambda_.26} parent=23 // pred_region
        %p219 = scmp.lt.s32.totalorder %s12, 1
        %s220 = scalar_select %p219, %s12, 1
        %s221 = smul.addr %s220, 64
        %s222 = scalar_lea.vmem %s1, %s221
      $region32: #{_lambda_.26} parent=23 // pred_fallthru
        _
      // Predicated region
      $region33: #{_lambda_.26} parent=23 // pred_check
        %p223 = pneg %p84
      $region34: #{_lambda_.26} parent=23 // pred_check_branch
        %225 = sbr.rel (%p223) target = $region36
      $region35: #{_lambda_.26} parent=23 // pred_region
        %p226 = scmp.lt.s32.totalorder %s12, 1
        %s227 = scalar_select %p226, %s12, 1
        %s228 = smul.addr %s227, 64
        %s229 = smul.addr %s228, 8
        %s230 = scalar_lea.vmem %s2, %s229
      $region36: #{_lambda_.26} parent=23 // pred_fallthru
        _
      // Predicated region
      $region37: #{_lambda_.26} parent=23 // pred_check
        %p231 = pneg %p110
      $region38: #{_lambda_.26} parent=23 // pred_check_branch
        %233 = sbr.rel (%p231) target = $region40
      $region39: #{_lambda_.26} parent=23 // pred_region
        %p234 = scmp.lt.s32.totalorder %s12, 1
        %s235 = scalar_select %p234, %s12, 1
        %s236 = smul.addr %s235, 64
        %s237 = smul.addr %s236, 8
        %s238 = scalar_lea.vmem %s3, %s237
      $region40: #{_lambda_.26} parent=23 // pred_fallthru
        _
    $region24: #{_lambda_.26} parent=5 // pred_fallthru
      _
    %p239 = scmp.le.s32.totalorder 1, %s12
    %p240 = scmp.lt.s32.totalorder %s12, 3
    %p241 = pnand %p239, %p240
    %p242 = pneg %p241
    // Predicated region
    $region41: #{_lambda_.26} parent=5 // pred_check
      _
    $region42: #{_lambda_.26} parent=5 // pred_check_branch
      %244 = sbr.rel (%p241) target = $region44
    $region43: #{_lambda_.26} parent=5 // pred_region
      %s245 = ssub.s32 %s12, 1
      %p246 = scmp.lt.s32.totalorder %s17, 1
      %s247 = scalar_select %p246, %s17, 1
      %s248 = smul.addr %s247, 64
      %s249 = scalar_lea.vmem %s0, %s248
      %p250 = pneg %p38
      %p251 = pneg %p35
      %p252 = scmp.lt.s32.totalorder %s17, 1
      %s253 = scalar_select %p252, %s17, 1
      %s254 = smul.addr %s253, 64
      %s255 = scalar_lea.vmem %s1, %s254
      %p256 = pneg %p64
      %p257 = pneg %p61
      %p258 = scmp.lt.s32.totalorder %s17, 1
      %s259 = scalar_select %p258, %s17, 1
      %s260 = smul.addr %s259, 64
      %s261 = smul.addr %s260, 8
      %s262 = scalar_lea.vmem %s2, %s261
      %p263 = pneg %p90
      %p264 = pneg %p87
      %p265 = scmp.lt.s32.totalorder %s17, 1
      %s266 = scalar_select %p265, %s17, 1
      %s267 = smul.addr %s266, 64
      %s268 = smul.addr %s267, 8
      %s269 = scalar_lea.vmem %s3, %s268
      %p270 = pneg %p116
      %p271 = pneg %p113
      %p272 = pneg %p137
      %p273 = pneg %p134
      %p274 = pneg %p158
      %p275 = pneg %p155
      %p276 = pneg %p184
      %p277 = pneg %p181
      %p278 = scmp.lt.s32.totalorder %s17, 1
      %s279 = scalar_select %p278, %s17, 1
      %s280 = smul.addr %s279, 64
      %s281 = scalar_lea.vmem %s6, %s280
      %p282 = scmp.lt.s32.totalorder %s17, 1
      %s283 = scalar_select %p282, %s17, 1
      %s284 = smul.addr %s283, 64
      %s285 = scalar_lea.vmem %s0, %s284
      %p286 = scmp.lt.s32.totalorder %s17, 1
      %s287 = scalar_select %p286, %s17, 1
      %s288 = smul.addr %s287, 64
      %s289 = scalar_lea.vmem %s1, %s288
      %p290 = scmp.lt.s32.totalorder %s17, 1
      %s291 = scalar_select %p290, %s17, 1
      %s292 = smul.addr %s291, 64
      %s293 = smul.addr %s292, 8
      %s294 = scalar_lea.vmem %s2, %s293
      %p295 = scmp.lt.s32.totalorder %s17, 1
      %s296 = scalar_select %p295, %s17, 1
      %s297 = smul.addr %s296, 64
      %s298 = smul.addr %s297, 8
      %s299 = scalar_lea.vmem %s3, %s298
      %p300 = scmp.lt.s32.totalorder %s17, 1
      %s301 = scalar_select %p300, %s17, 1
      %s302 = smul.addr %s301, 64
      %s303 = scalar_lea.vmem %s6, %s302
      %v304 = vld [vmem:[%s4] sm:$0xff]
      %v305 = vld [vmem:[%s4 + $0x8] sm:$0xff]
      %v306 = vld [vmem:[%s4 + $0x10] sm:$0xff]
      %v307 = vld [vmem:[%s4 + $0x18] sm:$0xff]
      %v308 = vld [vmem:[%s5] sm:$0x1]
      %v309 = vld [vmem:[%s5 + $0x1] sm:$0x1]
      %v310 = vld [vmem:[%s5 + $0x2] sm:$0x1]
      %v311 = vld [vmem:[%s5 + $0x3] sm:$0x1]
      %s312 = smul.u32 0, 4
      %s313 = scalar_lea.vmem %s285, %s312
      %v314 = vld [vmem:[%s313] sm:$0x1]
      %v315 = vld [vmem:[%s313 + $0x1] sm:$0x1]
      %v316 = vld [vmem:[%s313 + $0x2] sm:$0x1]
      %v317 = vld [vmem:[%s313 + $0x3] sm:$0x1]
      %v318 = vld [vmem:[%s313 + $0x4] sm:$0x1]
      %v319 = vld [vmem:[%s313 + $0x5] sm:$0x1]
      %v320 = vld [vmem:[%s313 + $0x6] sm:$0x1]
      %v321 = vld [vmem:[%s313 + $0x7] sm:$0x1]
      %v322 = vld [vmem:[%s313 + $0x8] sm:$0x1]
      %v323 = vld [vmem:[%s313 + $0x9] sm:$0x1]
      %v324 = vld [vmem:[%s313 + $0xa] sm:$0x1]
      %v325 = vld [vmem:[%s313 + $0xb] sm:$0x1]
      %v326 = vld [vmem:[%s313 + $0xc] sm:$0x1]
      %v327 = vld [vmem:[%s313 + $0xd] sm:$0x1]
      %v328 = vld [vmem:[%s313 + $0xe] sm:$0x1]
      %v329 = vld [vmem:[%s313 + $0xf] sm:$0x1]
      %v330 = vld [vmem:[%s313 + $0x10] sm:$0x1]
      %v331 = vld [vmem:[%s313 + $0x11] sm:$0x1]
      %v332 = vld [vmem:[%s313 + $0x12] sm:$0x1]
      %v333 = vld [vmem:[%s313 + $0x13] sm:$0x1]
      %v334 = vld [vmem:[%s313 + $0x14] sm:$0x1]
      %v335 = vld [vmem:[%s313 + $0x15] sm:$0x1]
      %v336 = vld [vmem:[%s313 + $0x16] sm:$0x1]
      %v337 = vld [vmem:[%s313 + $0x17] sm:$0x1]
      %v338 = vld [vmem:[%s313 + $0x18] sm:$0x1]
      %v339 = vld [vmem:[%s313 + $0x19] sm:$0x1]
      %v340 = vld [vmem:[%s313 + $0x1a] sm:$0x1]
      %v341 = vld [vmem:[%s313 + $0x1b] sm:$0x1]
      %v342 = vld [vmem:[%s313 + $0x1c] sm:$0x1]
      %v343 = vld [vmem:[%s313 + $0x1d] sm:$0x1]
      %v344 = vld [vmem:[%s313 + $0x1e] sm:$0x1]
      %v345 = vld [vmem:[%s313 + $0x1f] sm:$0x1]
      %s346 = scalar_lea.vmem %s289, %s312
      %v347 = vld [vmem:[%s346] sm:$0x1]
      %v348 = vld [vmem:[%s346 + $0x1] sm:$0x1]
      %v349 = vld [vmem:[%s346 + $0x2] sm:$0x1]
      %v350 = vld [vmem:[%s346 + $0x3] sm:$0x1]
      %v351 = vld [vmem:[%s346 + $0x4] sm:$0x1]
      %v352 = vld [vmem:[%s346 + $0x5] sm:$0x1]
      %v353 = vld [vmem:[%s346 + $0x6] sm:$0x1]
      %v354 = vld [vmem:[%s346 + $0x7] sm:$0x1]
      %v355 = vld [vmem:[%s346 + $0x8] sm:$0x1]
      %v356 = vld [vmem:[%s346 + $0x9] sm:$0x1]
      %v357 = vld [vmem:[%s346 + $0xa] sm:$0x1]
      %v358 = vld [vmem:[%s346 + $0xb] sm:$0x1]
      %v359 = vld [vmem:[%s346 + $0xc] sm:$0x1]
      %v360 = vld [vmem:[%s346 + $0xd] sm:$0x1]
      %v361 = vld [vmem:[%s346 + $0xe] sm:$0x1]
      %v362 = vld [vmem:[%s346 + $0xf] sm:$0x1]
      %v363 = vld [vmem:[%s346 + $0x10] sm:$0x1]
      %v364 = vld [vmem:[%s346 + $0x11] sm:$0x1]
      %v365 = vld [vmem:[%s346 + $0x12] sm:$0x1]
      %v366 = vld [vmem:[%s346 + $0x13] sm:$0x1]
      %v367 = vld [vmem:[%s346 + $0x14] sm:$0x1]
      %v368 = vld [vmem:[%s346 + $0x15] sm:$0x1]
      %v369 = vld [vmem:[%s346 + $0x16] sm:$0x1]
      %v370 = vld [vmem:[%s346 + $0x17] sm:$0x1]
      %v371 = vld [vmem:[%s346 + $0x18] sm:$0x1]
      %v372 = vld [vmem:[%s346 + $0x19] sm:$0x1]
      %v373 = vld [vmem:[%s346 + $0x1a] sm:$0x1]
      %v374 = vld [vmem:[%s346 + $0x1b] sm:$0x1]
      %v375 = vld [vmem:[%s346 + $0x1c] sm:$0x1]
      %v376 = vld [vmem:[%s346 + $0x1d] sm:$0x1]
      %v377 = vld [vmem:[%s346 + $0x1e] sm:$0x1]
      %v378 = vld [vmem:[%s346 + $0x1f] sm:$0x1]
      %s379 = smul.u32 0, 32
      %s380 = scalar_lea.vmem %s294, %s379
      %v381 = vld [vmem:[%s380] sm:$0xff]
      %v382 = vld [vmem:[%s380 + $0x8] sm:$0xff]
      %v383 = vld [vmem:[%s380 + $0x10] sm:$0xff]
      %v384 = vld [vmem:[%s380 + $0x18] sm:$0xff]
      %v385 = vld [vmem:[%s380 + $0x20] sm:$0xff]
      %v386 = vld [vmem:[%s380 + $0x28] sm:$0xff]
      %v387 = vld [vmem:[%s380 + $0x30] sm:$0xff]
      %v388 = vld [vmem:[%s380 + $0x38] sm:$0xff]
      %v389 = vld [vmem:[%s380 + $0x40] sm:$0xff]
      %v390 = vld [vmem:[%s380 + $0x48] sm:$0xff]
      %v391 = vld [vmem:[%s380 + $0x50] sm:$0xff]
      %v392 = vld [vmem:[%s380 + $0x58] sm:$0xff]
      %v393 = vld [vmem:[%s380 + $0x60] sm:$0xff]
      %v394 = vld [vmem:[%s380 + $0x68] sm:$0xff]
      %v395 = vld [vmem:[%s380 + $0x70] sm:$0xff]
      %v396 = vld [vmem:[%s380 + $0x78] sm:$0xff]
      %v397 = vld [vmem:[%s380 + $0x80] sm:$0xff]
      %v398 = vld [vmem:[%s380 + $0x88] sm:$0xff]
      %v399 = vld [vmem:[%s380 + $0x90] sm:$0xff]
      %v400 = vld [vmem:[%s380 + $0x98] sm:$0xff]
      %v401 = vld [vmem:[%s380 + $0xa0] sm:$0xff]
      %v402 = vld [vmem:[%s380 + $0xa8] sm:$0xff]
      %v403 = vld [vmem:[%s380 + $0xb0] sm:$0xff]
      %v404 = vld [vmem:[%s380 + $0xb8] sm:$0xff]
      %v405 = vld [vmem:[%s380 + $0xc0] sm:$0xff]
      %v406 = vld [vmem:[%s380 + $0xc8] sm:$0xff]
      %v407 = vld [vmem:[%s380 + $0xd0] sm:$0xff]
      %v408 = vld [vmem:[%s380 + $0xd8] sm:$0xff]
      %v409 = vld [vmem:[%s380 + $0xe0] sm:$0xff]
      %v410 = vld [vmem:[%s380 + $0xe8] sm:$0xff]
      %v411 = vld [vmem:[%s380 + $0xf0] sm:$0xff]
      %v412 = vld [vmem:[%s380 + $0xf8] sm:$0xff]
      %s413 = scalar_lea.vmem %s299, %s379
      %v414 = vld [vmem:[%s413] sm:$0xff]
      %v415 = vld [vmem:[%s413 + $0x8] sm:$0xff]
      %v416 = vld [vmem:[%s413 + $0x10] sm:$0xff]
      %v417 = vld [vmem:[%s413 + $0x18] sm:$0xff]
      %v418 = vld [vmem:[%s413 + $0x20] sm:$0xff]
      %v419 = vld [vmem:[%s413 + $0x28] sm:$0xff]
      %v420 = vld [vmem:[%s413 + $0x30] sm:$0xff]
      %v421 = vld [vmem:[%s413 + $0x38] sm:$0xff]
      %v422 = vld [vmem:[%s413 + $0x40] sm:$0xff]
      %v423 = vld [vmem:[%s413 + $0x48] sm:$0xff]
      %v424 = vld [vmem:[%s413 + $0x50] sm:$0xff]
      %v425 = vld [vmem:[%s413 + $0x58] sm:$0xff]
      %v426 = vld [vmem:[%s413 + $0x60] sm:$0xff]
      %v427 = vld [vmem:[%s413 + $0x68] sm:$0xff]
      %v428 = vld [vmem:[%s413 + $0x70] sm:$0xff]
      %v429 = vld [vmem:[%s413 + $0x78] sm:$0xff]
      %v430 = vld [vmem:[%s413 + $0x80] sm:$0xff]
      %v431 = vld [vmem:[%s413 + $0x88] sm:$0xff]
      %v432 = vld [vmem:[%s413 + $0x90] sm:$0xff]
      %v433 = vld [vmem:[%s413 + $0x98] sm:$0xff]
      %v434 = vld [vmem:[%s413 + $0xa0] sm:$0xff]
      %v435 = vld [vmem:[%s413 + $0xa8] sm:$0xff]
      %v436 = vld [vmem:[%s413 + $0xb0] sm:$0xff]
      %v437 = vld [vmem:[%s413 + $0xb8] sm:$0xff]
      %v438 = vld [vmem:[%s413 + $0xc0] sm:$0xff]
      %v439 = vld [vmem:[%s413 + $0xc8] sm:$0xff]
      %v440 = vld [vmem:[%s413 + $0xd0] sm:$0xff]
      %v441 = vld [vmem:[%s413 + $0xd8] sm:$0xff]
      %v442 = vld [vmem:[%s413 + $0xe0] sm:$0xff]
      %v443 = vld [vmem:[%s413 + $0xe8] sm:$0xff]
      %v444 = vld [vmem:[%s413 + $0xf0] sm:$0xff]
      %v445 = vld [vmem:[%s413 + $0xf8] sm:$0xff]
      %v450 = vlaneseq
      %v451 = vshrl.u32 %v450, 7
      %v452 = vsub.s32 0, %v451
      %v453 = vrot.slane %v347, %v452
      %v454 = vlaneseq
      %v455 = vshrl.u32 %v454, 7
      %v456 = vsub.s32 0, %v455
      %v457 = vrot.slane %v348, %v456
      %v458 = vlaneseq
      %v459 = vshrl.u32 %v458, 7
      %v460 = vsub.s32 0, %v459
      %v461 = vrot.slane %v349, %v460
      %v462 = vlaneseq
      %v463 = vshrl.u32 %v462, 7
      %v464 = vsub.s32 0, %v463
      %v465 = vrot.slane %v350, %v464
      %v470 = vmul.f32 %v304, %v453
      %v471 = vmul.f32 %v305, %v457
      %v472 = vmul.f32 %v306, %v461
      %v473 = vmul.f32 %v307, %v465
      %v474 = vmul.f32 %v470, 1.442695
      %v475 = vpow.pop %v474
      %v476 = vmul.f32 %v471, 1.442695
      %v477 = vpow.pop %v476
      %v478 = vmul.f32 %v472, 1.442695
      %v479 = vpow.pop %v478
      %v480 = vmul.f32 %v473, 1.442695
      %v481 = vpow.pop %v480
      %v482 = vmul.f32 %v475, 0.0
      %v483 = vmul.f32 %v477, 0.0
      %v484 = vmul.f32 %v479, 0.0
      %v485 = vmul.f32 %v481, 0.0
      %v486 = vmul.f32 %v347, %v314
      %v487 = vmul.f32 %v348, %v315
      %v488 = vmul.f32 %v349, %v316
      %v489 = vmul.f32 %v350, %v317
      %491 = vset.pattern.permute.xlu0 0
      %492 = vperm.xlu0 %491, %v381
      %v493 = vpop.permute.xlu0 %492
      %496 = vset.pattern.permute.xlu0 0
      %497 = vperm.xlu0 %496, %v382
      %v498 = vpop.permute.xlu0 %497
      %501 = vset.pattern.permute.xlu0 0
      %502 = vperm.xlu0 %501, %v383
      %v503 = vpop.permute.xlu0 %502
      %506 = vset.pattern.permute.xlu0 0
      %507 = vperm.xlu0 %506, %v384
      %v508 = vpop.permute.xlu0 %507
      %v514 = vlaneseq
      %v515 = vshrl.u32 %v514, 7
      %v516 = vsub.s32 0, %v515
      %v517 = vrot.slane %v486, %v516
      %v518 = vlaneseq
      %v519 = vshrl.u32 %v518, 7
      %v520 = vsub.s32 0, %v519
      %v521 = vrot.slane %v487, %v520
      %v522 = vlaneseq
      %v523 = vshrl.u32 %v522, 7
      %v524 = vsub.s32 0, %v523
      %v525 = vrot.slane %v488, %v524
      %v526 = vlaneseq
      %v527 = vshrl.u32 %v526, 7
      %v528 = vsub.s32 0, %v527
      %v529 = vrot.slane %v489, %v528
      %v534 = vmul.f32 %v493, %v517
      %v535 = vmul.f32 %v498, %v521
      %v536 = vmul.f32 %v503, %v525
      %v537 = vmul.f32 %v508, %v529
      %v538 = vadd.f32 %v482, %v534
      %v539 = vadd.f32 %v483, %v535
      %v540 = vadd.f32 %v484, %v536
      %v541 = vadd.f32 %v485, %v537
      %543 = vset.pattern.permute.xlu0 0
      %544 = vperm.xlu0 %543, %v414
      %v545 = vpop.permute.xlu0 %544
      %548 = vset.pattern.permute.xlu0 0
      %549 = vperm.xlu0 %548, %v415
      %v550 = vpop.permute.xlu0 %549
      %553 = vset.pattern.permute.xlu0 0
      %554 = vperm.xlu0 %553, %v416
      %v555 = vpop.permute.xlu0 %554
      %558 = vset.pattern.permute.xlu0 0
      %559 = vperm.xlu0 %558, %v417
      %v560 = vpop.permute.xlu0 %559
      %v562 = vmul.f32 %v545, %v538
      %v563 = vmul.f32 %v550, %v539
      %v564 = vmul.f32 %v555, %v540
      %v565 = vmul.f32 %v560, %v541
      %vm566 = vcmask 523264
      %v567 = vsel %vm566, %v562, 0.0
      %v568 = vrot.slane %v567, 4
      %v569 = vadd.f32 %v567, %v568
      %v570 = vrot.slane %v569, 2
      %v571 = vadd.f32 %v569, %v570
      %v572 = vrot.slane %v571, 1
      %v573 = vadd.f32 %v571, %v572
      %v574 = vsel %vm566, %v563, 0.0
      %v575 = vrot.slane %v574, 4
      %v576 = vadd.f32 %v574, %v575
      %v577 = vrot.slane %v576, 2
      %v578 = vadd.f32 %v576, %v577
      %v579 = vrot.slane %v578, 1
      %v580 = vadd.f32 %v578, %v579
      %v581 = vsel %vm566, %v564, 0.0
      %v582 = vrot.slane %v581, 4
      %v583 = vadd.f32 %v581, %v582
      %v584 = vrot.slane %v583, 2
      %v585 = vadd.f32 %v583, %v584
      %v586 = vrot.slane %v585, 1
      %v587 = vadd.f32 %v585, %v586
      %v588 = vsel %vm566, %v565, 0.0
      %v589 = vrot.slane %v588, 4
      %v590 = vadd.f32 %v588, %v589
      %v591 = vrot.slane %v590, 2
      %v592 = vadd.f32 %v590, %v591
      %v593 = vrot.slane %v592, 1
      %v594 = vadd.f32 %v592, %v593
      %v595 = vmul.f32 %v308, %v314
      %v596 = vmul.f32 %v309, %v315
      %v597 = vmul.f32 %v310, %v316
      %v598 = vmul.f32 %v311, %v317
      %v599 = vadd.f32 %v573, %v595
      %v600 = vadd.f32 %v580, %v596
      %v601 = vadd.f32 %v587, %v597
      %v602 = vadd.f32 %v594, %v598
      %v607 = vlaneseq
      %v608 = vshrl.u32 %v607, 7
      %v609 = vsub.s32 0, %v608
      %v610 = vrot.slane %v351, %v609
      %v611 = vlaneseq
      %v612 = vshrl.u32 %v611, 7
      %v613 = vsub.s32 0, %v612
      %v614 = vrot.slane %v352, %v613
      %v615 = vlaneseq
      %v616 = vshrl.u32 %v615, 7
      %v617 = vsub.s32 0, %v616
      %v618 = vrot.slane %v353, %v617
      %v619 = vlaneseq
      %v620 = vshrl.u32 %v619, 7
      %v621 = vsub.s32 0, %v620
      %v622 = vrot.slane %v354, %v621
      %v627 = vmul.f32 %v304, %v610
      %v628 = vmul.f32 %v305, %v614
      %v629 = vmul.f32 %v306, %v618
      %v630 = vmul.f32 %v307, %v622
      %v631 = vmul.f32 %v627, 1.442695
      %v632 = vpow.pop %v631
      %v633 = vmul.f32 %v628, 1.442695
      %v634 = vpow.pop %v633
      %v635 = vmul.f32 %v629, 1.442695
      %v636 = vpow.pop %v635
      %v637 = vmul.f32 %v630, 1.442695
      %v638 = vpow.pop %v637
      %v639 = vmul.f32 %v632, %v538
      %v640 = vmul.f32 %v634, %v539
      %v641 = vmul.f32 %v636, %v540
      %v642 = vmul.f32 %v638, %v541
      %v643 = vmul.f32 %v351, %v318
      %v644 = vmul.f32 %v352, %v319
      %v645 = vmul.f32 %v353, %v320
      %v646 = vmul.f32 %v354, %v321
      %648 = vset.pattern.permute.xlu0 0
      %649 = vperm.xlu0 %648, %v385
      %v650 = vpop.permute.xlu0 %649
      %653 = vset.pattern.permute.xlu0 0
      %654 = vperm.xlu0 %653, %v386
      %v655 = vpop.permute.xlu0 %654
      %658 = vset.pattern.permute.xlu0 0
      %659 = vperm.xlu0 %658, %v387
      %v660 = vpop.permute.xlu0 %659
      %663 = vset.pattern.permute.xlu0 0
      %664 = vperm.xlu0 %663, %v388
      %v665 = vpop.permute.xlu0 %664
      %v671 = vlaneseq
      %v672 = vshrl.u32 %v671, 7
      %v673 = vsub.s32 0, %v672
      %v674 = vrot.slane %v643, %v673
      %v675 = vlaneseq
      %v676 = vshrl.u32 %v675, 7
      %v677 = vsub.s32 0, %v676
      %v678 = vrot.slane %v644, %v677
      %v679 = vlaneseq
      %v680 = vshrl.u32 %v679, 7
      %v681 = vsub.s32 0, %v680
      %v682 = vrot.slane %v645, %v681
      %v683 = vlaneseq
      %v684 = vshrl.u32 %v683, 7
      %v685 = vsub.s32 0, %v684
      %v686 = vrot.slane %v646, %v685
      %v691 = vmul.f32 %v650, %v674
      %v692 = vmul.f32 %v655, %v678
      %v693 = vmul.f32 %v660, %v682
      %v694 = vmul.f32 %v665, %v686
      %v695 = vadd.f32 %v639, %v691
      %v696 = vadd.f32 %v640, %v692
      %v697 = vadd.f32 %v641, %v693
      %v698 = vadd.f32 %v642, %v694
      %700 = vset.pattern.permute.xlu0 0
      %701 = vperm.xlu0 %700, %v418
      %v702 = vpop.permute.xlu0 %701
      %705 = vset.pattern.permute.xlu0 0
      %706 = vperm.xlu0 %705, %v419
      %v707 = vpop.permute.xlu0 %706
      %710 = vset.pattern.permute.xlu0 0
      %711 = vperm.xlu0 %710, %v420
      %v712 = vpop.permute.xlu0 %711
      %715 = vset.pattern.permute.xlu0 0
      %716 = vperm.xlu0 %715, %v421
      %v717 = vpop.permute.xlu0 %716
      %v719 = vmul.f32 %v702, %v695
      %v720 = vmul.f32 %v707, %v696
      %v721 = vmul.f32 %v712, %v697
      %v722 = vmul.f32 %v717, %v698
      %v723 = vsel %vm566, %v719, 0.0
      %v724 = vrot.slane %v723, 4
      %v725 = vadd.f32 %v723, %v724
      %v726 = vrot.slane %v725, 2
      %v727 = vadd.f32 %v725, %v726
      %v728 = vrot.slane %v727, 1
      %v729 = vadd.f32 %v727, %v728
      %v730 = vsel %vm566, %v720, 0.0
      %v731 = vrot.slane %v730, 4
      %v732 = vadd.f32 %v730, %v731
      %v733 = vrot.slane %v732, 2
      %v734 = vadd.f32 %v732, %v733
      %v735 = vrot.slane %v734, 1
      %v736 = vadd.f32 %v734, %v735
      %v737 = vsel %vm566, %v721, 0.0
      %v738 = vrot.slane %v737, 4
      %v739 = vadd.f32 %v737, %v738
      %v740 = vrot.slane %v739, 2
      %v741 = vadd.f32 %v739, %v740
      %v742 = vrot.slane %v741, 1
      %v743 = vadd.f32 %v741, %v742
      %v744 = vsel %vm566, %v722, 0.0
      %v745 = vrot.slane %v744, 4
      %v746 = vadd.f32 %v744, %v745
      %v747 = vrot.slane %v746, 2
      %v748 = vadd.f32 %v746, %v747
      %v749 = vrot.slane %v748, 1
      %v750 = vadd.f32 %v748, %v749
      %v751 = vmul.f32 %v308, %v318
      %v752 = vmul.f32 %v309, %v319
      %v753 = vmul.f32 %v310, %v320
      %v754 = vmul.f32 %v311, %v321
      %v755 = vadd.f32 %v729, %v751
      %v756 = vadd.f32 %v736, %v752
      %v757 = vadd.f32 %v743, %v753
      %v758 = vadd.f32 %v750, %v754
      %v763 = vlaneseq
      %v764 = vshrl.u32 %v763, 7
      %v765 = vsub.s32 0, %v764
      %v766 = vrot.slane %v355, %v765
      %v767 = vlaneseq
      %v768 = vshrl.u32 %v767, 7
      %v769 = vsub.s32 0, %v768
      %v770 = vrot.slane %v356, %v769
      %v771 = vlaneseq
      %v772 = vshrl.u32 %v771, 7
      %v773 = vsub.s32 0, %v772
      %v774 = vrot.slane %v357, %v773
      %v775 = vlaneseq
      %v776 = vshrl.u32 %v775, 7
      %v777 = vsub.s32 0, %v776
      %v778 = vrot.slane %v358, %v777
      %v783 = vmul.f32 %v304, %v766
      %v784 = vmul.f32 %v305, %v770
      %v785 = vmul.f32 %v306, %v774
      %v786 = vmul.f32 %v307, %v778
      %v787 = vmul.f32 %v783, 1.442695
      %v788 = vpow.pop %v787
      %v789 = vmul.f32 %v784, 1.442695
      %v790 = vpow.pop %v789
      %v791 = vmul.f32 %v785, 1.442695
      %v792 = vpow.pop %v791
      %v793 = vmul.f32 %v786, 1.442695
      %v794 = vpow.pop %v793
      %v795 = vmul.f32 %v788, %v695
      %v796 = vmul.f32 %v790, %v696
      %v797 = vmul.f32 %v792, %v697
      %v798 = vmul.f32 %v794, %v698
      %v799 = vmul.f32 %v355, %v322
      %v800 = vmul.f32 %v356, %v323
      %v801 = vmul.f32 %v357, %v324
      %v802 = vmul.f32 %v358, %v325
      %804 = vset.pattern.permute.xlu0 0
      %805 = vperm.xlu0 %804, %v389
      %v806 = vpop.permute.xlu0 %805
      %809 = vset.pattern.permute.xlu0 0
      %810 = vperm.xlu0 %809, %v390
      %v811 = vpop.permute.xlu0 %810
      %814 = vset.pattern.permute.xlu0 0
      %815 = vperm.xlu0 %814, %v391
      %v816 = vpop.permute.xlu0 %815
      %819 = vset.pattern.permute.xlu0 0
      %820 = vperm.xlu0 %819, %v392
      %v821 = vpop.permute.xlu0 %820
      %v827 = vlaneseq
      %v828 = vshrl.u32 %v827, 7
      %v829 = vsub.s32 0, %v828
      %v830 = vrot.slane %v799, %v829
      %v831 = vlaneseq
      %v832 = vshrl.u32 %v831, 7
      %v833 = vsub.s32 0, %v832
      %v834 = vrot.slane %v800, %v833
      %v835 = vlaneseq
      %v836 = vshrl.u32 %v835, 7
      %v837 = vsub.s32 0, %v836
      %v838 = vrot.slane %v801, %v837
      %v839 = vlaneseq
      %v840 = vshrl.u32 %v839, 7
      %v841 = vsub.s32 0, %v840
      %v842 = vrot.slane %v802, %v841
      %v847 = vmul.f32 %v806, %v830
      %v848 = vmul.f32 %v811, %v834
      %v849 = vmul.f32 %v816, %v838
      %v850 = vmul.f32 %v821, %v842
      %v851 = vadd.f32 %v795, %v847
      %v852 = vadd.f32 %v796, %v848
      %v853 = vadd.f32 %v797, %v849
      %v854 = vadd.f32 %v798, %v850
      %856 = vset.pattern.permute.xlu0 0
      %857 = vperm.xlu0 %856, %v422
      %v858 = vpop.permute.xlu0 %857
      %861 = vset.pattern.permute.xlu0 0
      %862 = vperm.xlu0 %861, %v423
      %v863 = vpop.permute.xlu0 %862
      %866 = vset.pattern.permute.xlu0 0
      %867 = vperm.xlu0 %866, %v424
      %v868 = vpop.permute.xlu0 %867
      %871 = vset.pattern.permute.xlu0 0
      %872 = vperm.xlu0 %871, %v425
      %v873 = vpop.permute.xlu0 %872
      %v875 = vmul.f32 %v858, %v851
      %v876 = vmul.f32 %v863, %v852
      %v877 = vmul.f32 %v868, %v853
      %v878 = vmul.f32 %v873, %v854
      %v879 = vsel %vm566, %v875, 0.0
      %v880 = vrot.slane %v879, 4
      %v881 = vadd.f32 %v879, %v880
      %v882 = vrot.slane %v881, 2
      %v883 = vadd.f32 %v881, %v882
      %v884 = vrot.slane %v883, 1
      %v885 = vadd.f32 %v883, %v884
      %v886 = vsel %vm566, %v876, 0.0
      %v887 = vrot.slane %v886, 4
      %v888 = vadd.f32 %v886, %v887
      %v889 = vrot.slane %v888, 2
      %v890 = vadd.f32 %v888, %v889
      %v891 = vrot.slane %v890, 1
      %v892 = vadd.f32 %v890, %v891
      %v893 = vsel %vm566, %v877, 0.0
      %v894 = vrot.slane %v893, 4
      %v895 = vadd.f32 %v893, %v894
      %v896 = vrot.slane %v895, 2
      %v897 = vadd.f32 %v895, %v896
      %v898 = vrot.slane %v897, 1
      %v899 = vadd.f32 %v897, %v898
      %v900 = vsel %vm566, %v878, 0.0
      %v901 = vrot.slane %v900, 4
      %v902 = vadd.f32 %v900, %v901
      %v903 = vrot.slane %v902, 2
      %v904 = vadd.f32 %v902, %v903
      %v905 = vrot.slane %v904, 1
      %v906 = vadd.f32 %v904, %v905
      %v907 = vmul.f32 %v308, %v322
      %v908 = vmul.f32 %v309, %v323
      %v909 = vmul.f32 %v310, %v324
      %v910 = vmul.f32 %v311, %v325
      %v911 = vadd.f32 %v885, %v907
      %v912 = vadd.f32 %v892, %v908
      %v913 = vadd.f32 %v899, %v909
      %v914 = vadd.f32 %v906, %v910
      %v919 = vlaneseq
      %v920 = vshrl.u32 %v919, 7
      %v921 = vsub.s32 0, %v920
      %v922 = vrot.slane %v359, %v921
      %v923 = vlaneseq
      %v924 = vshrl.u32 %v923, 7
      %v925 = vsub.s32 0, %v924
      %v926 = vrot.slane %v360, %v925
      %v927 = vlaneseq
      %v928 = vshrl.u32 %v927, 7
      %v929 = vsub.s32 0, %v928
      %v930 = vrot.slane %v361, %v929
      %v931 = vlaneseq
      %v932 = vshrl.u32 %v931, 7
      %v933 = vsub.s32 0, %v932
      %v934 = vrot.slane %v362, %v933
      %v939 = vmul.f32 %v304, %v922
      %v940 = vmul.f32 %v305, %v926
      %v941 = vmul.f32 %v306, %v930
      %v942 = vmul.f32 %v307, %v934
      %v943 = vmul.f32 %v939, 1.442695
      %v944 = vpow.pop %v943
      %v945 = vmul.f32 %v940, 1.442695
      %v946 = vpow.pop %v945
      %v947 = vmul.f32 %v941, 1.442695
      %v948 = vpow.pop %v947
      %v949 = vmul.f32 %v942, 1.442695
      %v950 = vpow.pop %v949
      %v951 = vmul.f32 %v944, %v851
      %v952 = vmul.f32 %v946, %v852
      %v953 = vmul.f32 %v948, %v853
      %v954 = vmul.f32 %v950, %v854
      %v955 = vmul.f32 %v359, %v326
      %v956 = vmul.f32 %v360, %v327
      %v957 = vmul.f32 %v361, %v328
      %v958 = vmul.f32 %v362, %v329
      %960 = vset.pattern.permute.xlu0 0
      %961 = vperm.xlu0 %960, %v393
      %v962 = vpop.permute.xlu0 %961
      %965 = vset.pattern.permute.xlu0 0
      %966 = vperm.xlu0 %965, %v394
      %v967 = vpop.permute.xlu0 %966
      %970 = vset.pattern.permute.xlu0 0
      %971 = vperm.xlu0 %970, %v395
      %v972 = vpop.permute.xlu0 %971
      %975 = vset.pattern.permute.xlu0 0
      %976 = vperm.xlu0 %975, %v396
      %v977 = vpop.permute.xlu0 %976
      %v983 = vlaneseq
      %v984 = vshrl.u32 %v983, 7
      %v985 = vsub.s32 0, %v984
      %v986 = vrot.slane %v955, %v985
      %v987 = vlaneseq
      %v988 = vshrl.u32 %v987, 7
      %v989 = vsub.s32 0, %v988
      %v990 = vrot.slane %v956, %v989
      %v991 = vlaneseq
      %v992 = vshrl.u32 %v991, 7
      %v993 = vsub.s32 0, %v992
      %v994 = vrot.slane %v957, %v993
      %v995 = vlaneseq
      %v996 = vshrl.u32 %v995, 7
      %v997 = vsub.s32 0, %v996
      %v998 = vrot.slane %v958, %v997
      %v1003 = vmul.f32 %v962, %v986
      %v1004 = vmul.f32 %v967, %v990
      %v1005 = vmul.f32 %v972, %v994
      %v1006 = vmul.f32 %v977, %v998
      %v1007 = vadd.f32 %v951, %v1003
      %v1008 = vadd.f32 %v952, %v1004
      %v1009 = vadd.f32 %v953, %v1005
      %v1010 = vadd.f32 %v954, %v1006
      %1012 = vset.pattern.permute.xlu0 0
      %1013 = vperm.xlu0 %1012, %v426
      %v1014 = vpop.permute.xlu0 %1013
      %1017 = vset.pattern.permute.xlu0 0
      %1018 = vperm.xlu0 %1017, %v427
      %v1019 = vpop.permute.xlu0 %1018
      %1022 = vset.pattern.permute.xlu0 0
      %1023 = vperm.xlu0 %1022, %v428
      %v1024 = vpop.permute.xlu0 %1023
      %1027 = vset.pattern.permute.xlu0 0
      %1028 = vperm.xlu0 %1027, %v429
      %v1029 = vpop.permute.xlu0 %1028
      %v1031 = vmul.f32 %v1014, %v1007
      %v1032 = vmul.f32 %v1019, %v1008
      %v1033 = vmul.f32 %v1024, %v1009
      %v1034 = vmul.f32 %v1029, %v1010
      %v1035 = vsel %vm566, %v1031, 0.0
      %v1036 = vrot.slane %v1035, 4
      %v1037 = vadd.f32 %v1035, %v1036
      %v1038 = vrot.slane %v1037, 2
      %v1039 = vadd.f32 %v1037, %v1038
      %v1040 = vrot.slane %v1039, 1
      %v1041 = vadd.f32 %v1039, %v1040
      %v1042 = vsel %vm566, %v1032, 0.0
      %v1043 = vrot.slane %v1042, 4
      %v1044 = vadd.f32 %v1042, %v1043
      %v1045 = vrot.slane %v1044, 2
      %v1046 = vadd.f32 %v1044, %v1045
      %v1047 = vrot.slane %v1046, 1
      %v1048 = vadd.f32 %v1046, %v1047
      %v1049 = vsel %vm566, %v1033, 0.0
      %v1050 = vrot.slane %v1049, 4
      %v1051 = vadd.f32 %v1049, %v1050
      %v1052 = vrot.slane %v1051, 2
      %v1053 = vadd.f32 %v1051, %v1052
      %v1054 = vrot.slane %v1053, 1
      %v1055 = vadd.f32 %v1053, %v1054
      %v1056 = vsel %vm566, %v1034, 0.0
      %v1057 = vrot.slane %v1056, 4
      %v1058 = vadd.f32 %v1056, %v1057
      %v1059 = vrot.slane %v1058, 2
      %v1060 = vadd.f32 %v1058, %v1059
      %v1061 = vrot.slane %v1060, 1
      %v1062 = vadd.f32 %v1060, %v1061
      %v1063 = vmul.f32 %v308, %v326
      %v1064 = vmul.f32 %v309, %v327
      %v1065 = vmul.f32 %v310, %v328
      %v1066 = vmul.f32 %v311, %v329
      %v1067 = vadd.f32 %v1041, %v1063
      %v1068 = vadd.f32 %v1048, %v1064
      %v1069 = vadd.f32 %v1055, %v1065
      %v1070 = vadd.f32 %v1062, %v1066
      %v1075 = vlaneseq
      %v1076 = vshrl.u32 %v1075, 7
      %v1077 = vsub.s32 0, %v1076
      %v1078 = vrot.slane %v363, %v1077
      %v1079 = vlaneseq
      %v1080 = vshrl.u32 %v1079, 7
      %v1081 = vsub.s32 0, %v1080
      %v1082 = vrot.slane %v364, %v1081
      %v1083 = vlaneseq
      %v1084 = vshrl.u32 %v1083, 7
      %v1085 = vsub.s32 0, %v1084
      %v1086 = vrot.slane %v365, %v1085
      %v1087 = vlaneseq
      %v1088 = vshrl.u32 %v1087, 7
      %v1089 = vsub.s32 0, %v1088
      %v1090 = vrot.slane %v366, %v1089
      %v1095 = vmul.f32 %v304, %v1078
      %v1096 = vmul.f32 %v305, %v1082
      %v1097 = vmul.f32 %v306, %v1086
      %v1098 = vmul.f32 %v307, %v1090
      %v1099 = vmul.f32 %v1095, 1.442695
      %v1100 = vpow.pop %v1099
      %v1101 = vmul.f32 %v1096, 1.442695
      %v1102 = vpow.pop %v1101
      %v1103 = vmul.f32 %v1097, 1.442695
      %v1104 = vpow.pop %v1103
      %v1105 = vmul.f32 %v1098, 1.442695
      %v1106 = vpow.pop %v1105
      %v1107 = vmul.f32 %v1100, %v1007
      %v1108 = vmul.f32 %v1102, %v1008
      %v1109 = vmul.f32 %v1104, %v1009
      %v1110 = vmul.f32 %v1106, %v1010
      %v1111 = vmul.f32 %v363, %v330
      %v1112 = vmul.f32 %v364, %v331
      %v1113 = vmul.f32 %v365, %v332
      %v1114 = vmul.f32 %v366, %v333
      %1116 = vset.pattern.permute.xlu0 0
      %1117 = vperm.xlu0 %1116, %v397
      %v1118 = vpop.permute.xlu0 %1117
      %1121 = vset.pattern.permute.xlu0 0
      %1122 = vperm.xlu0 %1121, %v398
      %v1123 = vpop.permute.xlu0 %1122
      %1126 = vset.pattern.permute.xlu0 0
      %1127 = vperm.xlu0 %1126, %v399
      %v1128 = vpop.permute.xlu0 %1127
      %1131 = vset.pattern.permute.xlu0 0
      %1132 = vperm.xlu0 %1131, %v400
      %v1133 = vpop.permute.xlu0 %1132
      %v1139 = vlaneseq
      %v1140 = vshrl.u32 %v1139, 7
      %v1141 = vsub.s32 0, %v1140
      %v1142 = vrot.slane %v1111, %v1141
      %v1143 = vlaneseq
      %v1144 = vshrl.u32 %v1143, 7
      %v1145 = vsub.s32 0, %v1144
      %v1146 = vrot.slane %v1112, %v1145
      %v1147 = vlaneseq
      %v1148 = vshrl.u32 %v1147, 7
      %v1149 = vsub.s32 0, %v1148
      %v1150 = vrot.slane %v1113, %v1149
      %v1151 = vlaneseq
      %v1152 = vshrl.u32 %v1151, 7
      %v1153 = vsub.s32 0, %v1152
      %v1154 = vrot.slane %v1114, %v1153
      %v1159 = vmul.f32 %v1118, %v1142
      %v1160 = vmul.f32 %v1123, %v1146
      %v1161 = vmul.f32 %v1128, %v1150
      %v1162 = vmul.f32 %v1133, %v1154
      %v1163 = vadd.f32 %v1107, %v1159
      %v1164 = vadd.f32 %v1108, %v1160
      %v1165 = vadd.f32 %v1109, %v1161
      %v1166 = vadd.f32 %v1110, %v1162
      %1168 = vset.pattern.permute.xlu0 0
      %1169 = vperm.xlu0 %1168, %v430
      %v1170 = vpop.permute.xlu0 %1169
      %1173 = vset.pattern.permute.xlu0 0
      %1174 = vperm.xlu0 %1173, %v431
      %v1175 = vpop.permute.xlu0 %1174
      %1178 = vset.pattern.permute.xlu0 0
      %1179 = vperm.xlu0 %1178, %v432
      %v1180 = vpop.permute.xlu0 %1179
      %1183 = vset.pattern.permute.xlu0 0
      %1184 = vperm.xlu0 %1183, %v433
      %v1185 = vpop.permute.xlu0 %1184
      %v1187 = vmul.f32 %v1170, %v1163
      %v1188 = vmul.f32 %v1175, %v1164
      %v1189 = vmul.f32 %v1180, %v1165
      %v1190 = vmul.f32 %v1185, %v1166
      %v1191 = vsel %vm566, %v1187, 0.0
      %v1192 = vrot.slane %v1191, 4
      %v1193 = vadd.f32 %v1191, %v1192
      %v1194 = vrot.slane %v1193, 2
      %v1195 = vadd.f32 %v1193, %v1194
      %v1196 = vrot.slane %v1195, 1
      %v1197 = vadd.f32 %v1195, %v1196
      %v1198 = vsel %vm566, %v1188, 0.0
      %v1199 = vrot.slane %v1198, 4
      %v1200 = vadd.f32 %v1198, %v1199
      %v1201 = vrot.slane %v1200, 2
      %v1202 = vadd.f32 %v1200, %v1201
      %v1203 = vrot.slane %v1202, 1
      %v1204 = vadd.f32 %v1202, %v1203
      %v1205 = vsel %vm566, %v1189, 0.0
      %v1206 = vrot.slane %v1205, 4
      %v1207 = vadd.f32 %v1205, %v1206
      %v1208 = vrot.slane %v1207, 2
      %v1209 = vadd.f32 %v1207, %v1208
      %v1210 = vrot.slane %v1209, 1
      %v1211 = vadd.f32 %v1209, %v1210
      %v1212 = vsel %vm566, %v1190, 0.0
      %v1213 = vrot.slane %v1212, 4
      %v1214 = vadd.f32 %v1212, %v1213
      %v1215 = vrot.slane %v1214, 2
      %v1216 = vadd.f32 %v1214, %v1215
      %v1217 = vrot.slane %v1216, 1
      %v1218 = vadd.f32 %v1216, %v1217
      %v1219 = vmul.f32 %v308, %v330
      %v1220 = vmul.f32 %v309, %v331
      %v1221 = vmul.f32 %v310, %v332
      %v1222 = vmul.f32 %v311, %v333
      %v1223 = vadd.f32 %v1197, %v1219
      %v1224 = vadd.f32 %v1204, %v1220
      %v1225 = vadd.f32 %v1211, %v1221
      %v1226 = vadd.f32 %v1218, %v1222
      %v1231 = vlaneseq
      %v1232 = vshrl.u32 %v1231, 7
      %v1233 = vsub.s32 0, %v1232
      %v1234 = vrot.slane %v367, %v1233
      %v1235 = vlaneseq
      %v1236 = vshrl.u32 %v1235, 7
      %v1237 = vsub.s32 0, %v1236
      %v1238 = vrot.slane %v368, %v1237
      %v1239 = vlaneseq
      %v1240 = vshrl.u32 %v1239, 7
      %v1241 = vsub.s32 0, %v1240
      %v1242 = vrot.slane %v369, %v1241
      %v1243 = vlaneseq
      %v1244 = vshrl.u32 %v1243, 7
      %v1245 = vsub.s32 0, %v1244
      %v1246 = vrot.slane %v370, %v1245
      %v1251 = vmul.f32 %v304, %v1234
      %v1252 = vmul.f32 %v305, %v1238
      %v1253 = vmul.f32 %v306, %v1242
      %v1254 = vmul.f32 %v307, %v1246
      %v1255 = vmul.f32 %v1251, 1.442695
      %v1256 = vpow.pop %v1255
      %v1257 = vmul.f32 %v1252, 1.442695
      %v1258 = vpow.pop %v1257
      %v1259 = vmul.f32 %v1253, 1.442695
      %v1260 = vpow.pop %v1259
      %v1261 = vmul.f32 %v1254, 1.442695
      %v1262 = vpow.pop %v1261
      %v1263 = vmul.f32 %v1256, %v1163
      %v1264 = vmul.f32 %v1258, %v1164
      %v1265 = vmul.f32 %v1260, %v1165
      %v1266 = vmul.f32 %v1262, %v1166
      %v1267 = vmul.f32 %v367, %v334
      %v1268 = vmul.f32 %v368, %v335
      %v1269 = vmul.f32 %v369, %v336
      %v1270 = vmul.f32 %v370, %v337
      %1272 = vset.pattern.permute.xlu0 0
      %1273 = vperm.xlu0 %1272, %v401
      %v1274 = vpop.permute.xlu0 %1273
      %1277 = vset.pattern.permute.xlu0 0
      %1278 = vperm.xlu0 %1277, %v402
      %v1279 = vpop.permute.xlu0 %1278
      %1282 = vset.pattern.permute.xlu0 0
      %1283 = vperm.xlu0 %1282, %v403
      %v1284 = vpop.permute.xlu0 %1283
      %1287 = vset.pattern.permute.xlu0 0
      %1288 = vperm.xlu0 %1287, %v404
      %v1289 = vpop.permute.xlu0 %1288
      %v1295 = vlaneseq
      %v1296 = vshrl.u32 %v1295, 7
      %v1297 = vsub.s32 0, %v1296
      %v1298 = vrot.slane %v1267, %v1297
      %v1299 = vlaneseq
      %v1300 = vshrl.u32 %v1299, 7
      %v1301 = vsub.s32 0, %v1300
      %v1302 = vrot.slane %v1268, %v1301
      %v1303 = vlaneseq
      %v1304 = vshrl.u32 %v1303, 7
      %v1305 = vsub.s32 0, %v1304
      %v1306 = vrot.slane %v1269, %v1305
      %v1307 = vlaneseq
      %v1308 = vshrl.u32 %v1307, 7
      %v1309 = vsub.s32 0, %v1308
      %v1310 = vrot.slane %v1270, %v1309
      %v1315 = vmul.f32 %v1274, %v1298
      %v1316 = vmul.f32 %v1279, %v1302
      %v1317 = vmul.f32 %v1284, %v1306
      %v1318 = vmul.f32 %v1289, %v1310
      %v1319 = vadd.f32 %v1263, %v1315
      %v1320 = vadd.f32 %v1264, %v1316
      %v1321 = vadd.f32 %v1265, %v1317
      %v1322 = vadd.f32 %v1266, %v1318
      %1324 = vset.pattern.permute.xlu0 0
      %1325 = vperm.xlu0 %1324, %v434
      %v1326 = vpop.permute.xlu0 %1325
      %1329 = vset.pattern.permute.xlu0 0
      %1330 = vperm.xlu0 %1329, %v435
      %v1331 = vpop.permute.xlu0 %1330
      %1334 = vset.pattern.permute.xlu0 0
      %1335 = vperm.xlu0 %1334, %v436
      %v1336 = vpop.permute.xlu0 %1335
      %1339 = vset.pattern.permute.xlu0 0
      %1340 = vperm.xlu0 %1339, %v437
      %v1341 = vpop.permute.xlu0 %1340
      %v1343 = vmul.f32 %v1326, %v1319
      %v1344 = vmul.f32 %v1331, %v1320
      %v1345 = vmul.f32 %v1336, %v1321
      %v1346 = vmul.f32 %v1341, %v1322
      %v1347 = vsel %vm566, %v1343, 0.0
      %v1348 = vrot.slane %v1347, 4
      %v1349 = vadd.f32 %v1347, %v1348
      %v1350 = vrot.slane %v1349, 2
      %v1351 = vadd.f32 %v1349, %v1350
      %v1352 = vrot.slane %v1351, 1
      %v1353 = vadd.f32 %v1351, %v1352
      %v1354 = vsel %vm566, %v1344, 0.0
      %v1355 = vrot.slane %v1354, 4
      %v1356 = vadd.f32 %v1354, %v1355
      %v1357 = vrot.slane %v1356, 2
      %v1358 = vadd.f32 %v1356, %v1357
      %v1359 = vrot.slane %v1358, 1
      %v1360 = vadd.f32 %v1358, %v1359
      %v1361 = vsel %vm566, %v1345, 0.0
      %v1362 = vrot.slane %v1361, 4
      %v1363 = vadd.f32 %v1361, %v1362
      %v1364 = vrot.slane %v1363, 2
      %v1365 = vadd.f32 %v1363, %v1364
      %v1366 = vrot.slane %v1365, 1
      %v1367 = vadd.f32 %v1365, %v1366
      %v1368 = vsel %vm566, %v1346, 0.0
      %v1369 = vrot.slane %v1368, 4
      %v1370 = vadd.f32 %v1368, %v1369
      %v1371 = vrot.slane %v1370, 2
      %v1372 = vadd.f32 %v1370, %v1371
      %v1373 = vrot.slane %v1372, 1
      %v1374 = vadd.f32 %v1372, %v1373
      %v1375 = vmul.f32 %v308, %v334
      %v1376 = vmul.f32 %v309, %v335
      %v1377 = vmul.f32 %v310, %v336
      %v1378 = vmul.f32 %v311, %v337
      %v1379 = vadd.f32 %v1353, %v1375
      %v1380 = vadd.f32 %v1360, %v1376
      %v1381 = vadd.f32 %v1367, %v1377
      %v1382 = vadd.f32 %v1374, %v1378
      %v1387 = vlaneseq
      %v1388 = vshrl.u32 %v1387, 7
      %v1389 = vsub.s32 0, %v1388
      %v1390 = vrot.slane %v371, %v1389
      %v1391 = vlaneseq
      %v1392 = vshrl.u32 %v1391, 7
      %v1393 = vsub.s32 0, %v1392
      %v1394 = vrot.slane %v372, %v1393
      %v1395 = vlaneseq
      %v1396 = vshrl.u32 %v1395, 7
      %v1397 = vsub.s32 0, %v1396
      %v1398 = vrot.slane %v373, %v1397
      %v1399 = vlaneseq
      %v1400 = vshrl.u32 %v1399, 7
      %v1401 = vsub.s32 0, %v1400
      %v1402 = vrot.slane %v374, %v1401
      %v1407 = vmul.f32 %v304, %v1390
      %v1408 = vmul.f32 %v305, %v1394
      %v1409 = vmul.f32 %v306, %v1398
      %v1410 = vmul.f32 %v307, %v1402
      %v1411 = vmul.f32 %v1407, 1.442695
      %v1412 = vpow.pop %v1411
      %v1413 = vmul.f32 %v1408, 1.442695
      %v1414 = vpow.pop %v1413
      %v1415 = vmul.f32 %v1409, 1.442695
      %v1416 = vpow.pop %v1415
      %v1417 = vmul.f32 %v1410, 1.442695
      %v1418 = vpow.pop %v1417
      %v1419 = vmul.f32 %v1412, %v1319
      %v1420 = vmul.f32 %v1414, %v1320
      %v1421 = vmul.f32 %v1416, %v1321
      %v1422 = vmul.f32 %v1418, %v1322
      %v1423 = vmul.f32 %v371, %v338
      %v1424 = vmul.f32 %v372, %v339
      %v1425 = vmul.f32 %v373, %v340
      %v1426 = vmul.f32 %v374, %v341
      %1428 = vset.pattern.permute.xlu0 0
      %1429 = vperm.xlu0 %1428, %v405
      %v1430 = vpop.permute.xlu0 %1429
      %1433 = vset.pattern.permute.xlu0 0
      %1434 = vperm.xlu0 %1433, %v406
      %v1435 = vpop.permute.xlu0 %1434
      %1438 = vset.pattern.permute.xlu0 0
      %1439 = vperm.xlu0 %1438, %v407
      %v1440 = vpop.permute.xlu0 %1439
      %1443 = vset.pattern.permute.xlu0 0
      %1444 = vperm.xlu0 %1443, %v408
      %v1445 = vpop.permute.xlu0 %1444
      %v1451 = vlaneseq
      %v1452 = vshrl.u32 %v1451, 7
      %v1453 = vsub.s32 0, %v1452
      %v1454 = vrot.slane %v1423, %v1453
      %v1455 = vlaneseq
      %v1456 = vshrl.u32 %v1455, 7
      %v1457 = vsub.s32 0, %v1456
      %v1458 = vrot.slane %v1424, %v1457
      %v1459 = vlaneseq
      %v1460 = vshrl.u32 %v1459, 7
      %v1461 = vsub.s32 0, %v1460
      %v1462 = vrot.slane %v1425, %v1461
      %v1463 = vlaneseq
      %v1464 = vshrl.u32 %v1463, 7
      %v1465 = vsub.s32 0, %v1464
      %v1466 = vrot.slane %v1426, %v1465
      %v1471 = vmul.f32 %v1430, %v1454
      %v1472 = vmul.f32 %v1435, %v1458
      %v1473 = vmul.f32 %v1440, %v1462
      %v1474 = vmul.f32 %v1445, %v1466
      %v1475 = vadd.f32 %v1419, %v1471
      %v1476 = vadd.f32 %v1420, %v1472
      %v1477 = vadd.f32 %v1421, %v1473
      %v1478 = vadd.f32 %v1422, %v1474
      %1480 = vset.pattern.permute.xlu0 0
      %1481 = vperm.xlu0 %1480, %v438
      %v1482 = vpop.permute.xlu0 %1481
      %1485 = vset.pattern.permute.xlu0 0
      %1486 = vperm.xlu0 %1485, %v439
      %v1487 = vpop.permute.xlu0 %1486
      %1490 = vset.pattern.permute.xlu0 0
      %1491 = vperm.xlu0 %1490, %v440
      %v1492 = vpop.permute.xlu0 %1491
      %1495 = vset.pattern.permute.xlu0 0
      %1496 = vperm.xlu0 %1495, %v441
      %v1497 = vpop.permute.xlu0 %1496
      %v1499 = vmul.f32 %v1482, %v1475
      %v1500 = vmul.f32 %v1487, %v1476
      %v1501 = vmul.f32 %v1492, %v1477
      %v1502 = vmul.f32 %v1497, %v1478
      %v1503 = vsel %vm566, %v1499, 0.0
      %v1504 = vrot.slane %v1503, 4
      %v1505 = vadd.f32 %v1503, %v1504
      %v1506 = vrot.slane %v1505, 2
      %v1507 = vadd.f32 %v1505, %v1506
      %v1508 = vrot.slane %v1507, 1
      %v1509 = vadd.f32 %v1507, %v1508
      %v1510 = vsel %vm566, %v1500, 0.0
      %v1511 = vrot.slane %v1510, 4
      %v1512 = vadd.f32 %v1510, %v1511
      %v1513 = vrot.slane %v1512, 2
      %v1514 = vadd.f32 %v1512, %v1513
      %v1515 = vrot.slane %v1514, 1
      %v1516 = vadd.f32 %v1514, %v1515
      %v1517 = vsel %vm566, %v1501, 0.0
      %v1518 = vrot.slane %v1517, 4
      %v1519 = vadd.f32 %v1517, %v1518
      %v1520 = vrot.slane %v1519, 2
      %v1521 = vadd.f32 %v1519, %v1520
      %v1522 = vrot.slane %v1521, 1
      %v1523 = vadd.f32 %v1521, %v1522
      %v1524 = vsel %vm566, %v1502, 0.0
      %v1525 = vrot.slane %v1524, 4
      %v1526 = vadd.f32 %v1524, %v1525
      %v1527 = vrot.slane %v1526, 2
      %v1528 = vadd.f32 %v1526, %v1527
      %v1529 = vrot.slane %v1528, 1
      %v1530 = vadd.f32 %v1528, %v1529
      %v1531 = vmul.f32 %v308, %v338
      %v1532 = vmul.f32 %v309, %v339
      %v1533 = vmul.f32 %v310, %v340
      %v1534 = vmul.f32 %v311, %v341
      %v1535 = vadd.f32 %v1509, %v1531
      %v1536 = vadd.f32 %v1516, %v1532
      %v1537 = vadd.f32 %v1523, %v1533
      %v1538 = vadd.f32 %v1530, %v1534
      %v1543 = vlaneseq
      %v1544 = vshrl.u32 %v1543, 7
      %v1545 = vsub.s32 0, %v1544
      %v1546 = vrot.slane %v375, %v1545
      %v1547 = vlaneseq
      %v1548 = vshrl.u32 %v1547, 7
      %v1549 = vsub.s32 0, %v1548
      %v1550 = vrot.slane %v376, %v1549
      %v1551 = vlaneseq
      %v1552 = vshrl.u32 %v1551, 7
      %v1553 = vsub.s32 0, %v1552
      %v1554 = vrot.slane %v377, %v1553
      %v1555 = vlaneseq
      %v1556 = vshrl.u32 %v1555, 7
      %v1557 = vsub.s32 0, %v1556
      %v1558 = vrot.slane %v378, %v1557
      %v1563 = vmul.f32 %v304, %v1546
      %v1564 = vmul.f32 %v305, %v1550
      %v1565 = vmul.f32 %v306, %v1554
      %v1566 = vmul.f32 %v307, %v1558
      %v1567 = vmul.f32 %v1563, 1.442695
      %v1568 = vpow.pop %v1567
      %v1569 = vmul.f32 %v1564, 1.442695
      %v1570 = vpow.pop %v1569
      %v1571 = vmul.f32 %v1565, 1.442695
      %v1572 = vpow.pop %v1571
      %v1573 = vmul.f32 %v1566, 1.442695
      %v1574 = vpow.pop %v1573
      %v1575 = vmul.f32 %v1568, %v1475
      %v1576 = vmul.f32 %v1570, %v1476
      %v1577 = vmul.f32 %v1572, %v1477
      %v1578 = vmul.f32 %v1574, %v1478
      %v1579 = vmul.f32 %v375, %v342
      %v1580 = vmul.f32 %v376, %v343
      %v1581 = vmul.f32 %v377, %v344
      %v1582 = vmul.f32 %v378, %v345
      %1584 = vset.pattern.permute.xlu0 0
      %1585 = vperm.xlu0 %1584, %v409
      %v1586 = vpop.permute.xlu0 %1585
      %1589 = vset.pattern.permute.xlu0 0
      %1590 = vperm.xlu0 %1589, %v410
      %v1591 = vpop.permute.xlu0 %1590
      %1594 = vset.pattern.permute.xlu0 0
      %1595 = vperm.xlu0 %1594, %v411
      %v1596 = vpop.permute.xlu0 %1595
      %1599 = vset.pattern.permute.xlu0 0
      %1600 = vperm.xlu0 %1599, %v412
      %v1601 = vpop.permute.xlu0 %1600
      %v1607 = vlaneseq
      %v1608 = vshrl.u32 %v1607, 7
      %v1609 = vsub.s32 0, %v1608
      %v1610 = vrot.slane %v1579, %v1609
      %v1611 = vlaneseq
      %v1612 = vshrl.u32 %v1611, 7
      %v1613 = vsub.s32 0, %v1612
      %v1614 = vrot.slane %v1580, %v1613
      %v1615 = vlaneseq
      %v1616 = vshrl.u32 %v1615, 7
      %v1617 = vsub.s32 0, %v1616
      %v1618 = vrot.slane %v1581, %v1617
      %v1619 = vlaneseq
      %v1620 = vshrl.u32 %v1619, 7
      %v1621 = vsub.s32 0, %v1620
      %v1622 = vrot.slane %v1582, %v1621
      %v1627 = vmul.f32 %v1586, %v1610
      %v1628 = vmul.f32 %v1591, %v1614
      %v1629 = vmul.f32 %v1596, %v1618
      %v1630 = vmul.f32 %v1601, %v1622
      %v1631 = vadd.f32 %v1575, %v1627
      %v1632 = vadd.f32 %v1576, %v1628
      %v1633 = vadd.f32 %v1577, %v1629
      %v1634 = vadd.f32 %v1578, %v1630
      %1636 = vset.pattern.permute.xlu0 0
      %1637 = vperm.xlu0 %1636, %v442
      %v1638 = vpop.permute.xlu0 %1637
      %1641 = vset.pattern.permute.xlu0 0
      %1642 = vperm.xlu0 %1641, %v443
      %v1643 = vpop.permute.xlu0 %1642
      %1646 = vset.pattern.permute.xlu0 0
      %1647 = vperm.xlu0 %1646, %v444
      %v1648 = vpop.permute.xlu0 %1647
      %1651 = vset.pattern.permute.xlu0 0
      %1652 = vperm.xlu0 %1651, %v445
      %v1653 = vpop.permute.xlu0 %1652
      %v1655 = vmul.f32 %v1638, %v1631
      %v1656 = vmul.f32 %v1643, %v1632
      %v1657 = vmul.f32 %v1648, %v1633
      %v1658 = vmul.f32 %v1653, %v1634
      %v1659 = vsel %vm566, %v1655, 0.0
      %v1660 = vrot.slane %v1659, 4
      %v1661 = vadd.f32 %v1659, %v1660
      %v1662 = vrot.slane %v1661, 2
      %v1663 = vadd.f32 %v1661, %v1662
      %v1664 = vrot.slane %v1663, 1
      %v1665 = vadd.f32 %v1663, %v1664
      %v1666 = vsel %vm566, %v1656, 0.0
      %v1667 = vrot.slane %v1666, 4
      %v1668 = vadd.f32 %v1666, %v1667
      %v1669 = vrot.slane %v1668, 2
      %v1670 = vadd.f32 %v1668, %v1669
      %v1671 = vrot.slane %v1670, 1
      %v1672 = vadd.f32 %v1670, %v1671
      %v1673 = vsel %vm566, %v1657, 0.0
      %v1674 = vrot.slane %v1673, 4
      %v1675 = vadd.f32 %v1673, %v1674
      %v1676 = vrot.slane %v1675, 2
      %v1677 = vadd.f32 %v1675, %v1676
      %v1678 = vrot.slane %v1677, 1
      %v1679 = vadd.f32 %v1677, %v1678
      %v1680 = vsel %vm566, %v1658, 0.0
      %v1681 = vrot.slane %v1680, 4
      %v1682 = vadd.f32 %v1680, %v1681
      %v1683 = vrot.slane %v1682, 2
      %v1684 = vadd.f32 %v1682, %v1683
      %v1685 = vrot.slane %v1684, 1
      %v1686 = vadd.f32 %v1684, %v1685
      %v1687 = vmul.f32 %v308, %v342
      %v1688 = vmul.f32 %v309, %v343
      %v1689 = vmul.f32 %v310, %v344
      %v1690 = vmul.f32 %v311, %v345
      %v1691 = vadd.f32 %v1665, %v1687
      %v1692 = vadd.f32 %v1672, %v1688
      %v1693 = vadd.f32 %v1679, %v1689
      %v1694 = vadd.f32 %v1686, %v1690
      %s1695 = scalar_lea.vmem %s303, %s312
      %vm1696 = vcmask 516096
      %1697 = vst.msk [vmem:[%s1695] sm:$0x1] %vm1696, %v599
      %1698 = vst.msk [vmem:[%s1695 + $0x1] sm:$0x1] %vm1696, %v600
      %1699 = vst.msk [vmem:[%s1695 + $0x2] sm:$0x1] %vm1696, %v601
      %1700 = vst.msk [vmem:[%s1695 + $0x3] sm:$0x1] %vm1696, %v602
      %1701 = vst.msk [vmem:[%s1695 + $0x4] sm:$0x1] %vm1696, %v755
      %1702 = vst.msk [vmem:[%s1695 + $0x5] sm:$0x1] %vm1696, %v756
      %1703 = vst.msk [vmem:[%s1695 + $0x6] sm:$0x1] %vm1696, %v757
      %1704 = vst.msk [vmem:[%s1695 + $0x7] sm:$0x1] %vm1696, %v758
      %1705 = vst.msk [vmem:[%s1695 + $0x8] sm:$0x1] %vm1696, %v911
      %1706 = vst.msk [vmem:[%s1695 + $0x9] sm:$0x1] %vm1696, %v912
      %1707 = vst.msk [vmem:[%s1695 + $0xa] sm:$0x1] %vm1696, %v913
      %1708 = vst.msk [vmem:[%s1695 + $0xb] sm:$0x1] %vm1696, %v914
      %1709 = vst.msk [vmem:[%s1695 + $0xc] sm:$0x1] %vm1696, %v1067
      %1710 = vst.msk [vmem:[%s1695 + $0xd] sm:$0x1] %vm1696, %v1068
      %1711 = vst.msk [vmem:[%s1695 + $0xe] sm:$0x1] %vm1696, %v1069
      %1712 = vst.msk [vmem:[%s1695 + $0xf] sm:$0x1] %vm1696, %v1070
      %1713 = vst.msk [vmem:[%s1695 + $0x10] sm:$0x1] %vm1696, %v1223
      %1714 = vst.msk [vmem:[%s1695 + $0x11] sm:$0x1] %vm1696, %v1224
      %1715 = vst.msk [vmem:[%s1695 + $0x12] sm:$0x1] %vm1696, %v1225
      %1716 = vst.msk [vmem:[%s1695 + $0x13] sm:$0x1] %vm1696, %v1226
      %1717 = vst.msk [vmem:[%s1695 + $0x14] sm:$0x1] %vm1696, %v1379
      %1718 = vst.msk [vmem:[%s1695 + $0x15] sm:$0x1] %vm1696, %v1380
      %1719 = vst.msk [vmem:[%s1695 + $0x16] sm:$0x1] %vm1696, %v1381
      %1720 = vst.msk [vmem:[%s1695 + $0x17] sm:$0x1] %vm1696, %v1382
      %1721 = vst.msk [vmem:[%s1695 + $0x18] sm:$0x1] %vm1696, %v1535
      %1722 = vst.msk [vmem:[%s1695 + $0x19] sm:$0x1] %vm1696, %v1536
      %1723 = vst.msk [vmem:[%s1695 + $0x1a] sm:$0x1] %vm1696, %v1537
      %1724 = vst.msk [vmem:[%s1695 + $0x1b] sm:$0x1] %vm1696, %v1538
      %1725 = vst.msk [vmem:[%s1695 + $0x1c] sm:$0x1] %vm1696, %v1691
      %1726 = vst.msk [vmem:[%s1695 + $0x1d] sm:$0x1] %vm1696, %v1692
      %1727 = vst.msk [vmem:[%s1695 + $0x1e] sm:$0x1] %vm1696, %v1693
      %1728 = vst.msk [vmem:[%s1695 + $0x1f] sm:$0x1] %vm1696, %v1694
      %s1729 = smul.u32 8, 4
      %s1730 = scalar_lea.vmem %s285, %s1729
      %v1731 = vld [vmem:[%s1730] sm:$0x1]
      %v1732 = vld [vmem:[%s1730 + $0x1] sm:$0x1]
      %v1733 = vld [vmem:[%s1730 + $0x2] sm:$0x1]
      %v1734 = vld [vmem:[%s1730 + $0x3] sm:$0x1]
      %v1735 = vld [vmem:[%s1730 + $0x4] sm:$0x1]
      %v1736 = vld [vmem:[%s1730 + $0x5] sm:$0x1]
      %v1737 = vld [vmem:[%s1730 + $0x6] sm:$0x1]
      %v1738 = vld [vmem:[%s1730 + $0x7] sm:$0x1]
      %v1739 = vld [vmem:[%s1730 + $0x8] sm:$0x1]
      %v1740 = vld [vmem:[%s1730 + $0x9] sm:$0x1]
      %v1741 = vld [vmem:[%s1730 + $0xa] sm:$0x1]
      %v1742 = vld [vmem:[%s1730 + $0xb] sm:$0x1]
      %v1743 = vld [vmem:[%s1730 + $0xc] sm:$0x1]
      %v1744 = vld [vmem:[%s1730 + $0xd] sm:$0x1]
      %v1745 = vld [vmem:[%s1730 + $0xe] sm:$0x1]
      %v1746 = vld [vmem:[%s1730 + $0xf] sm:$0x1]
      %v1747 = vld [vmem:[%s1730 + $0x10] sm:$0x1]
      %v1748 = vld [vmem:[%s1730 + $0x11] sm:$0x1]
      %v1749 = vld [vmem:[%s1730 + $0x12] sm:$0x1]
      %v1750 = vld [vmem:[%s1730 + $0x13] sm:$0x1]
      %v1751 = vld [vmem:[%s1730 + $0x14] sm:$0x1]
      %v1752 = vld [vmem:[%s1730 + $0x15] sm:$0x1]
      %v1753 = vld [vmem:[%s1730 + $0x16] sm:$0x1]
      %v1754 = vld [vmem:[%s1730 + $0x17] sm:$0x1]
      %v1755 = vld [vmem:[%s1730 + $0x18] sm:$0x1]
      %v1756 = vld [vmem:[%s1730 + $0x19] sm:$0x1]
      %v1757 = vld [vmem:[%s1730 + $0x1a] sm:$0x1]
      %v1758 = vld [vmem:[%s1730 + $0x1b] sm:$0x1]
      %v1759 = vld [vmem:[%s1730 + $0x1c] sm:$0x1]
      %v1760 = vld [vmem:[%s1730 + $0x1d] sm:$0x1]
      %v1761 = vld [vmem:[%s1730 + $0x1e] sm:$0x1]
      %v1762 = vld [vmem:[%s1730 + $0x1f] sm:$0x1]
      %s1763 = scalar_lea.vmem %s289, %s1729
      %v1764 = vld [vmem:[%s1763] sm:$0x1]
      %v1765 = vld [vmem:[%s1763 + $0x1] sm:$0x1]
      %v1766 = vld [vmem:[%s1763 + $0x2] sm:$0x1]
      %v1767 = vld [vmem:[%s1763 + $0x3] sm:$0x1]
      %v1768 = vld [vmem:[%s1763 + $0x4] sm:$0x1]
      %v1769 = vld [vmem:[%s1763 + $0x5] sm:$0x1]
      %v1770 = vld [vmem:[%s1763 + $0x6] sm:$0x1]
      %v1771 = vld [vmem:[%s1763 + $0x7] sm:$0x1]
      %v1772 = vld [vmem:[%s1763 + $0x8] sm:$0x1]
      %v1773 = vld [vmem:[%s1763 + $0x9] sm:$0x1]
      %v1774 = vld [vmem:[%s1763 + $0xa] sm:$0x1]
      %v1775 = vld [vmem:[%s1763 + $0xb] sm:$0x1]
      %v1776 = vld [vmem:[%s1763 + $0xc] sm:$0x1]
      %v1777 = vld [vmem:[%s1763 + $0xd] sm:$0x1]
      %v1778 = vld [vmem:[%s1763 + $0xe] sm:$0x1]
      %v1779 = vld [vmem:[%s1763 + $0xf] sm:$0x1]
      %v1780 = vld [vmem:[%s1763 + $0x10] sm:$0x1]
      %v1781 = vld [vmem:[%s1763 + $0x11] sm:$0x1]
      %v1782 = vld [vmem:[%s1763 + $0x12] sm:$0x1]
      %v1783 = vld [vmem:[%s1763 + $0x13] sm:$0x1]
      %v1784 = vld [vmem:[%s1763 + $0x14] sm:$0x1]
      %v1785 = vld [vmem:[%s1763 + $0x15] sm:$0x1]
      %v1786 = vld [vmem:[%s1763 + $0x16] sm:$0x1]
      %v1787 = vld [vmem:[%s1763 + $0x17] sm:$0x1]
      %v1788 = vld [vmem:[%s1763 + $0x18] sm:$0x1]
      %v1789 = vld [vmem:[%s1763 + $0x19] sm:$0x1]
      %v1790 = vld [vmem:[%s1763 + $0x1a] sm:$0x1]
      %v1791 = vld [vmem:[%s1763 + $0x1b] sm:$0x1]
      %v1792 = vld [vmem:[%s1763 + $0x1c] sm:$0x1]
      %v1793 = vld [vmem:[%s1763 + $0x1d] sm:$0x1]
      %v1794 = vld [vmem:[%s1763 + $0x1e] sm:$0x1]
      %v1795 = vld [vmem:[%s1763 + $0x1f] sm:$0x1]
      %s1796 = smul.u32 8, 32
      %s1797 = scalar_lea.vmem %s294, %s1796
      %v1798 = vld [vmem:[%s1797] sm:$0xff]
      %v1799 = vld [vmem:[%s1797 + $0x8] sm:$0xff]
      %v1800 = vld [vmem:[%s1797 + $0x10] sm:$0xff]
      %v1801 = vld [vmem:[%s1797 + $0x18] sm:$0xff]
      %v1802 = vld [vmem:[%s1797 + $0x20] sm:$0xff]
      %v1803 = vld [vmem:[%s1797 + $0x28] sm:$0xff]
      %v1804 = vld [vmem:[%s1797 + $0x30] sm:$0xff]
      %v1805 = vld [vmem:[%s1797 + $0x38] sm:$0xff]
      %v1806 = vld [vmem:[%s1797 + $0x40] sm:$0xff]
      %v1807 = vld [vmem:[%s1797 + $0x48] sm:$0xff]
      %v1808 = vld [vmem:[%s1797 + $0x50] sm:$0xff]
      %v1809 = vld [vmem:[%s1797 + $0x58] sm:$0xff]
      %v1810 = vld [vmem:[%s1797 + $0x60] sm:$0xff]
      %v1811 = vld [vmem:[%s1797 + $0x68] sm:$0xff]
      %v1812 = vld [vmem:[%s1797 + $0x70] sm:$0xff]
      %v1813 = vld [vmem:[%s1797 + $0x78] sm:$0xff]
      %v1814 = vld [vmem:[%s1797 + $0x80] sm:$0xff]
      %v1815 = vld [vmem:[%s1797 + $0x88] sm:$0xff]
      %v1816 = vld [vmem:[%s1797 + $0x90] sm:$0xff]
      %v1817 = vld [vmem:[%s1797 + $0x98] sm:$0xff]
      %v1818 = vld [vmem:[%s1797 + $0xa0] sm:$0xff]
      %v1819 = vld [vmem:[%s1797 + $0xa8] sm:$0xff]
      %v1820 = vld [vmem:[%s1797 + $0xb0] sm:$0xff]
      %v1821 = vld [vmem:[%s1797 + $0xb8] sm:$0xff]
      %v1822 = vld [vmem:[%s1797 + $0xc0] sm:$0xff]
      %v1823 = vld [vmem:[%s1797 + $0xc8] sm:$0xff]
      %v1824 = vld [vmem:[%s1797 + $0xd0] sm:$0xff]
      %v1825 = vld [vmem:[%s1797 + $0xd8] sm:$0xff]
      %v1826 = vld [vmem:[%s1797 + $0xe0] sm:$0xff]
      %v1827 = vld [vmem:[%s1797 + $0xe8] sm:$0xff]
      %v1828 = vld [vmem:[%s1797 + $0xf0] sm:$0xff]
      %v1829 = vld [vmem:[%s1797 + $0xf8] sm:$0xff]
      %s1830 = scalar_lea.vmem %s299, %s1796
      %v1831 = vld [vmem:[%s1830] sm:$0xff]
      %v1832 = vld [vmem:[%s1830 + $0x8] sm:$0xff]
      %v1833 = vld [vmem:[%s1830 + $0x10] sm:$0xff]
      %v1834 = vld [vmem:[%s1830 + $0x18] sm:$0xff]
      %v1835 = vld [vmem:[%s1830 + $0x20] sm:$0xff]
      %v1836 = vld [vmem:[%s1830 + $0x28] sm:$0xff]
      %v1837 = vld [vmem:[%s1830 + $0x30] sm:$0xff]
      %v1838 = vld [vmem:[%s1830 + $0x38] sm:$0xff]
      %v1839 = vld [vmem:[%s1830 + $0x40] sm:$0xff]
      %v1840 = vld [vmem:[%s1830 + $0x48] sm:$0xff]
      %v1841 = vld [vmem:[%s1830 + $0x50] sm:$0xff]
      %v1842 = vld [vmem:[%s1830 + $0x58] sm:$0xff]
      %v1843 = vld [vmem:[%s1830 + $0x60] sm:$0xff]
      %v1844 = vld [vmem:[%s1830 + $0x68] sm:$0xff]
      %v1845 = vld [vmem:[%s1830 + $0x70] sm:$0xff]
      %v1846 = vld [vmem:[%s1830 + $0x78] sm:$0xff]
      %v1847 = vld [vmem:[%s1830 + $0x80] sm:$0xff]
      %v1848 = vld [vmem:[%s1830 + $0x88] sm:$0xff]
      %v1849 = vld [vmem:[%s1830 + $0x90] sm:$0xff]
      %v1850 = vld [vmem:[%s1830 + $0x98] sm:$0xff]
      %v1851 = vld [vmem:[%s1830 + $0xa0] sm:$0xff]
      %v1852 = vld [vmem:[%s1830 + $0xa8] sm:$0xff]
      %v1853 = vld [vmem:[%s1830 + $0xb0] sm:$0xff]
      %v1854 = vld [vmem:[%s1830 + $0xb8] sm:$0xff]
      %v1855 = vld [vmem:[%s1830 + $0xc0] sm:$0xff]
      %v1856 = vld [vmem:[%s1830 + $0xc8] sm:$0xff]
      %v1857 = vld [vmem:[%s1830 + $0xd0] sm:$0xff]
      %v1858 = vld [vmem:[%s1830 + $0xd8] sm:$0xff]
      %v1859 = vld [vmem:[%s1830 + $0xe0] sm:$0xff]
      %v1860 = vld [vmem:[%s1830 + $0xe8] sm:$0xff]
      %v1861 = vld [vmem:[%s1830 + $0xf0] sm:$0xff]
      %v1862 = vld [vmem:[%s1830 + $0xf8] sm:$0xff]
      %v1867 = vlaneseq
      %v1868 = vshrl.u32 %v1867, 7
      %v1869 = vsub.s32 0, %v1868
      %v1870 = vrot.slane %v1764, %v1869
      %v1871 = vlaneseq
      %v1872 = vshrl.u32 %v1871, 7
      %v1873 = vsub.s32 0, %v1872
      %v1874 = vrot.slane %v1765, %v1873
      %v1875 = vlaneseq
      %v1876 = vshrl.u32 %v1875, 7
      %v1877 = vsub.s32 0, %v1876
      %v1878 = vrot.slane %v1766, %v1877
      %v1879 = vlaneseq
      %v1880 = vshrl.u32 %v1879, 7
      %v1881 = vsub.s32 0, %v1880
      %v1882 = vrot.slane %v1767, %v1881
      %v1887 = vmul.f32 %v304, %v1870
      %v1888 = vmul.f32 %v305, %v1874
      %v1889 = vmul.f32 %v306, %v1878
      %v1890 = vmul.f32 %v307, %v1882
      %v1891 = vmul.f32 %v1887, 1.442695
      %v1892 = vpow.pop %v1891
      %v1893 = vmul.f32 %v1888, 1.442695
      %v1894 = vpow.pop %v1893
      %v1895 = vmul.f32 %v1889, 1.442695
      %v1896 = vpow.pop %v1895
      %v1897 = vmul.f32 %v1890, 1.442695
      %v1898 = vpow.pop %v1897
      %v1899 = vmul.f32 %v1892, %v1631
      %v1900 = vmul.f32 %v1894, %v1632
      %v1901 = vmul.f32 %v1896, %v1633
      %v1902 = vmul.f32 %v1898, %v1634
      %v1903 = vmul.f32 %v1764, %v1731
      %v1904 = vmul.f32 %v1765, %v1732
      %v1905 = vmul.f32 %v1766, %v1733
      %v1906 = vmul.f32 %v1767, %v1734
      %1908 = vset.pattern.permute.xlu0 0
      %1909 = vperm.xlu0 %1908, %v1798
      %v1910 = vpop.permute.xlu0 %1909
      %1913 = vset.pattern.permute.xlu0 0
      %1914 = vperm.xlu0 %1913, %v1799
      %v1915 = vpop.permute.xlu0 %1914
      %1918 = vset.pattern.permute.xlu0 0
      %1919 = vperm.xlu0 %1918, %v1800
      %v1920 = vpop.permute.xlu0 %1919
      %1923 = vset.pattern.permute.xlu0 0
      %1924 = vperm.xlu0 %1923, %v1801
      %v1925 = vpop.permute.xlu0 %1924
      %v1931 = vlaneseq
      %v1932 = vshrl.u32 %v1931, 7
      %v1933 = vsub.s32 0, %v1932
      %v1934 = vrot.slane %v1903, %v1933
      %v1935 = vlaneseq
      %v1936 = vshrl.u32 %v1935, 7
      %v1937 = vsub.s32 0, %v1936
      %v1938 = vrot.slane %v1904, %v1937
      %v1939 = vlaneseq
      %v1940 = vshrl.u32 %v1939, 7
      %v1941 = vsub.s32 0, %v1940
      %v1942 = vrot.slane %v1905, %v1941
      %v1943 = vlaneseq
      %v1944 = vshrl.u32 %v1943, 7
      %v1945 = vsub.s32 0, %v1944
      %v1946 = vrot.slane %v1906, %v1945
      %v1951 = vmul.f32 %v1910, %v1934
      %v1952 = vmul.f32 %v1915, %v1938
      %v1953 = vmul.f32 %v1920, %v1942
      %v1954 = vmul.f32 %v1925, %v1946
      %v1955 = vadd.f32 %v1899, %v1951
      %v1956 = vadd.f32 %v1900, %v1952
      %v1957 = vadd.f32 %v1901, %v1953
      %v1958 = vadd.f32 %v1902, %v1954
      %1960 = vset.pattern.permute.xlu0 0
      %1961 = vperm.xlu0 %1960, %v1831
      %v1962 = vpop.permute.xlu0 %1961
      %1965 = vset.pattern.permute.xlu0 0
      %1966 = vperm.xlu0 %1965, %v1832
      %v1967 = vpop.permute.xlu0 %1966
      %1970 = vset.pattern.permute.xlu0 0
      %1971 = vperm.xlu0 %1970, %v1833
      %v1972 = vpop.permute.xlu0 %1971
      %1975 = vset.pattern.permute.xlu0 0
      %1976 = vperm.xlu0 %1975, %v1834
      %v1977 = vpop.permute.xlu0 %1976
      %v1979 = vmul.f32 %v1962, %v1955
      %v1980 = vmul.f32 %v1967, %v1956
      %v1981 = vmul.f32 %v1972, %v1957
      %v1982 = vmul.f32 %v1977, %v1958
      %v1983 = vsel %vm566, %v1979, 0.0
      %v1984 = vrot.slane %v1983, 4
      %v1985 = vadd.f32 %v1983, %v1984
      %v1986 = vrot.slane %v1985, 2
      %v1987 = vadd.f32 %v1985, %v1986
      %v1988 = vrot.slane %v1987, 1
      %v1989 = vadd.f32 %v1987, %v1988
      %v1990 = vsel %vm566, %v1980, 0.0
      %v1991 = vrot.slane %v1990, 4
      %v1992 = vadd.f32 %v1990, %v1991
      %v1993 = vrot.slane %v1992, 2
      %v1994 = vadd.f32 %v1992, %v1993
      %v1995 = vrot.slane %v1994, 1
      %v1996 = vadd.f32 %v1994, %v1995
      %v1997 = vsel %vm566, %v1981, 0.0
      %v1998 = vrot.slane %v1997, 4
      %v1999 = vadd.f32 %v1997, %v1998
      %v2000 = vrot.slane %v1999, 2
      %v2001 = vadd.f32 %v1999, %v2000
      %v2002 = vrot.slane %v2001, 1
      %v2003 = vadd.f32 %v2001, %v2002
      %v2004 = vsel %vm566, %v1982, 0.0
      %v2005 = vrot.slane %v2004, 4
      %v2006 = vadd.f32 %v2004, %v2005
      %v2007 = vrot.slane %v2006, 2
      %v2008 = vadd.f32 %v2006, %v2007
      %v2009 = vrot.slane %v2008, 1
      %v2010 = vadd.f32 %v2008, %v2009
      %v2011 = vmul.f32 %v308, %v1731
      %v2012 = vmul.f32 %v309, %v1732
      %v2013 = vmul.f32 %v310, %v1733
      %v2014 = vmul.f32 %v311, %v1734
      %v2015 = vadd.f32 %v1989, %v2011
      %v2016 = vadd.f32 %v1996, %v2012
      %v2017 = vadd.f32 %v2003, %v2013
      %v2018 = vadd.f32 %v2010, %v2014
      %v2023 = vlaneseq
      %v2024 = vshrl.u32 %v2023, 7
      %v2025 = vsub.s32 0, %v2024
      %v2026 = vrot.slane %v1768, %v2025
      %v2027 = vlaneseq
      %v2028 = vshrl.u32 %v2027, 7
      %v2029 = vsub.s32 0, %v2028
      %v2030 = vrot.slane %v1769, %v2029
      %v2031 = vlaneseq
      %v2032 = vshrl.u32 %v2031, 7
      %v2033 = vsub.s32 0, %v2032
      %v2034 = vrot.slane %v1770, %v2033
      %v2035 = vlaneseq
      %v2036 = vshrl.u32 %v2035, 7
      %v2037 = vsub.s32 0, %v2036
      %v2038 = vrot.slane %v1771, %v2037
      %v2043 = vmul.f32 %v304, %v2026
      %v2044 = vmul.f32 %v305, %v2030
      %v2045 = vmul.f32 %v306, %v2034
      %v2046 = vmul.f32 %v307, %v2038
      %v2047 = vmul.f32 %v2043, 1.442695
      %v2048 = vpow.pop %v2047
      %v2049 = vmul.f32 %v2044, 1.442695
      %v2050 = vpow.pop %v2049
      %v2051 = vmul.f32 %v2045, 1.442695
      %v2052 = vpow.pop %v2051
      %v2053 = vmul.f32 %v2046, 1.442695
      %v2054 = vpow.pop %v2053
      %v2055 = vmul.f32 %v2048, %v1955
      %v2056 = vmul.f32 %v2050, %v1956
      %v2057 = vmul.f32 %v2052, %v1957
      %v2058 = vmul.f32 %v2054, %v1958
      %v2059 = vmul.f32 %v1768, %v1735
      %v2060 = vmul.f32 %v1769, %v1736
      %v2061 = vmul.f32 %v1770, %v1737
      %v2062 = vmul.f32 %v1771, %v1738
      %2064 = vset.pattern.permute.xlu0 0
      %2065 = vperm.xlu0 %2064, %v1802
      %v2066 = vpop.permute.xlu0 %2065
      %2069 = vset.pattern.permute.xlu0 0
      %2070 = vperm.xlu0 %2069, %v1803
      %v2071 = vpop.permute.xlu0 %2070
      %2074 = vset.pattern.permute.xlu0 0
      %2075 = vperm.xlu0 %2074, %v1804
      %v2076 = vpop.permute.xlu0 %2075
      %2079 = vset.pattern.permute.xlu0 0
      %2080 = vperm.xlu0 %2079, %v1805
      %v2081 = vpop.permute.xlu0 %2080
      %v2087 = vlaneseq
      %v2088 = vshrl.u32 %v2087, 7
      %v2089 = vsub.s32 0, %v2088
      %v2090 = vrot.slane %v2059, %v2089
      %v2091 = vlaneseq
      %v2092 = vshrl.u32 %v2091, 7
      %v2093 = vsub.s32 0, %v2092
      %v2094 = vrot.slane %v2060, %v2093
      %v2095 = vlaneseq
      %v2096 = vshrl.u32 %v2095, 7
      %v2097 = vsub.s32 0, %v2096
      %v2098 = vrot.slane %v2061, %v2097
      %v2099 = vlaneseq
      %v2100 = vshrl.u32 %v2099, 7
      %v2101 = vsub.s32 0, %v2100
      %v2102 = vrot.slane %v2062, %v2101
      %v2107 = vmul.f32 %v2066, %v2090
      %v2108 = vmul.f32 %v2071, %v2094
      %v2109 = vmul.f32 %v2076, %v2098
      %v2110 = vmul.f32 %v2081, %v2102
      %v2111 = vadd.f32 %v2055, %v2107
      %v2112 = vadd.f32 %v2056, %v2108
      %v2113 = vadd.f32 %v2057, %v2109
      %v2114 = vadd.f32 %v2058, %v2110
      %2116 = vset.pattern.permute.xlu0 0
      %2117 = vperm.xlu0 %2116, %v1835
      %v2118 = vpop.permute.xlu0 %2117
      %2121 = vset.pattern.permute.xlu0 0
      %2122 = vperm.xlu0 %2121, %v1836
      %v2123 = vpop.permute.xlu0 %2122
      %2126 = vset.pattern.permute.xlu0 0
      %2127 = vperm.xlu0 %2126, %v1837
      %v2128 = vpop.permute.xlu0 %2127
      %2131 = vset.pattern.permute.xlu0 0
      %2132 = vperm.xlu0 %2131, %v1838
      %v2133 = vpop.permute.xlu0 %2132
      %v2135 = vmul.f32 %v2118, %v2111
      %v2136 = vmul.f32 %v2123, %v2112
      %v2137 = vmul.f32 %v2128, %v2113
      %v2138 = vmul.f32 %v2133, %v2114
      %v2139 = vsel %vm566, %v2135, 0.0
      %v2140 = vrot.slane %v2139, 4
      %v2141 = vadd.f32 %v2139, %v2140
      %v2142 = vrot.slane %v2141, 2
      %v2143 = vadd.f32 %v2141, %v2142
      %v2144 = vrot.slane %v2143, 1
      %v2145 = vadd.f32 %v2143, %v2144
      %v2146 = vsel %vm566, %v2136, 0.0
      %v2147 = vrot.slane %v2146, 4
      %v2148 = vadd.f32 %v2146, %v2147
      %v2149 = vrot.slane %v2148, 2
      %v2150 = vadd.f32 %v2148, %v2149
      %v2151 = vrot.slane %v2150, 1
      %v2152 = vadd.f32 %v2150, %v2151
      %v2153 = vsel %vm566, %v2137, 0.0
      %v2154 = vrot.slane %v2153, 4
      %v2155 = vadd.f32 %v2153, %v2154
      %v2156 = vrot.slane %v2155, 2
      %v2157 = vadd.f32 %v2155, %v2156
      %v2158 = vrot.slane %v2157, 1
      %v2159 = vadd.f32 %v2157, %v2158
      %v2160 = vsel %vm566, %v2138, 0.0
      %v2161 = vrot.slane %v2160, 4
      %v2162 = vadd.f32 %v2160, %v2161
      %v2163 = vrot.slane %v2162, 2
      %v2164 = vadd.f32 %v2162, %v2163
      %v2165 = vrot.slane %v2164, 1
      %v2166 = vadd.f32 %v2164, %v2165
      %v2167 = vmul.f32 %v308, %v1735
      %v2168 = vmul.f32 %v309, %v1736
      %v2169 = vmul.f32 %v310, %v1737
      %v2170 = vmul.f32 %v311, %v1738
      %v2171 = vadd.f32 %v2145, %v2167
      %v2172 = vadd.f32 %v2152, %v2168
      %v2173 = vadd.f32 %v2159, %v2169
      %v2174 = vadd.f32 %v2166, %v2170
      %v2179 = vlaneseq
      %v2180 = vshrl.u32 %v2179, 7
      %v2181 = vsub.s32 0, %v2180
      %v2182 = vrot.slane %v1772, %v2181
      %v2183 = vlaneseq
      %v2184 = vshrl.u32 %v2183, 7
      %v2185 = vsub.s32 0, %v2184
      %v2186 = vrot.slane %v1773, %v2185
      %v2187 = vlaneseq
      %v2188 = vshrl.u32 %v2187, 7
      %v2189 = vsub.s32 0, %v2188
      %v2190 = vrot.slane %v1774, %v2189
      %v2191 = vlaneseq
      %v2192 = vshrl.u32 %v2191, 7
      %v2193 = vsub.s32 0, %v2192
      %v2194 = vrot.slane %v1775, %v2193
      %v2199 = vmul.f32 %v304, %v2182
      %v2200 = vmul.f32 %v305, %v2186
      %v2201 = vmul.f32 %v306, %v2190
      %v2202 = vmul.f32 %v307, %v2194
      %v2203 = vmul.f32 %v2199, 1.442695
      %v2204 = vpow.pop %v2203
      %v2205 = vmul.f32 %v2200, 1.442695
      %v2206 = vpow.pop %v2205
      %v2207 = vmul.f32 %v2201, 1.442695
      %v2208 = vpow.pop %v2207
      %v2209 = vmul.f32 %v2202, 1.442695
      %v2210 = vpow.pop %v2209
      %v2211 = vmul.f32 %v2204, %v2111
      %v2212 = vmul.f32 %v2206, %v2112
      %v2213 = vmul.f32 %v2208, %v2113
      %v2214 = vmul.f32 %v2210, %v2114
      %v2215 = vmul.f32 %v1772, %v1739
      %v2216 = vmul.f32 %v1773, %v1740
      %v2217 = vmul.f32 %v1774, %v1741
      %v2218 = vmul.f32 %v1775, %v1742
      %2220 = vset.pattern.permute.xlu0 0
      %2221 = vperm.xlu0 %2220, %v1806
      %v2222 = vpop.permute.xlu0 %2221
      %2225 = vset.pattern.permute.xlu0 0
      %2226 = vperm.xlu0 %2225, %v1807
      %v2227 = vpop.permute.xlu0 %2226
      %2230 = vset.pattern.permute.xlu0 0
      %2231 = vperm.xlu0 %2230, %v1808
      %v2232 = vpop.permute.xlu0 %2231
      %2235 = vset.pattern.permute.xlu0 0
      %2236 = vperm.xlu0 %2235, %v1809
      %v2237 = vpop.permute.xlu0 %2236
      %v2243 = vlaneseq
      %v2244 = vshrl.u32 %v2243, 7
      %v2245 = vsub.s32 0, %v2244
      %v2246 = vrot.slane %v2215, %v2245
      %v2247 = vlaneseq
      %v2248 = vshrl.u32 %v2247, 7
      %v2249 = vsub.s32 0, %v2248
      %v2250 = vrot.slane %v2216, %v2249
      %v2251 = vlaneseq
      %v2252 = vshrl.u32 %v2251, 7
      %v2253 = vsub.s32 0, %v2252
      %v2254 = vrot.slane %v2217, %v2253
      %v2255 = vlaneseq
      %v2256 = vshrl.u32 %v2255, 7
      %v2257 = vsub.s32 0, %v2256
      %v2258 = vrot.slane %v2218, %v2257
      %v2263 = vmul.f32 %v2222, %v2246
      %v2264 = vmul.f32 %v2227, %v2250
      %v2265 = vmul.f32 %v2232, %v2254
      %v2266 = vmul.f32 %v2237, %v2258
      %v2267 = vadd.f32 %v2211, %v2263
      %v2268 = vadd.f32 %v2212, %v2264
      %v2269 = vadd.f32 %v2213, %v2265
      %v2270 = vadd.f32 %v2214, %v2266
      %2272 = vset.pattern.permute.xlu0 0
      %2273 = vperm.xlu0 %2272, %v1839
      %v2274 = vpop.permute.xlu0 %2273
      %2277 = vset.pattern.permute.xlu0 0
      %2278 = vperm.xlu0 %2277, %v1840
      %v2279 = vpop.permute.xlu0 %2278
      %2282 = vset.pattern.permute.xlu0 0
      %2283 = vperm.xlu0 %2282, %v1841
      %v2284 = vpop.permute.xlu0 %2283
      %2287 = vset.pattern.permute.xlu0 0
      %2288 = vperm.xlu0 %2287, %v1842
      %v2289 = vpop.permute.xlu0 %2288
      %v2291 = vmul.f32 %v2274, %v2267
      %v2292 = vmul.f32 %v2279, %v2268
      %v2293 = vmul.f32 %v2284, %v2269
      %v2294 = vmul.f32 %v2289, %v2270
      %v2295 = vsel %vm566, %v2291, 0.0
      %v2296 = vrot.slane %v2295, 4
      %v2297 = vadd.f32 %v2295, %v2296
      %v2298 = vrot.slane %v2297, 2
      %v2299 = vadd.f32 %v2297, %v2298
      %v2300 = vrot.slane %v2299, 1
      %v2301 = vadd.f32 %v2299, %v2300
      %v2302 = vsel %vm566, %v2292, 0.0
      %v2303 = vrot.slane %v2302, 4
      %v2304 = vadd.f32 %v2302, %v2303
      %v2305 = vrot.slane %v2304, 2
      %v2306 = vadd.f32 %v2304, %v2305
      %v2307 = vrot.slane %v2306, 1
      %v2308 = vadd.f32 %v2306, %v2307
      %v2309 = vsel %vm566, %v2293, 0.0
      %v2310 = vrot.slane %v2309, 4
      %v2311 = vadd.f32 %v2309, %v2310
      %v2312 = vrot.slane %v2311, 2
      %v2313 = vadd.f32 %v2311, %v2312
      %v2314 = vrot.slane %v2313, 1
      %v2315 = vadd.f32 %v2313, %v2314
      %v2316 = vsel %vm566, %v2294, 0.0
      %v2317 = vrot.slane %v2316, 4
      %v2318 = vadd.f32 %v2316, %v2317
      %v2319 = vrot.slane %v2318, 2
      %v2320 = vadd.f32 %v2318, %v2319
      %v2321 = vrot.slane %v2320, 1
      %v2322 = vadd.f32 %v2320, %v2321
      %v2323 = vmul.f32 %v308, %v1739
      %v2324 = vmul.f32 %v309, %v1740
      %v2325 = vmul.f32 %v310, %v1741
      %v2326 = vmul.f32 %v311, %v1742
      %v2327 = vadd.f32 %v2301, %v2323
      %v2328 = vadd.f32 %v2308, %v2324
      %v2329 = vadd.f32 %v2315, %v2325
      %v2330 = vadd.f32 %v2322, %v2326
      %v2335 = vlaneseq
      %v2336 = vshrl.u32 %v2335, 7
      %v2337 = vsub.s32 0, %v2336
      %v2338 = vrot.slane %v1776, %v2337
      %v2339 = vlaneseq
      %v2340 = vshrl.u32 %v2339, 7
      %v2341 = vsub.s32 0, %v2340
      %v2342 = vrot.slane %v1777, %v2341
      %v2343 = vlaneseq
      %v2344 = vshrl.u32 %v2343, 7
      %v2345 = vsub.s32 0, %v2344
      %v2346 = vrot.slane %v1778, %v2345
      %v2347 = vlaneseq
      %v2348 = vshrl.u32 %v2347, 7
      %v2349 = vsub.s32 0, %v2348
      %v2350 = vrot.slane %v1779, %v2349
      %v2355 = vmul.f32 %v304, %v2338
      %v2356 = vmul.f32 %v305, %v2342
      %v2357 = vmul.f32 %v306, %v2346
      %v2358 = vmul.f32 %v307, %v2350
      %v2359 = vmul.f32 %v2355, 1.442695
      %v2360 = vpow.pop %v2359
      %v2361 = vmul.f32 %v2356, 1.442695
      %v2362 = vpow.pop %v2361
      %v2363 = vmul.f32 %v2357, 1.442695
      %v2364 = vpow.pop %v2363
      %v2365 = vmul.f32 %v2358, 1.442695
      %v2366 = vpow.pop %v2365
      %v2367 = vmul.f32 %v2360, %v2267
      %v2368 = vmul.f32 %v2362, %v2268
      %v2369 = vmul.f32 %v2364, %v2269
      %v2370 = vmul.f32 %v2366, %v2270
      %v2371 = vmul.f32 %v1776, %v1743
      %v2372 = vmul.f32 %v1777, %v1744
      %v2373 = vmul.f32 %v1778, %v1745
      %v2374 = vmul.f32 %v1779, %v1746
      %2376 = vset.pattern.permute.xlu0 0
      %2377 = vperm.xlu0 %2376, %v1810
      %v2378 = vpop.permute.xlu0 %2377
      %2381 = vset.pattern.permute.xlu0 0
      %2382 = vperm.xlu0 %2381, %v1811
      %v2383 = vpop.permute.xlu0 %2382
      %2386 = vset.pattern.permute.xlu0 0
      %2387 = vperm.xlu0 %2386, %v1812
      %v2388 = vpop.permute.xlu0 %2387
      %2391 = vset.pattern.permute.xlu0 0
      %2392 = vperm.xlu0 %2391, %v1813
      %v2393 = vpop.permute.xlu0 %2392
      %v2399 = vlaneseq
      %v2400 = vshrl.u32 %v2399, 7
      %v2401 = vsub.s32 0, %v2400
      %v2402 = vrot.slane %v2371, %v2401
      %v2403 = vlaneseq
      %v2404 = vshrl.u32 %v2403, 7
      %v2405 = vsub.s32 0, %v2404
      %v2406 = vrot.slane %v2372, %v2405
      %v2407 = vlaneseq
      %v2408 = vshrl.u32 %v2407, 7
      %v2409 = vsub.s32 0, %v2408
      %v2410 = vrot.slane %v2373, %v2409
      %v2411 = vlaneseq
      %v2412 = vshrl.u32 %v2411, 7
      %v2413 = vsub.s32 0, %v2412
      %v2414 = vrot.slane %v2374, %v2413
      %v2419 = vmul.f32 %v2378, %v2402
      %v2420 = vmul.f32 %v2383, %v2406
      %v2421 = vmul.f32 %v2388, %v2410
      %v2422 = vmul.f32 %v2393, %v2414
      %v2423 = vadd.f32 %v2367, %v2419
      %v2424 = vadd.f32 %v2368, %v2420
      %v2425 = vadd.f32 %v2369, %v2421
      %v2426 = vadd.f32 %v2370, %v2422
      %2428 = vset.pattern.permute.xlu0 0
      %2429 = vperm.xlu0 %2428, %v1843
      %v2430 = vpop.permute.xlu0 %2429
      %2433 = vset.pattern.permute.xlu0 0
      %2434 = vperm.xlu0 %2433, %v1844
      %v2435 = vpop.permute.xlu0 %2434
      %2438 = vset.pattern.permute.xlu0 0
      %2439 = vperm.xlu0 %2438, %v1845
      %v2440 = vpop.permute.xlu0 %2439
      %2443 = vset.pattern.permute.xlu0 0
      %2444 = vperm.xlu0 %2443, %v1846
      %v2445 = vpop.permute.xlu0 %2444
      %v2447 = vmul.f32 %v2430, %v2423
      %v2448 = vmul.f32 %v2435, %v2424
      %v2449 = vmul.f32 %v2440, %v2425
      %v2450 = vmul.f32 %v2445, %v2426
      %v2451 = vsel %vm566, %v2447, 0.0
      %v2452 = vrot.slane %v2451, 4
      %v2453 = vadd.f32 %v2451, %v2452
      %v2454 = vrot.slane %v2453, 2
      %v2455 = vadd.f32 %v2453, %v2454
      %v2456 = vrot.slane %v2455, 1
      %v2457 = vadd.f32 %v2455, %v2456
      %v2458 = vsel %vm566, %v2448, 0.0
      %v2459 = vrot.slane %v2458, 4
      %v2460 = vadd.f32 %v2458, %v2459
      %v2461 = vrot.slane %v2460, 2
      %v2462 = vadd.f32 %v2460, %v2461
      %v2463 = vrot.slane %v2462, 1
      %v2464 = vadd.f32 %v2462, %v2463
      %v2465 = vsel %vm566, %v2449, 0.0
      %v2466 = vrot.slane %v2465, 4
      %v2467 = vadd.f32 %v2465, %v2466
      %v2468 = vrot.slane %v2467, 2
      %v2469 = vadd.f32 %v2467, %v2468
      %v2470 = vrot.slane %v2469, 1
      %v2471 = vadd.f32 %v2469, %v2470
      %v2472 = vsel %vm566, %v2450, 0.0
      %v2473 = vrot.slane %v2472, 4
      %v2474 = vadd.f32 %v2472, %v2473
      %v2475 = vrot.slane %v2474, 2
      %v2476 = vadd.f32 %v2474, %v2475
      %v2477 = vrot.slane %v2476, 1
      %v2478 = vadd.f32 %v2476, %v2477
      %v2479 = vmul.f32 %v308, %v1743
      %v2480 = vmul.f32 %v309, %v1744
      %v2481 = vmul.f32 %v310, %v1745
      %v2482 = vmul.f32 %v311, %v1746
      %v2483 = vadd.f32 %v2457, %v2479
      %v2484 = vadd.f32 %v2464, %v2480
      %v2485 = vadd.f32 %v2471, %v2481
      %v2486 = vadd.f32 %v2478, %v2482
      %v2491 = vlaneseq
      %v2492 = vshrl.u32 %v2491, 7
      %v2493 = vsub.s32 0, %v2492
      %v2494 = vrot.slane %v1780, %v2493
      %v2495 = vlaneseq
      %v2496 = vshrl.u32 %v2495, 7
      %v2497 = vsub.s32 0, %v2496
      %v2498 = vrot.slane %v1781, %v2497
      %v2499 = vlaneseq
      %v2500 = vshrl.u32 %v2499, 7
      %v2501 = vsub.s32 0, %v2500
      %v2502 = vrot.slane %v1782, %v2501
      %v2503 = vlaneseq
      %v2504 = vshrl.u32 %v2503, 7
      %v2505 = vsub.s32 0, %v2504
      %v2506 = vrot.slane %v1783, %v2505
      %v2511 = vmul.f32 %v304, %v2494
      %v2512 = vmul.f32 %v305, %v2498
      %v2513 = vmul.f32 %v306, %v2502
      %v2514 = vmul.f32 %v307, %v2506
      %v2515 = vmul.f32 %v2511, 1.442695
      %v2516 = vpow.pop %v2515
      %v2517 = vmul.f32 %v2512, 1.442695
      %v2518 = vpow.pop %v2517
      %v2519 = vmul.f32 %v2513, 1.442695
      %v2520 = vpow.pop %v2519
      %v2521 = vmul.f32 %v2514, 1.442695
      %v2522 = vpow.pop %v2521
      %v2523 = vmul.f32 %v2516, %v2423
      %v2524 = vmul.f32 %v2518, %v2424
      %v2525 = vmul.f32 %v2520, %v2425
      %v2526 = vmul.f32 %v2522, %v2426
      %v2527 = vmul.f32 %v1780, %v1747
      %v2528 = vmul.f32 %v1781, %v1748
      %v2529 = vmul.f32 %v1782, %v1749
      %v2530 = vmul.f32 %v1783, %v1750
      %2532 = vset.pattern.permute.xlu0 0
      %2533 = vperm.xlu0 %2532, %v1814
      %v2534 = vpop.permute.xlu0 %2533
      %2537 = vset.pattern.permute.xlu0 0
      %2538 = vperm.xlu0 %2537, %v1815
      %v2539 = vpop.permute.xlu0 %2538
      %2542 = vset.pattern.permute.xlu0 0
      %2543 = vperm.xlu0 %2542, %v1816
      %v2544 = vpop.permute.xlu0 %2543
      %2547 = vset.pattern.permute.xlu0 0
      %2548 = vperm.xlu0 %2547, %v1817
      %v2549 = vpop.permute.xlu0 %2548
      %v2555 = vlaneseq
      %v2556 = vshrl.u32 %v2555, 7
      %v2557 = vsub.s32 0, %v2556
      %v2558 = vrot.slane %v2527, %v2557
      %v2559 = vlaneseq
      %v2560 = vshrl.u32 %v2559, 7
      %v2561 = vsub.s32 0, %v2560
      %v2562 = vrot.slane %v2528, %v2561
      %v2563 = vlaneseq
      %v2564 = vshrl.u32 %v2563, 7
      %v2565 = vsub.s32 0, %v2564
      %v2566 = vrot.slane %v2529, %v2565
      %v2567 = vlaneseq
      %v2568 = vshrl.u32 %v2567, 7
      %v2569 = vsub.s32 0, %v2568
      %v2570 = vrot.slane %v2530, %v2569
      %v2575 = vmul.f32 %v2534, %v2558
      %v2576 = vmul.f32 %v2539, %v2562
      %v2577 = vmul.f32 %v2544, %v2566
      %v2578 = vmul.f32 %v2549, %v2570
      %v2579 = vadd.f32 %v2523, %v2575
      %v2580 = vadd.f32 %v2524, %v2576
      %v2581 = vadd.f32 %v2525, %v2577
      %v2582 = vadd.f32 %v2526, %v2578
      %2584 = vset.pattern.permute.xlu0 0
      %2585 = vperm.xlu0 %2584, %v1847
      %v2586 = vpop.permute.xlu0 %2585
      %2589 = vset.pattern.permute.xlu0 0
      %2590 = vperm.xlu0 %2589, %v1848
      %v2591 = vpop.permute.xlu0 %2590
      %2594 = vset.pattern.permute.xlu0 0
      %2595 = vperm.xlu0 %2594, %v1849
      %v2596 = vpop.permute.xlu0 %2595
      %2599 = vset.pattern.permute.xlu0 0
      %2600 = vperm.xlu0 %2599, %v1850
      %v2601 = vpop.permute.xlu0 %2600
      %v2603 = vmul.f32 %v2586, %v2579
      %v2604 = vmul.f32 %v2591, %v2580
      %v2605 = vmul.f32 %v2596, %v2581
      %v2606 = vmul.f32 %v2601, %v2582
      %v2607 = vsel %vm566, %v2603, 0.0
      %v2608 = vrot.slane %v2607, 4
      %v2609 = vadd.f32 %v2607, %v2608
      %v2610 = vrot.slane %v2609, 2
      %v2611 = vadd.f32 %v2609, %v2610
      %v2612 = vrot.slane %v2611, 1
      %v2613 = vadd.f32 %v2611, %v2612
      %v2614 = vsel %vm566, %v2604, 0.0
      %v2615 = vrot.slane %v2614, 4
      %v2616 = vadd.f32 %v2614, %v2615
      %v2617 = vrot.slane %v2616, 2
      %v2618 = vadd.f32 %v2616, %v2617
      %v2619 = vrot.slane %v2618, 1
      %v2620 = vadd.f32 %v2618, %v2619
      %v2621 = vsel %vm566, %v2605, 0.0
      %v2622 = vrot.slane %v2621, 4
      %v2623 = vadd.f32 %v2621, %v2622
      %v2624 = vrot.slane %v2623, 2
      %v2625 = vadd.f32 %v2623, %v2624
      %v2626 = vrot.slane %v2625, 1
      %v2627 = vadd.f32 %v2625, %v2626
      %v2628 = vsel %vm566, %v2606, 0.0
      %v2629 = vrot.slane %v2628, 4
      %v2630 = vadd.f32 %v2628, %v2629
      %v2631 = vrot.slane %v2630, 2
      %v2632 = vadd.f32 %v2630, %v2631
      %v2633 = vrot.slane %v2632, 1
      %v2634 = vadd.f32 %v2632, %v2633
      %v2635 = vmul.f32 %v308, %v1747
      %v2636 = vmul.f32 %v309, %v1748
      %v2637 = vmul.f32 %v310, %v1749
      %v2638 = vmul.f32 %v311, %v1750
      %v2639 = vadd.f32 %v2613, %v2635
      %v2640 = vadd.f32 %v2620, %v2636
      %v2641 = vadd.f32 %v2627, %v2637
      %v2642 = vadd.f32 %v2634, %v2638
      %v2647 = vlaneseq
      %v2648 = vshrl.u32 %v2647, 7
      %v2649 = vsub.s32 0, %v2648
      %v2650 = vrot.slane %v1784, %v2649
      %v2651 = vlaneseq
      %v2652 = vshrl.u32 %v2651, 7
      %v2653 = vsub.s32 0, %v2652
      %v2654 = vrot.slane %v1785, %v2653
      %v2655 = vlaneseq
      %v2656 = vshrl.u32 %v2655, 7
      %v2657 = vsub.s32 0, %v2656
      %v2658 = vrot.slane %v1786, %v2657
      %v2659 = vlaneseq
      %v2660 = vshrl.u32 %v2659, 7
      %v2661 = vsub.s32 0, %v2660
      %v2662 = vrot.slane %v1787, %v2661
      %v2667 = vmul.f32 %v304, %v2650
      %v2668 = vmul.f32 %v305, %v2654
      %v2669 = vmul.f32 %v306, %v2658
      %v2670 = vmul.f32 %v307, %v2662
      %v2671 = vmul.f32 %v2667, 1.442695
      %v2672 = vpow.pop %v2671
      %v2673 = vmul.f32 %v2668, 1.442695
      %v2674 = vpow.pop %v2673
      %v2675 = vmul.f32 %v2669, 1.442695
      %v2676 = vpow.pop %v2675
      %v2677 = vmul.f32 %v2670, 1.442695
      %v2678 = vpow.pop %v2677
      %v2679 = vmul.f32 %v2672, %v2579
      %v2680 = vmul.f32 %v2674, %v2580
      %v2681 = vmul.f32 %v2676, %v2581
      %v2682 = vmul.f32 %v2678, %v2582
      %v2683 = vmul.f32 %v1784, %v1751
      %v2684 = vmul.f32 %v1785, %v1752
      %v2685 = vmul.f32 %v1786, %v1753
      %v2686 = vmul.f32 %v1787, %v1754
      %2688 = vset.pattern.permute.xlu0 0
      %2689 = vperm.xlu0 %2688, %v1818
      %v2690 = vpop.permute.xlu0 %2689
      %2693 = vset.pattern.permute.xlu0 0
      %2694 = vperm.xlu0 %2693, %v1819
      %v2695 = vpop.permute.xlu0 %2694
      %2698 = vset.pattern.permute.xlu0 0
      %2699 = vperm.xlu0 %2698, %v1820
      %v2700 = vpop.permute.xlu0 %2699
      %2703 = vset.pattern.permute.xlu0 0
      %2704 = vperm.xlu0 %2703, %v1821
      %v2705 = vpop.permute.xlu0 %2704
      %v2711 = vlaneseq
      %v2712 = vshrl.u32 %v2711, 7
      %v2713 = vsub.s32 0, %v2712
      %v2714 = vrot.slane %v2683, %v2713
      %v2715 = vlaneseq
      %v2716 = vshrl.u32 %v2715, 7
      %v2717 = vsub.s32 0, %v2716
      %v2718 = vrot.slane %v2684, %v2717
      %v2719 = vlaneseq
      %v2720 = vshrl.u32 %v2719, 7
      %v2721 = vsub.s32 0, %v2720
      %v2722 = vrot.slane %v2685, %v2721
      %v2723 = vlaneseq
      %v2724 = vshrl.u32 %v2723, 7
      %v2725 = vsub.s32 0, %v2724
      %v2726 = vrot.slane %v2686, %v2725
      %v2731 = vmul.f32 %v2690, %v2714
      %v2732 = vmul.f32 %v2695, %v2718
      %v2733 = vmul.f32 %v2700, %v2722
      %v2734 = vmul.f32 %v2705, %v2726
      %v2735 = vadd.f32 %v2679, %v2731
      %v2736 = vadd.f32 %v2680, %v2732
      %v2737 = vadd.f32 %v2681, %v2733
      %v2738 = vadd.f32 %v2682, %v2734
      %2740 = vset.pattern.permute.xlu0 0
      %2741 = vperm.xlu0 %2740, %v1851
      %v2742 = vpop.permute.xlu0 %2741
      %2745 = vset.pattern.permute.xlu0 0
      %2746 = vperm.xlu0 %2745, %v1852
      %v2747 = vpop.permute.xlu0 %2746
      %2750 = vset.pattern.permute.xlu0 0
      %2751 = vperm.xlu0 %2750, %v1853
      %v2752 = vpop.permute.xlu0 %2751
      %2755 = vset.pattern.permute.xlu0 0
      %2756 = vperm.xlu0 %2755, %v1854
      %v2757 = vpop.permute.xlu0 %2756
      %v2759 = vmul.f32 %v2742, %v2735
      %v2760 = vmul.f32 %v2747, %v2736
      %v2761 = vmul.f32 %v2752, %v2737
      %v2762 = vmul.f32 %v2757, %v2738
      %v2763 = vsel %vm566, %v2759, 0.0
      %v2764 = vrot.slane %v2763, 4
      %v2765 = vadd.f32 %v2763, %v2764
      %v2766 = vrot.slane %v2765, 2
      %v2767 = vadd.f32 %v2765, %v2766
      %v2768 = vrot.slane %v2767, 1
      %v2769 = vadd.f32 %v2767, %v2768
      %v2770 = vsel %vm566, %v2760, 0.0
      %v2771 = vrot.slane %v2770, 4
      %v2772 = vadd.f32 %v2770, %v2771
      %v2773 = vrot.slane %v2772, 2
      %v2774 = vadd.f32 %v2772, %v2773
      %v2775 = vrot.slane %v2774, 1
      %v2776 = vadd.f32 %v2774, %v2775
      %v2777 = vsel %vm566, %v2761, 0.0
      %v2778 = vrot.slane %v2777, 4
      %v2779 = vadd.f32 %v2777, %v2778
      %v2780 = vrot.slane %v2779, 2
      %v2781 = vadd.f32 %v2779, %v2780
      %v2782 = vrot.slane %v2781, 1
      %v2783 = vadd.f32 %v2781, %v2782
      %v2784 = vsel %vm566, %v2762, 0.0
      %v2785 = vrot.slane %v2784, 4
      %v2786 = vadd.f32 %v2784, %v2785
      %v2787 = vrot.slane %v2786, 2
      %v2788 = vadd.f32 %v2786, %v2787
      %v2789 = vrot.slane %v2788, 1
      %v2790 = vadd.f32 %v2788, %v2789
      %v2791 = vmul.f32 %v308, %v1751
      %v2792 = vmul.f32 %v309, %v1752
      %v2793 = vmul.f32 %v310, %v1753
      %v2794 = vmul.f32 %v311, %v1754
      %v2795 = vadd.f32 %v2769, %v2791
      %v2796 = vadd.f32 %v2776, %v2792
      %v2797 = vadd.f32 %v2783, %v2793
      %v2798 = vadd.f32 %v2790, %v2794
      %v2803 = vlaneseq
      %v2804 = vshrl.u32 %v2803, 7
      %v2805 = vsub.s32 0, %v2804
      %v2806 = vrot.slane %v1788, %v2805
      %v2807 = vlaneseq
      %v2808 = vshrl.u32 %v2807, 7
      %v2809 = vsub.s32 0, %v2808
      %v2810 = vrot.slane %v1789, %v2809
      %v2811 = vlaneseq
      %v2812 = vshrl.u32 %v2811, 7
      %v2813 = vsub.s32 0, %v2812
      %v2814 = vrot.slane %v1790, %v2813
      %v2815 = vlaneseq
      %v2816 = vshrl.u32 %v2815, 7
      %v2817 = vsub.s32 0, %v2816
      %v2818 = vrot.slane %v1791, %v2817
      %v2823 = vmul.f32 %v304, %v2806
      %v2824 = vmul.f32 %v305, %v2810
      %v2825 = vmul.f32 %v306, %v2814
      %v2826 = vmul.f32 %v307, %v2818
      %v2827 = vmul.f32 %v2823, 1.442695
      %v2828 = vpow.pop %v2827
      %v2829 = vmul.f32 %v2824, 1.442695
      %v2830 = vpow.pop %v2829
      %v2831 = vmul.f32 %v2825, 1.442695
      %v2832 = vpow.pop %v2831
      %v2833 = vmul.f32 %v2826, 1.442695
      %v2834 = vpow.pop %v2833
      %v2835 = vmul.f32 %v2828, %v2735
      %v2836 = vmul.f32 %v2830, %v2736
      %v2837 = vmul.f32 %v2832, %v2737
      %v2838 = vmul.f32 %v2834, %v2738
      %v2839 = vmul.f32 %v1788, %v1755
      %v2840 = vmul.f32 %v1789, %v1756
      %v2841 = vmul.f32 %v1790, %v1757
      %v2842 = vmul.f32 %v1791, %v1758
      %2844 = vset.pattern.permute.xlu0 0
      %2845 = vperm.xlu0 %2844, %v1822
      %v2846 = vpop.permute.xlu0 %2845
      %2849 = vset.pattern.permute.xlu0 0
      %2850 = vperm.xlu0 %2849, %v1823
      %v2851 = vpop.permute.xlu0 %2850
      %2854 = vset.pattern.permute.xlu0 0
      %2855 = vperm.xlu0 %2854, %v1824
      %v2856 = vpop.permute.xlu0 %2855
      %2859 = vset.pattern.permute.xlu0 0
      %2860 = vperm.xlu0 %2859, %v1825
      %v2861 = vpop.permute.xlu0 %2860
      %v2867 = vlaneseq
      %v2868 = vshrl.u32 %v2867, 7
      %v2869 = vsub.s32 0, %v2868
      %v2870 = vrot.slane %v2839, %v2869
      %v2871 = vlaneseq
      %v2872 = vshrl.u32 %v2871, 7
      %v2873 = vsub.s32 0, %v2872
      %v2874 = vrot.slane %v2840, %v2873
      %v2875 = vlaneseq
      %v2876 = vshrl.u32 %v2875, 7
      %v2877 = vsub.s32 0, %v2876
      %v2878 = vrot.slane %v2841, %v2877
      %v2879 = vlaneseq
      %v2880 = vshrl.u32 %v2879, 7
      %v2881 = vsub.s32 0, %v2880
      %v2882 = vrot.slane %v2842, %v2881
      %v2887 = vmul.f32 %v2846, %v2870
      %v2888 = vmul.f32 %v2851, %v2874
      %v2889 = vmul.f32 %v2856, %v2878
      %v2890 = vmul.f32 %v2861, %v2882
      %v2891 = vadd.f32 %v2835, %v2887
      %v2892 = vadd.f32 %v2836, %v2888
      %v2893 = vadd.f32 %v2837, %v2889
      %v2894 = vadd.f32 %v2838, %v2890
      %2896 = vset.pattern.permute.xlu0 0
      %2897 = vperm.xlu0 %2896, %v1855
      %v2898 = vpop.permute.xlu0 %2897
      %2901 = vset.pattern.permute.xlu0 0
      %2902 = vperm.xlu0 %2901, %v1856
      %v2903 = vpop.permute.xlu0 %2902
      %2906 = vset.pattern.permute.xlu0 0
      %2907 = vperm.xlu0 %2906, %v1857
      %v2908 = vpop.permute.xlu0 %2907
      %2911 = vset.pattern.permute.xlu0 0
      %2912 = vperm.xlu0 %2911, %v1858
      %v2913 = vpop.permute.xlu0 %2912
      %v2915 = vmul.f32 %v2898, %v2891
      %v2916 = vmul.f32 %v2903, %v2892
      %v2917 = vmul.f32 %v2908, %v2893
      %v2918 = vmul.f32 %v2913, %v2894
      %v2919 = vsel %vm566, %v2915, 0.0
      %v2920 = vrot.slane %v2919, 4
      %v2921 = vadd.f32 %v2919, %v2920
      %v2922 = vrot.slane %v2921, 2
      %v2923 = vadd.f32 %v2921, %v2922
      %v2924 = vrot.slane %v2923, 1
      %v2925 = vadd.f32 %v2923, %v2924
      %v2926 = vsel %vm566, %v2916, 0.0
      %v2927 = vrot.slane %v2926, 4
      %v2928 = vadd.f32 %v2926, %v2927
      %v2929 = vrot.slane %v2928, 2
      %v2930 = vadd.f32 %v2928, %v2929
      %v2931 = vrot.slane %v2930, 1
      %v2932 = vadd.f32 %v2930, %v2931
      %v2933 = vsel %vm566, %v2917, 0.0
      %v2934 = vrot.slane %v2933, 4
      %v2935 = vadd.f32 %v2933, %v2934
      %v2936 = vrot.slane %v2935, 2
      %v2937 = vadd.f32 %v2935, %v2936
      %v2938 = vrot.slane %v2937, 1
      %v2939 = vadd.f32 %v2937, %v2938
      %v2940 = vsel %vm566, %v2918, 0.0
      %v2941 = vrot.slane %v2940, 4
      %v2942 = vadd.f32 %v2940, %v2941
      %v2943 = vrot.slane %v2942, 2
      %v2944 = vadd.f32 %v2942, %v2943
      %v2945 = vrot.slane %v2944, 1
      %v2946 = vadd.f32 %v2944, %v2945
      %v2947 = vmul.f32 %v308, %v1755
      %v2948 = vmul.f32 %v309, %v1756
      %v2949 = vmul.f32 %v310, %v1757
      %v2950 = vmul.f32 %v311, %v1758
      %v2951 = vadd.f32 %v2925, %v2947
      %v2952 = vadd.f32 %v2932, %v2948
      %v2953 = vadd.f32 %v2939, %v2949
      %v2954 = vadd.f32 %v2946, %v2950
      %v2959 = vlaneseq
      %v2960 = vshrl.u32 %v2959, 7
      %v2961 = vsub.s32 0, %v2960
      %v2962 = vrot.slane %v1792, %v2961
      %v2963 = vlaneseq
      %v2964 = vshrl.u32 %v2963, 7
      %v2965 = vsub.s32 0, %v2964
      %v2966 = vrot.slane %v1793, %v2965
      %v2967 = vlaneseq
      %v2968 = vshrl.u32 %v2967, 7
      %v2969 = vsub.s32 0, %v2968
      %v2970 = vrot.slane %v1794, %v2969
      %v2971 = vlaneseq
      %v2972 = vshrl.u32 %v2971, 7
      %v2973 = vsub.s32 0, %v2972
      %v2974 = vrot.slane %v1795, %v2973
      %v2979 = vmul.f32 %v304, %v2962
      %v2980 = vmul.f32 %v305, %v2966
      %v2981 = vmul.f32 %v306, %v2970
      %v2982 = vmul.f32 %v307, %v2974
      %v2983 = vmul.f32 %v2979, 1.442695
      %v2984 = vpow.pop %v2983
      %v2985 = vmul.f32 %v2980, 1.442695
      %v2986 = vpow.pop %v2985
      %v2987 = vmul.f32 %v2981, 1.442695
      %v2988 = vpow.pop %v2987
      %v2989 = vmul.f32 %v2982, 1.442695
      %v2990 = vpow.pop %v2989
      %v2991 = vmul.f32 %v2984, %v2891
      %v2992 = vmul.f32 %v2986, %v2892
      %v2993 = vmul.f32 %v2988, %v2893
      %v2994 = vmul.f32 %v2990, %v2894
      %v2995 = vmul.f32 %v1792, %v1759
      %v2996 = vmul.f32 %v1793, %v1760
      %v2997 = vmul.f32 %v1794, %v1761
      %v2998 = vmul.f32 %v1795, %v1762
      %3000 = vset.pattern.permute.xlu0 0
      %3001 = vperm.xlu0 %3000, %v1826
      %v3002 = vpop.permute.xlu0 %3001
      %3005 = vset.pattern.permute.xlu0 0
      %3006 = vperm.xlu0 %3005, %v1827
      %v3007 = vpop.permute.xlu0 %3006
      %3010 = vset.pattern.permute.xlu0 0
      %3011 = vperm.xlu0 %3010, %v1828
      %v3012 = vpop.permute.xlu0 %3011
      %3015 = vset.pattern.permute.xlu0 0
      %3016 = vperm.xlu0 %3015, %v1829
      %v3017 = vpop.permute.xlu0 %3016
      %v3023 = vlaneseq
      %v3024 = vshrl.u32 %v3023, 7
      %v3025 = vsub.s32 0, %v3024
      %v3026 = vrot.slane %v2995, %v3025
      %v3027 = vlaneseq
      %v3028 = vshrl.u32 %v3027, 7
      %v3029 = vsub.s32 0, %v3028
      %v3030 = vrot.slane %v2996, %v3029
      %v3031 = vlaneseq
      %v3032 = vshrl.u32 %v3031, 7
      %v3033 = vsub.s32 0, %v3032
      %v3034 = vrot.slane %v2997, %v3033
      %v3035 = vlaneseq
      %v3036 = vshrl.u32 %v3035, 7
      %v3037 = vsub.s32 0, %v3036
      %v3038 = vrot.slane %v2998, %v3037
      %v3043 = vmul.f32 %v3002, %v3026
      %v3044 = vmul.f32 %v3007, %v3030
      %v3045 = vmul.f32 %v3012, %v3034
      %v3046 = vmul.f32 %v3017, %v3038
      %v3047 = vadd.f32 %v2991, %v3043
      %v3048 = vadd.f32 %v2992, %v3044
      %v3049 = vadd.f32 %v2993, %v3045
      %v3050 = vadd.f32 %v2994, %v3046
      %3052 = vset.pattern.permute.xlu0 0
      %3053 = vperm.xlu0 %3052, %v1859
      %v3054 = vpop.permute.xlu0 %3053
      %3057 = vset.pattern.permute.xlu0 0
      %3058 = vperm.xlu0 %3057, %v1860
      %v3059 = vpop.permute.xlu0 %3058
      %3062 = vset.pattern.permute.xlu0 0
      %3063 = vperm.xlu0 %3062, %v1861
      %v3064 = vpop.permute.xlu0 %3063
      %3067 = vset.pattern.permute.xlu0 0
      %3068 = vperm.xlu0 %3067, %v1862
      %v3069 = vpop.permute.xlu0 %3068
      %v3071 = vmul.f32 %v3054, %v3047
      %v3072 = vmul.f32 %v3059, %v3048
      %v3073 = vmul.f32 %v3064, %v3049
      %v3074 = vmul.f32 %v3069, %v3050
      %v3075 = vsel %vm566, %v3071, 0.0
      %v3076 = vrot.slane %v3075, 4
      %v3077 = vadd.f32 %v3075, %v3076
      %v3078 = vrot.slane %v3077, 2
      %v3079 = vadd.f32 %v3077, %v3078
      %v3080 = vrot.slane %v3079, 1
      %v3081 = vadd.f32 %v3079, %v3080
      %v3082 = vsel %vm566, %v3072, 0.0
      %v3083 = vrot.slane %v3082, 4
      %v3084 = vadd.f32 %v3082, %v3083
      %v3085 = vrot.slane %v3084, 2
      %v3086 = vadd.f32 %v3084, %v3085
      %v3087 = vrot.slane %v3086, 1
      %v3088 = vadd.f32 %v3086, %v3087
      %v3089 = vsel %vm566, %v3073, 0.0
      %v3090 = vrot.slane %v3089, 4
      %v3091 = vadd.f32 %v3089, %v3090
      %v3092 = vrot.slane %v3091, 2
      %v3093 = vadd.f32 %v3091, %v3092
      %v3094 = vrot.slane %v3093, 1
      %v3095 = vadd.f32 %v3093, %v3094
      %v3096 = vsel %vm566, %v3074, 0.0
      %v3097 = vrot.slane %v3096, 4
      %v3098 = vadd.f32 %v3096, %v3097
      %v3099 = vrot.slane %v3098, 2
      %v3100 = vadd.f32 %v3098, %v3099
      %v3101 = vrot.slane %v3100, 1
      %v3102 = vadd.f32 %v3100, %v3101
      %v3103 = vmul.f32 %v308, %v1759
      %v3104 = vmul.f32 %v309, %v1760
      %v3105 = vmul.f32 %v310, %v1761
      %v3106 = vmul.f32 %v311, %v1762
      %v3107 = vadd.f32 %v3081, %v3103
      %v3108 = vadd.f32 %v3088, %v3104
      %v3109 = vadd.f32 %v3095, %v3105
      %v3110 = vadd.f32 %v3102, %v3106
      %s3111 = scalar_lea.vmem %s303, %s1729
      %3112 = vst.msk [vmem:[%s3111] sm:$0x1] %vm1696, %v2015
      %3113 = vst.msk [vmem:[%s3111 + $0x1] sm:$0x1] %vm1696, %v2016
      %3114 = vst.msk [vmem:[%s3111 + $0x2] sm:$0x1] %vm1696, %v2017
      %3115 = vst.msk [vmem:[%s3111 + $0x3] sm:$0x1] %vm1696, %v2018
      %3116 = vst.msk [vmem:[%s3111 + $0x4] sm:$0x1] %vm1696, %v2171
      %3117 = vst.msk [vmem:[%s3111 + $0x5] sm:$0x1] %vm1696, %v2172
      %3118 = vst.msk [vmem:[%s3111 + $0x6] sm:$0x1] %vm1696, %v2173
      %3119 = vst.msk [vmem:[%s3111 + $0x7] sm:$0x1] %vm1696, %v2174
      %3120 = vst.msk [vmem:[%s3111 + $0x8] sm:$0x1] %vm1696, %v2327
      %3121 = vst.msk [vmem:[%s3111 + $0x9] sm:$0x1] %vm1696, %v2328
      %3122 = vst.msk [vmem:[%s3111 + $0xa] sm:$0x1] %vm1696, %v2329
      %3123 = vst.msk [vmem:[%s3111 + $0xb] sm:$0x1] %vm1696, %v2330
      %3124 = vst.msk [vmem:[%s3111 + $0xc] sm:$0x1] %vm1696, %v2483
      %3125 = vst.msk [vmem:[%s3111 + $0xd] sm:$0x1] %vm1696, %v2484
      %3126 = vst.msk [vmem:[%s3111 + $0xe] sm:$0x1] %vm1696, %v2485
      %3127 = vst.msk [vmem:[%s3111 + $0xf] sm:$0x1] %vm1696, %v2486
      %3128 = vst.msk [vmem:[%s3111 + $0x10] sm:$0x1] %vm1696, %v2639
      %3129 = vst.msk [vmem:[%s3111 + $0x11] sm:$0x1] %vm1696, %v2640
      %3130 = vst.msk [vmem:[%s3111 + $0x12] sm:$0x1] %vm1696, %v2641
      %3131 = vst.msk [vmem:[%s3111 + $0x13] sm:$0x1] %vm1696, %v2642
      %3132 = vst.msk [vmem:[%s3111 + $0x14] sm:$0x1] %vm1696, %v2795
      %3133 = vst.msk [vmem:[%s3111 + $0x15] sm:$0x1] %vm1696, %v2796
      %3134 = vst.msk [vmem:[%s3111 + $0x16] sm:$0x1] %vm1696, %v2797
      %3135 = vst.msk [vmem:[%s3111 + $0x17] sm:$0x1] %vm1696, %v2798
      %3136 = vst.msk [vmem:[%s3111 + $0x18] sm:$0x1] %vm1696, %v2951
      %3137 = vst.msk [vmem:[%s3111 + $0x19] sm:$0x1] %vm1696, %v2952
      %3138 = vst.msk [vmem:[%s3111 + $0x1a] sm:$0x1] %vm1696, %v2953
      %3139 = vst.msk [vmem:[%s3111 + $0x1b] sm:$0x1] %vm1696, %v2954
      %3140 = vst.msk [vmem:[%s3111 + $0x1c] sm:$0x1] %vm1696, %v3107
      %3141 = vst.msk [vmem:[%s3111 + $0x1d] sm:$0x1] %vm1696, %v3108
      %3142 = vst.msk [vmem:[%s3111 + $0x1e] sm:$0x1] %vm1696, %v3109
      %3143 = vst.msk [vmem:[%s3111 + $0x1f] sm:$0x1] %vm1696, %v3110
      %p3144 = scmp.lt.s32.totalorder %s17, 1
      %s3145 = scalar_select %p3144, %s17, 1
      %s3146 = smul.addr %s3145, 64
      %s3147 = scalar_lea.vmem %s6, %s3146
      // Predicated region
      $region45: #{_lambda_.26} parent=43 // pred_check
        %p3148 = pneg %p181
      $region46: #{_lambda_.26} parent=43 // pred_check_branch
        %3150 = sbr.rel (%p3148) target = $region48
      $region47: #{_lambda_.26} parent=43 // pred_region
        _
      $region48: #{_lambda_.26} parent=43 // pred_fallthru
        _
    $region44: #{_lambda_.26} parent=5 // pred_fallthru
      _
    %p3151 = scmp.le.s32.totalorder 2, %s12
    // Predicated region
    $region49: #{_lambda_.26} parent=5 // pred_check
      %p3152 = pneg %p3151
    $region50: #{_lambda_.26} parent=5 // pred_check_branch
      %3154 = sbr.rel (%p3152) target = $region52
    $region51: #{_lambda_.26} parent=5 // pred_region
      %s3155 = ssub.s32 %s12, 2
      // Predicated region
      $region53: #{_lambda_.26} parent=51 // pred_check
        %p3156 = pneg %p187
      $region54: #{_lambda_.26} parent=51 // pred_check_branch
        %3158 = sbr.rel (%p3156) target = $region56
      $region55: #{_lambda_.26} parent=51 // pred_region
        %p3159 = scmp.lt.s32.totalorder %s18, 1
        %s3160 = scalar_select %p3159, %s18, 1
        %s3161 = smul.addr %s3160, 64
        %s3162 = scalar_lea.vmem %s6, %s3161
      $region56: #{_lambda_.26} parent=51 // pred_fallthru
        _
    $region52: #{_lambda_.26} parent=5 // pred_fallthru
      _
  $region6: #{_lambda_.26} parent=0 // loop_footer
    %s16 = sadd.s32 1, %s12
  $region7: #{_lambda_.26} parent=0 // loop_footer_branch
    %11 = sbr.rel target = $region3
  $region8: #{_lambda_.26} parent=0 // loop_exit
    _

// kernel: _lambda_.31
$region0: #{_lambda_.31}
  #allocation0 [shape = 'u32[]', space=smem, size = 0x4, offset = 0x4, fixed_abs, tag = 'smem constant byte address 0x4 - core index']
  #allocation1 [shape = 'u32[144,128]{1,0:T(1,128)}', space=vmem, size = 0x12000, scoped, tag = 'internal scratch']
  %s0 = inlined_call_operand.vmem [shape: f32[8,64], index: 0, kind: input, shape index: {}]
  %s1 = inlined_call_operand.vmem [shape: bf16[64,256], index: 1, kind: input, shape index: {}]
  %s2 = inlined_call_operand.vmem [shape: f32[1,256], index: 2, kind: input, shape index: {}]
  %s3 = inlined_call_operand.vmem [shape: f32[8,256], index: 3, kind: output, shape index: {}]
  %s4 = sld [smem:[#allocation0]]
  $region22: #{_lambda_.31} parent=0
    _
  %s6 = ssub.s32 1, %s4
  %s7 = scalar_select 0, %s6, %s4
  // Predicated region
  $region2: #{_lambda_.31} parent=0 // pred_check
    _
  $region3: #{_lambda_.31} parent=0 // pred_check_branch
    %9 = sbr.rel (0) target = $region5
  $region4: #{_lambda_.31} parent=0 // pred_region
    _
  $region5: #{_lambda_.31} parent=0 // pred_fallthru
    _
  // Predicated region
  $region6: #{_lambda_.31} parent=0 // pred_check
    _
  $region7: #{_lambda_.31} parent=0 // pred_check_branch
    %11 = sbr.rel (0) target = $region9
  $region8: #{_lambda_.31} parent=0 // pred_region
    _
  $region9: #{_lambda_.31} parent=0 // pred_fallthru
    _
  // Predicated region
  $region10: #{_lambda_.31} parent=0 // pred_check
    _
  $region11: #{_lambda_.31} parent=0 // pred_check_branch
    %13 = sbr.rel (0) target = $region13
  $region12: #{_lambda_.31} parent=0 // pred_region
    _
  $region13: #{_lambda_.31} parent=0 // pred_fallthru
    _
  %v15 = vld [vmem:[%s0] sm:$0xff]
  %vm16 = vcmask 523264
  %v17 = vsel %vm16, %v15, 0.0
  %18 = vadd.xlane.f32.xlu0 %v17
  %v19 = vpop.xlane.xlu0 %18
  %v20 = vrcp.pop 64.0
  %v21 = vmul.f32 %v19, %v20
  %v22 = vsub.f32 %v15, %v21
  %v23 = vmul.f32 %v22, %v22
  %v24 = vsel %vm16, %v23, 0.0
  %25 = vadd.xlane.f32.xlu0 %v24
  %v26 = vpop.xlane.xlu0 %25
  %v27 = vmul.f32 %v26, %v20
  %v28 = vadd.f32 %v27, 1e-05
  %v29 = vrsqrt.pop %v28
  %v30 = vmul.f32 %v22, %v29
  %v31 = vpack.c.bf16 %v30, %v30
  %v32 = vld [vmem:[%s1] sm:$0xff]
  %v33 = vld [vmem:[%s1 + $0x8] sm:$0xff]
  %v34 = vld [vmem:[%s1 + $0x10] sm:$0xff]
  %v35 = vld [vmem:[%s1 + $0x18] sm:$0xff]
  %v36 = vld [vmem:[%s1 + $0x20] sm:$0xff]
  %v37 = vld [vmem:[%s1 + $0x28] sm:$0xff]
  %v38 = vld [vmem:[%s1 + $0x30] sm:$0xff]
  %v39 = vld [vmem:[%s1 + $0x38] sm:$0xff]
  %v40 = vld [vmem:[%s2] sm:$0x3]
  %v42 = vlaneseq
  %v43 = vshrl.u32 %v42, 7
  %v44 = vsub.s32 0, %v43
  %v45 = vrot.slane %v40, %v44
  %v46 = vlaneseq
  %v47 = vshrl.u32 %v46, 7
  %v48 = vsub.s32 1, %v47
  %v49 = vrot.slane %v40, %v48
  %v60 = vunpack.c.l.b16 %v32
  %v61 = vunpack.c.h.b16 %v32
  %v62 = vunpack.c.l.b16 %v33
  %v63 = vunpack.c.h.b16 %v33
  %v64 = vunpack.c.l.b16 %v34
  %v65 = vunpack.c.h.b16 %v34
  %v66 = vunpack.c.l.b16 %v35
  %v67 = vunpack.c.h.b16 %v35
  %v68 = vunpack.c.l.b16 %v36
  %v69 = vunpack.c.h.b16 %v36
  %v70 = vunpack.c.l.b16 %v37
  %v71 = vunpack.c.h.b16 %v37
  %v72 = vunpack.c.l.b16 %v38
  %v73 = vunpack.c.h.b16 %v38
  %v74 = vunpack.c.l.b16 %v39
  %v75 = vunpack.c.h.b16 %v39
  %v76 = vpack.c.b16 %v62, %v60
  %v77 = vpack.c.b16 %v63, %v61
  %v78 = vpack.c.b16 %v66, %v64
  %v79 = vpack.c.b16 %v67, %v65
  %v80 = vpack.c.b16 %v70, %v68
  %v81 = vpack.c.b16 %v71, %v69
  %v82 = vpack.c.b16 %v74, %v72
  %v83 = vpack.c.b16 %v75, %v73
  %v93 = vsel %vm16, %v31, 0
  %95 = vmatprep.subr.bf16.mxu0 %v77
  %96 = vmatpush1.bf16.msra.mxu0 %v76
  %97 = vmatprep.subr.bf16.mxu0 %v79
  %98 = vmatpush1.bf16.msra.mxu0 %v78
  %99 = vmatprep.subr.bf16.mxu0 %v81
  %100 = vmatpush1.bf16.msra.mxu0 %v80
  %101 = vmatprep.subr.bf16.mxu0 %v83
  %102 = vmatpush1.bf16.msra.mxu0 %v82
  %103 = vmatprep.subr.bf16.mxu0 0
  %104 = vmatpush1.bf16.msra.mxu0 0
  %105 = vmatprep.subr.bf16.mxu0 0
  %106 = vmatpush1.bf16.msra.mxu0 0
  %107 = vmatprep.subr.bf16.mxu0 0
  %108 = vmatpush1.bf16.msra.mxu0 0
  %109 = vmatprep.subr.bf16.mxu0 0
  %110 = vmatpush1.bf16.msra.mxu0 0
  %111 = vmatprep.subr.bf16.mxu0 0
  %112 = vmatpush1.bf16.msra.mxu0 0
  %113 = vmatprep.subr.bf16.mxu0 0
  %114 = vmatpush1.bf16.msra.mxu0 0
  %115 = vmatprep.subr.bf16.mxu0 0
  %116 = vmatpush1.bf16.msra.mxu0 0
  %117 = vmatprep.subr.bf16.mxu0 0
  %118 = vmatpush1.bf16.msra.mxu0 0
  %119 = vmatprep.subr.bf16.mxu0 0
  %120 = vmatpush1.bf16.msra.mxu0 0
  %121 = vmatprep.subr.bf16.mxu0 0
  %122 = vmatpush1.bf16.msra.mxu0 0
  %123 = vmatprep.subr.bf16.mxu0 0
  %124 = vmatpush1.bf16.msra.mxu0 0
  %125 = vmatprep.subr.bf16.mxu0 0
  %126 = vmatpush1.bf16.msra.mxu0 0
  %127 = vmatprep.mubr.bf16.mxu0 0
  %128 = vmatmul.mubr.bf16.gmra.mrb[0].mxu0 %v93
  %v129 = vpop.f32.mrb[0].mxu0
  %v130 = vadd.f32 %v45, %v129
  %v131 = vpop.f32.mrb[0].mxu0
  %v132 = vadd.f32 %v49, %v131
  %v133 = vpop.f32.mrb[0].mxu0
  %v134 = vpop.f32.mrb[0].mxu0
  %135 = vdwg.mxu0
  %136 = vst [vmem:[%s3] sm:$0xff] %v130
  %137 = vst [vmem:[%s3 + $0x8] sm:$0xff] %v132
  // Predicated region
  $region14: #{_lambda_.31} parent=0 // pred_check
    _
  $region15: #{_lambda_.31} parent=0 // pred_check_branch
    %139 = sbr.rel (0) target = $region17
  $region16: #{_lambda_.31} parent=0 // pred_region
    _
  $region17: #{_lambda_.31} parent=0 // pred_fallthru
    _
  // Predicated region
  $region18: #{_lambda_.31} parent=0 // pred_check
    _
  $region19: #{_lambda_.31} parent=0 // pred_check_branch
    %141 = sbr.rel (0) target = $region21
  $region20: #{_lambda_.31} parent=0 // pred_region
    _
  $region21: #{_lambda_.31} parent=0 // pred_fallthru
    _

// kernel: _lambda_.32
$region0: #{_lambda_.32}
  #allocation0 [shape = 'u32[]', space=smem, size = 0x4, offset = 0x4, fixed_abs, tag = 'smem constant byte address 0x4 - core index']
  #allocation1 [shape = 'u32[144,128]{1,0:T(1,128)}', space=vmem, size = 0x12000, scoped, tag = 'internal scratch']
  %s0 = inlined_call_operand.vmem [shape: f32[2,4,4,128], index: 0, kind: input, shape index: {}]
  %s1 = inlined_call_operand.vmem [shape: f32[3,3,128], index: 1, kind: input, shape index: {}]
  %s2 = inlined_call_operand.vmem [shape: f32[1,1,128], index: 2, kind: input, shape index: {}]
  %s3 = inlined_call_operand.vmem [shape: f32[2,2,2,128], index: 3, kind: output, shape index: {}]
  %s4 = sld [smem:[#allocation0]]
  $region45: #{_lambda_.32} parent=0
    _
  %s6 = ssub.s32 1, %s4
  %s7 = scalar_select 0, %s6, %s4
  loop: start=0, step=1, limit=4
  $region2: #{_lambda_.32} parent=0 // loop_pre_header
    _
  $region3: #{_lambda_.32} parent=0 // loop_header
    %s9 = sphi 0, %s13
    %p10 = scmp.ge.s32.totalorder %s9, 4
    %s19 = sphi 0, %s21
    %s22 = sphi 0, %s19
    %s23 = sphi 0, %s22
    %s39 = sphi 0, %s23
    %s43 = sphi 0, %s43
    %s45 = sphi 0, %s43
    %s46 = sphi 0, %s45
    %s60 = sphi 0, %s46
    %s64 = sphi 0, %s64
    %s66 = sphi 0, %s64
    %s67 = sphi 0, %s66
    %s81 = sphi 0, %s67
    %s87 = sphi 0, %s89
    %s90 = sphi 0, %s87
    %s91 = sphi 0, %s90
    %s107 = sphi 0, %s91
  $region4: #{_lambda_.32} parent=0 // loop_header_branch
    %12 = sbr.rel (%p10) target = $region8
  $region5: #{_lambda_.32} parent=0 // loop_body
    %s14 = ssub.s32 %s9, 1
    %s15 = ssub.s32 %s9, 2
    %s16 = sadd.s32 %s9, 1
    %s17 = ssub.s32 %s9, %s16
    %p18 = scmp.eq.s32.totalorder %s17, 0
    %s20 = sadd.s32 %s19, 1
    %s21 = scalar_select %p18, %s19, %s20
    %p24 = pneg %p18
    %p25 = scmp.eq.s32.totalorder %s9, 1
    %p26 = por %p24, %p25
    %p27 = scmp.ne.s32.totalorder %s19, %s22
    %p28 = scmp.eq.s32.totalorder %s9, 0
    %p29 = por %p27, %p28
    %p30 = scmp.ne.s32.totalorder %s19, %s22
    %p31 = scmp.eq.s32.totalorder %s14, 1
    %p32 = por %p30, %p31
    %p33 = scmp.ne.s32.totalorder %s22, %s23
    %p34 = scmp.eq.s32.totalorder %s14, 0
    %p35 = por %p33, %p34
    %p36 = scmp.ne.s32.totalorder %s22, %s23
    %p37 = scmp.eq.s32.totalorder %s15, 1
    %p38 = por %p36, %p37
    %p40 = scmp.ne.s32.totalorder %s23, %s39
    %p41 = scmp.eq.s32.totalorder %s15, 0
    %p42 = por %p40, %p41
    %s44 = sadd.s32 %s43, 1
    %p47 = scmp.eq.s32.totalorder %s9, 1
    %p48 = scmp.ne.s32.totalorder %s43, %s45
    %p49 = scmp.eq.s32.totalorder %s9, 0
    %p50 = por %p48, %p49
    %p51 = scmp.ne.s32.totalorder %s43, %s45
    %p52 = scmp.eq.s32.totalorder %s14, 1
    %p53 = por %p51, %p52
    %p54 = scmp.ne.s32.totalorder %s45, %s46
    %p55 = scmp.eq.s32.totalorder %s14, 0
    %p56 = por %p54, %p55
    %p57 = scmp.ne.s32.totalorder %s45, %s46
    %p58 = scmp.eq.s32.totalorder %s15, 1
    %p59 = por %p57, %p58
    %p61 = scmp.ne.s32.totalorder %s46, %s60
    %p62 = scmp.eq.s32.totalorder %s15, 0
    %p63 = por %p61, %p62
    %s65 = sadd.s32 %s64, 1
    %p68 = scmp.eq.s32.totalorder %s9, 1
    %p69 = scmp.ne.s32.totalorder %s64, %s66
    %p70 = scmp.eq.s32.totalorder %s9, 0
    %p71 = por %p69, %p70
    %p72 = scmp.ne.s32.totalorder %s64, %s66
    %p73 = scmp.eq.s32.totalorder %s14, 1
    %p74 = por %p72, %p73
    %p75 = scmp.ne.s32.totalorder %s66, %s67
    %p76 = scmp.eq.s32.totalorder %s14, 0
    %p77 = por %p75, %p76
    %p78 = scmp.ne.s32.totalorder %s66, %s67
    %p79 = scmp.eq.s32.totalorder %s15, 1
    %p80 = por %p78, %p79
    %p82 = scmp.ne.s32.totalorder %s67, %s81
    %p83 = scmp.eq.s32.totalorder %s15, 0
    %p84 = por %p82, %p83
    %s85 = ssub.s32 %s9, %s16
    %p86 = scmp.eq.s32.totalorder %s85, 0
    %s88 = sadd.s32 %s87, 1
    %s89 = scalar_select %p86, %s87, %s88
    %p92 = pneg %p86
    %p93 = scmp.eq.s32.totalorder %s9, 1
    %p94 = por %p92, %p93
    %p95 = scmp.ne.s32.totalorder %s87, %s90
    %p96 = scmp.eq.s32.totalorder %s9, 0
    %p97 = por %p95, %p96
    %p98 = scmp.ne.s32.totalorder %s87, %s90
    %p99 = scmp.eq.s32.totalorder %s14, 1
    %p100 = por %p98, %p99
    %p101 = scmp.ne.s32.totalorder %s90, %s91
    %p102 = scmp.eq.s32.totalorder %s14, 0
    %p103 = por %p101, %p102
    %p104 = scmp.ne.s32.totalorder %s90, %s91
    %p105 = scmp.eq.s32.totalorder %s15, 1
    %p106 = por %p104, %p105
    %p108 = scmp.ne.s32.totalorder %s91, %s107
    %p109 = scmp.eq.s32.totalorder %s15, 0
    %p110 = por %p108, %p109
    %p111 = scmp.le.s32.totalorder 1, %s9
    %p112 = scmp.lt.s32.totalorder %s9, 3
    %p113 = pnand %p111, %p112
    %p114 = pneg %p113
    // Predicated region
    $region9: #{_lambda_.32} parent=5 // pred_check
      _
    $region10: #{_lambda_.32} parent=5 // pred_check_branch
      %116 = sbr.rel (%p113) target = $region12
    $region11: #{_lambda_.32} parent=5 // pred_region
      %s117 = ssub.s32 %s9, 1
      // Predicated region
      $region13: #{_lambda_.32} parent=11 // pred_check
        %p118 = pneg %p56
      $region14: #{_lambda_.32} parent=11 // pred_check_branch
        %120 = sbr.rel (%p118) target = $region16
      $region15: #{_lambda_.32} parent=11 // pred_region
        _
      $region16: #{_lambda_.32} parent=11 // pred_fallthru
        _
      // Predicated region
      $region17: #{_lambda_.32} parent=11 // pred_check
        %p121 = pneg %p77
      $region18: #{_lambda_.32} parent=11 // pred_check_branch
        %123 = sbr.rel (%p121) target = $region20
      $region19: #{_lambda_.32} parent=11 // pred_region
        _
      $region20: #{_lambda_.32} parent=11 // pred_fallthru
        _
    $region12: #{_lambda_.32} parent=5 // pred_fallthru
      _
    %p124 = scmp.lt.s32.totalorder %s9, 2
    // Predicated region
    $region21: #{_lambda_.32} parent=5 // pred_check
      %p125 = pneg %p124
    $region22: #{_lambda_.32} parent=5 // pred_check_branch
      %127 = sbr.rel (%p125) target = $region24
    $region23: #{_lambda_.32} parent=5 // pred_region
      // Predicated region
      $region25: #{_lambda_.32} parent=23 // pred_check
        %p128 = pneg %p29
      $region26: #{_lambda_.32} parent=23 // pred_check_branch
        %130 = sbr.rel (%p128) target = $region28
      $region27: #{_lambda_.32} parent=23 // pred_region
        %p131 = scmp.lt.s32.totalorder %s9, 1
        %s132 = scalar_select %p131, %s9, 1
        %s133 = smul.addr %s132, 4
        %s134 = smul.addr %s133, 4
        %s135 = scalar_lea.vmem %s0, %s134
      $region28: #{_lambda_.32} parent=23 // pred_fallthru
        _
    $region24: #{_lambda_.32} parent=5 // pred_fallthru
      _
    %p136 = scmp.le.s32.totalorder 1, %s9
    %p137 = scmp.lt.s32.totalorder %s9, 3
    %p138 = pnand %p136, %p137
    %p139 = pneg %p138
    // Predicated region
    $region29: #{_lambda_.32} parent=5 // pred_check
      _
    $region30: #{_lambda_.32} parent=5 // pred_check_branch
      %141 = sbr.rel (%p138) target = $region32
    $region31: #{_lambda_.32} parent=5 // pred_region
      %s142 = ssub.s32 %s9, 1
      %p143 = scmp.lt.s32.totalorder %s14, 1
      %s144 = scalar_select %p143, %s14, 1
      %s145 = smul.addr %s144, 4
      %s146 = smul.addr %s145, 4
      %s147 = scalar_lea.vmem %s0, %s146
      %p148 = pneg %p35
      %p149 = pneg %p32
      %p150 = pneg %p56
      %p151 = pneg %p53
      %p152 = pneg %p77
      %p153 = pneg %p74
      %p154 = pneg %p103
      %p155 = pneg %p100
      %p156 = scmp.lt.s32.totalorder %s14, 1
      %s157 = scalar_select %p156, %s14, 1
      %s158 = smul.addr %s157, 2
      %s159 = smul.addr %s158, 2
      %s160 = scalar_lea.vmem %s3, %s159
      %p161 = scmp.lt.s32.totalorder %s14, 1
      %s162 = scalar_select %p161, %s14, 1
      %s163 = smul.addr %s162, 4
      %s164 = smul.addr %s163, 4
      %s165 = scalar_lea.vmem %s0, %s164
      %p166 = scmp.lt.s32.totalorder %s14, 1
      %s167 = scalar_select %p166, %s14, 1
      %s168 = smul.addr %s167, 2
      %s169 = smul.addr %s168, 2
      %s170 = scalar_lea.vmem %s3, %s169
      %v171 = vld [vmem:[%s165] sm:$0x3]
      %v172 = vld [vmem:[%s165 + $0x4] sm:$0x3]
      %v173 = vld [vmem:[%s1] sm:$0x1]
      %v174 = vlaneseq
      %v175 = vshrl.u32 %v174, 7
      %v176 = vsub.s32 0, %v175
      %v177 = vrot.slane %v173, %v176
      %v178 = vmul.f32 %v171, %v177
      %v179 = vmul.f32 %v172, %v177
      %v180 = vadd.f32 %v178, 0.0
      %v181 = vadd.f32 %v179, 0.0
      %v182 = vld [vmem:[%s165 + $0x1] sm:$0x3]
      %v183 = vld [vmem:[%s165 + $0x5] sm:$0x3]
      %v184 = vld [vmem:[%s1 + $0x1] sm:$0x1]
      %v185 = vlaneseq
      %v186 = vshrl.u32 %v185, 7
      %v187 = vsub.s32 0, %v186
      %v188 = vrot.slane %v184, %v187
      %v189 = vmul.f32 %v182, %v188
      %v190 = vmul.f32 %v183, %v188
      %v191 = vadd.f32 %v180, %v189
      %v192 = vadd.f32 %v181, %v190
      %v193 = vld [vmem:[%s165 + $0x2] sm:$0x3]
      %v194 = vld [vmem:[%s165 + $0x6] sm:$0x3]
      %v195 = vld [vmem:[%s1 + $0x2] sm:$0x1]
      %v196 = vlaneseq
      %v197 = vshrl.u32 %v196, 7
      %v198 = vsub.s32 0, %v197
      %v199 = vrot.slane %v195, %v198
      %v200 = vmul.f32 %v193, %v199
      %v201 = vmul.f32 %v194, %v199
      %v202 = vadd.f32 %v191, %v200
      %v203 = vadd.f32 %v192, %v201
      %s204 = scalar_lea.vmem %s165, 4
      %v205 = vld [vmem:[%s204] sm:$0x3]
      %v206 = vld [vmem:[%s204 + $0x4] sm:$0x3]
      %s207 = scalar_lea.vmem %s1, 4
      %v208 = vld [vmem:[%s207] sm:$0x1]
      %v209 = vlaneseq
      %v210 = vshrl.u32 %v209, 7
      %v211 = vsub.s32 0, %v210
      %v212 = vrot.slane %v208, %v211
      %v213 = vmul.f32 %v205, %v212
      %v214 = vmul.f32 %v206, %v212
      %v215 = vadd.f32 %v202, %v213
      %v216 = vadd.f32 %v203, %v214
      %v217 = vld [vmem:[%s204 + $0x1] sm:$0x3]
      %v218 = vld [vmem:[%s204 + $0x5] sm:$0x3]
      %v219 = vld [vmem:[%s207 + $0x1] sm:$0x1]
      %v220 = vlaneseq
      %v221 = vshrl.u32 %v220, 7
      %v222 = vsub.s32 0, %v221
      %v223 = vrot.slane %v219, %v222
      %v224 = vmul.f32 %v217, %v223
      %v225 = vmul.f32 %v218, %v223
      %v226 = vadd.f32 %v215, %v224
      %v227 = vadd.f32 %v216, %v225
      %v228 = vld [vmem:[%s204 + $0x2] sm:$0x3]
      %v229 = vld [vmem:[%s204 + $0x6] sm:$0x3]
      %v230 = vld [vmem:[%s207 + $0x2] sm:$0x1]
      %v231 = vlaneseq
      %v232 = vshrl.u32 %v231, 7
      %v233 = vsub.s32 0, %v232
      %v234 = vrot.slane %v230, %v233
      %v235 = vmul.f32 %v228, %v234
      %v236 = vmul.f32 %v229, %v234
      %v237 = vadd.f32 %v226, %v235
      %v238 = vadd.f32 %v227, %v236
      %s239 = scalar_lea.vmem %s165, 8
      %v240 = vld [vmem:[%s239] sm:$0x3]
      %v241 = vld [vmem:[%s239 + $0x4] sm:$0x3]
      %s242 = scalar_lea.vmem %s1, 8
      %v243 = vld [vmem:[%s242] sm:$0x1]
      %v244 = vlaneseq
      %v245 = vshrl.u32 %v244, 7
      %v246 = vsub.s32 0, %v245
      %v247 = vrot.slane %v243, %v246
      %v248 = vmul.f32 %v240, %v247
      %v249 = vmul.f32 %v241, %v247
      %v250 = vadd.f32 %v237, %v248
      %v251 = vadd.f32 %v238, %v249
      %v252 = vld [vmem:[%s239 + $0x1] sm:$0x3]
      %v253 = vld [vmem:[%s239 + $0x5] sm:$0x3]
      %v254 = vld [vmem:[%s242 + $0x1] sm:$0x1]
      %v255 = vlaneseq
      %v256 = vshrl.u32 %v255, 7
      %v257 = vsub.s32 0, %v256
      %v258 = vrot.slane %v254, %v257
      %v259 = vmul.f32 %v252, %v258
      %v260 = vmul.f32 %v253, %v258
      %v261 = vadd.f32 %v250, %v259
      %v262 = vadd.f32 %v251, %v260
      %v263 = vld [vmem:[%s239 + $0x2] sm:$0x3]
      %v264 = vld [vmem:[%s239 + $0x6] sm:$0x3]
      %v265 = vld [vmem:[%s242 + $0x2] sm:$0x1]
      %v266 = vlaneseq
      %v267 = vshrl.u32 %v266, 7
      %v268 = vsub.s32 0, %v267
      %v269 = vrot.slane %v265, %v268
      %v270 = vmul.f32 %v263, %v269
      %v271 = vmul.f32 %v264, %v269
      %v272 = vadd.f32 %v261, %v270
      %v273 = vadd.f32 %v262, %v271
      %v274 = vld [vmem:[%s2] sm:$0x1]
      %v276 = vlaneseq
      %v277 = vshrl.u32 %v276, 7
      %v278 = vsub.s32 0, %v277
      %v279 = vrot.slane %v274, %v278
      %v281 = vadd.f32 %v272, %v279
      %v282 = vadd.f32 %v273, %v279
      %v283 = vsub.f32 0.0, %v281
      %v284 = vsub.f32 0.0, %v282
      %v285 = vmul.f32 %v283, 1.442695
      %v286 = vpow.pop %v285
      %v287 = vmul.f32 %v284, 1.442695
      %v288 = vpow.pop %v287
      %v289 = vadd.f32 %v286, 1.0
      %v290 = vadd.f32 %v288, 1.0
      %v291 = vrcp.pop %v289
      %v292 = vmul.f32 1.0, %v291
      %v293 = vrcp.pop %v290
      %v294 = vmul.f32 1.0, %v293
      %v295 = vmul.f32 %v281, %v292
      %v296 = vmul.f32 %v282, %v294
      %297 = vst [vmem:[%s170] sm:$0x3] %v295
      %298 = vst [vmem:[%s170 + $0x2] sm:$0x3] %v296
      %p299 = scmp.lt.s32.totalorder %s14, 1
      %s300 = scalar_select %p299, %s14, 1
      %s301 = smul.addr %s300, 2
      %s302 = smul.addr %s301, 2
      %s303 = scalar_lea.vmem %s3, %s302
      // Predicated region
      $region33: #{_lambda_.32} parent=31 // pred_check
        %p304 = pneg %p100
      $region34: #{_lambda_.32} parent=31 // pred_check_branch
        %306 = sbr.rel (%p304) target = $region36
      $region35: #{_lambda_.32} parent=31 // pred_region
        _
      $region36: #{_lambda_.32} parent=31 // pred_fallthru
        _
    $region32: #{_lambda_.32} parent=5 // pred_fallthru
      _
    %p307 = scmp.le.s32.totalorder 2, %s9
    // Predicated region
    $region37: #{_lambda_.32} parent=5 // pred_check
      %p308 = pneg %p307
    $region38: #{_lambda_.32} parent=5 // pred_check_branch
      %310 = sbr.rel (%p308) target = $region40
    $region39: #{_lambda_.32} parent=5 // pred_region
      %s311 = ssub.s32 %s9, 2
      // Predicated region
      $region41: #{_lambda_.32} parent=39 // pred_check
        %p312 = pneg %p106
      $region42: #{_lambda_.32} parent=39 // pred_check_branch
        %314 = sbr.rel (%p312) target = $region44
      $region43: #{_lambda_.32} parent=39 // pred_region
        %p315 = scmp.lt.s32.totalorder %s15, 1
        %s316 = scalar_select %p315, %s15, 1
        %s317 = smul.addr %s316, 2
        %s318 = smul.addr %s317, 2
        %s319 = scalar_lea.vmem %s3, %s318
      $region44: #{_lambda_.32} parent=39 // pred_fallthru
        _
    $region40: #{_lambda_.32} parent=5 // pred_fallthru
      _
  $region6: #{_lambda_.32} parent=0 // loop_footer
    %s13 = sadd.s32 1, %s9
  $region7: #{_lambda_.32} parent=0 // loop_footer_branch
    %8 = sbr.rel target = $region3
  $region8: #{_lambda_.32} parent=0 // loop_exit
    _

// kernel: _lambda_.33
$region0: #{_lambda_.33}
  #allocation0 [shape = 'u32[]', space=smem, size = 0x4, offset = 0x4, fixed_abs, tag = 'smem constant byte address 0x4 - core index']
  #allocation1 [shape = 'u32[144,128]{1,0:T(1,128)}', space=vmem, size = 0x12000, scoped, tag = 'internal scratch']
  %s0 = inlined_call_operand.vmem [shape: f32[8,128], index: 0, kind: input, shape index: {}]
  %s1 = inlined_call_operand.vmem [shape: bf16[128,80], index: 1, kind: input, shape index: {}]
  %s2 = inlined_call_operand.vmem [shape: f32[8,80], index: 2, kind: output, shape index: {}]
  %s3 = sld [smem:[#allocation0]]
  $region18: #{_lambda_.33} parent=0
    _
  %s5 = ssub.s32 1, %s3
  %s6 = scalar_select 0, %s5, %s3
  // Predicated region
  $region2: #{_lambda_.33} parent=0 // pred_check
    _
  $region3: #{_lambda_.33} parent=0 // pred_check_branch
    %8 = sbr.rel (0) target = $region5
  $region4: #{_lambda_.33} parent=0 // pred_region
    _
  $region5: #{_lambda_.33} parent=0 // pred_fallthru
    _
  // Predicated region
  $region6: #{_lambda_.33} parent=0 // pred_check
    _
  $region7: #{_lambda_.33} parent=0 // pred_check_branch
    %10 = sbr.rel (0) target = $region9
  $region8: #{_lambda_.33} parent=0 // pred_region
    _
  $region9: #{_lambda_.33} parent=0 // pred_fallthru
    _
  %v12 = vld [vmem:[%s0] sm:$0xff]
  %v13 = vpack.c.bf16 %v12, %v12
  %v14 = vld [vmem:[%s1] sm:$0xf]
  %v15 = vld [vmem:[%s1 + $0x4] sm:$0xf]
  %v16 = vld [vmem:[%s1 + $0x8] sm:$0xf]
  %v17 = vld [vmem:[%s1 + $0xc] sm:$0xf]
  %v18 = vld [vmem:[%s1 + $0x10] sm:$0xf]
  %v19 = vld [vmem:[%s1 + $0x14] sm:$0xf]
  %v20 = vld [vmem:[%s1 + $0x18] sm:$0xf]
  %v21 = vld [vmem:[%s1 + $0x1c] sm:$0xf]
  %v22 = vld [vmem:[%s1 + $0x20] sm:$0xf]
  %v23 = vld [vmem:[%s1 + $0x24] sm:$0xf]
  %v24 = vld [vmem:[%s1 + $0x28] sm:$0xf]
  %v25 = vld [vmem:[%s1 + $0x2c] sm:$0xf]
  %v26 = vld [vmem:[%s1 + $0x30] sm:$0xf]
  %v27 = vld [vmem:[%s1 + $0x34] sm:$0xf]
  %v28 = vld [vmem:[%s1 + $0x38] sm:$0xf]
  %v29 = vld [vmem:[%s1 + $0x3c] sm:$0xf]
  %v46 = vunpack.c.l.b16 %v14
  %v47 = vunpack.c.l.b16 %v15
  %v48 = vunpack.c.l.b16 %v16
  %v49 = vunpack.c.l.b16 %v17
  %v50 = vunpack.c.l.b16 %v18
  %v51 = vunpack.c.l.b16 %v19
  %v52 = vunpack.c.l.b16 %v20
  %v53 = vunpack.c.l.b16 %v21
  %v54 = vunpack.c.l.b16 %v22
  %v55 = vunpack.c.l.b16 %v23
  %v56 = vunpack.c.l.b16 %v24
  %v57 = vunpack.c.l.b16 %v25
  %v58 = vunpack.c.l.b16 %v26
  %v59 = vunpack.c.l.b16 %v27
  %v60 = vunpack.c.l.b16 %v28
  %v61 = vunpack.c.l.b16 %v29
  %v62 = vpack.c.b16 %v47, %v46
  %v63 = vpack.c.b16 %v49, %v48
  %v64 = vpack.c.b16 %v51, %v50
  %v65 = vpack.c.b16 %v53, %v52
  %v66 = vpack.c.b16 %v55, %v54
  %v67 = vpack.c.b16 %v57, %v56
  %v68 = vpack.c.b16 %v59, %v58
  %v69 = vpack.c.b16 %v61, %v60
  %78 = vmatprep.subr.bf16.mxu0 0
  %79 = vmatpush1.bf16.msra.mxu0 %v62
  %80 = vmatprep.subr.bf16.mxu0 0
  %81 = vmatpush1.bf16.msra.mxu0 %v63
  %82 = vmatprep.subr.bf16.mxu0 0
  %83 = vmatpush1.bf16.msra.mxu0 %v64
  %84 = vmatprep.subr.bf16.mxu0 0
  %85 = vmatpush1.bf16.msra.mxu0 %v65
  %86 = vmatprep.subr.bf16.mxu0 0
  %87 = vmatpush1.bf16.msra.mxu0 %v66
  %88 = vmatprep.subr.bf16.mxu0 0
  %89 = vmatpush1.bf16.msra.mxu0 %v67
  %90 = vmatprep.subr.bf16.mxu0 0
  %91 = vmatpush1.bf16.msra.mxu0 %v68
  %92 = vmatprep.subr.bf16.mxu0 0
  %93 = vmatpush1.bf16.msra.mxu0 %v69
  %94 = vmatprep.subr.bf16.mxu0 0
  %95 = vmatpush1.bf16.msra.mxu0 0
  %96 = vmatprep.subr.bf16.mxu0 0
  %97 = vmatpush1.bf16.msra.mxu0 0
  %98 = vmatprep.subr.bf16.mxu0 0
  %99 = vmatpush1.bf16.msra.mxu0 0
  %100 = vmatprep.subr.bf16.mxu0 0
  %101 = vmatpush1.bf16.msra.mxu0 0
  %102 = vmatprep.subr.bf16.mxu0 0
  %103 = vmatpush1.bf16.msra.mxu0 0
  %104 = vmatprep.subr.bf16.mxu0 0
  %105 = vmatpush1.bf16.msra.mxu0 0
  %106 = vmatprep.subr.bf16.mxu0 0
  %107 = vmatpush1.bf16.msra.mxu0 0
  %108 = vmatprep.subr.bf16.mxu0 0
  %109 = vmatpush1.bf16.msra.mxu0 0
  %110 = vmatprep.mubr.bf16.mxu0 0
  %111 = vmatmul.mubr.bf16.gmra.mrb[0].mxu0 %v13
  %v112 = vpop.f32.mrb[0].mxu0
  %v113 = vadd.f32 0.0, %v112
  %v114 = vpop.f32.mrb[0].mxu0
  %v115 = vpop.f32.mrb[0].mxu0
  %v116 = vpop.f32.mrb[0].mxu0
  %117 = vdwg.mxu0
  %vm118 = vcmask 654336
  %119 = vst.msk [vmem:[%s2] sm:$0xff] %vm118, %v113
  // Predicated region
  $region10: #{_lambda_.33} parent=0 // pred_check
    _
  $region11: #{_lambda_.33} parent=0 // pred_check_branch
    %121 = sbr.rel (0) target = $region13
  $region12: #{_lambda_.33} parent=0 // pred_region
    _
  $region13: #{_lambda_.33} parent=0 // pred_fallthru
    _
  // Predicated region
  $region14: #{_lambda_.33} parent=0 // pred_check
    _
  $region15: #{_lambda_.33} parent=0 // pred_check_branch
    %123 = sbr.rel (0) target = $region17
  $region16: #{_lambda_.33} parent=0 // pred_region
    _
  $region17: #{_lambda_.33} parent=0 // pred_fallthru
    _

// kernel: _lambda_.34
$region0: #{_lambda_.34}
  #allocation0 [shape = 'u32[]', space=smem, size = 0x4, offset = 0x4, fixed_abs, tag = 'smem constant byte address 0x4 - core index']
  #allocation1 [shape = 'u32[144,128]{1,0:T(1,128)}', space=vmem, size = 0x12000, scoped, tag = 'internal scratch']
  %s0 = inlined_call_operand.vmem [shape: f32[8,16], index: 0, kind: input, shape index: {}]
  %s1 = inlined_call_operand.vmem [shape: bf16[16,512], index: 1, kind: input, shape index: {}]
  %s2 = inlined_call_operand.vmem [shape: f32[1,512], index: 2, kind: input, shape index: {}]
  %s3 = inlined_call_operand.vmem [shape: f32[8,512], index: 3, kind: output, shape index: {}]
  %s4 = sld [smem:[#allocation0]]
  $region22: #{_lambda_.34} parent=0
    _
  %s6 = ssub.s32 1, %s4
  %s7 = scalar_select 0, %s6, %s4
  // Predicated region
  $region2: #{_lambda_.34} parent=0 // pred_check
    _
  $region3: #{_lambda_.34} parent=0 // pred_check_branch
    %9 = sbr.rel (0) target = $region5
  $region4: #{_lambda_.34} parent=0 // pred_region
    _
  $region5: #{_lambda_.34} parent=0 // pred_fallthru
    _
  // Predicated region
  $region6: #{_lambda_.34} parent=0 // pred_check
    _
  $region7: #{_lambda_.34} parent=0 // pred_check_branch
    %11 = sbr.rel (0) target = $region9
  $region8: #{_lambda_.34} parent=0 // pred_region
    _
  $region9: #{_lambda_.34} parent=0 // pred_fallthru
    _
  // Predicated region
  $region10: #{_lambda_.34} parent=0 // pred_check
    _
  $region11: #{_lambda_.34} parent=0 // pred_check_branch
    %13 = sbr.rel (0) target = $region13
  $region12: #{_lambda_.34} parent=0 // pred_region
    _
  $region13: #{_lambda_.34} parent=0 // pred_fallthru
    _
  %v15 = vld [vmem:[%s0] sm:$0xff]
  %v16 = vpack.c.bf16 %v15, %v15
  %v17 = vld [vmem:[%s1] sm:$0xff]
  %v18 = vld [vmem:[%s1 + $0x8] sm:$0xff]
  %v19 = vld [vmem:[%s1 + $0x10] sm:$0xff]
  %v20 = vld [vmem:[%s1 + $0x18] sm:$0xff]
  %v21 = vld [vmem:[%s2] sm:$0xf]
  %v23 = vlaneseq
  %v24 = vshrl.u32 %v23, 7
  %v25 = vsub.s32 0, %v24
  %v26 = vrot.slane %v21, %v25
  %v27 = vlaneseq
  %v28 = vshrl.u32 %v27, 7
  %v29 = vsub.s32 1, %v28
  %v30 = vrot.slane %v21, %v29
  %v31 = vlaneseq
  %v32 = vshrl.u32 %v31, 7
  %v33 = vsub.s32 2, %v32
  %v34 = vrot.slane %v21, %v33
  %v35 = vlaneseq
  %v36 = vshrl.u32 %v35, 7
  %v37 = vsub.s32 3, %v36
  %v38 = vrot.slane %v21, %v37
  %v47 = vunpack.c.l.b16 %v17
  %v48 = vunpack.c.h.b16 %v17
  %v49 = vunpack.c.l.b16 %v18
  %v50 = vunpack.c.h.b16 %v18
  %v51 = vunpack.c.l.b16 %v19
  %v52 = vunpack.c.h.b16 %v19
  %v53 = vunpack.c.l.b16 %v20
  %v54 = vunpack.c.h.b16 %v20
  %v55 = vpack.c.b16 %v51, %v47
  %v56 = vpack.c.b16 %v52, %v48
  %v57 = vpack.c.b16 %v53, %v49
  %v58 = vpack.c.b16 %v54, %v50
  %vm63 = vcmask 130048
  %v65 = vsel %vm63, %v16, 0
  %67 = vmatprep.subr.bf16.mxu0 %v56
  %68 = vmatpush1.bf16.msra.mxu0 %v55
  %69 = vmatprep.subr.bf16.mxu0 0
  %70 = vmatpush1.bf16.msra.mxu0 0
  %71 = vmatprep.subr.bf16.mxu0 0
  %72 = vmatpush1.bf16.msra.mxu0 0
  %73 = vmatprep.subr.bf16.mxu0 0
  %74 = vmatpush1.bf16.msra.mxu0 0
  %75 = vmatprep.subr.bf16.mxu0 0
  %76 = vmatpush1.bf16.msra.mxu0 0
  %77 = vmatprep.subr.bf16.mxu0 0
  %78 = vmatpush1.bf16.msra.mxu0 0
  %79 = vmatprep.subr.bf16.mxu0 0
  %80 = vmatpush1.bf16.msra.mxu0 0
  %81 = vmatprep.subr.bf16.mxu0 0
  %82 = vmatpush1.bf16.msra.mxu0 0
  %83 = vmatprep.subr.bf16.mxu0 0
  %84 = vmatpush1.bf16.msra.mxu0 0
  %85 = vmatprep.subr.bf16.mxu0 0
  %86 = vmatpush1.bf16.msra.mxu0 0
  %87 = vmatprep.subr.bf16.mxu0 0
  %88 = vmatpush1.bf16.msra.mxu0 0
  %89 = vmatprep.subr.bf16.mxu0 0
  %90 = vmatpush1.bf16.msra.mxu0 0
  %91 = vmatprep.subr.bf16.mxu0 0
  %92 = vmatpush1.bf16.msra.mxu0 0
  %93 = vmatprep.subr.bf16.mxu0 0
  %94 = vmatpush1.bf16.msra.mxu0 0
  %95 = vmatprep.subr.bf16.mxu0 0
  %96 = vmatpush1.bf16.msra.mxu0 0
  %97 = vmatprep.subr.bf16.mxu0 0
  %98 = vmatpush1.bf16.msra.mxu0 0
  %99 = vmatprep.mubr.bf16.mxu0 0
  %100 = vmatmul.mubr.bf16.gmra.mrb[0].mxu0 %v65
  %v101 = vpop.f32.mrb[0].mxu0
  %v102 = vadd.f32 %v26, %v101
  %v103 = vpop.f32.mrb[0].mxu0
  %v104 = vadd.f32 %v30, %v103
  %v105 = vpop.f32.mrb[0].mxu0
  %v106 = vpop.f32.mrb[0].mxu0
  %107 = vdwg.mxu0
  %108 = vmatprep.subr.bf16.mxu0 %v58
  %109 = vmatpush1.bf16.msra.mxu0 %v57
  %110 = vmatprep.subr.bf16.mxu0 0
  %111 = vmatpush1.bf16.msra.mxu0 0
  %112 = vmatprep.subr.bf16.mxu0 0
  %113 = vmatpush1.bf16.msra.mxu0 0
  %114 = vmatprep.subr.bf16.mxu0 0
  %115 = vmatpush1.bf16.msra.mxu0 0
  %116 = vmatprep.subr.bf16.mxu0 0
  %117 = vmatpush1.bf16.msra.mxu0 0
  %118 = vmatprep.subr.bf16.mxu0 0
  %119 = vmatpush1.bf16.msra.mxu0 0
  %120 = vmatprep.subr.bf16.mxu0 0
  %121 = vmatpush1.bf16.msra.mxu0 0
  %122 = vmatprep.subr.bf16.mxu0 0
  %123 = vmatpush1.bf16.msra.mxu0 0
  %124 = vmatprep.subr.bf16.mxu0 0
  %125 = vmatpush1.bf16.msra.mxu0 0
  %126 = vmatprep.subr.bf16.mxu0 0
  %127 = vmatpush1.bf16.msra.mxu0 0
  %128 = vmatprep.subr.bf16.mxu0 0
  %129 = vmatpush1.bf16.msra.mxu0 0
  %130 = vmatprep.subr.bf16.mxu0 0
  %131 = vmatpush1.bf16.msra.mxu0 0
  %132 = vmatprep.subr.bf16.mxu0 0
  %133 = vmatpush1.bf16.msra.mxu0 0
  %134 = vmatprep.subr.bf16.mxu0 0
  %135 = vmatpush1.bf16.msra.mxu0 0
  %136 = vmatprep.subr.bf16.mxu0 0
  %137 = vmatpush1.bf16.msra.mxu0 0
  %138 = vmatprep.subr.bf16.mxu0 0
  %139 = vmatpush1.bf16.msra.mxu0 0
  %140 = vmatprep.mubr.bf16.mxu0 0
  %141 = vmatmul.mubr.bf16.gmra.mrb[0].mxu0 %v65
  %v142 = vpop.f32.mrb[0].mxu0
  %v143 = vadd.f32 %v34, %v142
  %v144 = vpop.f32.mrb[0].mxu0
  %v145 = vadd.f32 %v38, %v144
  %v146 = vpop.f32.mrb[0].mxu0
  %v147 = vpop.f32.mrb[0].mxu0
  %148 = vdwg.mxu0
  %v149 = vmax.f32 %v102, 0.0
  %v150 = vmax.f32 %v104, 0.0
  %v151 = vmax.f32 %v143, 0.0
  %v152 = vmax.f32 %v145, 0.0
  %v153 = vand.u32 2147483647, %v102
  %v154 = vand.u32 2147483647, %v104
  %v155 = vand.u32 2147483647, %v143
  %v156 = vand.u32 2147483647, %v145
  %v157 = vsub.f32 0.0, %v153
  %v158 = vsub.f32 0.0, %v154
  %v159 = vsub.f32 0.0, %v155
  %v160 = vsub.f32 0.0, %v156
  %v161 = vmul.f32 %v157, 1.442695
  %v162 = vpow.pop %v161
  %v163 = vmul.f32 %v158, 1.442695
  %v164 = vpow.pop %v163
  %v165 = vmul.f32 %v159, 1.442695
  %v166 = vpow.pop %v165
  %v167 = vmul.f32 %v160, 1.442695
  %v168 = vpow.pop %v167
  %v169 = vadd.f32 %v162, 1.0
  %v170 = vadd.f32 %v164, 1.0
  %v171 = vadd.f32 %v166, 1.0
  %v172 = vadd.f32 %v168, 1.0
  %v173 = vlog2.pop %v169
  %v174 = vmul.f32 %v173, 0.6931472
  %v175 = vlog2.pop %v170
  %v176 = vmul.f32 %v175, 0.6931472
  %v177 = vlog2.pop %v171
  %v178 = vmul.f32 %v177, 0.6931472
  %v179 = vlog2.pop %v172
  %v180 = vmul.f32 %v179, 0.6931472
  %v181 = vadd.f32 %v149, %v174
  %v182 = vadd.f32 %v150, %v176
  %v183 = vadd.f32 %v151, %v178
  %v184 = vadd.f32 %v152, %v180
  %185 = vst [vmem:[%s3] sm:$0xff] %v181
  %186 = vst [vmem:[%s3 + $0x8] sm:$0xff] %v182
  %187 = vst [vmem:[%s3 + $0x10] sm:$0xff] %v183
  %188 = vst [vmem:[%s3 + $0x18] sm:$0xff] %v184
  // Predicated region
  $region14: #{_lambda_.34} parent=0 // pred_check
    _
  $region15: #{_lambda_.34} parent=0 // pred_check_branch
    %190 = sbr.rel (0) target = $region17
  $region16: #{_lambda_.34} parent=0 // pred_region
    _
  $region17: #{_lambda_.34} parent=0 // pred_fallthru
    _
  // Predicated region
  $region18: #{_lambda_.34} parent=0 // pred_check
    _
  $region19: #{_lambda_.34} parent=0 // pred_check_branch
    %192 = sbr.rel (0) target = $region21
  $region20: #{_lambda_.34} parent=0 // pred_region
    _
  $region21: #{_lambda_.34} parent=0 // pred_fallthru
    _

// kernel: _lambda_.38
$region0: #{_lambda_.38}
  #allocation0 [shape = 'u32[]', space=smem, size = 0x4, offset = 0x4, fixed_abs, tag = 'smem constant byte address 0x4 - core index']
  #allocation1 [shape = 'u32[144,128]{1,0:T(1,128)}', space=vmem, size = 0x12000, scoped, tag = 'internal scratch']
  %s0 = inlined_call_operand.vmem [shape: f32[8,256], index: 0, kind: input, shape index: {}]
  %s1 = inlined_call_operand.vmem [shape: bf16[256,64], index: 1, kind: input, shape index: {}]
  %s2 = inlined_call_operand.vmem [shape: f32[1,64], index: 2, kind: input, shape index: {}]
  %s3 = inlined_call_operand.vmem [shape: f32[8,64], index: 3, kind: output, shape index: {}]
  %s4 = sld [smem:[#allocation0]]
  $region22: #{_lambda_.38} parent=0
    _
  %s6 = ssub.s32 1, %s4
  %s7 = scalar_select 0, %s6, %s4
  // Predicated region
  $region2: #{_lambda_.38} parent=0 // pred_check
    _
  $region3: #{_lambda_.38} parent=0 // pred_check_branch
    %9 = sbr.rel (0) target = $region5
  $region4: #{_lambda_.38} parent=0 // pred_region
    _
  $region5: #{_lambda_.38} parent=0 // pred_fallthru
    _
  // Predicated region
  $region6: #{_lambda_.38} parent=0 // pred_check
    _
  $region7: #{_lambda_.38} parent=0 // pred_check_branch
    %11 = sbr.rel (0) target = $region9
  $region8: #{_lambda_.38} parent=0 // pred_region
    _
  $region9: #{_lambda_.38} parent=0 // pred_fallthru
    _
  // Predicated region
  $region10: #{_lambda_.38} parent=0 // pred_check
    _
  $region11: #{_lambda_.38} parent=0 // pred_check_branch
    %13 = sbr.rel (0) target = $region13
  $region12: #{_lambda_.38} parent=0 // pred_region
    _
  $region13: #{_lambda_.38} parent=0 // pred_fallthru
    _
  %v15 = vld [vmem:[%s0] sm:$0xff]
  %v16 = vld [vmem:[%s0 + $0x8] sm:$0xff]
  %v17 = vpack.c.bf16 %v15, %v15
  %v18 = vpack.c.bf16 %v16, %v16
  %v19 = vld [vmem:[%s1] sm:$0xf]
  %v20 = vld [vmem:[%s1 + $0x4] sm:$0xf]
  %v21 = vld [vmem:[%s1 + $0x8] sm:$0xf]
  %v22 = vld [vmem:[%s1 + $0xc] sm:$0xf]
  %v23 = vld [vmem:[%s1 + $0x10] sm:$0xf]
  %v24 = vld [vmem:[%s1 + $0x14] sm:$0xf]
  %v25 = vld [vmem:[%s1 + $0x18] sm:$0xf]
  %v26 = vld [vmem:[%s1 + $0x1c] sm:$0xf]
  %v27 = vld [vmem:[%s1 + $0x20] sm:$0xf]
  %v28 = vld [vmem:[%s1 + $0x24] sm:$0xf]
  %v29 = vld [vmem:[%s1 + $0x28] sm:$0xf]
  %v30 = vld [vmem:[%s1 + $0x2c] sm:$0xf]
  %v31 = vld [vmem:[%s1 + $0x30] sm:$0xf]
  %v32 = vld [vmem:[%s1 + $0x34] sm:$0xf]
  %v33 = vld [vmem:[%s1 + $0x38] sm:$0xf]
  %v34 = vld [vmem:[%s1 + $0x3c] sm:$0xf]
  %v35 = vld [vmem:[%s1 + $0x40] sm:$0xf]
  %v36 = vld [vmem:[%s1 + $0x44] sm:$0xf]
  %v37 = vld [vmem:[%s1 + $0x48] sm:$0xf]
  %v38 = vld [vmem:[%s1 + $0x4c] sm:$0xf]
  %v39 = vld [vmem:[%s1 + $0x50] sm:$0xf]
  %v40 = vld [vmem:[%s1 + $0x54] sm:$0xf]
  %v41 = vld [vmem:[%s1 + $0x58] sm:$0xf]
  %v42 = vld [vmem:[%s1 + $0x5c] sm:$0xf]
  %v43 = vld [vmem:[%s1 + $0x60] sm:$0xf]
  %v44 = vld [vmem:[%s1 + $0x64] sm:$0xf]
  %v45 = vld [vmem:[%s1 + $0x68] sm:$0xf]
  %v46 = vld [vmem:[%s1 + $0x6c] sm:$0xf]
  %v47 = vld [vmem:[%s1 + $0x70] sm:$0xf]
  %v48 = vld [vmem:[%s1 + $0x74] sm:$0xf]
  %v49 = vld [vmem:[%s1 + $0x78] sm:$0xf]
  %v50 = vld [vmem:[%s1 + $0x7c] sm:$0xf]
  %v51 = vld [vmem:[%s2] sm:$0x1]
  %v53 = vlaneseq
  %v54 = vshrl.u32 %v53, 7
  %v55 = vsub.s32 0, %v54
  %v56 = vrot.slane %v51, %v55
  %v90 = vunpack.c.l.b16 %v19
  %v91 = vunpack.c.l.b16 %v20
  %v92 = vunpack.c.l.b16 %v21
  %v93 = vunpack.c.l.b16 %v22
  %v94 = vunpack.c.l.b16 %v23
  %v95 = vunpack.c.l.b16 %v24
  %v96 = vunpack.c.l.b16 %v25
  %v97 = vunpack.c.l.b16 %v26
  %v98 = vunpack.c.l.b16 %v27
  %v99 = vunpack.c.l.b16 %v28
  %v100 = vunpack.c.l.b16 %v29
  %v101 = vunpack.c.l.b16 %v30
  %v102 = vunpack.c.l.b16 %v31
  %v103 = vunpack.c.l.b16 %v32
  %v104 = vunpack.c.l.b16 %v33
  %v105 = vunpack.c.l.b16 %v34
  %v106 = vunpack.c.l.b16 %v35
  %v107 = vunpack.c.l.b16 %v36
  %v108 = vunpack.c.l.b16 %v37
  %v109 = vunpack.c.l.b16 %v38
  %v110 = vunpack.c.l.b16 %v39
  %v111 = vunpack.c.l.b16 %v40
  %v112 = vunpack.c.l.b16 %v41
  %v113 = vunpack.c.l.b16 %v42
  %v114 = vunpack.c.l.b16 %v43
  %v115 = vunpack.c.l.b16 %v44
  %v116 = vunpack.c.l.b16 %v45
  %v117 = vunpack.c.l.b16 %v46
  %v118 = vunpack.c.l.b16 %v47
  %v119 = vunpack.c.l.b16 %v48
  %v120 = vunpack.c.l.b16 %v49
  %v121 = vunpack.c.l.b16 %v50
  %v122 = vpack.c.b16 %v91, %v90
  %v123 = vpack.c.b16 %v93, %v92
  %v124 = vpack.c.b16 %v95, %v94
  %v125 = vpack.c.b16 %v97, %v96
  %v126 = vpack.c.b16 %v99, %v98
  %v127 = vpack.c.b16 %v101, %v100
  %v128 = vpack.c.b16 %v103, %v102
  %v129 = vpack.c.b16 %v105, %v104
  %v130 = vpack.c.b16 %v107, %v106
  %v131 = vpack.c.b16 %v109, %v108
  %v132 = vpack.c.b16 %v111, %v110
  %v133 = vpack.c.b16 %v113, %v112
  %v134 = vpack.c.b16 %v115, %v114
  %v135 = vpack.c.b16 %v117, %v116
  %v136 = vpack.c.b16 %v119, %v118
  %v137 = vpack.c.b16 %v121, %v120
  %154 = vmatprep.subr.bf16.mxu0 0
  %155 = vmatpush1.bf16.msra.mxu0 %v122
  %156 = vmatprep.subr.bf16.mxu0 0
  %157 = vmatpush1.bf16.msra.mxu0 %v123
  %158 = vmatprep.subr.bf16.mxu0 0
  %159 = vmatpush1.bf16.msra.mxu0 %v124
  %160 = vmatprep.subr.bf16.mxu0 0
  %161 = vmatpush1.bf16.msra.mxu0 %v125
  %162 = vmatprep.subr.bf16.mxu0 0
  %163 = vmatpush1.bf16.msra.mxu0 %v126
  %164 = vmatprep.subr.bf16.mxu0 0
  %165 = vmatpush1.bf16.msra.mxu0 %v127
  %166 = vmatprep.subr.bf16.mxu0 0
  %167 = vmatpush1.bf16.msra.mxu0 %v128
  %168 = vmatprep.subr.bf16.mxu0 0
  %169 = vmatpush1.bf16.msra.mxu0 %v129
  %170 = vmatprep.subr.bf16.mxu0 0
  %171 = vmatpush1.bf16.msra.mxu0 %v130
  %172 = vmatprep.subr.bf16.mxu0 0
  %173 = vmatpush1.bf16.msra.mxu0 %v131
  %174 = vmatprep.subr.bf16.mxu0 0
  %175 = vmatpush1.bf16.msra.mxu0 %v132
  %176 = vmatprep.subr.bf16.mxu0 0
  %177 = vmatpush1.bf16.msra.mxu0 %v133
  %178 = vmatprep.subr.bf16.mxu0 0
  %179 = vmatpush1.bf16.msra.mxu0 %v134
  %180 = vmatprep.subr.bf16.mxu0 0
  %181 = vmatpush1.bf16.msra.mxu0 %v135
  %182 = vmatprep.subr.bf16.mxu0 0
  %183 = vmatpush1.bf16.msra.mxu0 %v136
  %184 = vmatprep.subr.bf16.mxu0 0
  %185 = vmatpush1.bf16.msra.mxu0 %v137
  %186 = vmatprep.mubr.bf16.mxu0 %v18
  %187 = vmatmul.mubr.bf16.gmra.mrb[0].mxu0 %v17
  %v188 = vpop.f32.mrb[0].mxu0
  %v189 = vadd.f32 %v56, %v188
  %v190 = vpop.f32.mrb[0].mxu0
  %v191 = vpop.f32.mrb[0].mxu0
  %v192 = vpop.f32.mrb[0].mxu0
  %193 = vdwg.mxu0
  %vm194 = vcmask 523264
  %195 = vst.msk [vmem:[%s3] sm:$0xff] %vm194, %v189
  // Predicated region
  $region14: #{_lambda_.38} parent=0 // pred_check
    _
  $region15: #{_lambda_.38} parent=0 // pred_check_branch
    %197 = sbr.rel (0) target = $region17
  $region16: #{_lambda_.38} parent=0 // pred_region
    _
  $region17: #{_lambda_.38} parent=0 // pred_fallthru
    _
  // Predicated region
  $region18: #{_lambda_.38} parent=0 // pred_check
    _
  $region19: #{_lambda_.38} parent=0 // pred_check_branch
    %199 = sbr.rel (0) target = $region21
  $region20: #{_lambda_.38} parent=0 // pred_region
    _
  $region21: #{_lambda_.38} parent=0 // pred_fallthru
    _

// kernel: _lambda_.36
$region0: #{_lambda_.36}
  #allocation0 [shape = 'u32[]', space=smem, size = 0x4, offset = 0x4, fixed_abs, tag = 'smem constant byte address 0x4 - core index']
  #allocation1 [shape = 'u32[144,128]{1,0:T(1,128)}', space=vmem, size = 0x12000, scoped, tag = 'internal scratch']
  %s0 = inlined_call_operand.vmem [shape: f32[8,128], index: 0, kind: input, shape index: {}]
  %s1 = inlined_call_operand.vmem [shape: f32[8,128], index: 1, kind: input, shape index: {}]
  %s2 = inlined_call_operand.vmem [shape: f32[1,128], index: 2, kind: input, shape index: {}]
  %s3 = inlined_call_operand.vmem [shape: f32[1,128], index: 3, kind: input, shape index: {}]
  %s4 = inlined_call_operand.vmem [shape: bf16[128,64], index: 4, kind: input, shape index: {}]
  %s5 = inlined_call_operand.vmem [shape: f32[8,64], index: 5, kind: output, shape index: {}]
  %s6 = sld [smem:[#allocation0]]
  $region30: #{_lambda_.36} parent=0
    _
  %s8 = ssub.s32 1, %s6
  %s9 = scalar_select 0, %s8, %s6
  // Predicated region
  $region2: #{_lambda_.36} parent=0 // pred_check
    _
  $region3: #{_lambda_.36} parent=0 // pred_check_branch
    %11 = sbr.rel (0) target = $region5
  $region4: #{_lambda_.36} parent=0 // pred_region
    _
  $region5: #{_lambda_.36} parent=0 // pred_fallthru
    _
  // Predicated region
  $region6: #{_lambda_.36} parent=0 // pred_check
    _
  $region7: #{_lambda_.36} parent=0 // pred_check_branch
    %13 = sbr.rel (0) target = $region9
  $region8: #{_lambda_.36} parent=0 // pred_region
    _
  $region9: #{_lambda_.36} parent=0 // pred_fallthru
    _
  // Predicated region
  $region10: #{_lambda_.36} parent=0 // pred_check
    _
  $region11: #{_lambda_.36} parent=0 // pred_check_branch
    %15 = sbr.rel (0) target = $region13
  $region12: #{_lambda_.36} parent=0 // pred_region
    _
  $region13: #{_lambda_.36} parent=0 // pred_fallthru
    _
  // Predicated region
  $region14: #{_lambda_.36} parent=0 // pred_check
    _
  $region15: #{_lambda_.36} parent=0 // pred_check_branch
    %17 = sbr.rel (0) target = $region17
  $region16: #{_lambda_.36} parent=0 // pred_region
    _
  $region17: #{_lambda_.36} parent=0 // pred_fallthru
    _
  // Predicated region
  $region18: #{_lambda_.36} parent=0 // pred_check
    _
  $region19: #{_lambda_.36} parent=0 // pred_check_branch
    %19 = sbr.rel (0) target = $region21
  $region20: #{_lambda_.36} parent=0 // pred_region
    _
  $region21: #{_lambda_.36} parent=0 // pred_fallthru
    _
  %v21 = vld [vmem:[%s0] sm:$0xff]
  %22 = vadd.xlane.f32.xlu0 %v21
  %v23 = vpop.xlane.xlu0 %22
  %v24 = vrcp.pop 128.0
  %v25 = vmul.f32 %v23, %v24
  %v26 = vsub.f32 %v21, %v25
  %v27 = vmul.f32 %v26, %v26
  %28 = vadd.xlane.f32.xlu0 %v27
  %v29 = vpop.xlane.xlu0 %28
  %v30 = vmul.f32 %v29, %v24
  %v31 = vadd.f32 %v30, 1e-05
  %v32 = vrsqrt.pop %v31
  %v33 = vmul.f32 %v26, %v32
  %v34 = vld [vmem:[%s2] sm:$0x1]
  %v36 = vlaneseq
  %v37 = vshrl.u32 %v36, 7
  %v38 = vsub.s32 0, %v37
  %v39 = vrot.slane %v34, %v38
  %v41 = vmul.f32 %v33, %v39
  %v42 = vld [vmem:[%s3] sm:$0x1]
  %v44 = vlaneseq
  %v45 = vshrl.u32 %v44, 7
  %v46 = vsub.s32 0, %v45
  %v47 = vrot.slane %v42, %v46
  %v49 = vadd.f32 %v41, %v47
  %v50 = vld [vmem:[%s1] sm:$0xff]
  %v51 = vsub.f32 0.0, %v50
  %v52 = vmul.f32 %v51, 1.442695
  %v53 = vpow.pop %v52
  %v54 = vadd.f32 %v53, 1.0
  %v55 = vrcp.pop %v54
  %v56 = vmul.f32 1.0, %v55
  %v57 = vmul.f32 %v50, %v56
  %v58 = vmul.f32 %v49, %v57
  %v59 = vpack.c.bf16 %v58, %v58
  %v60 = vld [vmem:[%s4] sm:$0xf]
  %v61 = vld [vmem:[%s4 + $0x4] sm:$0xf]
  %v62 = vld [vmem:[%s4 + $0x8] sm:$0xf]
  %v63 = vld [vmem:[%s4 + $0xc] sm:$0xf]
  %v64 = vld [vmem:[%s4 + $0x10] sm:$0xf]
  %v65 = vld [vmem:[%s4 + $0x14] sm:$0xf]
  %v66 = vld [vmem:[%s4 + $0x18] sm:$0xf]
  %v67 = vld [vmem:[%s4 + $0x1c] sm:$0xf]
  %v68 = vld [vmem:[%s4 + $0x20] sm:$0xf]
  %v69 = vld [vmem:[%s4 + $0x24] sm:$0xf]
  %v70 = vld [vmem:[%s4 + $0x28] sm:$0xf]
  %v71 = vld [vmem:[%s4 + $0x2c] sm:$0xf]
  %v72 = vld [vmem:[%s4 + $0x30] sm:$0xf]
  %v73 = vld [vmem:[%s4 + $0x34] sm:$0xf]
  %v74 = vld [vmem:[%s4 + $0x38] sm:$0xf]
  %v75 = vld [vmem:[%s4 + $0x3c] sm:$0xf]
  %v92 = vunpack.c.l.b16 %v60
  %v93 = vunpack.c.l.b16 %v61
  %v94 = vunpack.c.l.b16 %v62
  %v95 = vunpack.c.l.b16 %v63
  %v96 = vunpack.c.l.b16 %v64
  %v97 = vunpack.c.l.b16 %v65
  %v98 = vunpack.c.l.b16 %v66
  %v99 = vunpack.c.l.b16 %v67
  %v100 = vunpack.c.l.b16 %v68
  %v101 = vunpack.c.l.b16 %v69
  %v102 = vunpack.c.l.b16 %v70
  %v103 = vunpack.c.l.b16 %v71
  %v104 = vunpack.c.l.b16 %v72
  %v105 = vunpack.c.l.b16 %v73
  %v106 = vunpack.c.l.b16 %v74
  %v107 = vunpack.c.l.b16 %v75
  %v108 = vpack.c.b16 %v93, %v92
  %v109 = vpack.c.b16 %v95, %v94
  %v110 = vpack.c.b16 %v97, %v96
  %v111 = vpack.c.b16 %v99, %v98
  %v112 = vpack.c.b16 %v101, %v100
  %v113 = vpack.c.b16 %v103, %v102
  %v114 = vpack.c.b16 %v105, %v104
  %v115 = vpack.c.b16 %v107, %v106
  %124 = vmatprep.subr.bf16.mxu0 0
  %125 = vmatpush1.bf16.msra.mxu0 %v108
  %126 = vmatprep.subr.bf16.mxu0 0
  %127 = vmatpush1.bf16.msra.mxu0 %v109
  %128 = vmatprep.subr.bf16.mxu0 0
  %129 = vmatpush1.bf16.msra.mxu0 %v110
  %130 = vmatprep.subr.bf16.mxu0 0
  %131 = vmatpush1.bf16.msra.mxu0 %v111
  %132 = vmatprep.subr.bf16.mxu0 0
  %133 = vmatpush1.bf16.msra.mxu0 %v112
  %134 = vmatprep.subr.bf16.mxu0 0
  %135 = vmatpush1.bf16.msra.mxu0 %v113
  %136 = vmatprep.subr.bf16.mxu0 0
  %137 = vmatpush1.bf16.msra.mxu0 %v114
  %138 = vmatprep.subr.bf16.mxu0 0
  %139 = vmatpush1.bf16.msra.mxu0 %v115
  %140 = vmatprep.subr.bf16.mxu0 0
  %141 = vmatpush1.bf16.msra.mxu0 0
  %142 = vmatprep.subr.bf16.mxu0 0
  %143 = vmatpush1.bf16.msra.mxu0 0
  %144 = vmatprep.subr.bf16.mxu0 0
  %145 = vmatpush1.bf16.msra.mxu0 0
  %146 = vmatprep.subr.bf16.mxu0 0
  %147 = vmatpush1.bf16.msra.mxu0 0
  %148 = vmatprep.subr.bf16.mxu0 0
  %149 = vmatpush1.bf16.msra.mxu0 0
  %150 = vmatprep.subr.bf16.mxu0 0
  %151 = vmatpush1.bf16.msra.mxu0 0
  %152 = vmatprep.subr.bf16.mxu0 0
  %153 = vmatpush1.bf16.msra.mxu0 0
  %154 = vmatprep.subr.bf16.mxu0 0
  %155 = vmatpush1.bf16.msra.mxu0 0
  %156 = vmatprep.mubr.bf16.mxu0 0
  %157 = vmatmul.mubr.bf16.gmra.mrb[0].mxu0 %v59
  %v158 = vpop.f32.mrb[0].mxu0
  %v159 = vadd.f32 0.0, %v158
  %v160 = vpop.f32.mrb[0].mxu0
  %v161 = vpop.f32.mrb[0].mxu0
  %v162 = vpop.f32.mrb[0].mxu0
  %163 = vdwg.mxu0
  %vm164 = vcmask 523264
  %165 = vst.msk [vmem:[%s5] sm:$0xff] %vm164, %v159
  // Predicated region
  $region22: #{_lambda_.36} parent=0 // pred_check
    _
  $region23: #{_lambda_.36} parent=0 // pred_check_branch
    %167 = sbr.rel (0) target = $region25
  $region24: #{_lambda_.36} parent=0 // pred_region
    _
  $region25: #{_lambda_.36} parent=0 // pred_fallthru
    _
  // Predicated region
  $region26: #{_lambda_.36} parent=0 // pred_check
    _
  $region27: #{_lambda_.36} parent=0 // pred_check_branch
    %169 = sbr.rel (0) target = $region29
  $region28: #{_lambda_.36} parent=0 // pred_region
    _
  $region29: #{_lambda_.36} parent=0 // pred_fallthru
    _

// kernel: _lambda_.35
$region0: #{_lambda_.35}
  #allocation0 [shape = 'u32[]', space=smem, size = 0x4, offset = 0x4, fixed_abs, tag = 'smem constant byte address 0x4 - core index']
  #allocation1 [shape = 'u32[144,128]{1,0:T(1,128)}', space=vmem, size = 0x12000, scoped, tag = 'internal scratch']
  %s0 = inlined_call_operand.vmem [shape: f32[2,4,4,1,128], index: 0, kind: input, shape index: {}]
  %s1 = inlined_call_operand.vmem [shape: f32[2,4,4,1,128], index: 1, kind: input, shape index: {}]
  %s2 = inlined_call_operand.vmem [shape: f32[2,4,4,8,1], index: 2, kind: input, shape index: {}]
  %s3 = inlined_call_operand.vmem [shape: f32[2,4,4,8,1], index: 3, kind: input, shape index: {}]
  %s4 = inlined_call_operand.vmem [shape: f32[4,8,128], index: 4, kind: input, shape index: {}]
  %s5 = inlined_call_operand.vmem [shape: f32[4,1,128], index: 5, kind: input, shape index: {}]
  %s6 = inlined_call_operand.vmem [shape: f32[2,4,4,1,128], index: 6, kind: output, shape index: {}]
  %s7 = sld [smem:[#allocation0]]
  $region57: #{_lambda_.35} parent=0
    _
  %s9 = ssub.s32 1, %s7
  %s10 = scalar_select 0, %s9, %s7
  loop: start=0, step=1, limit=4
  $region2: #{_lambda_.35} parent=0 // loop_pre_header
    _
  $region3: #{_lambda_.35} parent=0 // loop_header
    %s12 = sphi 0, %s16
    %p13 = scmp.ge.s32.totalorder %s12, 4
    %s22 = sphi 0, %s24
    %s25 = sphi 0, %s22
    %s26 = sphi 0, %s25
    %s42 = sphi 0, %s26
    %s48 = sphi 0, %s50
    %s51 = sphi 0, %s48
    %s52 = sphi 0, %s51
    %s68 = sphi 0, %s52
    %s74 = sphi 0, %s76
    %s77 = sphi 0, %s74
    %s78 = sphi 0, %s77
    %s94 = sphi 0, %s78
    %s100 = sphi 0, %s102
    %s103 = sphi 0, %s100
    %s104 = sphi 0, %s103
    %s120 = sphi 0, %s104
    %s124 = sphi 0, %s124
    %s126 = sphi 0, %s124
    %s127 = sphi 0, %s126
    %s141 = sphi 0, %s127
    %s145 = sphi 0, %s145
    %s147 = sphi 0, %s145
    %s148 = sphi 0, %s147
    %s162 = sphi 0, %s148
    %s168 = sphi 0, %s170
    %s171 = sphi 0, %s168
    %s172 = sphi 0, %s171
    %s188 = sphi 0, %s172
  $region4: #{_lambda_.35} parent=0 // loop_header_branch
    %15 = sbr.rel (%p13) target = $region8
  $region5: #{_lambda_.35} parent=0 // loop_body
    %s17 = ssub.s32 %s12, 1
    %s18 = ssub.s32 %s12, 2
    %s19 = sadd.s32 %s12, 1
    %s20 = ssub.s32 %s12, %s19
    %p21 = scmp.eq.s32.totalorder %s20, 0
    %s23 = sadd.s32 %s22, 1
    %s24 = scalar_select %p21, %s22, %s23
    %p27 = pneg %p21
    %p28 = scmp.eq.s32.totalorder %s12, 1
    %p29 = por %p27, %p28
    %p30 = scmp.ne.s32.totalorder %s22, %s25
    %p31 = scmp.eq.s32.totalorder %s12, 0
    %p32 = por %p30, %p31
    %p33 = scmp.ne.s32.totalorder %s22, %s25
    %p34 = scmp.eq.s32.totalorder %s17, 1
    %p35 = por %p33, %p34
    %p36 = scmp.ne.s32.totalorder %s25, %s26
    %p37 = scmp.eq.s32.totalorder %s17, 0
    %p38 = por %p36, %p37
    %p39 = scmp.ne.s32.totalorder %s25, %s26
    %p40 = scmp.eq.s32.totalorder %s18, 1
    %p41 = por %p39, %p40
    %p43 = scmp.ne.s32.totalorder %s26, %s42
    %p44 = scmp.eq.s32.totalorder %s18, 0
    %p45 = por %p43, %p44
    %s46 = ssub.s32 %s12, %s19
    %p47 = scmp.eq.s32.totalorder %s46, 0
    %s49 = sadd.s32 %s48, 1
    %s50 = scalar_select %p47, %s48, %s49
    %p53 = pneg %p47
    %p54 = scmp.eq.s32.totalorder %s12, 1
    %p55 = por %p53, %p54
    %p56 = scmp.ne.s32.totalorder %s48, %s51
    %p57 = scmp.eq.s32.totalorder %s12, 0
    %p58 = por %p56, %p57
    %p59 = scmp.ne.s32.totalorder %s48, %s51
    %p60 = scmp.eq.s32.totalorder %s17, 1
    %p61 = por %p59, %p60
    %p62 = scmp.ne.s32.totalorder %s51, %s52
    %p63 = scmp.eq.s32.totalorder %s17, 0
    %p64 = por %p62, %p63
    %p65 = scmp.ne.s32.totalorder %s51, %s52
    %p66 = scmp.eq.s32.totalorder %s18, 1
    %p67 = por %p65, %p66
    %p69 = scmp.ne.s32.totalorder %s52, %s68
    %p70 = scmp.eq.s32.totalorder %s18, 0
    %p71 = por %p69, %p70
    %s72 = ssub.s32 %s12, %s19
    %p73 = scmp.eq.s32.totalorder %s72, 0
    %s75 = sadd.s32 %s74, 1
    %s76 = scalar_select %p73, %s74, %s75
    %p79 = pneg %p73
    %p80 = scmp.eq.s32.totalorder %s12, 1
    %p81 = por %p79, %p80
    %p82 = scmp.ne.s32.totalorder %s74, %s77
    %p83 = scmp.eq.s32.totalorder %s12, 0
    %p84 = por %p82, %p83
    %p85 = scmp.ne.s32.totalorder %s74, %s77
    %p86 = scmp.eq.s32.totalorder %s17, 1
    %p87 = por %p85, %p86
    %p88 = scmp.ne.s32.totalorder %s77, %s78
    %p89 = scmp.eq.s32.totalorder %s17, 0
    %p90 = por %p88, %p89
    %p91 = scmp.ne.s32.totalorder %s77, %s78
    %p92 = scmp.eq.s32.totalorder %s18, 1
    %p93 = por %p91, %p92
    %p95 = scmp.ne.s32.totalorder %s78, %s94
    %p96 = scmp.eq.s32.totalorder %s18, 0
    %p97 = por %p95, %p96
    %s98 = ssub.s32 %s12, %s19
    %p99 = scmp.eq.s32.totalorder %s98, 0
    %s101 = sadd.s32 %s100, 1
    %s102 = scalar_select %p99, %s100, %s101
    %p105 = pneg %p99
    %p106 = scmp.eq.s32.totalorder %s12, 1
    %p107 = por %p105, %p106
    %p108 = scmp.ne.s32.totalorder %s100, %s103
    %p109 = scmp.eq.s32.totalorder %s12, 0
    %p110 = por %p108, %p109
    %p111 = scmp.ne.s32.totalorder %s100, %s103
    %p112 = scmp.eq.s32.totalorder %s17, 1
    %p113 = por %p111, %p112
    %p114 = scmp.ne.s32.totalorder %s103, %s104
    %p115 = scmp.eq.s32.totalorder %s17, 0
    %p116 = por %p114, %p115
    %p117 = scmp.ne.s32.totalorder %s103, %s104
    %p118 = scmp.eq.s32.totalorder %s18, 1
    %p119 = por %p117, %p118
    %p121 = scmp.ne.s32.totalorder %s104, %s120
    %p122 = scmp.eq.s32.totalorder %s18, 0
    %p123 = por %p121, %p122
    %s125 = sadd.s32 %s124, 1
    %p128 = scmp.eq.s32.totalorder %s12, 1
    %p129 = scmp.ne.s32.totalorder %s124, %s126
    %p130 = scmp.eq.s32.totalorder %s12, 0
    %p131 = por %p129, %p130
    %p132 = scmp.ne.s32.totalorder %s124, %s126
    %p133 = scmp.eq.s32.totalorder %s17, 1
    %p134 = por %p132, %p133
    %p135 = scmp.ne.s32.totalorder %s126, %s127
    %p136 = scmp.eq.s32.totalorder %s17, 0
    %p137 = por %p135, %p136
    %p138 = scmp.ne.s32.totalorder %s126, %s127
    %p139 = scmp.eq.s32.totalorder %s18, 1
    %p140 = por %p138, %p139
    %p142 = scmp.ne.s32.totalorder %s127, %s141
    %p143 = scmp.eq.s32.totalorder %s18, 0
    %p144 = por %p142, %p143
    %s146 = sadd.s32 %s145, 1
    %p149 = scmp.eq.s32.totalorder %s12, 1
    %p150 = scmp.ne.s32.totalorder %s145, %s147
    %p151 = scmp.eq.s32.totalorder %s12, 0
    %p152 = por %p150, %p151
    %p153 = scmp.ne.s32.totalorder %s145, %s147
    %p154 = scmp.eq.s32.totalorder %s17, 1
    %p155 = por %p153, %p154
    %p156 = scmp.ne.s32.totalorder %s147, %s148
    %p157 = scmp.eq.s32.totalorder %s17, 0
    %p158 = por %p156, %p157
    %p159 = scmp.ne.s32.totalorder %s147, %s148
    %p160 = scmp.eq.s32.totalorder %s18, 1
    %p161 = por %p159, %p160
    %p163 = scmp.ne.s32.totalorder %s148, %s162
    %p164 = scmp.eq.s32.totalorder %s18, 0
    %p165 = por %p163, %p164
    %s166 = ssub.s32 %s12, %s19
    %p167 = scmp.eq.s32.totalorder %s166, 0
    %s169 = sadd.s32 %s168, 1
    %s170 = scalar_select %p167, %s168, %s169
    %p173 = pneg %p167
    %p174 = scmp.eq.s32.totalorder %s12, 1
    %p175 = por %p173, %p174
    %p176 = scmp.ne.s32.totalorder %s168, %s171
    %p177 = scmp.eq.s32.totalorder %s12, 0
    %p178 = por %p176, %p177
    %p179 = scmp.ne.s32.totalorder %s168, %s171
    %p180 = scmp.eq.s32.totalorder %s17, 1
    %p181 = por %p179, %p180
    %p182 = scmp.ne.s32.totalorder %s171, %s172
    %p183 = scmp.eq.s32.totalorder %s17, 0
    %p184 = por %p182, %p183
    %p185 = scmp.ne.s32.totalorder %s171, %s172
    %p186 = scmp.eq.s32.totalorder %s18, 1
    %p187 = por %p185, %p186
    %p189 = scmp.ne.s32.totalorder %s172, %s188
    %p190 = scmp.eq.s32.totalorder %s18, 0
    %p191 = por %p189, %p190
    %p192 = scmp.le.s32.totalorder 1, %s12
    %p193 = scmp.lt.s32.totalorder %s12, 3
    %p194 = pnand %p192, %p193
    %p195 = pneg %p194
    // Predicated region
    $region9: #{_lambda_.35} parent=5 // pred_check
      _
    $region10: #{_lambda_.35} parent=5 // pred_check_branch
      %197 = sbr.rel (%p194) target = $region12
    $region11: #{_lambda_.35} parent=5 // pred_region
      %s198 = ssub.s32 %s12, 1
      // Predicated region
      $region13: #{_lambda_.35} parent=11 // pred_check
        %p199 = pneg %p137
      $region14: #{_lambda_.35} parent=11 // pred_check_branch
        %201 = sbr.rel (%p199) target = $region16
      $region15: #{_lambda_.35} parent=11 // pred_region
        _
      $region16: #{_lambda_.35} parent=11 // pred_fallthru
        _
      // Predicated region
      $region17: #{_lambda_.35} parent=11 // pred_check
        %p202 = pneg %p158
      $region18: #{_lambda_.35} parent=11 // pred_check_branch
        %204 = sbr.rel (%p202) target = $region20
      $region19: #{_lambda_.35} parent=11 // pred_region
        _
      $region20: #{_lambda_.35} parent=11 // pred_fallthru
        _
    $region12: #{_lambda_.35} parent=5 // pred_fallthru
      _
    %p205 = scmp.lt.s32.totalorder %s12, 2
    // Predicated region
    $region21: #{_lambda_.35} parent=5 // pred_check
      %p206 = pneg %p205
    $region22: #{_lambda_.35} parent=5 // pred_check_branch
      %208 = sbr.rel (%p206) target = $region24
    $region23: #{_lambda_.35} parent=5 // pred_region
      // Predicated region
      $region25: #{_lambda_.35} parent=23 // pred_check
        %p209 = pneg %p32
      $region26: #{_lambda_.35} parent=23 // pred_check_branch
        %211 = sbr.rel (%p209) target = $region28
      $region27: #{_lambda_.35} parent=23 // pred_region
        %p212 = scmp.lt.s32.totalorder %s12, 1
        %s213 = scalar_select %p212, %s12, 1
        %s214 = smul.addr %s213, 16
        %s215 = scalar_lea.vmem %s0, %s214
      $region28: #{_lambda_.35} parent=23 // pred_fallthru
        _
      // Predicated region
      $region29: #{_lambda_.35} parent=23 // pred_check
        %p216 = pneg %p58
      $region30: #{_lambda_.35} parent=23 // pred_check_branch
        %218 = sbr.rel (%p216) target = $region32
      $region31: #{_lambda_.35} parent=23 // pred_region
        %p219 = scmp.lt.s32.totalorder %s12, 1
        %s220 = scalar_select %p219, %s12, 1
        %s221 = smul.addr %s220, 16
        %s222 = scalar_lea.vmem %s1, %s221
      $region32: #{_lambda_.35} parent=23 // pred_fallthru
        _
      // Predicated region
      $region33: #{_lambda_.35} parent=23 // pred_check
        %p223 = pneg %p84
      $region34: #{_lambda_.35} parent=23 // pred_check_branch
        %225 = sbr.rel (%p223) target = $region36
      $region35: #{_lambda_.35} parent=23 // pred_region
        %p226 = scmp.lt.s32.totalorder %s12, 1
        %s227 = scalar_select %p226, %s12, 1
        %s228 = smul.addr %s227, 16
        %s229 = smul.addr %s228, 8
        %s230 = scalar_lea.vmem %s2, %s229
      $region36: #{_lambda_.35} parent=23 // pred_fallthru
        _
      // Predicated region
      $region37: #{_lambda_.35} parent=23 // pred_check
        %p231 = pneg %p110
      $region38: #{_lambda_.35} parent=23 // pred_check_branch
        %233 = sbr.rel (%p231) target = $region40
      $region39: #{_lambda_.35} parent=23 // pred_region
        %p234 = scmp.lt.s32.totalorder %s12, 1
        %s235 = scalar_select %p234, %s12, 1
        %s236 = smul.addr %s235, 16
        %s237 = smul.addr %s236, 8
        %s238 = scalar_lea.vmem %s3, %s237
      $region40: #{_lambda_.35} parent=23 // pred_fallthru
        _
    $region24: #{_lambda_.35} parent=5 // pred_fallthru
      _
    %p239 = scmp.le.s32.totalorder 1, %s12
    %p240 = scmp.lt.s32.totalorder %s12, 3
    %p241 = pnand %p239, %p240
    %p242 = pneg %p241
    // Predicated region
    $region41: #{_lambda_.35} parent=5 // pred_check
      _
    $region42: #{_lambda_.35} parent=5 // pred_check_branch
      %244 = sbr.rel (%p241) target = $region44
    $region43: #{_lambda_.35} parent=5 // pred_region
      %s245 = ssub.s32 %s12, 1
      %p246 = scmp.lt.s32.totalorder %s17, 1
      %s247 = scalar_select %p246, %s17, 1
      %s248 = smul.addr %s247, 16
      %s249 = scalar_lea.vmem %s0, %s248
      %p250 = pneg %p38
      %p251 = pneg %p35
      %p252 = scmp.lt.s32.totalorder %s17, 1
      %s253 = scalar_select %p252, %s17, 1
      %s254 = smul.addr %s253, 16
      %s255 = scalar_lea.vmem %s1, %s254
      %p256 = pneg %p64
      %p257 = pneg %p61
      %p258 = scmp.lt.s32.totalorder %s17, 1
      %s259 = scalar_select %p258, %s17, 1
      %s260 = smul.addr %s259, 16
      %s261 = smul.addr %s260, 8
      %s262 = scalar_lea.vmem %s2, %s261
      %p263 = pneg %p90
      %p264 = pneg %p87
      %p265 = scmp.lt.s32.totalorder %s17, 1
      %s266 = scalar_select %p265, %s17, 1
      %s267 = smul.addr %s266, 16
      %s268 = smul.addr %s267, 8
      %s269 = scalar_lea.vmem %s3, %s268
      %p270 = pneg %p116
      %p271 = pneg %p113
      %p272 = pneg %p137
      %p273 = pneg %p134
      %p274 = pneg %p158
      %p275 = pneg %p155
      %p276 = pneg %p184
      %p277 = pneg %p181
      %p278 = scmp.lt.s32.totalorder %s17, 1
      %s279 = scalar_select %p278, %s17, 1
      %s280 = smul.addr %s279, 16
      %s281 = scalar_lea.vmem %s6, %s280
      %p282 = scmp.lt.s32.totalorder %s17, 1
      %s283 = scalar_select %p282, %s17, 1
      %s284 = smul.addr %s283, 16
      %s285 = scalar_lea.vmem %s0, %s284
      %p286 = scmp.lt.s32.totalorder %s17, 1
      %s287 = scalar_select %p286, %s17, 1
      %s288 = smul.addr %s287, 16
      %s289 = scalar_lea.vmem %s1, %s288
      %p290 = scmp.lt.s32.totalorder %s17, 1
      %s291 = scalar_select %p290, %s17, 1
      %s292 = smul.addr %s291, 16
      %s293 = smul.addr %s292, 8
      %s294 = scalar_lea.vmem %s2, %s293
      %p295 = scmp.lt.s32.totalorder %s17, 1
      %s296 = scalar_select %p295, %s17, 1
      %s297 = smul.addr %s296, 16
      %s298 = smul.addr %s297, 8
      %s299 = scalar_lea.vmem %s3, %s298
      %p300 = scmp.lt.s32.totalorder %s17, 1
      %s301 = scalar_select %p300, %s17, 1
      %s302 = smul.addr %s301, 16
      %s303 = scalar_lea.vmem %s6, %s302
      %v304 = vld [vmem:[%s4] sm:$0xff]
      %v305 = vld [vmem:[%s4 + $0x8] sm:$0xff]
      %v306 = vld [vmem:[%s4 + $0x10] sm:$0xff]
      %v307 = vld [vmem:[%s4 + $0x18] sm:$0xff]
      %v308 = vld [vmem:[%s5] sm:$0x1]
      %v309 = vld [vmem:[%s5 + $0x1] sm:$0x1]
      %v310 = vld [vmem:[%s5 + $0x2] sm:$0x1]
      %v311 = vld [vmem:[%s5 + $0x3] sm:$0x1]
      %s312 = smul.u32 0, 4
      %s313 = scalar_lea.vmem %s285, %s312
      %v314 = vld [vmem:[%s313] sm:$0x1]
      %v315 = vld [vmem:[%s313 + $0x1] sm:$0x1]
      %v316 = vld [vmem:[%s313 + $0x2] sm:$0x1]
      %v317 = vld [vmem:[%s313 + $0x3] sm:$0x1]
      %v318 = vld [vmem:[%s313 + $0x4] sm:$0x1]
      %v319 = vld [vmem:[%s313 + $0x5] sm:$0x1]
      %v320 = vld [vmem:[%s313 + $0x6] sm:$0x1]
      %v321 = vld [vmem:[%s313 + $0x7] sm:$0x1]
      %v322 = vld [vmem:[%s313 + $0x8] sm:$0x1]
      %v323 = vld [vmem:[%s313 + $0x9] sm:$0x1]
      %v324 = vld [vmem:[%s313 + $0xa] sm:$0x1]
      %v325 = vld [vmem:[%s313 + $0xb] sm:$0x1]
      %v326 = vld [vmem:[%s313 + $0xc] sm:$0x1]
      %v327 = vld [vmem:[%s313 + $0xd] sm:$0x1]
      %v328 = vld [vmem:[%s313 + $0xe] sm:$0x1]
      %v329 = vld [vmem:[%s313 + $0xf] sm:$0x1]
      %s330 = scalar_lea.vmem %s289, %s312
      %v331 = vld [vmem:[%s330] sm:$0x1]
      %v332 = vld [vmem:[%s330 + $0x1] sm:$0x1]
      %v333 = vld [vmem:[%s330 + $0x2] sm:$0x1]
      %v334 = vld [vmem:[%s330 + $0x3] sm:$0x1]
      %v335 = vld [vmem:[%s330 + $0x4] sm:$0x1]
      %v336 = vld [vmem:[%s330 + $0x5] sm:$0x1]
      %v337 = vld [vmem:[%s330 + $0x6] sm:$0x1]
      %v338 = vld [vmem:[%s330 + $0x7] sm:$0x1]
      %v339 = vld [vmem:[%s330 + $0x8] sm:$0x1]
      %v340 = vld [vmem:[%s330 + $0x9] sm:$0x1]
      %v341 = vld [vmem:[%s330 + $0xa] sm:$0x1]
      %v342 = vld [vmem:[%s330 + $0xb] sm:$0x1]
      %v343 = vld [vmem:[%s330 + $0xc] sm:$0x1]
      %v344 = vld [vmem:[%s330 + $0xd] sm:$0x1]
      %v345 = vld [vmem:[%s330 + $0xe] sm:$0x1]
      %v346 = vld [vmem:[%s330 + $0xf] sm:$0x1]
      %s347 = smul.u32 0, 32
      %s348 = scalar_lea.vmem %s294, %s347
      %v349 = vld [vmem:[%s348] sm:$0xff]
      %v350 = vld [vmem:[%s348 + $0x8] sm:$0xff]
      %v351 = vld [vmem:[%s348 + $0x10] sm:$0xff]
      %v352 = vld [vmem:[%s348 + $0x18] sm:$0xff]
      %v353 = vld [vmem:[%s348 + $0x20] sm:$0xff]
      %v354 = vld [vmem:[%s348 + $0x28] sm:$0xff]
      %v355 = vld [vmem:[%s348 + $0x30] sm:$0xff]
      %v356 = vld [vmem:[%s348 + $0x38] sm:$0xff]
      %v357 = vld [vmem:[%s348 + $0x40] sm:$0xff]
      %v358 = vld [vmem:[%s348 + $0x48] sm:$0xff]
      %v359 = vld [vmem:[%s348 + $0x50] sm:$0xff]
      %v360 = vld [vmem:[%s348 + $0x58] sm:$0xff]
      %v361 = vld [vmem:[%s348 + $0x60] sm:$0xff]
      %v362 = vld [vmem:[%s348 + $0x68] sm:$0xff]
      %v363 = vld [vmem:[%s348 + $0x70] sm:$0xff]
      %v364 = vld [vmem:[%s348 + $0x78] sm:$0xff]
      %s365 = scalar_lea.vmem %s299, %s347
      %v366 = vld [vmem:[%s365] sm:$0xff]
      %v367 = vld [vmem:[%s365 + $0x8] sm:$0xff]
      %v368 = vld [vmem:[%s365 + $0x10] sm:$0xff]
      %v369 = vld [vmem:[%s365 + $0x18] sm:$0xff]
      %v370 = vld [vmem:[%s365 + $0x20] sm:$0xff]
      %v371 = vld [vmem:[%s365 + $0x28] sm:$0xff]
      %v372 = vld [vmem:[%s365 + $0x30] sm:$0xff]
      %v373 = vld [vmem:[%s365 + $0x38] sm:$0xff]
      %v374 = vld [vmem:[%s365 + $0x40] sm:$0xff]
      %v375 = vld [vmem:[%s365 + $0x48] sm:$0xff]
      %v376 = vld [vmem:[%s365 + $0x50] sm:$0xff]
      %v377 = vld [vmem:[%s365 + $0x58] sm:$0xff]
      %v378 = vld [vmem:[%s365 + $0x60] sm:$0xff]
      %v379 = vld [vmem:[%s365 + $0x68] sm:$0xff]
      %v380 = vld [vmem:[%s365 + $0x70] sm:$0xff]
      %v381 = vld [vmem:[%s365 + $0x78] sm:$0xff]
      %v386 = vlaneseq
      %v387 = vshrl.u32 %v386, 7
      %v388 = vsub.s32 0, %v387
      %v389 = vrot.slane %v331, %v388
      %v390 = vlaneseq
      %v391 = vshrl.u32 %v390, 7
      %v392 = vsub.s32 0, %v391
      %v393 = vrot.slane %v332, %v392
      %v394 = vlaneseq
      %v395 = vshrl.u32 %v394, 7
      %v396 = vsub.s32 0, %v395
      %v397 = vrot.slane %v333, %v396
      %v398 = vlaneseq
      %v399 = vshrl.u32 %v398, 7
      %v400 = vsub.s32 0, %v399
      %v401 = vrot.slane %v334, %v400
      %v406 = vmul.f32 %v304, %v389
      %v407 = vmul.f32 %v305, %v393
      %v408 = vmul.f32 %v306, %v397
      %v409 = vmul.f32 %v307, %v401
      %v410 = vmul.f32 %v406, 1.442695
      %v411 = vpow.pop %v410
      %v412 = vmul.f32 %v407, 1.442695
      %v413 = vpow.pop %v412
      %v414 = vmul.f32 %v408, 1.442695
      %v415 = vpow.pop %v414
      %v416 = vmul.f32 %v409, 1.442695
      %v417 = vpow.pop %v416
      %v418 = vmul.f32 %v411, 0.0
      %v419 = vmul.f32 %v413, 0.0
      %v420 = vmul.f32 %v415, 0.0
      %v421 = vmul.f32 %v417, 0.0
      %v422 = vmul.f32 %v331, %v314
      %v423 = vmul.f32 %v332, %v315
      %v424 = vmul.f32 %v333, %v316
      %v425 = vmul.f32 %v334, %v317
      %427 = vset.pattern.permute.xlu0 0
      %428 = vperm.xlu0 %427, %v349
      %v429 = vpop.permute.xlu0 %428
      %432 = vset.pattern.permute.xlu0 0
      %433 = vperm.xlu0 %432, %v350
      %v434 = vpop.permute.xlu0 %433
      %437 = vset.pattern.permute.xlu0 0
      %438 = vperm.xlu0 %437, %v351
      %v439 = vpop.permute.xlu0 %438
      %442 = vset.pattern.permute.xlu0 0
      %443 = vperm.xlu0 %442, %v352
      %v444 = vpop.permute.xlu0 %443
      %v450 = vlaneseq
      %v451 = vshrl.u32 %v450, 7
      %v452 = vsub.s32 0, %v451
      %v453 = vrot.slane %v422, %v452
      %v454 = vlaneseq
      %v455 = vshrl.u32 %v454, 7
      %v456 = vsub.s32 0, %v455
      %v457 = vrot.slane %v423, %v456
      %v458 = vlaneseq
      %v459 = vshrl.u32 %v458, 7
      %v460 = vsub.s32 0, %v459
      %v461 = vrot.slane %v424, %v460
      %v462 = vlaneseq
      %v463 = vshrl.u32 %v462, 7
      %v464 = vsub.s32 0, %v463
      %v465 = vrot.slane %v425, %v464
      %v470 = vmul.f32 %v429, %v453
      %v471 = vmul.f32 %v434, %v457
      %v472 = vmul.f32 %v439, %v461
      %v473 = vmul.f32 %v444, %v465
      %v474 = vadd.f32 %v418, %v470
      %v475 = vadd.f32 %v419, %v471
      %v476 = vadd.f32 %v420, %v472
      %v477 = vadd.f32 %v421, %v473
      %479 = vset.pattern.permute.xlu0 0
      %480 = vperm.xlu0 %479, %v366
      %v481 = vpop.permute.xlu0 %480
      %484 = vset.pattern.permute.xlu0 0
      %485 = vperm.xlu0 %484, %v367
      %v486 = vpop.permute.xlu0 %485
      %489 = vset.pattern.permute.xlu0 0
      %490 = vperm.xlu0 %489, %v368
      %v491 = vpop.permute.xlu0 %490
      %494 = vset.pattern.permute.xlu0 0
      %495 = vperm.xlu0 %494, %v369
      %v496 = vpop.permute.xlu0 %495
      %v498 = vmul.f32 %v481, %v474
      %v499 = vmul.f32 %v486, %v475
      %v500 = vmul.f32 %v491, %v476
      %v501 = vmul.f32 %v496, %v477
      %v502 = vrot.slane %v498, 4
      %v503 = vadd.f32 %v498, %v502
      %v504 = vrot.slane %v503, 2
      %v505 = vadd.f32 %v503, %v504
      %v506 = vrot.slane %v505, 1
      %v507 = vadd.f32 %v505, %v506
      %v508 = vrot.slane %v499, 4
      %v509 = vadd.f32 %v499, %v508
      %v510 = vrot.slane %v509, 2
      %v511 = vadd.f32 %v509, %v510
      %v512 = vrot.slane %v511, 1
      %v513 = vadd.f32 %v511, %v512
      %v514 = vrot.slane %v500, 4
      %v515 = vadd.f32 %v500, %v514
      %v516 = vrot.slane %v515, 2
      %v517 = vadd.f32 %v515, %v516
      %v518 = vrot.slane %v517, 1
      %v519 = vadd.f32 %v517, %v518
      %v520 = vrot.slane %v501, 4
      %v521 = vadd.f32 %v501, %v520
      %v522 = vrot.slane %v521, 2
      %v523 = vadd.f32 %v521, %v522
      %v524 = vrot.slane %v523, 1
      %v525 = vadd.f32 %v523, %v524
      %v526 = vmul.f32 %v308, %v314
      %v527 = vmul.f32 %v309, %v315
      %v528 = vmul.f32 %v310, %v316
      %v529 = vmul.f32 %v311, %v317
      %v530 = vadd.f32 %v507, %v526
      %v531 = vadd.f32 %v513, %v527
      %v532 = vadd.f32 %v519, %v528
      %v533 = vadd.f32 %v525, %v529
      %v538 = vlaneseq
      %v539 = vshrl.u32 %v538, 7
      %v540 = vsub.s32 0, %v539
      %v541 = vrot.slane %v335, %v540
      %v542 = vlaneseq
      %v543 = vshrl.u32 %v542, 7
      %v544 = vsub.s32 0, %v543
      %v545 = vrot.slane %v336, %v544
      %v546 = vlaneseq
      %v547 = vshrl.u32 %v546, 7
      %v548 = vsub.s32 0, %v547
      %v549 = vrot.slane %v337, %v548
      %v550 = vlaneseq
      %v551 = vshrl.u32 %v550, 7
      %v552 = vsub.s32 0, %v551
      %v553 = vrot.slane %v338, %v552
      %v558 = vmul.f32 %v304, %v541
      %v559 = vmul.f32 %v305, %v545
      %v560 = vmul.f32 %v306, %v549
      %v561 = vmul.f32 %v307, %v553
      %v562 = vmul.f32 %v558, 1.442695
      %v563 = vpow.pop %v562
      %v564 = vmul.f32 %v559, 1.442695
      %v565 = vpow.pop %v564
      %v566 = vmul.f32 %v560, 1.442695
      %v567 = vpow.pop %v566
      %v568 = vmul.f32 %v561, 1.442695
      %v569 = vpow.pop %v568
      %v570 = vmul.f32 %v563, %v474
      %v571 = vmul.f32 %v565, %v475
      %v572 = vmul.f32 %v567, %v476
      %v573 = vmul.f32 %v569, %v477
      %v574 = vmul.f32 %v335, %v318
      %v575 = vmul.f32 %v336, %v319
      %v576 = vmul.f32 %v337, %v320
      %v577 = vmul.f32 %v338, %v321
      %579 = vset.pattern.permute.xlu0 0
      %580 = vperm.xlu0 %579, %v353
      %v581 = vpop.permute.xlu0 %580
      %584 = vset.pattern.permute.xlu0 0
      %585 = vperm.xlu0 %584, %v354
      %v586 = vpop.permute.xlu0 %585
      %589 = vset.pattern.permute.xlu0 0
      %590 = vperm.xlu0 %589, %v355
      %v591 = vpop.permute.xlu0 %590
      %594 = vset.pattern.permute.xlu0 0
      %595 = vperm.xlu0 %594, %v356
      %v596 = vpop.permute.xlu0 %595
      %v602 = vlaneseq
      %v603 = vshrl.u32 %v602, 7
      %v604 = vsub.s32 0, %v603
      %v605 = vrot.slane %v574, %v604
      %v606 = vlaneseq
      %v607 = vshrl.u32 %v606, 7
      %v608 = vsub.s32 0, %v607
      %v609 = vrot.slane %v575, %v608
      %v610 = vlaneseq
      %v611 = vshrl.u32 %v610, 7
      %v612 = vsub.s32 0, %v611
      %v613 = vrot.slane %v576, %v612
      %v614 = vlaneseq
      %v615 = vshrl.u32 %v614, 7
      %v616 = vsub.s32 0, %v615
      %v617 = vrot.slane %v577, %v616
      %v622 = vmul.f32 %v581, %v605
      %v623 = vmul.f32 %v586, %v609
      %v624 = vmul.f32 %v591, %v613
      %v625 = vmul.f32 %v596, %v617
      %v626 = vadd.f32 %v570, %v622
      %v627 = vadd.f32 %v571, %v623
      %v628 = vadd.f32 %v572, %v624
      %v629 = vadd.f32 %v573, %v625
      %631 = vset.pattern.permute.xlu0 0
      %632 = vperm.xlu0 %631, %v370
      %v633 = vpop.permute.xlu0 %632
      %636 = vset.pattern.permute.xlu0 0
      %637 = vperm.xlu0 %636, %v371
      %v638 = vpop.permute.xlu0 %637
      %641 = vset.pattern.permute.xlu0 0
      %642 = vperm.xlu0 %641, %v372
      %v643 = vpop.permute.xlu0 %642
      %646 = vset.pattern.permute.xlu0 0
      %647 = vperm.xlu0 %646, %v373
      %v648 = vpop.permute.xlu0 %647
      %v650 = vmul.f32 %v633, %v626
      %v651 = vmul.f32 %v638, %v627
      %v652 = vmul.f32 %v643, %v628
      %v653 = vmul.f32 %v648, %v629
      %v654 = vrot.slane %v650, 4
      %v655 = vadd.f32 %v650, %v654
      %v656 = vrot.slane %v655, 2
      %v657 = vadd.f32 %v655, %v656
      %v658 = vrot.slane %v657, 1
      %v659 = vadd.f32 %v657, %v658
      %v660 = vrot.slane %v651, 4
      %v661 = vadd.f32 %v651, %v660
      %v662 = vrot.slane %v661, 2
      %v663 = vadd.f32 %v661, %v662
      %v664 = vrot.slane %v663, 1
      %v665 = vadd.f32 %v663, %v664
      %v666 = vrot.slane %v652, 4
      %v667 = vadd.f32 %v652, %v666
      %v668 = vrot.slane %v667, 2
      %v669 = vadd.f32 %v667, %v668
      %v670 = vrot.slane %v669, 1
      %v671 = vadd.f32 %v669, %v670
      %v672 = vrot.slane %v653, 4
      %v673 = vadd.f32 %v653, %v672
      %v674 = vrot.slane %v673, 2
      %v675 = vadd.f32 %v673, %v674
      %v676 = vrot.slane %v675, 1
      %v677 = vadd.f32 %v675, %v676
      %v678 = vmul.f32 %v308, %v318
      %v679 = vmul.f32 %v309, %v319
      %v680 = vmul.f32 %v310, %v320
      %v681 = vmul.f32 %v311, %v321
      %v682 = vadd.f32 %v659, %v678
      %v683 = vadd.f32 %v665, %v679
      %v684 = vadd.f32 %v671, %v680
      %v685 = vadd.f32 %v677, %v681
      %v690 = vlaneseq
      %v691 = vshrl.u32 %v690, 7
      %v692 = vsub.s32 0, %v691
      %v693 = vrot.slane %v339, %v692
      %v694 = vlaneseq
      %v695 = vshrl.u32 %v694, 7
      %v696 = vsub.s32 0, %v695
      %v697 = vrot.slane %v340, %v696
      %v698 = vlaneseq
      %v699 = vshrl.u32 %v698, 7
      %v700 = vsub.s32 0, %v699
      %v701 = vrot.slane %v341, %v700
      %v702 = vlaneseq
      %v703 = vshrl.u32 %v702, 7
      %v704 = vsub.s32 0, %v703
      %v705 = vrot.slane %v342, %v704
      %v710 = vmul.f32 %v304, %v693
      %v711 = vmul.f32 %v305, %v697
      %v712 = vmul.f32 %v306, %v701
      %v713 = vmul.f32 %v307, %v705
      %v714 = vmul.f32 %v710, 1.442695
      %v715 = vpow.pop %v714
      %v716 = vmul.f32 %v711, 1.442695
      %v717 = vpow.pop %v716
      %v718 = vmul.f32 %v712, 1.442695
      %v719 = vpow.pop %v718
      %v720 = vmul.f32 %v713, 1.442695
      %v721 = vpow.pop %v720
      %v722 = vmul.f32 %v715, %v626
      %v723 = vmul.f32 %v717, %v627
      %v724 = vmul.f32 %v719, %v628
      %v725 = vmul.f32 %v721, %v629
      %v726 = vmul.f32 %v339, %v322
      %v727 = vmul.f32 %v340, %v323
      %v728 = vmul.f32 %v341, %v324
      %v729 = vmul.f32 %v342, %v325
      %731 = vset.pattern.permute.xlu0 0
      %732 = vperm.xlu0 %731, %v357
      %v733 = vpop.permute.xlu0 %732
      %736 = vset.pattern.permute.xlu0 0
      %737 = vperm.xlu0 %736, %v358
      %v738 = vpop.permute.xlu0 %737
      %741 = vset.pattern.permute.xlu0 0
      %742 = vperm.xlu0 %741, %v359
      %v743 = vpop.permute.xlu0 %742
      %746 = vset.pattern.permute.xlu0 0
      %747 = vperm.xlu0 %746, %v360
      %v748 = vpop.permute.xlu0 %747
      %v754 = vlaneseq
      %v755 = vshrl.u32 %v754, 7
      %v756 = vsub.s32 0, %v755
      %v757 = vrot.slane %v726, %v756
      %v758 = vlaneseq
      %v759 = vshrl.u32 %v758, 7
      %v760 = vsub.s32 0, %v759
      %v761 = vrot.slane %v727, %v760
      %v762 = vlaneseq
      %v763 = vshrl.u32 %v762, 7
      %v764 = vsub.s32 0, %v763
      %v765 = vrot.slane %v728, %v764
      %v766 = vlaneseq
      %v767 = vshrl.u32 %v766, 7
      %v768 = vsub.s32 0, %v767
      %v769 = vrot.slane %v729, %v768
      %v774 = vmul.f32 %v733, %v757
      %v775 = vmul.f32 %v738, %v761
      %v776 = vmul.f32 %v743, %v765
      %v777 = vmul.f32 %v748, %v769
      %v778 = vadd.f32 %v722, %v774
      %v779 = vadd.f32 %v723, %v775
      %v780 = vadd.f32 %v724, %v776
      %v781 = vadd.f32 %v725, %v777
      %783 = vset.pattern.permute.xlu0 0
      %784 = vperm.xlu0 %783, %v374
      %v785 = vpop.permute.xlu0 %784
      %788 = vset.pattern.permute.xlu0 0
      %789 = vperm.xlu0 %788, %v375
      %v790 = vpop.permute.xlu0 %789
      %793 = vset.pattern.permute.xlu0 0
      %794 = vperm.xlu0 %793, %v376
      %v795 = vpop.permute.xlu0 %794
      %798 = vset.pattern.permute.xlu0 0
      %799 = vperm.xlu0 %798, %v377
      %v800 = vpop.permute.xlu0 %799
      %v802 = vmul.f32 %v785, %v778
      %v803 = vmul.f32 %v790, %v779
      %v804 = vmul.f32 %v795, %v780
      %v805 = vmul.f32 %v800, %v781
      %v806 = vrot.slane %v802, 4
      %v807 = vadd.f32 %v802, %v806
      %v808 = vrot.slane %v807, 2
      %v809 = vadd.f32 %v807, %v808
      %v810 = vrot.slane %v809, 1
      %v811 = vadd.f32 %v809, %v810
      %v812 = vrot.slane %v803, 4
      %v813 = vadd.f32 %v803, %v812
      %v814 = vrot.slane %v813, 2
      %v815 = vadd.f32 %v813, %v814
      %v816 = vrot.slane %v815, 1
      %v817 = vadd.f32 %v815, %v816
      %v818 = vrot.slane %v804, 4
      %v819 = vadd.f32 %v804, %v818
      %v820 = vrot.slane %v819, 2
      %v821 = vadd.f32 %v819, %v820
      %v822 = vrot.slane %v821, 1
      %v823 = vadd.f32 %v821, %v822
      %v824 = vrot.slane %v805, 4
      %v825 = vadd.f32 %v805, %v824
      %v826 = vrot.slane %v825, 2
      %v827 = vadd.f32 %v825, %v826
      %v828 = vrot.slane %v827, 1
      %v829 = vadd.f32 %v827, %v828
      %v830 = vmul.f32 %v308, %v322
      %v831 = vmul.f32 %v309, %v323
      %v832 = vmul.f32 %v310, %v324
      %v833 = vmul.f32 %v311, %v325
      %v834 = vadd.f32 %v811, %v830
      %v835 = vadd.f32 %v817, %v831
      %v836 = vadd.f32 %v823, %v832
      %v837 = vadd.f32 %v829, %v833
      %v842 = vlaneseq
      %v843 = vshrl.u32 %v842, 7
      %v844 = vsub.s32 0, %v843
      %v845 = vrot.slane %v343, %v844
      %v846 = vlaneseq
      %v847 = vshrl.u32 %v846, 7
      %v848 = vsub.s32 0, %v847
      %v849 = vrot.slane %v344, %v848
      %v850 = vlaneseq
      %v851 = vshrl.u32 %v850, 7
      %v852 = vsub.s32 0, %v851
      %v853 = vrot.slane %v345, %v852
      %v854 = vlaneseq
      %v855 = vshrl.u32 %v854, 7
      %v856 = vsub.s32 0, %v855
      %v857 = vrot.slane %v346, %v856
      %v862 = vmul.f32 %v304, %v845
      %v863 = vmul.f32 %v305, %v849
      %v864 = vmul.f32 %v306, %v853
      %v865 = vmul.f32 %v307, %v857
      %v866 = vmul.f32 %v862, 1.442695
      %v867 = vpow.pop %v866
      %v868 = vmul.f32 %v863, 1.442695
      %v869 = vpow.pop %v868
      %v870 = vmul.f32 %v864, 1.442695
      %v871 = vpow.pop %v870
      %v872 = vmul.f32 %v865, 1.442695
      %v873 = vpow.pop %v872
      %v874 = vmul.f32 %v867, %v778
      %v875 = vmul.f32 %v869, %v779
      %v876 = vmul.f32 %v871, %v780
      %v877 = vmul.f32 %v873, %v781
      %v878 = vmul.f32 %v343, %v326
      %v879 = vmul.f32 %v344, %v327
      %v880 = vmul.f32 %v345, %v328
      %v881 = vmul.f32 %v346, %v329
      %883 = vset.pattern.permute.xlu0 0
      %884 = vperm.xlu0 %883, %v361
      %v885 = vpop.permute.xlu0 %884
      %888 = vset.pattern.permute.xlu0 0
      %889 = vperm.xlu0 %888, %v362
      %v890 = vpop.permute.xlu0 %889
      %893 = vset.pattern.permute.xlu0 0
      %894 = vperm.xlu0 %893, %v363
      %v895 = vpop.permute.xlu0 %894
      %898 = vset.pattern.permute.xlu0 0
      %899 = vperm.xlu0 %898, %v364
      %v900 = vpop.permute.xlu0 %899
      %v906 = vlaneseq
      %v907 = vshrl.u32 %v906, 7
      %v908 = vsub.s32 0, %v907
      %v909 = vrot.slane %v878, %v908
      %v910 = vlaneseq
      %v911 = vshrl.u32 %v910, 7
      %v912 = vsub.s32 0, %v911
      %v913 = vrot.slane %v879, %v912
      %v914 = vlaneseq
      %v915 = vshrl.u32 %v914, 7
      %v916 = vsub.s32 0, %v915
      %v917 = vrot.slane %v880, %v916
      %v918 = vlaneseq
      %v919 = vshrl.u32 %v918, 7
      %v920 = vsub.s32 0, %v919
      %v921 = vrot.slane %v881, %v920
      %v926 = vmul.f32 %v885, %v909
      %v927 = vmul.f32 %v890, %v913
      %v928 = vmul.f32 %v895, %v917
      %v929 = vmul.f32 %v900, %v921
      %v930 = vadd.f32 %v874, %v926
      %v931 = vadd.f32 %v875, %v927
      %v932 = vadd.f32 %v876, %v928
      %v933 = vadd.f32 %v877, %v929
      %935 = vset.pattern.permute.xlu0 0
      %936 = vperm.xlu0 %935, %v378
      %v937 = vpop.permute.xlu0 %936
      %940 = vset.pattern.permute.xlu0 0
      %941 = vperm.xlu0 %940, %v379
      %v942 = vpop.permute.xlu0 %941
      %945 = vset.pattern.permute.xlu0 0
      %946 = vperm.xlu0 %945, %v380
      %v947 = vpop.permute.xlu0 %946
      %950 = vset.pattern.permute.xlu0 0
      %951 = vperm.xlu0 %950, %v381
      %v952 = vpop.permute.xlu0 %951
      %v954 = vmul.f32 %v937, %v930
      %v955 = vmul.f32 %v942, %v931
      %v956 = vmul.f32 %v947, %v932
      %v957 = vmul.f32 %v952, %v933
      %v958 = vrot.slane %v954, 4
      %v959 = vadd.f32 %v954, %v958
      %v960 = vrot.slane %v959, 2
      %v961 = vadd.f32 %v959, %v960
      %v962 = vrot.slane %v961, 1
      %v963 = vadd.f32 %v961, %v962
      %v964 = vrot.slane %v955, 4
      %v965 = vadd.f32 %v955, %v964
      %v966 = vrot.slane %v965, 2
      %v967 = vadd.f32 %v965, %v966
      %v968 = vrot.slane %v967, 1
      %v969 = vadd.f32 %v967, %v968
      %v970 = vrot.slane %v956, 4
      %v971 = vadd.f32 %v956, %v970
      %v972 = vrot.slane %v971, 2
      %v973 = vadd.f32 %v971, %v972
      %v974 = vrot.slane %v973, 1
      %v975 = vadd.f32 %v973, %v974
      %v976 = vrot.slane %v957, 4
      %v977 = vadd.f32 %v957, %v976
      %v978 = vrot.slane %v977, 2
      %v979 = vadd.f32 %v977, %v978
      %v980 = vrot.slane %v979, 1
      %v981 = vadd.f32 %v979, %v980
      %v982 = vmul.f32 %v308, %v326
      %v983 = vmul.f32 %v309, %v327
      %v984 = vmul.f32 %v310, %v328
      %v985 = vmul.f32 %v311, %v329
      %v986 = vadd.f32 %v963, %v982
      %v987 = vadd.f32 %v969, %v983
      %v988 = vadd.f32 %v975, %v984
      %v989 = vadd.f32 %v981, %v985
      %s990 = scalar_lea.vmem %s303, %s312
      %991 = vst [vmem:[%s990] sm:$0x1] %v530
      %992 = vst [vmem:[%s990 + $0x1] sm:$0x1] %v531
      %993 = vst [vmem:[%s990 + $0x2] sm:$0x1] %v532
      %994 = vst [vmem:[%s990 + $0x3] sm:$0x1] %v533
      %995 = vst [vmem:[%s990 + $0x4] sm:$0x1] %v682
      %996 = vst [vmem:[%s990 + $0x5] sm:$0x1] %v683
      %997 = vst [vmem:[%s990 + $0x6] sm:$0x1] %v684
      %998 = vst [vmem:[%s990 + $0x7] sm:$0x1] %v685
      %999 = vst [vmem:[%s990 + $0x8] sm:$0x1] %v834
      %1000 = vst [vmem:[%s990 + $0x9] sm:$0x1] %v835
      %1001 = vst [vmem:[%s990 + $0xa] sm:$0x1] %v836
      %1002 = vst [vmem:[%s990 + $0xb] sm:$0x1] %v837
      %1003 = vst [vmem:[%s990 + $0xc] sm:$0x1] %v986
      %1004 = vst [vmem:[%s990 + $0xd] sm:$0x1] %v987
      %1005 = vst [vmem:[%s990 + $0xe] sm:$0x1] %v988
      %1006 = vst [vmem:[%s990 + $0xf] sm:$0x1] %v989
      %p1007 = scmp.lt.s32.totalorder %s17, 1
      %s1008 = scalar_select %p1007, %s17, 1
      %s1009 = smul.addr %s1008, 16
      %s1010 = scalar_lea.vmem %s6, %s1009
      // Predicated region
      $region45: #{_lambda_.35} parent=43 // pred_check
        %p1011 = pneg %p181
      $region46: #{_lambda_.35} parent=43 // pred_check_branch
        %1013 = sbr.rel (%p1011) target = $region48
      $region47: #{_lambda_.35} parent=43 // pred_region
        _
      $region48: #{_lambda_.35} parent=43 // pred_fallthru
        _
    $region44: #{_lambda_.35} parent=5 // pred_fallthru
      _
    %p1014 = scmp.le.s32.totalorder 2, %s12
    // Predicated region
    $region49: #{_lambda_.35} parent=5 // pred_check
      %p1015 = pneg %p1014
    $region50: #{_lambda_.35} parent=5 // pred_check_branch
      %1017 = sbr.rel (%p1015) target = $region52
    $region51: #{_lambda_.35} parent=5 // pred_region
      %s1018 = ssub.s32 %s12, 2
      // Predicated region
      $region53: #{_lambda_.35} parent=51 // pred_check
        %p1019 = pneg %p187
      $region54: #{_lambda_.35} parent=51 // pred_check_branch
        %1021 = sbr.rel (%p1019) target = $region56
      $region55: #{_lambda_.35} parent=51 // pred_region
        %p1022 = scmp.lt.s32.totalorder %s18, 1
        %s1023 = scalar_select %p1022, %s18, 1
        %s1024 = smul.addr %s1023, 16
        %s1025 = scalar_lea.vmem %s6, %s1024
      $region56: #{_lambda_.35} parent=51 // pred_fallthru
        _
    $region52: #{_lambda_.35} parent=5 // pred_fallthru
      _
  $region6: #{_lambda_.35} parent=0 // loop_footer
    %s16 = sadd.s32 1, %s12
  $region7: #{_lambda_.35} parent=0 // loop_footer_branch
    %11 = sbr.rel target = $region3
  $region8: #{_lambda_.35} parent=0 // loop_exit
    _

// kernel: _lambda_.39
$region0: #{_lambda_.39}
  #allocation0 [shape = 'u32[]', space=smem, size = 0x4, offset = 0x4, fixed_abs, tag = 'smem constant byte address 0x4 - core index']
  #allocation1 [shape = 'u32[144,128]{1,0:T(1,128)}', space=vmem, size = 0x12000, scoped, tag = 'internal scratch']
  %s0 = inlined_call_operand.vmem [shape: f32[8,64], index: 0, kind: input, shape index: {}]
  %s1 = inlined_call_operand.vmem [shape: f32[1,64], index: 1, kind: input, shape index: {}]
  %s2 = inlined_call_operand.vmem [shape: f32[1,64], index: 2, kind: input, shape index: {}]
  %s3 = inlined_call_operand.vmem [shape: f32[8,64], index: 3, kind: output, shape index: {}]
  %s4 = sld [smem:[#allocation0]]
  $region22: #{_lambda_.39} parent=0
    _
  %s6 = ssub.s32 1, %s4
  %s7 = scalar_select 0, %s6, %s4
  // Predicated region
  $region2: #{_lambda_.39} parent=0 // pred_check
    _
  $region3: #{_lambda_.39} parent=0 // pred_check_branch
    %9 = sbr.rel (0) target = $region5
  $region4: #{_lambda_.39} parent=0 // pred_region
    _
  $region5: #{_lambda_.39} parent=0 // pred_fallthru
    _
  // Predicated region
  $region6: #{_lambda_.39} parent=0 // pred_check
    _
  $region7: #{_lambda_.39} parent=0 // pred_check_branch
    %11 = sbr.rel (0) target = $region9
  $region8: #{_lambda_.39} parent=0 // pred_region
    _
  $region9: #{_lambda_.39} parent=0 // pred_fallthru
    _
  // Predicated region
  $region10: #{_lambda_.39} parent=0 // pred_check
    _
  $region11: #{_lambda_.39} parent=0 // pred_check_branch
    %13 = sbr.rel (0) target = $region13
  $region12: #{_lambda_.39} parent=0 // pred_region
    _
  $region13: #{_lambda_.39} parent=0 // pred_fallthru
    _
  %v14 = vld [vmem:[%s0] sm:$0xff]
  %vm15 = vcmask 523264
  %v16 = vsel %vm15, %v14, 0.0
  %17 = vadd.xlane.f32.xlu0 %v16
  %v18 = vpop.xlane.xlu0 %17
  %v19 = vrcp.pop 64.0
  %v20 = vmul.f32 %v18, %v19
  %v21 = vsub.f32 %v14, %v20
  %v22 = vmul.f32 %v21, %v21
  %v23 = vsel %vm15, %v22, 0.0
  %24 = vadd.xlane.f32.xlu0 %v23
  %v25 = vpop.xlane.xlu0 %24
  %v26 = vmul.f32 %v25, %v19
  %v27 = vadd.f32 %v26, 1e-05
  %v28 = vrsqrt.pop %v27
  %v29 = vmul.f32 %v21, %v28
  %v30 = vld [vmem:[%s1] sm:$0x1]
  %v32 = vlaneseq
  %v33 = vshrl.u32 %v32, 7
  %v34 = vsub.s32 0, %v33
  %v35 = vrot.slane %v30, %v34
  %v37 = vmul.f32 %v29, %v35
  %v38 = vld [vmem:[%s2] sm:$0x1]
  %v40 = vlaneseq
  %v41 = vshrl.u32 %v40, 7
  %v42 = vsub.s32 0, %v41
  %v43 = vrot.slane %v38, %v42
  %v45 = vadd.f32 %v37, %v43
  %46 = vst.msk [vmem:[%s3] sm:$0xff] %vm15, %v45
  // Predicated region
  $region14: #{_lambda_.39} parent=0 // pred_check
    _
  $region15: #{_lambda_.39} parent=0 // pred_check_branch
    %48 = sbr.rel (0) target = $region17
  $region16: #{_lambda_.39} parent=0 // pred_region
    _
  $region17: #{_lambda_.39} parent=0 // pred_fallthru
    _
  // Predicated region
  $region18: #{_lambda_.39} parent=0 // pred_check
    _
  $region19: #{_lambda_.39} parent=0 // pred_check_branch
    %50 = sbr.rel (0) target = $region21
  $region20: #{_lambda_.39} parent=0 // pred_region
    _
  $region21: #{_lambda_.39} parent=0 // pred_fallthru
    _

// kernel: _lambda_.40
$region0: #{_lambda_.40}
  #allocation0 [shape = 'u32[]', space=smem, size = 0x4, offset = 0x4, fixed_abs, tag = 'smem constant byte address 0x4 - core index']
  #allocation1 [shape = 'u32[144,128]{1,0:T(1,128)}', space=vmem, size = 0x12000, scoped, tag = 'internal scratch']
  %s0 = inlined_call_operand.vmem [shape: f32[2,64], index: 0, kind: input, shape index: {}]
  %s1 = inlined_call_operand.vmem [shape: bf16[64,256], index: 1, kind: input, shape index: {}]
  %s2 = inlined_call_operand.vmem [shape: f32[1,256], index: 2, kind: input, shape index: {}]
  %s3 = inlined_call_operand.vmem [shape: f32[2,256], index: 3, kind: output, shape index: {}]
  %s4 = sld [smem:[#allocation0]]
  $region22: #{_lambda_.40} parent=0
    _
  %s6 = ssub.s32 1, %s4
  %s7 = scalar_select 0, %s6, %s4
  // Predicated region
  $region2: #{_lambda_.40} parent=0 // pred_check
    _
  $region3: #{_lambda_.40} parent=0 // pred_check_branch
    %9 = sbr.rel (0) target = $region5
  $region4: #{_lambda_.40} parent=0 // pred_region
    _
  $region5: #{_lambda_.40} parent=0 // pred_fallthru
    _
  // Predicated region
  $region6: #{_lambda_.40} parent=0 // pred_check
    _
  $region7: #{_lambda_.40} parent=0 // pred_check_branch
    %11 = sbr.rel (0) target = $region9
  $region8: #{_lambda_.40} parent=0 // pred_region
    _
  $region9: #{_lambda_.40} parent=0 // pred_fallthru
    _
  // Predicated region
  $region10: #{_lambda_.40} parent=0 // pred_check
    _
  $region11: #{_lambda_.40} parent=0 // pred_check_branch
    %13 = sbr.rel (0) target = $region13
  $region12: #{_lambda_.40} parent=0 // pred_region
    _
  $region13: #{_lambda_.40} parent=0 // pred_fallthru
    _
  %v15 = vld [vmem:[%s0] sm:$0x3]
  %v16 = vpack.c.bf16 %v15, %v15
  %v17 = vld [vmem:[%s1] sm:$0xff]
  %v18 = vld [vmem:[%s1 + $0x8] sm:$0xff]
  %v19 = vld [vmem:[%s1 + $0x10] sm:$0xff]
  %v20 = vld [vmem:[%s1 + $0x18] sm:$0xff]
  %v21 = vld [vmem:[%s1 + $0x20] sm:$0xff]
  %v22 = vld [vmem:[%s1 + $0x28] sm:$0xff]
  %v23 = vld [vmem:[%s1 + $0x30] sm:$0xff]
  %v24 = vld [vmem:[%s1 + $0x38] sm:$0xff]
  %v25 = vld [vmem:[%s2] sm:$0x3]
  %v27 = vlaneseq
  %v28 = vshrl.u32 %v27, 7
  %v29 = vsub.s32 0, %v28
  %v30 = vrot.slane %v25, %v29
  %v31 = vlaneseq
  %v32 = vshrl.u32 %v31, 7
  %v33 = vsub.s32 1, %v32
  %v34 = vrot.slane %v25, %v33
  %v45 = vunpack.c.l.b16 %v17
  %v46 = vunpack.c.h.b16 %v17
  %v47 = vunpack.c.l.b16 %v18
  %v48 = vunpack.c.h.b16 %v18
  %v49 = vunpack.c.l.b16 %v19
  %v50 = vunpack.c.h.b16 %v19
  %v51 = vunpack.c.l.b16 %v20
  %v52 = vunpack.c.h.b16 %v20
  %v53 = vunpack.c.l.b16 %v21
  %v54 = vunpack.c.h.b16 %v21
  %v55 = vunpack.c.l.b16 %v22
  %v56 = vunpack.c.h.b16 %v22
  %v57 = vunpack.c.l.b16 %v23
  %v58 = vunpack.c.h.b16 %v23
  %v59 = vunpack.c.l.b16 %v24
  %v60 = vunpack.c.h.b16 %v24
  %v61 = vpack.c.b16 %v47, %v45
  %v62 = vpack.c.b16 %v48, %v46
  %v63 = vpack.c.b16 %v51, %v49
  %v64 = vpack.c.b16 %v52, %v50
  %v65 = vpack.c.b16 %v55, %v53
  %v66 = vpack.c.b16 %v56, %v54
  %v67 = vpack.c.b16 %v59, %v57
  %v68 = vpack.c.b16 %v60, %v58
  %vm77 = vcmask 523264
  %v79 = vsel %vm77, %v16, 0
  %81 = vmatprep.subr.bf16.mxu0 %v62
  %82 = vmatpush1.bf16.msra.mxu0 %v61
  %83 = vmatprep.subr.bf16.mxu0 %v64
  %84 = vmatpush1.bf16.msra.mxu0 %v63
  %85 = vmatprep.subr.bf16.mxu0 %v66
  %86 = vmatpush1.bf16.msra.mxu0 %v65
  %87 = vmatprep.subr.bf16.mxu0 %v68
  %88 = vmatpush1.bf16.msra.mxu0 %v67
  %89 = vmatprep.subr.bf16.mxu0 0
  %90 = vmatpush1.bf16.msra.mxu0 0
  %91 = vmatprep.subr.bf16.mxu0 0
  %92 = vmatpush1.bf16.msra.mxu0 0
  %93 = vmatprep.subr.bf16.mxu0 0
  %94 = vmatpush1.bf16.msra.mxu0 0
  %95 = vmatprep.subr.bf16.mxu0 0
  %96 = vmatpush1.bf16.msra.mxu0 0
  %97 = vmatprep.subr.bf16.mxu0 0
  %98 = vmatpush1.bf16.msra.mxu0 0
  %99 = vmatprep.subr.bf16.mxu0 0
  %100 = vmatpush1.bf16.msra.mxu0 0
  %101 = vmatprep.subr.bf16.mxu0 0
  %102 = vmatpush1.bf16.msra.mxu0 0
  %103 = vmatprep.subr.bf16.mxu0 0
  %104 = vmatpush1.bf16.msra.mxu0 0
  %105 = vmatprep.subr.bf16.mxu0 0
  %106 = vmatpush1.bf16.msra.mxu0 0
  %107 = vmatprep.subr.bf16.mxu0 0
  %108 = vmatpush1.bf16.msra.mxu0 0
  %109 = vmatprep.subr.bf16.mxu0 0
  %110 = vmatpush1.bf16.msra.mxu0 0
  %111 = vmatprep.subr.bf16.mxu0 0
  %112 = vmatpush1.bf16.msra.mxu0 0
  %113 = vmatprep.mubr.bf16.mxu0 0
  %114 = vmatmul.mubr.bf16.gmra.mrb[0].mxu0 %v79
  %v115 = vpop.f32.mrb[0].mxu0
  %v116 = vadd.f32 %v30, %v115
  %v117 = vpop.f32.mrb[0].mxu0
  %v118 = vadd.f32 %v34, %v117
  %v119 = vpop.f32.mrb[0].mxu0
  %v120 = vpop.f32.mrb[0].mxu0
  %121 = vdwg.mxu0
  %v122 = vmax.f32 %v116, 0.0
  %v123 = vmax.f32 %v118, 0.0
  %v126 = vcombine.low %v122, %v123
  %v128 = vunpack.c.l.s4 1983009808
  %v129 = vunpack.c.0.s8 %v128
  %v130 = vlaneseq
  %v131 = vshrl.u32 %v130, 7
  %v132 = vsub.s32 %v129, %v131
  %v133 = vrot.slane %v126, %v132
  %135 = vst [vmem:[%s3] sm:$0xf] %v133
  // Predicated region
  $region14: #{_lambda_.40} parent=0 // pred_check
    _
  $region15: #{_lambda_.40} parent=0 // pred_check_branch
    %137 = sbr.rel (0) target = $region17
  $region16: #{_lambda_.40} parent=0 // pred_region
    _
  $region17: #{_lambda_.40} parent=0 // pred_fallthru
    _
  // Predicated region
  $region18: #{_lambda_.40} parent=0 // pred_check
    _
  $region19: #{_lambda_.40} parent=0 // pred_check_branch
    %139 = sbr.rel (0) target = $region21
  $region20: #{_lambda_.40} parent=0 // pred_region
    _
  $region21: #{_lambda_.40} parent=0 // pred_fallthru
    _

// kernel: _lambda_.41
$region0: #{_lambda_.41}
  #allocation0 [shape = 'u32[]', space=smem, size = 0x4, offset = 0x4, fixed_abs, tag = 'smem constant byte address 0x4 - core index']
  #allocation1 [shape = 'u32[144,128]{1,0:T(1,128)}', space=vmem, size = 0x12000, scoped, tag = 'internal scratch']
  #allocation2 [shape = 'f32[1,1]{1,0:T(1,128)S(1)}', space=vmem, size = 0x200, scoped, tag = 'scoped memory for _lambda_.41']
  %s0 = inlined_call_operand.vmem [shape: f32[2,256], index: 0, kind: input, shape index: {}]
  %s1 = inlined_call_operand.vmem [shape: bf16[256,1], index: 1, kind: input, shape index: {}]
  %s2 = inlined_call_operand.<no memory space> [shape: f32[1,1], index: 2, kind: input, shape index: {}]
  %s3 = inlined_call_operand.vmem [shape: f32[2,1], index: 3, kind: output, shape index: {}]
  %s4 = sld [smem:[#allocation0]]
  $region22: #{_lambda_.41} parent=0
    _
  %s6 = ssub.s32 1, %s4
  %s7 = scalar_select 0, %s6, %s4
  %v8 = vstv %s2
  %9 = vst [vmem:[#allocation2] sm:$0x1] %v8
  // Predicated region
  $region2: #{_lambda_.41} parent=0 // pred_check
    _
  $region3: #{_lambda_.41} parent=0 // pred_check_branch
    %11 = sbr.rel (0) target = $region5
  $region4: #{_lambda_.41} parent=0 // pred_region
    _
  $region5: #{_lambda_.41} parent=0 // pred_fallthru
    _
  // Predicated region
  $region6: #{_lambda_.41} parent=0 // pred_check
    _
  $region7: #{_lambda_.41} parent=0 // pred_check_branch
    %13 = sbr.rel (0) target = $region9
  $region8: #{_lambda_.41} parent=0 // pred_region
    _
  $region9: #{_lambda_.41} parent=0 // pred_fallthru
    _
  // Predicated region
  $region10: #{_lambda_.41} parent=0 // pred_check
    _
  $region11: #{_lambda_.41} parent=0 // pred_check_branch
    %15 = sbr.rel (0) target = $region13
  $region12: #{_lambda_.41} parent=0 // pred_region
    _
  $region13: #{_lambda_.41} parent=0 // pred_fallthru
    _
  %v17 = vld [vmem:[%s0] sm:$0xf]
  %v20 = vunpack.c.l.s4 1983009808
  %v21 = vunpack.c.0.s8 %v20
  %v22 = vlaneseq
  %v23 = vshrl.u32 %v22, 7
  %v24 = vsub.s32 %v21, %v23
  %v25 = vrot.slane %v17, %v24
  %v26 = vcombine.high %v25, %v25
  %v29 = vpack.c.bf16 %v25, %v25
  %v30 = vpack.c.bf16 %v26, %v26
  %v31 = vld [vmem:[%s1] sm:$0xf]
  %v32 = vld [vmem:[%s1 + $0x4] sm:$0xf]
  %v33 = vld [vmem:[%s1 + $0x8] sm:$0xf]
  %v34 = vld [vmem:[%s1 + $0xc] sm:$0xf]
  %v35 = vld [vmem:[%s1 + $0x10] sm:$0xf]
  %v36 = vld [vmem:[%s1 + $0x14] sm:$0xf]
  %v37 = vld [vmem:[%s1 + $0x18] sm:$0xf]
  %v38 = vld [vmem:[%s1 + $0x1c] sm:$0xf]
  %v39 = vld [vmem:[%s1 + $0x20] sm:$0xf]
  %v40 = vld [vmem:[%s1 + $0x24] sm:$0xf]
  %v41 = vld [vmem:[%s1 + $0x28] sm:$0xf]
  %v42 = vld [vmem:[%s1 + $0x2c] sm:$0xf]
  %v43 = vld [vmem:[%s1 + $0x30] sm:$0xf]
  %v44 = vld [vmem:[%s1 + $0x34] sm:$0xf]
  %v45 = vld [vmem:[%s1 + $0x38] sm:$0xf]
  %v46 = vld [vmem:[%s1 + $0x3c] sm:$0xf]
  %v47 = vld [vmem:[%s1 + $0x40] sm:$0xf]
  %v48 = vld [vmem:[%s1 + $0x44] sm:$0xf]
  %v49 = vld [vmem:[%s1 + $0x48] sm:$0xf]
  %v50 = vld [vmem:[%s1 + $0x4c] sm:$0xf]
  %v51 = vld [vmem:[%s1 + $0x50] sm:$0xf]
  %v52 = vld [vmem:[%s1 + $0x54] sm:$0xf]
  %v53 = vld [vmem:[%s1 + $0x58] sm:$0xf]
  %v54 = vld [vmem:[%s1 + $0x5c] sm:$0xf]
  %v55 = vld [vmem:[%s1 + $0x60] sm:$0xf]
  %v56 = vld [vmem:[%s1 + $0x64] sm:$0xf]
  %v57 = vld [vmem:[%s1 + $0x68] sm:$0xf]
  %v58 = vld [vmem:[%s1 + $0x6c] sm:$0xf]
  %v59 = vld [vmem:[%s1 + $0x70] sm:$0xf]
  %v60 = vld [vmem:[%s1 + $0x74] sm:$0xf]
  %v61 = vld [vmem:[%s1 + $0x78] sm:$0xf]
  %v62 = vld [vmem:[%s1 + $0x7c] sm:$0xf]
  %v63 = vld [vmem:[#allocation2] sm:$0x1]
  %v65 = vlaneseq
  %v66 = vshrl.u32 %v65, 7
  %v67 = vsub.s32 0, %v66
  %v68 = vrot.slane %v63, %v67
  %v102 = vunpack.c.l.b16 %v31
  %v103 = vunpack.c.l.b16 %v32
  %v104 = vunpack.c.l.b16 %v33
  %v105 = vunpack.c.l.b16 %v34
  %v106 = vunpack.c.l.b16 %v35
  %v107 = vunpack.c.l.b16 %v36
  %v108 = vunpack.c.l.b16 %v37
  %v109 = vunpack.c.l.b16 %v38
  %v110 = vunpack.c.l.b16 %v39
  %v111 = vunpack.c.l.b16 %v40
  %v112 = vunpack.c.l.b16 %v41
  %v113 = vunpack.c.l.b16 %v42
  %v114 = vunpack.c.l.b16 %v43
  %v115 = vunpack.c.l.b16 %v44
  %v116 = vunpack.c.l.b16 %v45
  %v117 = vunpack.c.l.b16 %v46
  %v118 = vunpack.c.l.b16 %v47
  %v119 = vunpack.c.l.b16 %v48
  %v120 = vunpack.c.l.b16 %v49
  %v121 = vunpack.c.l.b16 %v50
  %v122 = vunpack.c.l.b16 %v51
  %v123 = vunpack.c.l.b16 %v52
  %v124 = vunpack.c.l.b16 %v53
  %v125 = vunpack.c.l.b16 %v54
  %v126 = vunpack.c.l.b16 %v55
  %v127 = vunpack.c.l.b16 %v56
  %v128 = vunpack.c.l.b16 %v57
  %v129 = vunpack.c.l.b16 %v58
  %v130 = vunpack.c.l.b16 %v59
  %v131 = vunpack.c.l.b16 %v60
  %v132 = vunpack.c.l.b16 %v61
  %v133 = vunpack.c.l.b16 %v62
  %v134 = vpack.c.b16 %v103, %v102
  %v135 = vpack.c.b16 %v105, %v104
  %v136 = vpack.c.b16 %v107, %v106
  %v137 = vpack.c.b16 %v109, %v108
  %v138 = vpack.c.b16 %v111, %v110
  %v139 = vpack.c.b16 %v113, %v112
  %v140 = vpack.c.b16 %v115, %v114
  %v141 = vpack.c.b16 %v117, %v116
  %v142 = vpack.c.b16 %v119, %v118
  %v143 = vpack.c.b16 %v121, %v120
  %v144 = vpack.c.b16 %v123, %v122
  %v145 = vpack.c.b16 %v125, %v124
  %v146 = vpack.c.b16 %v127, %v126
  %v147 = vpack.c.b16 %v129, %v128
  %v148 = vpack.c.b16 %v131, %v130
  %v149 = vpack.c.b16 %v133, %v132
  %166 = vmatprep.subr.bf16.mxu0 0
  %167 = vmatpush1.bf16.msra.mxu0 %v134
  %168 = vmatprep.subr.bf16.mxu0 0
  %169 = vmatpush1.bf16.msra.mxu0 %v135
  %170 = vmatprep.subr.bf16.mxu0 0
  %171 = vmatpush1.bf16.msra.mxu0 %v136
  %172 = vmatprep.subr.bf16.mxu0 0
  %173 = vmatpush1.bf16.msra.mxu0 %v137
  %174 = vmatprep.subr.bf16.mxu0 0
  %175 = vmatpush1.bf16.msra.mxu0 %v138
  %176 = vmatprep.subr.bf16.mxu0 0
  %177 = vmatpush1.bf16.msra.mxu0 %v139
  %178 = vmatprep.subr.bf16.mxu0 0
  %179 = vmatpush1.bf16.msra.mxu0 %v140
  %180 = vmatprep.subr.bf16.mxu0 0
  %181 = vmatpush1.bf16.msra.mxu0 %v141
  %182 = vmatprep.subr.bf16.mxu0 0
  %183 = vmatpush1.bf16.msra.mxu0 %v142
  %184 = vmatprep.subr.bf16.mxu0 0
  %185 = vmatpush1.bf16.msra.mxu0 %v143
  %186 = vmatprep.subr.bf16.mxu0 0
  %187 = vmatpush1.bf16.msra.mxu0 %v144
  %188 = vmatprep.subr.bf16.mxu0 0
  %189 = vmatpush1.bf16.msra.mxu0 %v145
  %190 = vmatprep.subr.bf16.mxu0 0
  %191 = vmatpush1.bf16.msra.mxu0 %v146
  %192 = vmatprep.subr.bf16.mxu0 0
  %193 = vmatpush1.bf16.msra.mxu0 %v147
  %194 = vmatprep.subr.bf16.mxu0 0
  %195 = vmatpush1.bf16.msra.mxu0 %v148
  %196 = vmatprep.subr.bf16.mxu0 0
  %197 = vmatpush1.bf16.msra.mxu0 %v149
  %198 = vmatprep.mubr.bf16.mxu0 %v30
  %199 = vmatmul.mubr.bf16.gmra.mrb[0].mxu0 %v29
  %v200 = vpop.f32.mrb[0].mxu0
  %v201 = vadd.f32 %v68, %v200
  %v202 = vpop.f32.mrb[0].mxu0
  %v203 = vpop.f32.mrb[0].mxu0
  %v204 = vpop.f32.mrb[0].mxu0
  %205 = vdwg.mxu0
  %v206 = vsub.f32 0.0, %v201
  %v207 = vmul.f32 %v206, 1.442695
  %v208 = vpow.pop %v207
  %v209 = vadd.f32 %v208, 1.0
  %v210 = vrcp.pop %v209
  %v211 = vmul.f32 1.0, %v210
  %vm212 = vcmask 1024
  %213 = vst.msk [vmem:[%s3] sm:$0x3] %vm212, %v211
  // Predicated region
  $region14: #{_lambda_.41} parent=0 // pred_check
    _
  $region15: #{_lambda_.41} parent=0 // pred_check_branch
    %215 = sbr.rel (0) target = $region17
  $region16: #{_lambda_.41} parent=0 // pred_region
    _
  $region17: #{_lambda_.41} parent=0 // pred_fallthru
    _
  // Predicated region
  $region18: #{_lambda_.41} parent=0 // pred_check
    _
  $region19: #{_lambda_.41} parent=0 // pred_check_branch
    %217 = sbr.rel (0) target = $region21
  $region20: #{_lambda_.41} parent=0 // pred_region
    _
  $region21: #{_lambda_.41} parent=0 // pred_fallthru
    _

</llo_original>
